<compile_context>
chip_gen: v5e
topology: v5e:2x2
jax: 0.10.0
libtpu: 0.0.40
codegen_flags: <defaults>
</compile_context>

<pallas_src>
import functools

import jax
import jax.numpy as jnp
from jax import lax
from jax.experimental import pallas as pl
from jax.experimental.pallas import tpu as pltpu


# ------------------------- per-generation VMEM budget ----------------------- #
def _default_vmem_limit():
    try:
        cap = pltpu.get_tpu_info().vmem_capacity_bytes     # 128 MiB v5e/v6e, 64 MiB v7x
        return min((int(cap) * 3) // 4, 100 * 1024 * 1024)
    except Exception:
        return 64 * 1024 * 1024

_VMEM_LIMIT = _default_vmem_limit()


def _cparams(*sems):
    return pltpu.CompilerParams(dimension_semantics=sems,
                                vmem_limit_bytes=_VMEM_LIMIT)


def _res(shape):
    """BlockSpec for an operand kept VMEM-resident across all grid steps."""
    nd = len(shape)
    return pl.BlockSpec(shape, lambda *args, _nd=nd: (0,) * _nd)


# ----------------------- row-tiled linear (+bias, +ReLU) -------------------- #
def _linear_kernel(x_ref, w_ref, b_ref, o_ref, *, relu):
    y = jnp.dot(x_ref[...].astype(jnp.bfloat16), w_ref[...],
                preferred_element_type=jnp.float32) + b_ref[...]
    if relu:
        y = jnp.maximum(y, 0.0)
    o_ref[...] = y.astype(o_ref.dtype)


def linear(x, w_bf16, b_2d, relu=False, out_dtype=jnp.bfloat16, block_m=512):
    """x: (M, K), w: (K, N) bf16, b: (1, N) f32 -> (M, N) out_dtype."""
    M, K = x.shape
    N = w_bf16.shape[1]
    bm = min(M, block_m)
    return pl.pallas_call(
        functools.partial(_linear_kernel, relu=relu),
        out_shape=jax.ShapeDtypeStruct((M, N), out_dtype),
        grid=(pl.cdiv(M, bm),),
        in_specs=[pl.BlockSpec((bm, K), lambda i: (i, 0)),
                  _res((K, N)),
                  _res((1, N))],
        out_specs=pl.BlockSpec((bm, N), lambda i: (i, 0)),
        compiler_params=_cparams("parallel"),
    )(x, w_bf16, b_2d)


# ------------------- fused bidirectional LSTM recurrence -------------------- #
def _bilstm_scan_kernel(xg_ref, whh_ref, out_ref, hb_scr, *, H, S, B):
    """One layer, both directions, full sequence.  xg_ref: (S, B, 8H) bf16
    (cols [:4H] fwd gates, [4H:] bwd gates); whh_ref: (2, H, 4H) bf16;
    out_ref: (S, B, 2H); hb_scr: (S, B, H) f32 scratch for the bwd pass."""
    whh_f = whh_ref[0]                                   # (H, 4H) bf16, hoisted
    whh_b = whh_ref[1]

    def cell(xg, h, c, whh):
        # bf16 gate matmul, f32 accumulation; c/h state and gates stay f32.
        gates = xg.astype(jnp.float32) + jnp.dot(
            h.astype(jnp.bfloat16), whh, preferred_element_type=jnp.float32)
        i = jax.nn.sigmoid(gates[:, 0 * H:1 * H])        # PyTorch order i,f,g,o
        f = jax.nn.sigmoid(gates[:, 1 * H:2 * H])
        g = jnp.tanh(gates[:, 2 * H:3 * H])
        o = jax.nn.sigmoid(gates[:, 3 * H:4 * H])
        c_new = f * c + i * g
        return o * jnp.tanh(c_new), c_new

    zero = jnp.zeros((B, H), jnp.float32)

    # Pass 1: backward direction (t = S-1 .. 0), buffered in VMEM scratch.
    def bwd_body(step, carry):
        h, c = carry
        t = S - 1 - step
        h, c = cell(xg_ref[t][:, 4 * H:], h, c, whh_b)
        hb_scr[t] = h
        return h, c
    lax.fori_loop(0, S, bwd_body, (zero, zero))

    # Pass 2: forward direction; emit dense (B, 2H) rows (fwd ++ bwd).
    def fwd_body(t, carry):
        h, c = carry
        h, c = cell(xg_ref[t][:, :4 * H], h, c, whh_f)
        out_ref[t] = jnp.concatenate([h, hb_scr[t]], axis=-1).astype(out_ref.dtype)
        return h, c
    lax.fori_loop(0, S, fwd_body, (zero, zero))


def bilstm_layer(x_sbi, lp):
    """One bidirectional LSTM layer, time-major. x: (S, B, In) -> (S, B, 2H) bf16."""
    S, B, In = x_sbi.shape
    H = lp['w_hh'].shape[1]
    # Input projection for BOTH directions as one MXU-friendly matmul (bf16 out).
    xg = linear(x_sbi.reshape(S * B, In), lp['w_ih'], lp['b'])   # (S*B, 8H) bf16
    xg = xg.reshape(S, B, 8 * H)                                 # free reshape
    return pl.pallas_call(
        functools.partial(_bilstm_scan_kernel, H=H, S=S, B=B),
        out_shape=jax.ShapeDtypeStruct((S, B, 2 * H), jnp.bfloat16),
        grid=(1,),
        in_specs=[_res((S, B, 8 * H)),          # xg, DMA'd once
                  _res((2, H, 4 * H))],         # stacked w_hh (bf16)
        out_specs=_res((S, B, 2 * H)),
        scratch_shapes=[pltpu.VMEM((S, B, H), jnp.float32)],
        compiler_params=_cparams("arbitrary"),  # sequential recurrence
    )(xg, lp['w_hh'])


def bilstm_block(x_sbi, layers):
    """Multi-layer bidirectional LSTM (nn.LSTM, bidirectional=True)."""
    out = x_sbi
    for lp in layers:
        out = bilstm_layer(out, lp)
        # inter-layer dropout skipped (eval semantics)
    return out


# ---- fused transformer encoder layer: MHA + LN1 + FFN + LN2 (post-norm) ---- #
def _tfm_layer_kernel(x_ref, wqkv_ref, bqkv_ref, wo_ref, bo_ref,
                      g1_ref, be1_ref, wf1_ref, bf1_ref, wf2_ref, bf2_ref,
                      g2_ref, be2_ref, o_ref, *, nhead, eps):
    Nb, L, D = x_ref.shape
    dh = D // nhead
    scale = 1.0 / (dh ** 0.5)

    x2 = x_ref[...].reshape(Nb * L, D)                   # bf16 (batch-first view)
    xb = x2.astype(jnp.bfloat16)
    x2f = x2.astype(jnp.float32)

    # ONE wide QKV projection: (Nb*L, D) @ (D, 3D).
    qkv = jnp.dot(xb, wqkv_ref[...], preferred_element_type=jnp.float32) + bqkv_ref[...]

    heads = []
    for h in range(nhead):                               # small per-head einsums only
        lo, hi = h * dh, (h + 1) * dh
        q = (qkv[:, lo:hi] * scale).astype(jnp.bfloat16).reshape(Nb, L, dh)
        k = qkv[:, D + lo:D + hi].astype(jnp.bfloat16).reshape(Nb, L, dh)
        v = qkv[:, 2 * D + lo:2 * D + hi].astype(jnp.bfloat16).reshape(Nb, L, dh)
        s = jnp.einsum('nld,nmd->nlm', q, k, preferred_element_type=jnp.float32)
        s = s - jnp.max(s, axis=-1, keepdims=True)
        p = jnp.exp(s)
        p = p * pl.reciprocal(jnp.sum(p, axis=-1, keepdims=True), approx=True)
        a = jnp.einsum('nlm,nmd->nld', p.astype(jnp.bfloat16), v,
                       preferred_element_type=jnp.float32)
        heads.append(a.reshape(Nb * L, dh))
    attn = jnp.concatenate(heads, axis=-1)               # (Nb*L, D) in VMEM

    # ONE wide out-projection + bias + residual.
    y = jnp.dot(attn.astype(jnp.bfloat16), wo_ref[...],
                preferred_element_type=jnp.float32) + bo_ref[...] + x2f
    mu = jnp.mean(y, axis=-1, keepdims=True)             # LayerNorm 1
    yc = y - mu
    var = jnp.mean(yc * yc, axis=-1, keepdims=True)
    y1 = yc * lax.rsqrt(var + eps) * g1_ref[...] + be1_ref[...]

    # FFN: linear -> ReLU -> linear, residual, LayerNorm 2.
    hdd = jnp.dot(y1.astype(jnp.bfloat16), wf1_ref[...],
                  preferred_element_type=jnp.float32) + bf1_ref[...]
    hdd = jnp.maximum(hdd, 0.0)
    y2 = jnp.dot(hdd.astype(jnp.bfloat16), wf2_ref[...],
                 preferred_element_type=jnp.float32) + bf2_ref[...] + y1
    mu = jnp.mean(y2, axis=-1, keepdims=True)
    yc = y2 - mu
    var = jnp.mean(yc * yc, axis=-1, keepdims=True)
    y2 = yc * lax.rsqrt(var + eps) * g2_ref[...] + be2_ref[...]

    o_ref[...] = y2.reshape(Nb, L, D).astype(o_ref.dtype)


def transformer_layer(z, p, nhead, block_n=128):
    """z: (N, L, D) bf16; fused attention + FFN.  On v7x shrink block_n further
    if d_model/dim_feedforward are large (VMEM budget is set via _VMEM_LIMIT)."""
    N, L, D = z.shape
    F = p['ff1_w'].shape[1]
    bn = min(N, block_n)
    return pl.pallas_call(
        functools.partial(_tfm_layer_kernel, nhead=nhead, eps=1e-5),
        out_shape=jax.ShapeDtypeStruct((N, L, D), jnp.bfloat16),
        grid=(pl.cdiv(N, bn),),
        in_specs=[pl.BlockSpec((bn, L, D), lambda i: (i, 0, 0)),
                  _res((D, 3 * D)), _res((1, 3 * D)),
                  _res((D, D)), _res((1, D)),
                  _res((1, D)), _res((1, D)),
                  _res((D, F)), _res((1, F)),
                  _res((F, D)), _res((1, D)),
                  _res((1, D)), _res((1, D))],
        out_specs=pl.BlockSpec((bn, L, D), lambda i: (i, 0, 0)),
        compiler_params=_cparams("parallel"),
    )(z, p['in_proj_w'], p['in_proj_b'], p['out_proj_w'], p['out_proj_b'],
      p['ln1_g'], p['ln1_b'], p['ff1_w'], p['ff1_b'], p['ff2_w'], p['ff2_b'],
      p['ln2_g'], p['ln2_b'])


# ----------------- fused classification head (slice + fc1..fc4) ------------- #
def _head_kernel(x_ref, w1, b1, w2, b2, w3, b3, w4, b4, o_ref):
    def lin(v, w_ref, b_ref, relu):
        y = jnp.dot(v.astype(jnp.bfloat16), w_ref[...],
                    preferred_element_type=jnp.float32) + b_ref[...]
        return jnp.maximum(y, 0.0) if relu else y

    x = x_ref[0]                                  # (B, d_model) == z[S-1]
    h = lin(x, w1, b1, True)
    h = lin(h, w2, b2, True)
    h = lin(h, w3, b3, True)
    o_ref[...] = lin(h, w4, b4, False)


def mlp_head(z, params):
    S, B, D = z.shape
    C = params['fc4_w'].shape[1]
    ws = [(params['fc1_w'], params['fc1_b']), (params['fc2_w'], params['fc2_b']),
          (params['fc3_w'], params['fc3_b']), (params['fc4_w'], params['fc4_b'])]
    in_specs = [pl.BlockSpec((1, B, D), lambda i: (S - 1, 0, 0))]   # fused slice
    args = [z]
    for w, b in ws:
        in_specs += [_res(w.shape), _res(b.shape)]
        args += [w, b]
    return pl.pallas_call(
        _head_kernel,
        out_shape=jax.ShapeDtypeStruct((B, C), jnp.float32),
        grid=(1,),
        in_specs=in_specs,
        out_specs=pl.BlockSpec((B, C), lambda i: (0, 0)),
        compiler_params=_cparams("arbitrary"),
    )(*args)


# ------------------------------ full forward -------------------------------- #
def model_forward(bert_hidden, params, *, nhead):
    # (B, S, E) -> time-major (S, B, E), bf16: the only host-side transpose/cast.
    x = jnp.transpose(bert_hidden, (1, 0, 2)).astype(jnp.bfloat16)
    lstm_outs = [bilstm_block(x, blk) for blk in params['lstm_blocks']]
    z = lstm_outs[0] if len(lstm_outs) == 1 else jnp.concatenate(lstm_outs, axis=-1)
    # (S, B, d_model) is exactly the (seq=B, batch=S, D) layout the PyTorch
    # transformer sees (batch_first=False applied to the (B, S, d_model) tensor).
    for lp in params['transformer_layers']:
        z = transformer_layer(z, lp, nhead)
    # transformer_out[:, -1, :] == z[S-1]; the slice is fused into mlp_head.
    return mlp_head(z, params)


# ------------------------------ param init/prep ----------------------------- #
def init_params(key, *, bert_dim, hidden_size, num_layers, lstm_blocks,
                transformer_layers, transformer_heads, dim_feedforward,
                num_classes):
    d_model = hidden_size * 2 * lstm_blocks
    assert d_model % transformer_heads == 0
    keys = iter(jax.random.split(key, 4096))

    def w(shape, scale=0.05):
        return (scale * jax.random.normal(next(keys), shape)).astype(jnp.float32)

    params = {'lstm_blocks': [], 'transformer_layers': []}
    for _ in range(lstm_blocks):
        layers = []
        in_dim = bert_dim
        for _ in range(num_layers):
            layers.append(dict(
                w_ih_f=w((in_dim, 4 * hidden_size)),
                w_hh_f=w((hidden_size, 4 * hidden_size)),
                b_f=w((4 * hidden_size,)),              # b_ih + b_hh combined
                w_ih_b=w((in_dim, 4 * hidden_size)),
                w_hh_b=w((hidden_size, 4 * hidden_size)),
                b_b=w((4 * hidden_size,)),
            ))
            in_dim = 2 * hidden_size
        params['lstm_blocks'].append(layers)
    for _ in range(transformer_layers):
        params['transformer_layers'].append(dict(
            in_proj_w=w((d_model, 3 * d_model)), in_proj_b=w((3 * d_model,)),
            out_proj_w=w((d_model, d_model)), out_proj_b=w((d_model,)),
            ln1_g=jnp.ones((d_model,), jnp.float32),
            ln1_b=jnp.zeros((d_model,), jnp.float32),
            ff1_w=w((d_model, dim_feedforward)), ff1_b=w((dim_feedforward,)),
            ff2_w=w((dim_feedforward, d_model)), ff2_b=w((d_model,)),
            ln2_g=jnp.ones((d_model,), jnp.float32),
            ln2_b=jnp.zeros((d_model,), jnp.float32),
        ))
    params['fc1_w'] = w((d_model, 512)); params['fc1_b'] = w((512,))
    params['fc2_w'] = w((512, 256));     params['fc2_b'] = w((256,))
    params['fc3_w'] = w((256, 128));     params['fc3_b'] = w((128,))
    params['fc4_w'] = w((128, num_classes)); params['fc4_b'] = w((num_classes,))
    return params


def prepare_params(raw):
    """One-time host-side packing: concat/stack LSTM weights, cast every matmul
    weight to bf16, reshape biases/LN params to (1, N)."""
    prep = {'lstm_blocks': [], 'transformer_layers': []}
    for layers in raw['lstm_blocks']:
        pls = []
        for lp in layers:
            pls.append(dict(
                w_ih=jnp.concatenate([lp['w_ih_f'], lp['w_ih_b']],
                                     axis=1).astype(jnp.bfloat16),   # (In, 8H)
                b=jnp.concatenate([lp['b_f'], lp['b_b']],
                                  axis=0).reshape(1, -1),            # (1, 8H) f32
                w_hh=jnp.stack([lp['w_hh_f'], lp['w_hh_b']],
                               axis=0).astype(jnp.bfloat16),         # (2, H, 4H)
            ))
        prep['lstm_blocks'].append(pls)
    for tp in raw['transformer_layers']:
        prep['transformer_layers'].append(dict(
            in_proj_w=tp['in_proj_w'].astype(jnp.bfloat16),
            in_proj_b=tp['in_proj_b'].reshape(1, -1),
            out_proj_w=tp['out_proj_w'].astype(jnp.bfloat16),
            out_proj_b=tp['out_proj_b'].reshape(1, -1),
            ln1_g=tp['ln1_g'].reshape(1, -1), ln1_b=tp['ln1_b'].reshape(1, -1),
            ff1_w=tp['ff1_w'].astype(jnp.bfloat16),
            ff1_b=tp['ff1_b'].reshape(1, -1),
            ff2_w=tp['ff2_w'].astype(jnp.bfloat16),
            ff2_b=tp['ff2_b'].reshape(1, -1),
            ln2_g=tp['ln2_g'].reshape(1, -1), ln2_b=tp['ln2_b'].reshape(1, -1),
        ))
    for k in ('fc1', 'fc2', 'fc3', 'fc4'):
        prep[k + '_w'] = raw[k + '_w'].astype(jnp.bfloat16)
        prep[k + '_b'] = raw[k + '_b'].reshape(1, -1)
    return prep


if __name__ == "__main__":
    B, S = 2, 8
    bert_dim = 32          # stand-in for BERT hidden size (768 in the original)
    hidden_size = 16
    num_layers = 2
    lstm_blocks = 2
    transformer_layers = 2
    transformer_heads = 4
    dim_feedforward = 128
    num_classes = 5

    key = jax.random.PRNGKey(0)
    k_in, k_par = jax.random.split(key)
    bert_hidden = jax.random.normal(k_in, (B, S, bert_dim), dtype=jnp.float32)
    raw_params = init_params(
        k_par, bert_dim=bert_dim, hidden_size=hidden_size, num_layers=num_layers,
        lstm_blocks=lstm_blocks, transformer_layers=transformer_layers,
        transformer_heads=transformer_heads, dim_feedforward=dim_feedforward,
        num_classes=num_classes)
    params = prepare_params(raw_params)   # one-time pack + bf16 cast (outside jit)

    fwd = jax.jit(functools.partial(model_forward, nhead=transformer_heads))
    out = fwd(bert_hidden, params)
    jax.block_until_ready(out)
    assert out.shape == (B, num_classes)
    assert bool(jnp.all(jnp.isfinite(out)))
    print("KERNEL_OK")
</pallas_src>

<mosaic_0001>
module attributes {stable_mosaic.version = 11 : i64} {
  func.func @_linear_kernel(%arg0: i32, %arg1: memref<16x32xbf16, #tpu.memory_space<vmem>>, %arg2: memref<32x128xbf16, #tpu.memory_space<vmem>>, %arg3: memref<1x128xf32, #tpu.memory_space<vmem>>, %arg4: memref<16x128xbf16, #tpu.memory_space<vmem>>) attributes {dimension_semantics = [#tpu.dimension_semantics<parallel>], iteration_bounds = array<i64: 1>, scalar_prefetch = 0 : i64, scratch_operands = 0 : i64, tpu.core_type = #tpu.core_type<tc>, window_params = [{transform_indices = @transform_0, window_bounds = array<i64: 16, 32>}, {pipeline_mode = #tpu.pipeline_mode<synchronous>, transform_indices = @transform_1, window_bounds = array<i64: 32, 128>}, {pipeline_mode = #tpu.pipeline_mode<synchronous>, transform_indices = @transform_2, window_bounds = array<i64: 1, 128>}, {transform_indices = @transform_3, window_bounds = array<i64: 16, 128>}]} {
    %c0 = arith.constant 0 : index
    %c0_0 = arith.constant 0 : index
    %0 = vector.load %arg1[%c0, %c0_0] : memref<16x32xbf16, #tpu.memory_space<vmem>>, vector<16x32xbf16>
    %c0_1 = arith.constant 0 : index
    %c0_2 = arith.constant 0 : index
    %1 = vector.load %arg2[%c0_1, %c0_2] : memref<32x128xbf16, #tpu.memory_space<vmem>>, vector<32x128xbf16>
    %cst = arith.constant dense<0.000000e+00> : vector<16x128xf32>
    %2 = tpu.matmul %0, %1, %cst {dimension_numbers = #tpu.dot_dimension_numbers<[1], [0], [0], [1], [0, 0, 1, 1], [], []>} : vector<16x32xbf16>, vector<32x128xbf16>, vector<16x128xf32> -> vector<16x128xf32>
    %c0_3 = arith.constant 0 : index
    %c0_4 = arith.constant 0 : index
    %3 = vector.load %arg3[%c0_3, %c0_4] : memref<1x128xf32, #tpu.memory_space<vmem>>, vector<1x128xf32>
    %4 = vector.broadcast %3 : vector<1x128xf32> to vector<16x128xf32>
    %5 = arith.addf %2, %4 : vector<16x128xf32>
    %6 = arith.truncf %5 : vector<16x128xf32> to vector<16x128xbf16>
    %c0_5 = arith.constant 0 : index
    %c0_6 = arith.constant 0 : index
    %7 = vector.load %arg4[%c0_5, %c0_6] : memref<16x128xbf16, #tpu.memory_space<vmem>>, vector<16x128xbf16>
    tpu.vector_store %arg4[%c0_5, %c0_6], %6 {strides = array<i32>} : memref<16x128xbf16, #tpu.memory_space<vmem>>, vector<16x128xbf16>,
    return
  }
  func.func @transform_0(%arg0: i32) -> (i32, i32) {
    %c0_i32 = arith.constant 0 : i32
    %c0_i32_0 = arith.constant 0 : i32
    return %arg0, %c0_i32 : i32, i32
  }
  func.func @transform_1(%arg0: i32) -> (i32, i32) {
    %c0_i32 = arith.constant 0 : i32
    %c0_i32_0 = arith.constant 0 : i32
    %c0_i32_1 = arith.constant 0 : i32
    return %c0_i32, %c0_i32_0 : i32, i32
  }
  func.func @transform_2(%arg0: i32) -> (i32, i32) {
    %c0_i32 = arith.constant 0 : i32
    %c0_i32_0 = arith.constant 0 : i32
    %c0_i32_1 = arith.constant 0 : i32
    return %c0_i32, %c0_i32_0 : i32, i32
  }
  func.func @transform_3(%arg0: i32) -> (i32, i32) {
    %c0_i32 = arith.constant 0 : i32
    %c0_i32_0 = arith.constant 0 : i32
    return %arg0, %c0_i32 : i32, i32
  }
}

module attributes {stable_mosaic.version = 11 : i64} {
  func.func @_bilstm_scan_kernel(%arg0: i32, %arg1: memref<8x2x128xbf16, #tpu.memory_space<vmem>>, %arg2: memref<2x16x64xbf16, #tpu.memory_space<vmem>>, %arg3: memref<8x2x32xbf16, #tpu.memory_space<vmem>>, %arg4: memref<8x2x16xf32, #tpu.memory_space<vmem>>) attributes {dimension_semantics = [#tpu.dimension_semantics<arbitrary>], iteration_bounds = array<i64: 1>, scalar_prefetch = 0 : i64, scratch_operands = 1 : i64, tpu.core_type = #tpu.core_type<tc>, window_params = [{pipeline_mode = #tpu.pipeline_mode<synchronous>, transform_indices = @transform_0, window_bounds = array<i64: 8, 2, 128>}, {pipeline_mode = #tpu.pipeline_mode<synchronous>, transform_indices = @transform_1, window_bounds = array<i64: 2, 16, 64>}, {pipeline_mode = #tpu.pipeline_mode<synchronous>, transform_indices = @transform_2, window_bounds = array<i64: 8, 2, 32>}]} {
    %c0 = arith.constant 0 : index
    %c0_0 = arith.constant 0 : index
    %c0_1 = arith.constant 0 : index
    %0 = vector.load %arg2[%c0, %c0_0, %c0_1] : memref<2x16x64xbf16, #tpu.memory_space<vmem>>, vector<1x16x64xbf16>
    %1 = vector.shape_cast %0 : vector<1x16x64xbf16> to vector<16x64xbf16>
    %c1 = arith.constant 1 : index
    %c0_2 = arith.constant 0 : index
    %c0_3 = arith.constant 0 : index
    %2 = vector.load %arg2[%c1, %c0_2, %c0_3] : memref<2x16x64xbf16, #tpu.memory_space<vmem>>, vector<1x16x64xbf16>
    %3 = vector.shape_cast %2 : vector<1x16x64xbf16> to vector<16x64xbf16>
    %cst = arith.constant 0.000000e+00 : f32
    %4 = vector.broadcast %cst : f32 to vector<2x16xf32>
    %c0_i32 = arith.constant 0 : i32
    %c8_i32 = arith.constant 8 : i32
    %5 = arith.addi %c0_i32, %c8_i32 : i32
    %c1_i32 = arith.constant 1 : i32
    %6:2 = scf.for %arg5 = %c0_i32 to %5 step %c1_i32 iter_args(%arg6 = %4, %arg7 = %4) -> (vector<2x16xf32>, vector<2x16xf32>)  : i32 {
      %c7_i32 = arith.constant 7 : i32
      %9 = arith.subi %c7_i32, %arg5 : i32
      %10 = arith.index_cast %9 : i32 to index
      %c0_9 = arith.constant 0 : index
      %c0_10 = arith.constant 0 : index
      %11 = vector.load %arg1[%10, %c0_9, %c0_10] : memref<8x2x128xbf16, #tpu.memory_space<vmem>>, vector<1x2x128xbf16>
      %12 = vector.shape_cast %11 : vector<1x2x128xbf16> to vector<2x128xbf16>
      %13 = vector.extract_strided_slice %12 {offsets = [0, 64], sizes = [2, 64], strides = [1, 1]} : vector<2x128xbf16> to vector<2x64xbf16>
      %14 = arith.extf %13 : vector<2x64xbf16> to vector<2x64xf32>
      %15 = arith.truncf %arg6 : vector<2x16xf32> to vector<2x16xbf16>
      %cst_11 = arith.constant dense<0.000000e+00> : vector<2x64xf32>
      %16 = tpu.matmul %15, %3, %cst_11 {dimension_numbers = #tpu.dot_dimension_numbers<[1], [0], [0], [1], [0, 0, 1, 1], [], []>} : vector<2x16xbf16>, vector<16x64xbf16>, vector<2x64xf32> -> vector<2x64xf32>
      %17 = arith.addf %14, %16 : vector<2x64xf32>
      %18 = vector.extract_strided_slice %17 {offsets = [0, 0], sizes = [2, 16], strides = [1, 1]} : vector<2x64xf32> to vector<2x16xf32>
      %19 = arith.negf %18 : vector<2x16xf32>
      %20 = math.exp %19 : vector<2x16xf32>
      %cst_12 = arith.constant 1.000000e+00 : f32
      %21 = vector.broadcast %cst_12 : f32 to vector<2x16xf32>
      %22 = arith.addf %21, %20 : vector<2x16xf32>
      %23 = arith.divf %21, %22 : vector<2x16xf32>
      %24 = vector.extract_strided_slice %17 {offsets = [0, 16], sizes = [2, 16], strides = [1, 1]} : vector<2x64xf32> to vector<2x16xf32>
      %25 = arith.negf %24 : vector<2x16xf32>
      %26 = math.exp %25 : vector<2x16xf32>
      %cst_13 = arith.constant 1.000000e+00 : f32
      %27 = vector.broadcast %cst_13 : f32 to vector<2x16xf32>
      %28 = arith.addf %27, %26 : vector<2x16xf32>
      %29 = arith.divf %27, %28 : vector<2x16xf32>
      %30 = vector.extract_strided_slice %17 {offsets = [0, 32], sizes = [2, 16], strides = [1, 1]} : vector<2x64xf32> to vector<2x16xf32>
      %31 = math.tanh %30 : vector<2x16xf32>
      %32 = vector.extract_strided_slice %17 {offsets = [0, 48], sizes = [2, 16], strides = [1, 1]} : vector<2x64xf32> to vector<2x16xf32>
      %33 = arith.negf %32 : vector<2x16xf32>
      %34 = math.exp %33 : vector<2x16xf32>
      %cst_14 = arith.constant 1.000000e+00 : f32
      %35 = vector.broadcast %cst_14 : f32 to vector<2x16xf32>
      %36 = arith.addf %35, %34 : vector<2x16xf32>
      %37 = arith.divf %35, %36 : vector<2x16xf32>
      %38 = arith.mulf %29, %arg7 : vector<2x16xf32>
      %39 = arith.mulf %23, %31 : vector<2x16xf32>
      %40 = arith.addf %38, %39 : vector<2x16xf32>
      %41 = math.tanh %40 : vector<2x16xf32>
      %42 = arith.mulf %37, %41 : vector<2x16xf32>
      %43 = arith.index_cast %9 : i32 to index
      %c0_15 = arith.constant 0 : index
      %c0_16 = arith.constant 0 : index
      %44 = vector.load %arg4[%43, %c0_15, %c0_16] : memref<8x2x16xf32, #tpu.memory_space<vmem>>, vector<1x2x16xf32>
      %45 = vector.shape_cast %44 : vector<1x2x16xf32> to vector<2x16xf32>
      %46 = vector.shape_cast %42 : vector<2x16xf32> to vector<1x2x16xf32>
      tpu.vector_store %arg4[%43, %c0_15, %c0_16], %46 {strides = array<i32>} : memref<8x2x16xf32, #tpu.memory_space<vmem>>, vector<1x2x16xf32>,
      scf.yield %42, %40 : vector<2x16xf32>, vector<2x16xf32>
    }
    %c8_i32_4 = arith.constant 8 : i32
    %c0_i32_5 = arith.constant 0 : i32
    %c8_i32_6 = arith.constant 8 : i32
    %7 = arith.addi %c0_i32_5, %c8_i32_6 : i32
    %c1_i32_7 = arith.constant 1 : i32
    %8:2 = scf.for %arg5 = %c0_i32_5 to %7 step %c1_i32_7 iter_args(%arg6 = %4, %arg7 = %4) -> (vector<2x16xf32>, vector<2x16xf32>)  : i32 {
      %9 = arith.index_cast %arg5 : i32 to index
      %c0_9 = arith.constant 0 : index
      %c0_10 = arith.constant 0 : index
      %10 = vector.load %arg1[%9, %c0_9, %c0_10] : memref<8x2x128xbf16, #tpu.memory_space<vmem>>, vector<1x2x128xbf16>
      %11 = vector.shape_cast %10 : vector<1x2x128xbf16> to vector<2x128xbf16>
      %12 = vector.extract_strided_slice %11 {offsets = [0, 0], sizes = [2, 64], strides = [1, 1]} : vector<2x128xbf16> to vector<2x64xbf16>
      %13 = arith.extf %12 : vector<2x64xbf16> to vector<2x64xf32>
      %14 = arith.truncf %arg6 : vector<2x16xf32> to vector<2x16xbf16>
      %cst_11 = arith.constant dense<0.000000e+00> : vector<2x64xf32>
      %15 = tpu.matmul %14, %1, %cst_11 {dimension_numbers = #tpu.dot_dimension_numbers<[1], [0], [0], [1], [0, 0, 1, 1], [], []>} : vector<2x16xbf16>, vector<16x64xbf16>, vector<2x64xf32> -> vector<2x64xf32>
      %16 = arith.addf %13, %15 : vector<2x64xf32>
      %17 = vector.extract_strided_slice %16 {offsets = [0, 0], sizes = [2, 16], strides = [1, 1]} : vector<2x64xf32> to vector<2x16xf32>
      %18 = arith.negf %17 : vector<2x16xf32>
      %19 = math.exp %18 : vector<2x16xf32>
      %cst_12 = arith.constant 1.000000e+00 : f32
      %20 = vector.broadcast %cst_12 : f32 to vector<2x16xf32>
      %21 = arith.addf %20, %19 : vector<2x16xf32>
      %22 = arith.divf %20, %21 : vector<2x16xf32>
      %23 = vector.extract_strided_slice %16 {offsets = [0, 16], sizes = [2, 16], strides = [1, 1]} : vector<2x64xf32> to vector<2x16xf32>
      %24 = arith.negf %23 : vector<2x16xf32>
      %25 = math.exp %24 : vector<2x16xf32>
      %cst_13 = arith.constant 1.000000e+00 : f32
      %26 = vector.broadcast %cst_13 : f32 to vector<2x16xf32>
      %27 = arith.addf %26, %25 : vector<2x16xf32>
      %28 = arith.divf %26, %27 : vector<2x16xf32>
      %29 = vector.extract_strided_slice %16 {offsets = [0, 32], sizes = [2, 16], strides = [1, 1]} : vector<2x64xf32> to vector<2x16xf32>
      %30 = math.tanh %29 : vector<2x16xf32>
      %31 = vector.extract_strided_slice %16 {offsets = [0, 48], sizes = [2, 16], strides = [1, 1]} : vector<2x64xf32> to vector<2x16xf32>
      %32 = arith.negf %31 : vector<2x16xf32>
      %33 = math.exp %32 : vector<2x16xf32>
      %cst_14 = arith.constant 1.000000e+00 : f32
      %34 = vector.broadcast %cst_14 : f32 to vector<2x16xf32>
      %35 = arith.addf %34, %33 : vector<2x16xf32>
      %36 = arith.divf %34, %35 : vector<2x16xf32>
      %37 = arith.mulf %28, %arg7 : vector<2x16xf32>
      %38 = arith.mulf %22, %30 : vector<2x16xf32>
      %39 = arith.addf %37, %38 : vector<2x16xf32>
      %40 = math.tanh %39 : vector<2x16xf32>
      %41 = arith.mulf %36, %40 : vector<2x16xf32>
      %42 = arith.index_cast %arg5 : i32 to index
      %c0_15 = arith.constant 0 : index
      %c0_16 = arith.constant 0 : index
      %43 = vector.load %arg4[%42, %c0_15, %c0_16] : memref<8x2x16xf32, #tpu.memory_space<vmem>>, vector<1x2x16xf32>
      %44 = vector.shape_cast %43 : vector<1x2x16xf32> to vector<2x16xf32>
      %45 = tpu.concatenate %41, %44 in 1 : vector<2x16xf32>, vector<2x16xf32> -> vector<2x32xf32>
      %46 = arith.truncf %45 : vector<2x32xf32> to vector<2x32xbf16>
      %47 = arith.index_cast %arg5 : i32 to index
      %c0_17 = arith.constant 0 : index
      %c0_18 = arith.constant 0 : index
      %48 = vector.load %arg3[%47, %c0_17, %c0_18] : memref<8x2x32xbf16, #tpu.memory_space<vmem>>, vector<1x2x32xbf16>
      %49 = vector.shape_cast %48 : vector<1x2x32xbf16> to vector<2x32xbf16>
      %50 = vector.shape_cast %46 : vector<2x32xbf16> to vector<1x2x32xbf16>
      tpu.vector_store %arg3[%47, %c0_17, %c0_18], %50 {strides = array<i32>} : memref<8x2x32xbf16, #tpu.memory_space<vmem>>, vector<1x2x32xbf16>,
      scf.yield %41, %39 : vector<2x16xf32>, vector<2x16xf32>
    }
    %c8_i32_8 = arith.constant 8 : i32
    return
  }
  func.func @transform_0(%arg0: i32) -> (i32, i32, i32) {
    %c0_i32 = arith.constant 0 : i32
    %c0_i32_0 = arith.constant 0 : i32
    %c0_i32_1 = arith.constant 0 : i32
    %c0_i32_2 = arith.constant 0 : i32
    return %c0_i32, %c0_i32_0, %c0_i32_1 : i32, i32, i32
  }
  func.func @transform_1(%arg0: i32) -> (i32, i32, i32) {
    %c0_i32 = arith.constant 0 : i32
    %c0_i32_0 = arith.constant 0 : i32
    %c0_i32_1 = arith.constant 0 : i32
    %c0_i32_2 = arith.constant 0 : i32
    return %c0_i32, %c0_i32_0, %c0_i32_1 : i32, i32, i32
  }
  func.func @transform_2(%arg0: i32) -> (i32, i32, i32) {
    %c0_i32 = arith.constant 0 : i32
    %c0_i32_0 = arith.constant 0 : i32
    %c0_i32_1 = arith.constant 0 : i32
    %c0_i32_2 = arith.constant 0 : i32
    return %c0_i32, %c0_i32_0, %c0_i32_1 : i32, i32, i32
  }
}

module attributes {stable_mosaic.version = 11 : i64} {
  func.func @_linear_kernel(%arg0: i32, %arg1: memref<16x32xbf16, #tpu.memory_space<vmem>>, %arg2: memref<32x128xbf16, #tpu.memory_space<vmem>>, %arg3: memref<1x128xf32, #tpu.memory_space<vmem>>, %arg4: memref<16x128xbf16, #tpu.memory_space<vmem>>) attributes {dimension_semantics = [#tpu.dimension_semantics<parallel>], iteration_bounds = array<i64: 1>, scalar_prefetch = 0 : i64, scratch_operands = 0 : i64, tpu.core_type = #tpu.core_type<tc>, window_params = [{transform_indices = @transform_0, window_bounds = array<i64: 16, 32>}, {pipeline_mode = #tpu.pipeline_mode<synchronous>, transform_indices = @transform_1, window_bounds = array<i64: 32, 128>}, {pipeline_mode = #tpu.pipeline_mode<synchronous>, transform_indices = @transform_2, window_bounds = array<i64: 1, 128>}, {transform_indices = @transform_3, window_bounds = array<i64: 16, 128>}]} {
    %c0 = arith.constant 0 : index
    %c0_0 = arith.constant 0 : index
    %0 = vector.load %arg1[%c0, %c0_0] : memref<16x32xbf16, #tpu.memory_space<vmem>>, vector<16x32xbf16>
    %c0_1 = arith.constant 0 : index
    %c0_2 = arith.constant 0 : index
    %1 = vector.load %arg2[%c0_1, %c0_2] : memref<32x128xbf16, #tpu.memory_space<vmem>>, vector<32x128xbf16>
    %cst = arith.constant dense<0.000000e+00> : vector<16x128xf32>
    %2 = tpu.matmul %0, %1, %cst {dimension_numbers = #tpu.dot_dimension_numbers<[1], [0], [0], [1], [0, 0, 1, 1], [], []>} : vector<16x32xbf16>, vector<32x128xbf16>, vector<16x128xf32> -> vector<16x128xf32>
    %c0_3 = arith.constant 0 : index
    %c0_4 = arith.constant 0 : index
    %3 = vector.load %arg3[%c0_3, %c0_4] : memref<1x128xf32, #tpu.memory_space<vmem>>, vector<1x128xf32>
    %4 = vector.broadcast %3 : vector<1x128xf32> to vector<16x128xf32>
    %5 = arith.addf %2, %4 : vector<16x128xf32>
    %6 = arith.truncf %5 : vector<16x128xf32> to vector<16x128xbf16>
    %c0_5 = arith.constant 0 : index
    %c0_6 = arith.constant 0 : index
    %7 = vector.load %arg4[%c0_5, %c0_6] : memref<16x128xbf16, #tpu.memory_space<vmem>>, vector<16x128xbf16>
    tpu.vector_store %arg4[%c0_5, %c0_6], %6 {strides = array<i32>} : memref<16x128xbf16, #tpu.memory_space<vmem>>, vector<16x128xbf16>,
    return
  }
  func.func @transform_0(%arg0: i32) -> (i32, i32) {
    %c0_i32 = arith.constant 0 : i32
    %c0_i32_0 = arith.constant 0 : i32
    return %arg0, %c0_i32 : i32, i32
  }
  func.func @transform_1(%arg0: i32) -> (i32, i32) {
    %c0_i32 = arith.constant 0 : i32
    %c0_i32_0 = arith.constant 0 : i32
    %c0_i32_1 = arith.constant 0 : i32
    return %c0_i32, %c0_i32_0 : i32, i32
  }
  func.func @transform_2(%arg0: i32) -> (i32, i32) {
    %c0_i32 = arith.constant 0 : i32
    %c0_i32_0 = arith.constant 0 : i32
    %c0_i32_1 = arith.constant 0 : i32
    return %c0_i32, %c0_i32_0 : i32, i32
  }
  func.func @transform_3(%arg0: i32) -> (i32, i32) {
    %c0_i32 = arith.constant 0 : i32
    %c0_i32_0 = arith.constant 0 : i32
    return %arg0, %c0_i32 : i32, i32
  }
}

module attributes {stable_mosaic.version = 11 : i64} {
  func.func @_bilstm_scan_kernel(%arg0: i32, %arg1: memref<8x2x128xbf16, #tpu.memory_space<vmem>>, %arg2: memref<2x16x64xbf16, #tpu.memory_space<vmem>>, %arg3: memref<8x2x32xbf16, #tpu.memory_space<vmem>>, %arg4: memref<8x2x16xf32, #tpu.memory_space<vmem>>) attributes {dimension_semantics = [#tpu.dimension_semantics<arbitrary>], iteration_bounds = array<i64: 1>, scalar_prefetch = 0 : i64, scratch_operands = 1 : i64, tpu.core_type = #tpu.core_type<tc>, window_params = [{pipeline_mode = #tpu.pipeline_mode<synchronous>, transform_indices = @transform_0, window_bounds = array<i64: 8, 2, 128>}, {pipeline_mode = #tpu.pipeline_mode<synchronous>, transform_indices = @transform_1, window_bounds = array<i64: 2, 16, 64>}, {pipeline_mode = #tpu.pipeline_mode<synchronous>, transform_indices = @transform_2, window_bounds = array<i64: 8, 2, 32>}]} {
    %c0 = arith.constant 0 : index
    %c0_0 = arith.constant 0 : index
    %c0_1 = arith.constant 0 : index
    %0 = vector.load %arg2[%c0, %c0_0, %c0_1] : memref<2x16x64xbf16, #tpu.memory_space<vmem>>, vector<1x16x64xbf16>
    %1 = vector.shape_cast %0 : vector<1x16x64xbf16> to vector<16x64xbf16>
    %c1 = arith.constant 1 : index
    %c0_2 = arith.constant 0 : index
    %c0_3 = arith.constant 0 : index
    %2 = vector.load %arg2[%c1, %c0_2, %c0_3] : memref<2x16x64xbf16, #tpu.memory_space<vmem>>, vector<1x16x64xbf16>
    %3 = vector.shape_cast %2 : vector<1x16x64xbf16> to vector<16x64xbf16>
    %cst = arith.constant 0.000000e+00 : f32
    %4 = vector.broadcast %cst : f32 to vector<2x16xf32>
    %c0_i32 = arith.constant 0 : i32
    %c8_i32 = arith.constant 8 : i32
    %5 = arith.addi %c0_i32, %c8_i32 : i32
    %c1_i32 = arith.constant 1 : i32
    %6:2 = scf.for %arg5 = %c0_i32 to %5 step %c1_i32 iter_args(%arg6 = %4, %arg7 = %4) -> (vector<2x16xf32>, vector<2x16xf32>)  : i32 {
      %c7_i32 = arith.constant 7 : i32
      %9 = arith.subi %c7_i32, %arg5 : i32
      %10 = arith.index_cast %9 : i32 to index
      %c0_9 = arith.constant 0 : index
      %c0_10 = arith.constant 0 : index
      %11 = vector.load %arg1[%10, %c0_9, %c0_10] : memref<8x2x128xbf16, #tpu.memory_space<vmem>>, vector<1x2x128xbf16>
      %12 = vector.shape_cast %11 : vector<1x2x128xbf16> to vector<2x128xbf16>
      %13 = vector.extract_strided_slice %12 {offsets = [0, 64], sizes = [2, 64], strides = [1, 1]} : vector<2x128xbf16> to vector<2x64xbf16>
      %14 = arith.extf %13 : vector<2x64xbf16> to vector<2x64xf32>
      %15 = arith.truncf %arg6 : vector<2x16xf32> to vector<2x16xbf16>
      %cst_11 = arith.constant dense<0.000000e+00> : vector<2x64xf32>
      %16 = tpu.matmul %15, %3, %cst_11 {dimension_numbers = #tpu.dot_dimension_numbers<[1], [0], [0], [1], [0, 0, 1, 1], [], []>} : vector<2x16xbf16>, vector<16x64xbf16>, vector<2x64xf32> -> vector<2x64xf32>
      %17 = arith.addf %14, %16 : vector<2x64xf32>
      %18 = vector.extract_strided_slice %17 {offsets = [0, 0], sizes = [2, 16], strides = [1, 1]} : vector<2x64xf32> to vector<2x16xf32>
      %19 = arith.negf %18 : vector<2x16xf32>
      %20 = math.exp %19 : vector<2x16xf32>
      %cst_12 = arith.constant 1.000000e+00 : f32
      %21 = vector.broadcast %cst_12 : f32 to vector<2x16xf32>
      %22 = arith.addf %21, %20 : vector<2x16xf32>
      %23 = arith.divf %21, %22 : vector<2x16xf32>
      %24 = vector.extract_strided_slice %17 {offsets = [0, 16], sizes = [2, 16], strides = [1, 1]} : vector<2x64xf32> to vector<2x16xf32>
      %25 = arith.negf %24 : vector<2x16xf32>
      %26 = math.exp %25 : vector<2x16xf32>
      %cst_13 = arith.constant 1.000000e+00 : f32
      %27 = vector.broadcast %cst_13 : f32 to vector<2x16xf32>
      %28 = arith.addf %27, %26 : vector<2x16xf32>
      %29 = arith.divf %27, %28 : vector<2x16xf32>
      %30 = vector.extract_strided_slice %17 {offsets = [0, 32], sizes = [2, 16], strides = [1, 1]} : vector<2x64xf32> to vector<2x16xf32>
      %31 = math.tanh %30 : vector<2x16xf32>
      %32 = vector.extract_strided_slice %17 {offsets = [0, 48], sizes = [2, 16], strides = [1, 1]} : vector<2x64xf32> to vector<2x16xf32>
      %33 = arith.negf %32 : vector<2x16xf32>
      %34 = math.exp %33 : vector<2x16xf32>
      %cst_14 = arith.constant 1.000000e+00 : f32
      %35 = vector.broadcast %cst_14 : f32 to vector<2x16xf32>
      %36 = arith.addf %35, %34 : vector<2x16xf32>
      %37 = arith.divf %35, %36 : vector<2x16xf32>
      %38 = arith.mulf %29, %arg7 : vector<2x16xf32>
      %39 = arith.mulf %23, %31 : vector<2x16xf32>
      %40 = arith.addf %38, %39 : vector<2x16xf32>
      %41 = math.tanh %40 : vector<2x16xf32>
      %42 = arith.mulf %37, %41 : vector<2x16xf32>
      %43 = arith.index_cast %9 : i32 to index
      %c0_15 = arith.constant 0 : index
      %c0_16 = arith.constant 0 : index
      %44 = vector.load %arg4[%43, %c0_15, %c0_16] : memref<8x2x16xf32, #tpu.memory_space<vmem>>, vector<1x2x16xf32>
      %45 = vector.shape_cast %44 : vector<1x2x16xf32> to vector<2x16xf32>
      %46 = vector.shape_cast %42 : vector<2x16xf32> to vector<1x2x16xf32>
      tpu.vector_store %arg4[%43, %c0_15, %c0_16], %46 {strides = array<i32>} : memref<8x2x16xf32, #tpu.memory_space<vmem>>, vector<1x2x16xf32>,
      scf.yield %42, %40 : vector<2x16xf32>, vector<2x16xf32>
    }
    %c8_i32_4 = arith.constant 8 : i32
    %c0_i32_5 = arith.constant 0 : i32
    %c8_i32_6 = arith.constant 8 : i32
    %7 = arith.addi %c0_i32_5, %c8_i32_6 : i32
    %c1_i32_7 = arith.constant 1 : i32
    %8:2 = scf.for %arg5 = %c0_i32_5 to %7 step %c1_i32_7 iter_args(%arg6 = %4, %arg7 = %4) -> (vector<2x16xf32>, vector<2x16xf32>)  : i32 {
      %9 = arith.index_cast %arg5 : i32 to index
      %c0_9 = arith.constant 0 : index
      %c0_10 = arith.constant 0 : index
      %10 = vector.load %arg1[%9, %c0_9, %c0_10] : memref<8x2x128xbf16, #tpu.memory_space<vmem>>, vector<1x2x128xbf16>
      %11 = vector.shape_cast %10 : vector<1x2x128xbf16> to vector<2x128xbf16>
      %12 = vector.extract_strided_slice %11 {offsets = [0, 0], sizes = [2, 64], strides = [1, 1]} : vector<2x128xbf16> to vector<2x64xbf16>
      %13 = arith.extf %12 : vector<2x64xbf16> to vector<2x64xf32>
      %14 = arith.truncf %arg6 : vector<2x16xf32> to vector<2x16xbf16>
      %cst_11 = arith.constant dense<0.000000e+00> : vector<2x64xf32>
      %15 = tpu.matmul %14, %1, %cst_11 {dimension_numbers = #tpu.dot_dimension_numbers<[1], [0], [0], [1], [0, 0, 1, 1], [], []>} : vector<2x16xbf16>, vector<16x64xbf16>, vector<2x64xf32> -> vector<2x64xf32>
      %16 = arith.addf %13, %15 : vector<2x64xf32>
      %17 = vector.extract_strided_slice %16 {offsets = [0, 0], sizes = [2, 16], strides = [1, 1]} : vector<2x64xf32> to vector<2x16xf32>
      %18 = arith.negf %17 : vector<2x16xf32>
      %19 = math.exp %18 : vector<2x16xf32>
      %cst_12 = arith.constant 1.000000e+00 : f32
      %20 = vector.broadcast %cst_12 : f32 to vector<2x16xf32>
      %21 = arith.addf %20, %19 : vector<2x16xf32>
      %22 = arith.divf %20, %21 : vector<2x16xf32>
      %23 = vector.extract_strided_slice %16 {offsets = [0, 16], sizes = [2, 16], strides = [1, 1]} : vector<2x64xf32> to vector<2x16xf32>
      %24 = arith.negf %23 : vector<2x16xf32>
      %25 = math.exp %24 : vector<2x16xf32>
      %cst_13 = arith.constant 1.000000e+00 : f32
      %26 = vector.broadcast %cst_13 : f32 to vector<2x16xf32>
      %27 = arith.addf %26, %25 : vector<2x16xf32>
      %28 = arith.divf %26, %27 : vector<2x16xf32>
      %29 = vector.extract_strided_slice %16 {offsets = [0, 32], sizes = [2, 16], strides = [1, 1]} : vector<2x64xf32> to vector<2x16xf32>
      %30 = math.tanh %29 : vector<2x16xf32>
      %31 = vector.extract_strided_slice %16 {offsets = [0, 48], sizes = [2, 16], strides = [1, 1]} : vector<2x64xf32> to vector<2x16xf32>
      %32 = arith.negf %31 : vector<2x16xf32>
      %33 = math.exp %32 : vector<2x16xf32>
      %cst_14 = arith.constant 1.000000e+00 : f32
      %34 = vector.broadcast %cst_14 : f32 to vector<2x16xf32>
      %35 = arith.addf %34, %33 : vector<2x16xf32>
      %36 = arith.divf %34, %35 : vector<2x16xf32>
      %37 = arith.mulf %28, %arg7 : vector<2x16xf32>
      %38 = arith.mulf %22, %30 : vector<2x16xf32>
      %39 = arith.addf %37, %38 : vector<2x16xf32>
      %40 = math.tanh %39 : vector<2x16xf32>
      %41 = arith.mulf %36, %40 : vector<2x16xf32>
      %42 = arith.index_cast %arg5 : i32 to index
      %c0_15 = arith.constant 0 : index
      %c0_16 = arith.constant 0 : index
      %43 = vector.load %arg4[%42, %c0_15, %c0_16] : memref<8x2x16xf32, #tpu.memory_space<vmem>>, vector<1x2x16xf32>
      %44 = vector.shape_cast %43 : vector<1x2x16xf32> to vector<2x16xf32>
      %45 = tpu.concatenate %41, %44 in 1 : vector<2x16xf32>, vector<2x16xf32> -> vector<2x32xf32>
      %46 = arith.truncf %45 : vector<2x32xf32> to vector<2x32xbf16>
      %47 = arith.index_cast %arg5 : i32 to index
      %c0_17 = arith.constant 0 : index
      %c0_18 = arith.constant 0 : index
      %48 = vector.load %arg3[%47, %c0_17, %c0_18] : memref<8x2x32xbf16, #tpu.memory_space<vmem>>, vector<1x2x32xbf16>
      %49 = vector.shape_cast %48 : vector<1x2x32xbf16> to vector<2x32xbf16>
      %50 = vector.shape_cast %46 : vector<2x32xbf16> to vector<1x2x32xbf16>
      tpu.vector_store %arg3[%47, %c0_17, %c0_18], %50 {strides = array<i32>} : memref<8x2x32xbf16, #tpu.memory_space<vmem>>, vector<1x2x32xbf16>,
      scf.yield %41, %39 : vector<2x16xf32>, vector<2x16xf32>
    }
    %c8_i32_8 = arith.constant 8 : i32
    return
  }
  func.func @transform_0(%arg0: i32) -> (i32, i32, i32) {
    %c0_i32 = arith.constant 0 : i32
    %c0_i32_0 = arith.constant 0 : i32
    %c0_i32_1 = arith.constant 0 : i32
    %c0_i32_2 = arith.constant 0 : i32
    return %c0_i32, %c0_i32_0, %c0_i32_1 : i32, i32, i32
  }
  func.func @transform_1(%arg0: i32) -> (i32, i32, i32) {
    %c0_i32 = arith.constant 0 : i32
    %c0_i32_0 = arith.constant 0 : i32
    %c0_i32_1 = arith.constant 0 : i32
    %c0_i32_2 = arith.constant 0 : i32
    return %c0_i32, %c0_i32_0, %c0_i32_1 : i32, i32, i32
  }
  func.func @transform_2(%arg0: i32) -> (i32, i32, i32) {
    %c0_i32 = arith.constant 0 : i32
    %c0_i32_0 = arith.constant 0 : i32
    %c0_i32_1 = arith.constant 0 : i32
    %c0_i32_2 = arith.constant 0 : i32
    return %c0_i32, %c0_i32_0, %c0_i32_1 : i32, i32, i32
  }
}

module attributes {stable_mosaic.version = 11 : i64} {
  func.func @_linear_kernel(%arg0: i32, %arg1: memref<16x32xbf16, #tpu.memory_space<vmem>>, %arg2: memref<32x128xbf16, #tpu.memory_space<vmem>>, %arg3: memref<1x128xf32, #tpu.memory_space<vmem>>, %arg4: memref<16x128xbf16, #tpu.memory_space<vmem>>) attributes {dimension_semantics = [#tpu.dimension_semantics<parallel>], iteration_bounds = array<i64: 1>, scalar_prefetch = 0 : i64, scratch_operands = 0 : i64, tpu.core_type = #tpu.core_type<tc>, window_params = [{transform_indices = @transform_0, window_bounds = array<i64: 16, 32>}, {pipeline_mode = #tpu.pipeline_mode<synchronous>, transform_indices = @transform_1, window_bounds = array<i64: 32, 128>}, {pipeline_mode = #tpu.pipeline_mode<synchronous>, transform_indices = @transform_2, window_bounds = array<i64: 1, 128>}, {transform_indices = @transform_3, window_bounds = array<i64: 16, 128>}]} {
    %c0 = arith.constant 0 : index
    %c0_0 = arith.constant 0 : index
    %0 = vector.load %arg1[%c0, %c0_0] : memref<16x32xbf16, #tpu.memory_space<vmem>>, vector<16x32xbf16>
    %c0_1 = arith.constant 0 : index
    %c0_2 = arith.constant 0 : index
    %1 = vector.load %arg2[%c0_1, %c0_2] : memref<32x128xbf16, #tpu.memory_space<vmem>>, vector<32x128xbf16>
    %cst = arith.constant dense<0.000000e+00> : vector<16x128xf32>
    %2 = tpu.matmul %0, %1, %cst {dimension_numbers = #tpu.dot_dimension_numbers<[1], [0], [0], [1], [0, 0, 1, 1], [], []>} : vector<16x32xbf16>, vector<32x128xbf16>, vector<16x128xf32> -> vector<16x128xf32>
    %c0_3 = arith.constant 0 : index
    %c0_4 = arith.constant 0 : index
    %3 = vector.load %arg3[%c0_3, %c0_4] : memref<1x128xf32, #tpu.memory_space<vmem>>, vector<1x128xf32>
    %4 = vector.broadcast %3 : vector<1x128xf32> to vector<16x128xf32>
    %5 = arith.addf %2, %4 : vector<16x128xf32>
    %6 = arith.truncf %5 : vector<16x128xf32> to vector<16x128xbf16>
    %c0_5 = arith.constant 0 : index
    %c0_6 = arith.constant 0 : index
    %7 = vector.load %arg4[%c0_5, %c0_6] : memref<16x128xbf16, #tpu.memory_space<vmem>>, vector<16x128xbf16>
    tpu.vector_store %arg4[%c0_5, %c0_6], %6 {strides = array<i32>} : memref<16x128xbf16, #tpu.memory_space<vmem>>, vector<16x128xbf16>,
    return
  }
  func.func @transform_0(%arg0: i32) -> (i32, i32) {
    %c0_i32 = arith.constant 0 : i32
    %c0_i32_0 = arith.constant 0 : i32
    return %arg0, %c0_i32 : i32, i32
  }
  func.func @transform_1(%arg0: i32) -> (i32, i32) {
    %c0_i32 = arith.constant 0 : i32
    %c0_i32_0 = arith.constant 0 : i32
    %c0_i32_1 = arith.constant 0 : i32
    return %c0_i32, %c0_i32_0 : i32, i32
  }
  func.func @transform_2(%arg0: i32) -> (i32, i32) {
    %c0_i32 = arith.constant 0 : i32
    %c0_i32_0 = arith.constant 0 : i32
    %c0_i32_1 = arith.constant 0 : i32
    return %c0_i32, %c0_i32_0 : i32, i32
  }
  func.func @transform_3(%arg0: i32) -> (i32, i32) {
    %c0_i32 = arith.constant 0 : i32
    %c0_i32_0 = arith.constant 0 : i32
    return %arg0, %c0_i32 : i32, i32
  }
}

module attributes {stable_mosaic.version = 11 : i64} {
  func.func @_tfm_layer_kernel(%arg0: i32, %arg1: memref<8x2x64xbf16, #tpu.memory_space<vmem>>, %arg2: memref<64x192xbf16, #tpu.memory_space<vmem>>, %arg3: memref<1x192xf32, #tpu.memory_space<vmem>>, %arg4: memref<64x64xbf16, #tpu.memory_space<vmem>>, %arg5: memref<1x64xf32, #tpu.memory_space<vmem>>, %arg6: memref<1x64xf32, #tpu.memory_space<vmem>>, %arg7: memref<1x64xf32, #tpu.memory_space<vmem>>, %arg8: memref<64x128xbf16, #tpu.memory_space<vmem>>, %arg9: memref<1x128xf32, #tpu.memory_space<vmem>>, %arg10: memref<128x64xbf16, #tpu.memory_space<vmem>>, %arg11: memref<1x64xf32, #tpu.memory_space<vmem>>, %arg12: memref<1x64xf32, #tpu.memory_space<vmem>>, %arg13: memref<1x64xf32, #tpu.memory_space<vmem>>, %arg14: memref<8x2x64xbf16, #tpu.memory_space<vmem>>) attributes {dimension_semantics = [#tpu.dimension_semantics<parallel>], iteration_bounds = array<i64: 1>, scalar_prefetch = 0 : i64, scratch_operands = 0 : i64, tpu.core_type = #tpu.core_type<tc>, window_params = [{transform_indices = @transform_0, window_bounds = array<i64: 8, 2, 64>}, {pipeline_mode = #tpu.pipeline_mode<synchronous>, transform_indices = @transform_1, window_bounds = array<i64: 64, 192>}, {pipeline_mode = #tpu.pipeline_mode<synchronous>, transform_indices = @transform_2, window_bounds = array<i64: 1, 192>}, {pipeline_mode = #tpu.pipeline_mode<synchronous>, transform_indices = @transform_3, window_bounds = array<i64: 64, 64>}, {pipeline_mode = #tpu.pipeline_mode<synchronous>, transform_indices = @transform_4, window_bounds = array<i64: 1, 64>}, {pipeline_mode = #tpu.pipeline_mode<synchronous>, transform_indices = @transform_5, window_bounds = array<i64: 1, 64>}, {pipeline_mode = #tpu.pipeline_mode<synchronous>, transform_indices = @transform_6, window_bounds = array<i64: 1, 64>}, {pipeline_mode = #tpu.pipeline_mode<synchronous>, transform_indices = @transform_7, window_bounds = array<i64: 64, 128>}, {pipeline_mode = #tpu.pipeline_mode<synchronous>, transform_indices = @transform_8, window_bounds = array<i64: 1, 128>}, {pipeline_mode = #tpu.pipeline_mode<synchronous>, transform_indices = @transform_9, window_bounds = array<i64: 128, 64>}, {pipeline_mode = #tpu.pipeline_mode<synchronous>, transform_indices = @transform_10, window_bounds = array<i64: 1, 64>}, {pipeline_mode = #tpu.pipeline_mode<synchronous>, transform_indices = @transform_11, window_bounds = array<i64: 1, 64>}, {pipeline_mode = #tpu.pipeline_mode<synchronous>, transform_indices = @transform_12, window_bounds = array<i64: 1, 64>}, {transform_indices = @transform_13, window_bounds = array<i64: 8, 2, 64>}]} {
    %c0 = arith.constant 0 : index
    %c0_0 = arith.constant 0 : index
    %c0_1 = arith.constant 0 : index
    %0 = vector.load %arg1[%c0, %c0_0, %c0_1] : memref<8x2x64xbf16, #tpu.memory_space<vmem>>, vector<8x2x64xbf16>
    %1 = vector.shape_cast %0 : vector<8x2x64xbf16> to vector<16x64xbf16>
    %2 = arith.extf %1 : vector<16x64xbf16> to vector<16x64xf32>
    %c0_2 = arith.constant 0 : index
    %c0_3 = arith.constant 0 : index
    %3 = vector.load %arg2[%c0_2, %c0_3] : memref<64x192xbf16, #tpu.memory_space<vmem>>, vector<64x192xbf16>
    %cst = arith.constant dense<0.000000e+00> : vector<16x192xf32>
    %4 = tpu.matmul %1, %3, %cst {dimension_numbers = #tpu.dot_dimension_numbers<[1], [0], [0], [1], [0, 0, 1, 1], [], []>} : vector<16x64xbf16>, vector<64x192xbf16>, vector<16x192xf32> -> vector<16x192xf32>
    %c0_4 = arith.constant 0 : index
    %c0_5 = arith.constant 0 : index
    %5 = vector.load %arg3[%c0_4, %c0_5] : memref<1x192xf32, #tpu.memory_space<vmem>>, vector<1x192xf32>
    %6 = vector.broadcast %5 : vector<1x192xf32> to vector<16x192xf32>
    %7 = arith.addf %4, %6 : vector<16x192xf32>
    %8 = vector.extract_strided_slice %7 {offsets = [0, 0], sizes = [16, 16], strides = [1, 1]} : vector<16x192xf32> to vector<16x16xf32>
    %cst_6 = arith.constant 2.500000e-01 : f32
    %9 = vector.broadcast %cst_6 : f32 to vector<16x16xf32>
    %10 = arith.mulf %8, %9 : vector<16x16xf32>
    %11 = arith.truncf %10 : vector<16x16xf32> to vector<16x16xbf16>
    %12 = vector.shape_cast %11 : vector<16x16xbf16> to vector<8x2x16xbf16>
    %13 = vector.extract_strided_slice %7 {offsets = [0, 64], sizes = [16, 16], strides = [1, 1]} : vector<16x192xf32> to vector<16x16xf32>
    %14 = arith.truncf %13 : vector<16x16xf32> to vector<16x16xbf16>
    %15 = vector.shape_cast %14 : vector<16x16xbf16> to vector<8x2x16xbf16>
    %16 = vector.extract_strided_slice %7 {offsets = [0, 128], sizes = [16, 16], strides = [1, 1]} : vector<16x192xf32> to vector<16x16xf32>
    %17 = arith.truncf %16 : vector<16x16xf32> to vector<16x16xbf16>
    %18 = vector.shape_cast %17 : vector<16x16xbf16> to vector<8x2x16xbf16>
    "tpu.trace_start"() <{level = 10 : i32, message = "nld,nmd->nlm"}> : () -> ()
    %cst_7 = arith.constant dense<0.000000e+00> : vector<8x2x2xf32>
    %19 = tpu.matmul %12, %15, %cst_7 {dimension_numbers = #tpu.dot_dimension_numbers<[2], [2], [1], [1], [0, 0, 0, 1, 1, 1], [0], [0]>} : vector<8x2x16xbf16>, vector<8x2x16xbf16>, vector<8x2x2xf32> -> vector<8x2x2xf32>
    "tpu.trace_stop"() : () -> ()
    %cst_8 = arith.constant dense<0xFF800000> : vector<8x2xf32>
    %20 = vector.multi_reduction <maximumf>, %19, %cst_8 [2] : vector<8x2x2xf32> to vector<8x2xf32>
    %21 = vector.shape_cast %20 : vector<8x2xf32> to vector<8x2x1xf32>
    %22 = vector.broadcast %21 : vector<8x2x1xf32> to vector<8x2x2xf32>
    %23 = arith.subf %19, %22 : vector<8x2x2xf32>
    %24 = math.exp %23 : vector<8x2x2xf32>
    %cst_9 = arith.constant dense<0.000000e+00> : vector<8x2xf32>
    %25 = vector.multi_reduction <add>, %24, %cst_9 [2] : vector<8x2x2xf32> to vector<8x2xf32>
    %26 = vector.shape_cast %25 : vector<8x2xf32> to vector<8x2x1xf32>
    %27 = tpu.reciprocal %26 {approx = true} : vector<8x2x1xf32> -> vector<8x2x1xf32>
    %28 = vector.broadcast %27 : vector<8x2x1xf32> to vector<8x2x2xf32>
    %29 = arith.mulf %24, %28 : vector<8x2x2xf32>
    %30 = arith.truncf %29 : vector<8x2x2xf32> to vector<8x2x2xbf16>
    "tpu.trace_start"() <{level = 10 : i32, message = "nlm,nmd->nld"}> : () -> ()
    %cst_10 = arith.constant dense<0.000000e+00> : vector<8x2x16xf32>
    %31 = tpu.matmul %30, %18, %cst_10 {dimension_numbers = #tpu.dot_dimension_numbers<[2], [1], [1], [2], [0, 0, 0, 1, 1, 2], [0], [0]>} : vector<8x2x2xbf16>, vector<8x2x16xbf16>, vector<8x2x16xf32> -> vector<8x2x16xf32>
    "tpu.trace_stop"() : () -> ()
    %32 = vector.shape_cast %31 : vector<8x2x16xf32> to vector<16x16xf32>
    %33 = vector.extract_strided_slice %7 {offsets = [0, 16], sizes = [16, 16], strides = [1, 1]} : vector<16x192xf32> to vector<16x16xf32>
    %cst_11 = arith.constant 2.500000e-01 : f32
    %34 = vector.broadcast %cst_11 : f32 to vector<16x16xf32>
    %35 = arith.mulf %33, %34 : vector<16x16xf32>
    %36 = arith.truncf %35 : vector<16x16xf32> to vector<16x16xbf16>
    %37 = vector.shape_cast %36 : vector<16x16xbf16> to vector<8x2x16xbf16>
    %38 = vector.extract_strided_slice %7 {offsets = [0, 80], sizes = [16, 16], strides = [1, 1]} : vector<16x192xf32> to vector<16x16xf32>
    %39 = arith.truncf %38 : vector<16x16xf32> to vector<16x16xbf16>
    %40 = vector.shape_cast %39 : vector<16x16xbf16> to vector<8x2x16xbf16>
    %41 = vector.extract_strided_slice %7 {offsets = [0, 144], sizes = [16, 16], strides = [1, 1]} : vector<16x192xf32> to vector<16x16xf32>
    %42 = arith.truncf %41 : vector<16x16xf32> to vector<16x16xbf16>
    %43 = vector.shape_cast %42 : vector<16x16xbf16> to vector<8x2x16xbf16>
    "tpu.trace_start"() <{level = 10 : i32, message = "nld,nmd->nlm"}> : () -> ()
    %cst_12 = arith.constant dense<0.000000e+00> : vector<8x2x2xf32>
    %44 = tpu.matmul %37, %40, %cst_12 {dimension_numbers = #tpu.dot_dimension_numbers<[2], [2], [1], [1], [0, 0, 0, 1, 1, 1], [0], [0]>} : vector<8x2x16xbf16>, vector<8x2x16xbf16>, vector<8x2x2xf32> -> vector<8x2x2xf32>
    "tpu.trace_stop"() : () -> ()
    %cst_13 = arith.constant dense<0xFF800000> : vector<8x2xf32>
    %45 = vector.multi_reduction <maximumf>, %44, %cst_13 [2] : vector<8x2x2xf32> to vector<8x2xf32>
    %46 = vector.shape_cast %45 : vector<8x2xf32> to vector<8x2x1xf32>
    %47 = vector.broadcast %46 : vector<8x2x1xf32> to vector<8x2x2xf32>
    %48 = arith.subf %44, %47 : vector<8x2x2xf32>
    %49 = math.exp %48 : vector<8x2x2xf32>
    %cst_14 = arith.constant dense<0.000000e+00> : vector<8x2xf32>
    %50 = vector.multi_reduction <add>, %49, %cst_14 [2] : vector<8x2x2xf32> to vector<8x2xf32>
    %51 = vector.shape_cast %50 : vector<8x2xf32> to vector<8x2x1xf32>
    %52 = tpu.reciprocal %51 {approx = true} : vector<8x2x1xf32> -> vector<8x2x1xf32>
    %53 = vector.broadcast %52 : vector<8x2x1xf32> to vector<8x2x2xf32>
    %54 = arith.mulf %49, %53 : vector<8x2x2xf32>
    %55 = arith.truncf %54 : vector<8x2x2xf32> to vector<8x2x2xbf16>
    "tpu.trace_start"() <{level = 10 : i32, message = "nlm,nmd->nld"}> : () -> ()
    %cst_15 = arith.constant dense<0.000000e+00> : vector<8x2x16xf32>
    %56 = tpu.matmul %55, %43, %cst_15 {dimension_numbers = #tpu.dot_dimension_numbers<[2], [1], [1], [2], [0, 0, 0, 1, 1, 2], [0], [0]>} : vector<8x2x2xbf16>, vector<8x2x16xbf16>, vector<8x2x16xf32> -> vector<8x2x16xf32>
    "tpu.trace_stop"() : () -> ()
    %57 = vector.shape_cast %56 : vector<8x2x16xf32> to vector<16x16xf32>
    %58 = vector.extract_strided_slice %7 {offsets = [0, 32], sizes = [16, 16], strides = [1, 1]} : vector<16x192xf32> to vector<16x16xf32>
    %cst_16 = arith.constant 2.500000e-01 : f32
    %59 = vector.broadcast %cst_16 : f32 to vector<16x16xf32>
    %60 = arith.mulf %58, %59 : vector<16x16xf32>
    %61 = arith.truncf %60 : vector<16x16xf32> to vector<16x16xbf16>
    %62 = vector.shape_cast %61 : vector<16x16xbf16> to vector<8x2x16xbf16>
    %63 = vector.extract_strided_slice %7 {offsets = [0, 96], sizes = [16, 16], strides = [1, 1]} : vector<16x192xf32> to vector<16x16xf32>
    %64 = arith.truncf %63 : vector<16x16xf32> to vector<16x16xbf16>
    %65 = vector.shape_cast %64 : vector<16x16xbf16> to vector<8x2x16xbf16>
    %66 = vector.extract_strided_slice %7 {offsets = [0, 160], sizes = [16, 16], strides = [1, 1]} : vector<16x192xf32> to vector<16x16xf32>
    %67 = arith.truncf %66 : vector<16x16xf32> to vector<16x16xbf16>
    %68 = vector.shape_cast %67 : vector<16x16xbf16> to vector<8x2x16xbf16>
    "tpu.trace_start"() <{level = 10 : i32, message = "nld,nmd->nlm"}> : () -> ()
    %cst_17 = arith.constant dense<0.000000e+00> : vector<8x2x2xf32>
    %69 = tpu.matmul %62, %65, %cst_17 {dimension_numbers = #tpu.dot_dimension_numbers<[2], [2], [1], [1], [0, 0, 0, 1, 1, 1], [0], [0]>} : vector<8x2x16xbf16>, vector<8x2x16xbf16>, vector<8x2x2xf32> -> vector<8x2x2xf32>
    "tpu.trace_stop"() : () -> ()
    %cst_18 = arith.constant dense<0xFF800000> : vector<8x2xf32>
    %70 = vector.multi_reduction <maximumf>, %69, %cst_18 [2] : vector<8x2x2xf32> to vector<8x2xf32>
    %71 = vector.shape_cast %70 : vector<8x2xf32> to vector<8x2x1xf32>
    %72 = vector.broadcast %71 : vector<8x2x1xf32> to vector<8x2x2xf32>
    %73 = arith.subf %69, %72 : vector<8x2x2xf32>
    %74 = math.exp %73 : vector<8x2x2xf32>
    %cst_19 = arith.constant dense<0.000000e+00> : vector<8x2xf32>
    %75 = vector.multi_reduction <add>, %74, %cst_19 [2] : vector<8x2x2xf32> to vector<8x2xf32>
    %76 = vector.shape_cast %75 : vector<8x2xf32> to vector<8x2x1xf32>
    %77 = tpu.reciprocal %76 {approx = true} : vector<8x2x1xf32> -> vector<8x2x1xf32>
    %78 = vector.broadcast %77 : vector<8x2x1xf32> to vector<8x2x2xf32>
    %79 = arith.mulf %74, %78 : vector<8x2x2xf32>
    %80 = arith.truncf %79 : vector<8x2x2xf32> to vector<8x2x2xbf16>
    "tpu.trace_start"() <{level = 10 : i32, message = "nlm,nmd->nld"}> : () -> ()
    %cst_20 = arith.constant dense<0.000000e+00> : vector<8x2x16xf32>
    %81 = tpu.matmul %80, %68, %cst_20 {dimension_numbers = #tpu.dot_dimension_numbers<[2], [1], [1], [2], [0, 0, 0, 1, 1, 2], [0], [0]>} : vector<8x2x2xbf16>, vector<8x2x16xbf16>, vector<8x2x16xf32> -> vector<8x2x16xf32>
    "tpu.trace_stop"() : () -> ()
    %82 = vector.shape_cast %81 : vector<8x2x16xf32> to vector<16x16xf32>
    %83 = vector.extract_strided_slice %7 {offsets = [0, 48], sizes = [16, 16], strides = [1, 1]} : vector<16x192xf32> to vector<16x16xf32>
    %cst_21 = arith.constant 2.500000e-01 : f32
    %84 = vector.broadcast %cst_21 : f32 to vector<16x16xf32>
    %85 = arith.mulf %83, %84 : vector<16x16xf32>
    %86 = arith.truncf %85 : vector<16x16xf32> to vector<16x16xbf16>
    %87 = vector.shape_cast %86 : vector<16x16xbf16> to vector<8x2x16xbf16>
    %88 = vector.extract_strided_slice %7 {offsets = [0, 112], sizes = [16, 16], strides = [1, 1]} : vector<16x192xf32> to vector<16x16xf32>
    %89 = arith.truncf %88 : vector<16x16xf32> to vector<16x16xbf16>
    %90 = vector.shape_cast %89 : vector<16x16xbf16> to vector<8x2x16xbf16>
    %91 = vector.extract_strided_slice %7 {offsets = [0, 176], sizes = [16, 16], strides = [1, 1]} : vector<16x192xf32> to vector<16x16xf32>
    %92 = arith.truncf %91 : vector<16x16xf32> to vector<16x16xbf16>
    %93 = vector.shape_cast %92 : vector<16x16xbf16> to vector<8x2x16xbf16>
    "tpu.trace_start"() <{level = 10 : i32, message = "nld,nmd->nlm"}> : () -> ()
    %cst_22 = arith.constant dense<0.000000e+00> : vector<8x2x2xf32>
    %94 = tpu.matmul %87, %90, %cst_22 {dimension_numbers = #tpu.dot_dimension_numbers<[2], [2], [1], [1], [0, 0, 0, 1, 1, 1], [0], [0]>} : vector<8x2x16xbf16>, vector<8x2x16xbf16>, vector<8x2x2xf32> -> vector<8x2x2xf32>
    "tpu.trace_stop"() : () -> ()
    %cst_23 = arith.constant dense<0xFF800000> : vector<8x2xf32>
    %95 = vector.multi_reduction <maximumf>, %94, %cst_23 [2] : vector<8x2x2xf32> to vector<8x2xf32>
    %96 = vector.shape_cast %95 : vector<8x2xf32> to vector<8x2x1xf32>
    %97 = vector.broadcast %96 : vector<8x2x1xf32> to vector<8x2x2xf32>
    %98 = arith.subf %94, %97 : vector<8x2x2xf32>
    %99 = math.exp %98 : vector<8x2x2xf32>
    %cst_24 = arith.constant dense<0.000000e+00> : vector<8x2xf32>
    %100 = vector.multi_reduction <add>, %99, %cst_24 [2] : vector<8x2x2xf32> to vector<8x2xf32>
    %101 = vector.shape_cast %100 : vector<8x2xf32> to vector<8x2x1xf32>
    %102 = tpu.reciprocal %101 {approx = true} : vector<8x2x1xf32> -> vector<8x2x1xf32>
    %103 = vector.broadcast %102 : vector<8x2x1xf32> to vector<8x2x2xf32>
    %104 = arith.mulf %99, %103 : vector<8x2x2xf32>
    %105 = arith.truncf %104 : vector<8x2x2xf32> to vector<8x2x2xbf16>
    "tpu.trace_start"() <{level = 10 : i32, message = "nlm,nmd->nld"}> : () -> ()
    %cst_25 = arith.constant dense<0.000000e+00> : vector<8x2x16xf32>
    %106 = tpu.matmul %105, %93, %cst_25 {dimension_numbers = #tpu.dot_dimension_numbers<[2], [1], [1], [2], [0, 0, 0, 1, 1, 2], [0], [0]>} : vector<8x2x2xbf16>, vector<8x2x16xbf16>, vector<8x2x16xf32> -> vector<8x2x16xf32>
    "tpu.trace_stop"() : () -> ()
    %107 = vector.shape_cast %106 : vector<8x2x16xf32> to vector<16x16xf32>
    %108 = tpu.concatenate %32, %57, %82, %107 in 1 : vector<16x16xf32>, vector<16x16xf32>, vector<16x16xf32>, vector<16x16xf32> -> vector<16x64xf32>
    %109 = arith.truncf %108 : vector<16x64xf32> to vector<16x64xbf16>
    %c0_26 = arith.constant 0 : index
    %c0_27 = arith.constant 0 : index
    %110 = vector.load %arg4[%c0_26, %c0_27] : memref<64x64xbf16, #tpu.memory_space<vmem>>, vector<64x64xbf16>
    %cst_28 = arith.constant dense<0.000000e+00> : vector<16x64xf32>
    %111 = tpu.matmul %109, %110, %cst_28 {dimension_numbers = #tpu.dot_dimension_numbers<[1], [0], [0], [1], [0, 0, 1, 1], [], []>} : vector<16x64xbf16>, vector<64x64xbf16>, vector<16x64xf32> -> vector<16x64xf32>
    %c0_29 = arith.constant 0 : index
    %c0_30 = arith.constant 0 : index
    %112 = vector.load %arg5[%c0_29, %c0_30] : memref<1x64xf32, #tpu.memory_space<vmem>>, vector<1x64xf32>
    %113 = vector.broadcast %112 : vector<1x64xf32> to vector<16x64xf32>
    %114 = arith.addf %111, %113 : vector<16x64xf32>
    %115 = arith.addf %114, %2 : vector<16x64xf32>
    %cst_31 = arith.constant dense<0.000000e+00> : vector<16xf32>
    %116 = vector.multi_reduction <add>, %115, %cst_31 [1] : vector<16x64xf32> to vector<16xf32>
    %117 = vector.shape_cast %116 : vector<16xf32> to vector<16x1xf32>
    %cst_32 = arith.constant 6.400000e+01 : f32
    %118 = vector.broadcast %cst_32 : f32 to vector<16x1xf32>
    %119 = arith.divf %117, %118 : vector<16x1xf32>
    %120 = vector.broadcast %119 : vector<16x1xf32> to vector<16x64xf32>
    %121 = arith.subf %115, %120 : vector<16x64xf32>
    %122 = arith.mulf %121, %121 : vector<16x64xf32>
    %cst_33 = arith.constant dense<0.000000e+00> : vector<16xf32>
    %123 = vector.multi_reduction <add>, %122, %cst_33 [1] : vector<16x64xf32> to vector<16xf32>
    %124 = vector.shape_cast %123 : vector<16xf32> to vector<16x1xf32>
    %cst_34 = arith.constant 6.400000e+01 : f32
    %125 = vector.broadcast %cst_34 : f32 to vector<16x1xf32>
    %126 = arith.divf %124, %125 : vector<16x1xf32>
    %cst_35 = arith.constant 9.99999974E-6 : f32
    %127 = vector.broadcast %cst_35 : f32 to vector<16x1xf32>
    %128 = arith.addf %126, %127 : vector<16x1xf32>
    %129 = math.rsqrt %128 : vector<16x1xf32>
    %130 = vector.broadcast %129 : vector<16x1xf32> to vector<16x64xf32>
    %131 = arith.mulf %121, %130 : vector<16x64xf32>
    %c0_36 = arith.constant 0 : index
    %c0_37 = arith.constant 0 : index
    %132 = vector.load %arg6[%c0_36, %c0_37] : memref<1x64xf32, #tpu.memory_space<vmem>>, vector<1x64xf32>
    %133 = vector.broadcast %132 : vector<1x64xf32> to vector<16x64xf32>
    %134 = arith.mulf %131, %133 : vector<16x64xf32>
    %c0_38 = arith.constant 0 : index
    %c0_39 = arith.constant 0 : index
    %135 = vector.load %arg7[%c0_38, %c0_39] : memref<1x64xf32, #tpu.memory_space<vmem>>, vector<1x64xf32>
    %136 = vector.broadcast %135 : vector<1x64xf32> to vector<16x64xf32>
    %137 = arith.addf %134, %136 : vector<16x64xf32>
    %138 = arith.truncf %137 : vector<16x64xf32> to vector<16x64xbf16>
    %c0_40 = arith.constant 0 : index
    %c0_41 = arith.constant 0 : index
    %139 = vector.load %arg8[%c0_40, %c0_41] : memref<64x128xbf16, #tpu.memory_space<vmem>>, vector<64x128xbf16>
    %cst_42 = arith.constant dense<0.000000e+00> : vector<16x128xf32>
    %140 = tpu.matmul %138, %139, %cst_42 {dimension_numbers = #tpu.dot_dimension_numbers<[1], [0], [0], [1], [0, 0, 1, 1], [], []>} : vector<16x64xbf16>, vector<64x128xbf16>, vector<16x128xf32> -> vector<16x128xf32>
    %c0_43 = arith.constant 0 : index
    %c0_44 = arith.constant 0 : index
    %141 = vector.load %arg9[%c0_43, %c0_44] : memref<1x128xf32, #tpu.memory_space<vmem>>, vector<1x128xf32>
    %142 = vector.broadcast %141 : vector<1x128xf32> to vector<16x128xf32>
    %143 = arith.addf %140, %142 : vector<16x128xf32>
    %cst_45 = arith.constant 0.000000e+00 : f32
    %144 = vector.broadcast %cst_45 : f32 to vector<16x128xf32>
    %145 = arith.maximumf %143, %144 : vector<16x128xf32>
    %146 = arith.truncf %145 : vector<16x128xf32> to vector<16x128xbf16>
    %c0_46 = arith.constant 0 : index
    %c0_47 = arith.constant 0 : index
    %147 = vector.load %arg10[%c0_46, %c0_47] : memref<128x64xbf16, #tpu.memory_space<vmem>>, vector<128x64xbf16>
    %cst_48 = arith.constant dense<0.000000e+00> : vector<16x64xf32>
    %148 = tpu.matmul %146, %147, %cst_48 {dimension_numbers = #tpu.dot_dimension_numbers<[1], [0], [0], [1], [0, 0, 1, 1], [], []>} : vector<16x128xbf16>, vector<128x64xbf16>, vector<16x64xf32> -> vector<16x64xf32>
    %c0_49 = arith.constant 0 : index
    %c0_50 = arith.constant 0 : index
    %149 = vector.load %arg11[%c0_49, %c0_50] : memref<1x64xf32, #tpu.memory_space<vmem>>, vector<1x64xf32>
    %150 = vector.broadcast %149 : vector<1x64xf32> to vector<16x64xf32>
    %151 = arith.addf %148, %150 : vector<16x64xf32>
    %152 = arith.addf %151, %137 : vector<16x64xf32>
    %cst_51 = arith.constant dense<0.000000e+00> : vector<16xf32>
    %153 = vector.multi_reduction <add>, %152, %cst_51 [1] : vector<16x64xf32> to vector<16xf32>
    %154 = vector.shape_cast %153 : vector<16xf32> to vector<16x1xf32>
    %cst_52 = arith.constant 6.400000e+01 : f32
    %155 = vector.broadcast %cst_52 : f32 to vector<16x1xf32>
    %156 = arith.divf %154, %155 : vector<16x1xf32>
    %157 = vector.broadcast %156 : vector<16x1xf32> to vector<16x64xf32>
    %158 = arith.subf %152, %157 : vector<16x64xf32>
    %159 = arith.mulf %158, %158 : vector<16x64xf32>
    %cst_53 = arith.constant dense<0.000000e+00> : vector<16xf32>
    %160 = vector.multi_reduction <add>, %159, %cst_53 [1] : vector<16x64xf32> to vector<16xf32>
    %161 = vector.shape_cast %160 : vector<16xf32> to vector<16x1xf32>
    %cst_54 = arith.constant 6.400000e+01 : f32
    %162 = vector.broadcast %cst_54 : f32 to vector<16x1xf32>
    %163 = arith.divf %161, %162 : vector<16x1xf32>
    %cst_55 = arith.constant 9.99999974E-6 : f32
    %164 = vector.broadcast %cst_55 : f32 to vector<16x1xf32>
    %165 = arith.addf %163, %164 : vector<16x1xf32>
    %166 = math.rsqrt %165 : vector<16x1xf32>
    %167 = vector.broadcast %166 : vector<16x1xf32> to vector<16x64xf32>
    %168 = arith.mulf %158, %167 : vector<16x64xf32>
    %c0_56 = arith.constant 0 : index
    %c0_57 = arith.constant 0 : index
    %169 = vector.load %arg12[%c0_56, %c0_57] : memref<1x64xf32, #tpu.memory_space<vmem>>, vector<1x64xf32>
    %170 = vector.broadcast %169 : vector<1x64xf32> to vector<16x64xf32>
    %171 = arith.mulf %168, %170 : vector<16x64xf32>
    %c0_58 = arith.constant 0 : index
    %c0_59 = arith.constant 0 : index
    %172 = vector.load %arg13[%c0_58, %c0_59] : memref<1x64xf32, #tpu.memory_space<vmem>>, vector<1x64xf32>
    %173 = vector.broadcast %172 : vector<1x64xf32> to vector<16x64xf32>
    %174 = arith.addf %171, %173 : vector<16x64xf32>
    %175 = vector.shape_cast %174 : vector<16x64xf32> to vector<8x2x64xf32>
    %176 = arith.truncf %175 : vector<8x2x64xf32> to vector<8x2x64xbf16>
    %c0_60 = arith.constant 0 : index
    %c0_61 = arith.constant 0 : index
    %c0_62 = arith.constant 0 : index
    %177 = vector.load %arg14[%c0_60, %c0_61, %c0_62] : memref<8x2x64xbf16, #tpu.memory_space<vmem>>, vector<8x2x64xbf16>
    tpu.vector_store %arg14[%c0_60, %c0_61, %c0_62], %176 {strides = array<i32>} : memref<8x2x64xbf16, #tpu.memory_space<vmem>>, vector<8x2x64xbf16>,
    return
  }
  func.func @transform_0(%arg0: i32) -> (i32, i32, i32) {
    %c0_i32 = arith.constant 0 : i32
    %c0_i32_0 = arith.constant 0 : i32
    %c0_i32_1 = arith.constant 0 : i32
    return %arg0, %c0_i32, %c0_i32_0 : i32, i32, i32
  }
  func.func @transform_1(%arg0: i32) -> (i32, i32) {
    %c0_i32 = arith.constant 0 : i32
    %c0_i32_0 = arith.constant 0 : i32
    %c0_i32_1 = arith.constant 0 : i32
    return %c0_i32, %c0_i32_0 : i32, i32
  }
  func.func @transform_2(%arg0: i32) -> (i32, i32) {
    %c0_i32 = arith.constant 0 : i32
    %c0_i32_0 = arith.constant 0 : i32
    %c0_i32_1 = arith.constant 0 : i32
    return %c0_i32, %c0_i32_0 : i32, i32
  }
  func.func @transform_3(%arg0: i32) -> (i32, i32) {
    %c0_i32 = arith.constant 0 : i32
    %c0_i32_0 = arith.constant 0 : i32
    %c0_i32_1 = arith.constant 0 : i32
    return %c0_i32, %c0_i32_0 : i32, i32
  }
  func.func @transform_4(%arg0: i32) -> (i32, i32) {
    %c0_i32 = arith.constant 0 : i32
    %c0_i32_0 = arith.constant 0 : i32
    %c0_i32_1 = arith.constant 0 : i32
    return %c0_i32, %c0_i32_0 : i32, i32
  }
  func.func @transform_5(%arg0: i32) -> (i32, i32) {
    %c0_i32 = arith.constant 0 : i32
    %c0_i32_0 = arith.constant 0 : i32
    %c0_i32_1 = arith.constant 0 : i32
    return %c0_i32, %c0_i32_0 : i32, i32
  }
  func.func @transform_6(%arg0: i32) -> (i32, i32) {
    %c0_i32 = arith.constant 0 : i32
    %c0_i32_0 = arith.constant 0 : i32
    %c0_i32_1 = arith.constant 0 : i32
    return %c0_i32, %c0_i32_0 : i32, i32
  }
  func.func @transform_7(%arg0: i32) -> (i32, i32) {
    %c0_i32 = arith.constant 0 : i32
    %c0_i32_0 = arith.constant 0 : i32
    %c0_i32_1 = arith.constant 0 : i32
    return %c0_i32, %c0_i32_0 : i32, i32
  }
  func.func @transform_8(%arg0: i32) -> (i32, i32) {
    %c0_i32 = arith.constant 0 : i32
    %c0_i32_0 = arith.constant 0 : i32
    %c0_i32_1 = arith.constant 0 : i32
    return %c0_i32, %c0_i32_0 : i32, i32
  }
  func.func @transform_9(%arg0: i32) -> (i32, i32) {
    %c0_i32 = arith.constant 0 : i32
    %c0_i32_0 = arith.constant 0 : i32
    %c0_i32_1 = arith.constant 0 : i32
    return %c0_i32, %c0_i32_0 : i32, i32
  }
  func.func @transform_10(%arg0: i32) -> (i32, i32) {
    %c0_i32 = arith.constant 0 : i32
    %c0_i32_0 = arith.constant 0 : i32
    %c0_i32_1 = arith.constant 0 : i32
    return %c0_i32, %c0_i32_0 : i32, i32
  }
  func.func @transform_11(%arg0: i32) -> (i32, i32) {
    %c0_i32 = arith.constant 0 : i32
    %c0_i32_0 = arith.constant 0 : i32
    %c0_i32_1 = arith.constant 0 : i32
    return %c0_i32, %c0_i32_0 : i32, i32
  }
  func.func @transform_12(%arg0: i32) -> (i32, i32) {
    %c0_i32 = arith.constant 0 : i32
    %c0_i32_0 = arith.constant 0 : i32
    %c0_i32_1 = arith.constant 0 : i32
    return %c0_i32, %c0_i32_0 : i32, i32
  }
  func.func @transform_13(%arg0: i32) -> (i32, i32, i32) {
    %c0_i32 = arith.constant 0 : i32
    %c0_i32_0 = arith.constant 0 : i32
    %c0_i32_1 = arith.constant 0 : i32
    return %arg0, %c0_i32, %c0_i32_0 : i32, i32, i32
  }
}

module attributes {stable_mosaic.version = 11 : i64} {
  func.func @_head_kernel(%arg0: i32, %arg1: memref<1x2x64xbf16, #tpu.memory_space<vmem>>, %arg2: memref<64x512xbf16, #tpu.memory_space<vmem>>, %arg3: memref<1x512xf32, #tpu.memory_space<vmem>>, %arg4: memref<512x256xbf16, #tpu.memory_space<vmem>>, %arg5: memref<1x256xf32, #tpu.memory_space<vmem>>, %arg6: memref<256x128xbf16, #tpu.memory_space<vmem>>, %arg7: memref<1x128xf32, #tpu.memory_space<vmem>>, %arg8: memref<128x5xbf16, #tpu.memory_space<vmem>>, %arg9: memref<1x5xf32, #tpu.memory_space<vmem>>, %arg10: memref<2x5xf32, #tpu.memory_space<vmem>>) attributes {dimension_semantics = [#tpu.dimension_semantics<arbitrary>], iteration_bounds = array<i64: 1>, scalar_prefetch = 0 : i64, scratch_operands = 0 : i64, tpu.core_type = #tpu.core_type<tc>, window_params = [{transform_indices = @transform_0, window_bounds = array<i64: 1, 2, 64>}, {pipeline_mode = #tpu.pipeline_mode<synchronous>, transform_indices = @transform_1, window_bounds = array<i64: 64, 512>}, {pipeline_mode = #tpu.pipeline_mode<synchronous>, transform_indices = @transform_2, window_bounds = array<i64: 1, 512>}, {pipeline_mode = #tpu.pipeline_mode<synchronous>, transform_indices = @transform_3, window_bounds = array<i64: 512, 256>}, {pipeline_mode = #tpu.pipeline_mode<synchronous>, transform_indices = @transform_4, window_bounds = array<i64: 1, 256>}, {pipeline_mode = #tpu.pipeline_mode<synchronous>, transform_indices = @transform_5, window_bounds = array<i64: 256, 128>}, {pipeline_mode = #tpu.pipeline_mode<synchronous>, transform_indices = @transform_6, window_bounds = array<i64: 1, 128>}, {pipeline_mode = #tpu.pipeline_mode<synchronous>, transform_indices = @transform_7, window_bounds = array<i64: 128, 5>}, {pipeline_mode = #tpu.pipeline_mode<synchronous>, transform_indices = @transform_8, window_bounds = array<i64: 1, 5>}, {pipeline_mode = #tpu.pipeline_mode<synchronous>, transform_indices = @transform_9, window_bounds = array<i64: 2, 5>}]} {
    %c0 = arith.constant 0 : index
    %c0_0 = arith.constant 0 : index
    %c0_1 = arith.constant 0 : index
    %0 = vector.load %arg1[%c0, %c0_0, %c0_1] : memref<1x2x64xbf16, #tpu.memory_space<vmem>>, vector<1x2x64xbf16>
    %1 = vector.shape_cast %0 : vector<1x2x64xbf16> to vector<2x64xbf16>
    %c0_2 = arith.constant 0 : index
    %c0_3 = arith.constant 0 : index
    %2 = vector.load %arg2[%c0_2, %c0_3] : memref<64x512xbf16, #tpu.memory_space<vmem>>, vector<64x512xbf16>
    %cst = arith.constant dense<0.000000e+00> : vector<2x512xf32>
    %3 = tpu.matmul %1, %2, %cst {dimension_numbers = #tpu.dot_dimension_numbers<[1], [0], [0], [1], [0, 0, 1, 1], [], []>} : vector<2x64xbf16>, vector<64x512xbf16>, vector<2x512xf32> -> vector<2x512xf32>
    %c0_4 = arith.constant 0 : index
    %c0_5 = arith.constant 0 : index
    %4 = vector.load %arg3[%c0_4, %c0_5] : memref<1x512xf32, #tpu.memory_space<vmem>>, vector<1x512xf32>
    %5 = vector.broadcast %4 : vector<1x512xf32> to vector<2x512xf32>
    %6 = arith.addf %3, %5 : vector<2x512xf32>
    %cst_6 = arith.constant 0.000000e+00 : f32
    %7 = vector.broadcast %cst_6 : f32 to vector<2x512xf32>
    %8 = arith.maximumf %6, %7 : vector<2x512xf32>
    %9 = arith.truncf %8 : vector<2x512xf32> to vector<2x512xbf16>
    %c0_7 = arith.constant 0 : index
    %c0_8 = arith.constant 0 : index
    %10 = vector.load %arg4[%c0_7, %c0_8] : memref<512x256xbf16, #tpu.memory_space<vmem>>, vector<512x256xbf16>
    %cst_9 = arith.constant dense<0.000000e+00> : vector<2x256xf32>
    %11 = tpu.matmul %9, %10, %cst_9 {dimension_numbers = #tpu.dot_dimension_numbers<[1], [0], [0], [1], [0, 0, 1, 1], [], []>} : vector<2x512xbf16>, vector<512x256xbf16>, vector<2x256xf32> -> vector<2x256xf32>
    %c0_10 = arith.constant 0 : index
    %c0_11 = arith.constant 0 : index
    %12 = vector.load %arg5[%c0_10, %c0_11] : memref<1x256xf32, #tpu.memory_space<vmem>>, vector<1x256xf32>
    %13 = vector.broadcast %12 : vector<1x256xf32> to vector<2x256xf32>
    %14 = arith.addf %11, %13 : vector<2x256xf32>
    %cst_12 = arith.constant 0.000000e+00 : f32
    %15 = vector.broadcast %cst_12 : f32 to vector<2x256xf32>
    %16 = arith.maximumf %14, %15 : vector<2x256xf32>
    %17 = arith.truncf %16 : vector<2x256xf32> to vector<2x256xbf16>
    %c0_13 = arith.constant 0 : index
    %c0_14 = arith.constant 0 : index
    %18 = vector.load %arg6[%c0_13, %c0_14] : memref<256x128xbf16, #tpu.memory_space<vmem>>, vector<256x128xbf16>
    %cst_15 = arith.constant dense<0.000000e+00> : vector<2x128xf32>
    %19 = tpu.matmul %17, %18, %cst_15 {dimension_numbers = #tpu.dot_dimension_numbers<[1], [0], [0], [1], [0, 0, 1, 1], [], []>} : vector<2x256xbf16>, vector<256x128xbf16>, vector<2x128xf32> -> vector<2x128xf32>
    %c0_16 = arith.constant 0 : index
    %c0_17 = arith.constant 0 : index
    %20 = vector.load %arg7[%c0_16, %c0_17] : memref<1x128xf32, #tpu.memory_space<vmem>>, vector<1x128xf32>
    %21 = vector.broadcast %20 : vector<1x128xf32> to vector<2x128xf32>
    %22 = arith.addf %19, %21 : vector<2x128xf32>
    %cst_18 = arith.constant 0.000000e+00 : f32
    %23 = vector.broadcast %cst_18 : f32 to vector<2x128xf32>
    %24 = arith.maximumf %22, %23 : vector<2x128xf32>
    %25 = arith.truncf %24 : vector<2x128xf32> to vector<2x128xbf16>
    %c0_19 = arith.constant 0 : index
    %c0_20 = arith.constant 0 : index
    %26 = vector.load %arg8[%c0_19, %c0_20] : memref<128x5xbf16, #tpu.memory_space<vmem>>, vector<128x5xbf16>
    %cst_21 = arith.constant dense<0.000000e+00> : vector<2x5xf32>
    %27 = tpu.matmul %25, %26, %cst_21 {dimension_numbers = #tpu.dot_dimension_numbers<[1], [0], [0], [1], [0, 0, 1, 1], [], []>} : vector<2x128xbf16>, vector<128x5xbf16>, vector<2x5xf32> -> vector<2x5xf32>
    %c0_22 = arith.constant 0 : index
    %c0_23 = arith.constant 0 : index
    %28 = vector.load %arg9[%c0_22, %c0_23] : memref<1x5xf32, #tpu.memory_space<vmem>>, vector<1x5xf32>
    %29 = vector.broadcast %28 : vector<1x5xf32> to vector<2x5xf32>
    %30 = arith.addf %27, %29 : vector<2x5xf32>
    %c0_24 = arith.constant 0 : index
    %c0_25 = arith.constant 0 : index
    %31 = vector.load %arg10[%c0_24, %c0_25] : memref<2x5xf32, #tpu.memory_space<vmem>>, vector<2x5xf32>
    tpu.vector_store %arg10[%c0_24, %c0_25], %30 {strides = array<i32>} : memref<2x5xf32, #tpu.memory_space<vmem>>, vector<2x5xf32>,
    return
  }
  func.func @transform_0(%arg0: i32) -> (i32, i32, i32) {
    %c7_i32 = arith.constant 7 : i32
    %c0_i32 = arith.constant 0 : i32
    %c0_i32_0 = arith.constant 0 : i32
    %c0_i32_1 = arith.constant 0 : i32
    return %c7_i32, %c0_i32, %c0_i32_0 : i32, i32, i32
  }
  func.func @transform_1(%arg0: i32) -> (i32, i32) {
    %c0_i32 = arith.constant 0 : i32
    %c0_i32_0 = arith.constant 0 : i32
    %c0_i32_1 = arith.constant 0 : i32
    return %c0_i32, %c0_i32_0 : i32, i32
  }
  func.func @transform_2(%arg0: i32) -> (i32, i32) {
    %c0_i32 = arith.constant 0 : i32
    %c0_i32_0 = arith.constant 0 : i32
    %c0_i32_1 = arith.constant 0 : i32
    return %c0_i32, %c0_i32_0 : i32, i32
  }
  func.func @transform_3(%arg0: i32) -> (i32, i32) {
    %c0_i32 = arith.constant 0 : i32
    %c0_i32_0 = arith.constant 0 : i32
    %c0_i32_1 = arith.constant 0 : i32
    return %c0_i32, %c0_i32_0 : i32, i32
  }
  func.func @transform_4(%arg0: i32) -> (i32, i32) {
    %c0_i32 = arith.constant 0 : i32
    %c0_i32_0 = arith.constant 0 : i32
    %c0_i32_1 = arith.constant 0 : i32
    return %c0_i32, %c0_i32_0 : i32, i32
  }
  func.func @transform_5(%arg0: i32) -> (i32, i32) {
    %c0_i32 = arith.constant 0 : i32
    %c0_i32_0 = arith.constant 0 : i32
    %c0_i32_1 = arith.constant 0 : i32
    return %c0_i32, %c0_i32_0 : i32, i32
  }
  func.func @transform_6(%arg0: i32) -> (i32, i32) {
    %c0_i32 = arith.constant 0 : i32
    %c0_i32_0 = arith.constant 0 : i32
    %c0_i32_1 = arith.constant 0 : i32
    return %c0_i32, %c0_i32_0 : i32, i32
  }
  func.func @transform_7(%arg0: i32) -> (i32, i32) {
    %c0_i32 = arith.constant 0 : i32
    %c0_i32_0 = arith.constant 0 : i32
    %c0_i32_1 = arith.constant 0 : i32
    return %c0_i32, %c0_i32_0 : i32, i32
  }
  func.func @transform_8(%arg0: i32) -> (i32, i32) {
    %c0_i32 = arith.constant 0 : i32
    %c0_i32_0 = arith.constant 0 : i32
    %c0_i32_1 = arith.constant 0 : i32
    return %c0_i32, %c0_i32_0 : i32, i32
  }
  func.func @transform_9(%arg0: i32) -> (i32, i32) {
    %c0_i32 = arith.constant 0 : i32
    %c0_i32_0 = arith.constant 0 : i32
    %c0_i32_1 = arith.constant 0 : i32
    return %c0_i32, %c0_i32_0 : i32, i32
  }
}

module attributes {stable_mosaic.version = 11 : i64} {
  func.func @_tfm_layer_kernel(%arg0: i32, %arg1: memref<8x2x64xbf16, #tpu.memory_space<vmem>>, %arg2: memref<64x192xbf16, #tpu.memory_space<vmem>>, %arg3: memref<1x192xf32, #tpu.memory_space<vmem>>, %arg4: memref<64x64xbf16, #tpu.memory_space<vmem>>, %arg5: memref<1x64xf32, #tpu.memory_space<vmem>>, %arg6: memref<1x64xf32, #tpu.memory_space<vmem>>, %arg7: memref<1x64xf32, #tpu.memory_space<vmem>>, %arg8: memref<64x128xbf16, #tpu.memory_space<vmem>>, %arg9: memref<1x128xf32, #tpu.memory_space<vmem>>, %arg10: memref<128x64xbf16, #tpu.memory_space<vmem>>, %arg11: memref<1x64xf32, #tpu.memory_space<vmem>>, %arg12: memref<1x64xf32, #tpu.memory_space<vmem>>, %arg13: memref<1x64xf32, #tpu.memory_space<vmem>>, %arg14: memref<8x2x64xbf16, #tpu.memory_space<vmem>>) attributes {dimension_semantics = [#tpu.dimension_semantics<parallel>], iteration_bounds = array<i64: 1>, scalar_prefetch = 0 : i64, scratch_operands = 0 : i64, tpu.core_type = #tpu.core_type<tc>, window_params = [{transform_indices = @transform_0, window_bounds = array<i64: 8, 2, 64>}, {pipeline_mode = #tpu.pipeline_mode<synchronous>, transform_indices = @transform_1, window_bounds = array<i64: 64, 192>}, {pipeline_mode = #tpu.pipeline_mode<synchronous>, transform_indices = @transform_2, window_bounds = array<i64: 1, 192>}, {pipeline_mode = #tpu.pipeline_mode<synchronous>, transform_indices = @transform_3, window_bounds = array<i64: 64, 64>}, {pipeline_mode = #tpu.pipeline_mode<synchronous>, transform_indices = @transform_4, window_bounds = array<i64: 1, 64>}, {pipeline_mode = #tpu.pipeline_mode<synchronous>, transform_indices = @transform_5, window_bounds = array<i64: 1, 64>}, {pipeline_mode = #tpu.pipeline_mode<synchronous>, transform_indices = @transform_6, window_bounds = array<i64: 1, 64>}, {pipeline_mode = #tpu.pipeline_mode<synchronous>, transform_indices = @transform_7, window_bounds = array<i64: 64, 128>}, {pipeline_mode = #tpu.pipeline_mode<synchronous>, transform_indices = @transform_8, window_bounds = array<i64: 1, 128>}, {pipeline_mode = #tpu.pipeline_mode<synchronous>, transform_indices = @transform_9, window_bounds = array<i64: 128, 64>}, {pipeline_mode = #tpu.pipeline_mode<synchronous>, transform_indices = @transform_10, window_bounds = array<i64: 1, 64>}, {pipeline_mode = #tpu.pipeline_mode<synchronous>, transform_indices = @transform_11, window_bounds = array<i64: 1, 64>}, {pipeline_mode = #tpu.pipeline_mode<synchronous>, transform_indices = @transform_12, window_bounds = array<i64: 1, 64>}, {transform_indices = @transform_13, window_bounds = array<i64: 8, 2, 64>}]} {
    %c0 = arith.constant 0 : index
    %c0_0 = arith.constant 0 : index
    %c0_1 = arith.constant 0 : index
    %0 = vector.load %arg1[%c0, %c0_0, %c0_1] : memref<8x2x64xbf16, #tpu.memory_space<vmem>>, vector<8x2x64xbf16>
    %1 = vector.shape_cast %0 : vector<8x2x64xbf16> to vector<16x64xbf16>
    %2 = arith.extf %1 : vector<16x64xbf16> to vector<16x64xf32>
    %c0_2 = arith.constant 0 : index
    %c0_3 = arith.constant 0 : index
    %3 = vector.load %arg2[%c0_2, %c0_3] : memref<64x192xbf16, #tpu.memory_space<vmem>>, vector<64x192xbf16>
    %cst = arith.constant dense<0.000000e+00> : vector<16x192xf32>
    %4 = tpu.matmul %1, %3, %cst {dimension_numbers = #tpu.dot_dimension_numbers<[1], [0], [0], [1], [0, 0, 1, 1], [], []>} : vector<16x64xbf16>, vector<64x192xbf16>, vector<16x192xf32> -> vector<16x192xf32>
    %c0_4 = arith.constant 0 : index
    %c0_5 = arith.constant 0 : index
    %5 = vector.load %arg3[%c0_4, %c0_5] : memref<1x192xf32, #tpu.memory_space<vmem>>, vector<1x192xf32>
    %6 = vector.broadcast %5 : vector<1x192xf32> to vector<16x192xf32>
    %7 = arith.addf %4, %6 : vector<16x192xf32>
    %8 = vector.extract_strided_slice %7 {offsets = [0, 0], sizes = [16, 16], strides = [1, 1]} : vector<16x192xf32> to vector<16x16xf32>
    %cst_6 = arith.constant 2.500000e-01 : f32
    %9 = vector.broadcast %cst_6 : f32 to vector<16x16xf32>
    %10 = arith.mulf %8, %9 : vector<16x16xf32>
    %11 = arith.truncf %10 : vector<16x16xf32> to vector<16x16xbf16>
    %12 = vector.shape_cast %11 : vector<16x16xbf16> to vector<8x2x16xbf16>
    %13 = vector.extract_strided_slice %7 {offsets = [0, 64], sizes = [16, 16], strides = [1, 1]} : vector<16x192xf32> to vector<16x16xf32>
    %14 = arith.truncf %13 : vector<16x16xf32> to vector<16x16xbf16>
    %15 = vector.shape_cast %14 : vector<16x16xbf16> to vector<8x2x16xbf16>
    %16 = vector.extract_strided_slice %7 {offsets = [0, 128], sizes = [16, 16], strides = [1, 1]} : vector<16x192xf32> to vector<16x16xf32>
    %17 = arith.truncf %16 : vector<16x16xf32> to vector<16x16xbf16>
    %18 = vector.shape_cast %17 : vector<16x16xbf16> to vector<8x2x16xbf16>
    "tpu.trace_start"() <{level = 10 : i32, message = "nld,nmd->nlm"}> : () -> ()
    %cst_7 = arith.constant dense<0.000000e+00> : vector<8x2x2xf32>
    %19 = tpu.matmul %12, %15, %cst_7 {dimension_numbers = #tpu.dot_dimension_numbers<[2], [2], [1], [1], [0, 0, 0, 1, 1, 1], [0], [0]>} : vector<8x2x16xbf16>, vector<8x2x16xbf16>, vector<8x2x2xf32> -> vector<8x2x2xf32>
    "tpu.trace_stop"() : () -> ()
    %cst_8 = arith.constant dense<0xFF800000> : vector<8x2xf32>
    %20 = vector.multi_reduction <maximumf>, %19, %cst_8 [2] : vector<8x2x2xf32> to vector<8x2xf32>
    %21 = vector.shape_cast %20 : vector<8x2xf32> to vector<8x2x1xf32>
    %22 = vector.broadcast %21 : vector<8x2x1xf32> to vector<8x2x2xf32>
    %23 = arith.subf %19, %22 : vector<8x2x2xf32>
    %24 = math.exp %23 : vector<8x2x2xf32>
    %cst_9 = arith.constant dense<0.000000e+00> : vector<8x2xf32>
    %25 = vector.multi_reduction <add>, %24, %cst_9 [2] : vector<8x2x2xf32> to vector<8x2xf32>
    %26 = vector.shape_cast %25 : vector<8x2xf32> to vector<8x2x1xf32>
    %27 = tpu.reciprocal %26 {approx = true} : vector<8x2x1xf32> -> vector<8x2x1xf32>
    %28 = vector.broadcast %27 : vector<8x2x1xf32> to vector<8x2x2xf32>
    %29 = arith.mulf %24, %28 : vector<8x2x2xf32>
    %30 = arith.truncf %29 : vector<8x2x2xf32> to vector<8x2x2xbf16>
    "tpu.trace_start"() <{level = 10 : i32, message = "nlm,nmd->nld"}> : () -> ()
    %cst_10 = arith.constant dense<0.000000e+00> : vector<8x2x16xf32>
    %31 = tpu.matmul %30, %18, %cst_10 {dimension_numbers = #tpu.dot_dimension_numbers<[2], [1], [1], [2], [0, 0, 0, 1, 1, 2], [0], [0]>} : vector<8x2x2xbf16>, vector<8x2x16xbf16>, vector<8x2x16xf32> -> vector<8x2x16xf32>
    "tpu.trace_stop"() : () -> ()
    %32 = vector.shape_cast %31 : vector<8x2x16xf32> to vector<16x16xf32>
    %33 = vector.extract_strided_slice %7 {offsets = [0, 16], sizes = [16, 16], strides = [1, 1]} : vector<16x192xf32> to vector<16x16xf32>
    %cst_11 = arith.constant 2.500000e-01 : f32
    %34 = vector.broadcast %cst_11 : f32 to vector<16x16xf32>
    %35 = arith.mulf %33, %34 : vector<16x16xf32>
    %36 = arith.truncf %35 : vector<16x16xf32> to vector<16x16xbf16>
    %37 = vector.shape_cast %36 : vector<16x16xbf16> to vector<8x2x16xbf16>
    %38 = vector.extract_strided_slice %7 {offsets = [0, 80], sizes = [16, 16], strides = [1, 1]} : vector<16x192xf32> to vector<16x16xf32>
    %39 = arith.truncf %38 : vector<16x16xf32> to vector<16x16xbf16>
    %40 = vector.shape_cast %39 : vector<16x16xbf16> to vector<8x2x16xbf16>
    %41 = vector.extract_strided_slice %7 {offsets = [0, 144], sizes = [16, 16], strides = [1, 1]} : vector<16x192xf32> to vector<16x16xf32>
    %42 = arith.truncf %41 : vector<16x16xf32> to vector<16x16xbf16>
    %43 = vector.shape_cast %42 : vector<16x16xbf16> to vector<8x2x16xbf16>
    "tpu.trace_start"() <{level = 10 : i32, message = "nld,nmd->nlm"}> : () -> ()
    %cst_12 = arith.constant dense<0.000000e+00> : vector<8x2x2xf32>
    %44 = tpu.matmul %37, %40, %cst_12 {dimension_numbers = #tpu.dot_dimension_numbers<[2], [2], [1], [1], [0, 0, 0, 1, 1, 1], [0], [0]>} : vector<8x2x16xbf16>, vector<8x2x16xbf16>, vector<8x2x2xf32> -> vector<8x2x2xf32>
    "tpu.trace_stop"() : () -> ()
    %cst_13 = arith.constant dense<0xFF800000> : vector<8x2xf32>
    %45 = vector.multi_reduction <maximumf>, %44, %cst_13 [2] : vector<8x2x2xf32> to vector<8x2xf32>
    %46 = vector.shape_cast %45 : vector<8x2xf32> to vector<8x2x1xf32>
    %47 = vector.broadcast %46 : vector<8x2x1xf32> to vector<8x2x2xf32>
    %48 = arith.subf %44, %47 : vector<8x2x2xf32>
    %49 = math.exp %48 : vector<8x2x2xf32>
    %cst_14 = arith.constant dense<0.000000e+00> : vector<8x2xf32>
    %50 = vector.multi_reduction <add>, %49, %cst_14 [2] : vector<8x2x2xf32> to vector<8x2xf32>
    %51 = vector.shape_cast %50 : vector<8x2xf32> to vector<8x2x1xf32>
    %52 = tpu.reciprocal %51 {approx = true} : vector<8x2x1xf32> -> vector<8x2x1xf32>
    %53 = vector.broadcast %52 : vector<8x2x1xf32> to vector<8x2x2xf32>
    %54 = arith.mulf %49, %53 : vector<8x2x2xf32>
    %55 = arith.truncf %54 : vector<8x2x2xf32> to vector<8x2x2xbf16>
    "tpu.trace_start"() <{level = 10 : i32, message = "nlm,nmd->nld"}> : () -> ()
    %cst_15 = arith.constant dense<0.000000e+00> : vector<8x2x16xf32>
    %56 = tpu.matmul %55, %43, %cst_15 {dimension_numbers = #tpu.dot_dimension_numbers<[2], [1], [1], [2], [0, 0, 0, 1, 1, 2], [0], [0]>} : vector<8x2x2xbf16>, vector<8x2x16xbf16>, vector<8x2x16xf32> -> vector<8x2x16xf32>
    "tpu.trace_stop"() : () -> ()
    %57 = vector.shape_cast %56 : vector<8x2x16xf32> to vector<16x16xf32>
    %58 = vector.extract_strided_slice %7 {offsets = [0, 32], sizes = [16, 16], strides = [1, 1]} : vector<16x192xf32> to vector<16x16xf32>
    %cst_16 = arith.constant 2.500000e-01 : f32
    %59 = vector.broadcast %cst_16 : f32 to vector<16x16xf32>
    %60 = arith.mulf %58, %59 : vector<16x16xf32>
    %61 = arith.truncf %60 : vector<16x16xf32> to vector<16x16xbf16>
    %62 = vector.shape_cast %61 : vector<16x16xbf16> to vector<8x2x16xbf16>
    %63 = vector.extract_strided_slice %7 {offsets = [0, 96], sizes = [16, 16], strides = [1, 1]} : vector<16x192xf32> to vector<16x16xf32>
    %64 = arith.truncf %63 : vector<16x16xf32> to vector<16x16xbf16>
    %65 = vector.shape_cast %64 : vector<16x16xbf16> to vector<8x2x16xbf16>
    %66 = vector.extract_strided_slice %7 {offsets = [0, 160], sizes = [16, 16], strides = [1, 1]} : vector<16x192xf32> to vector<16x16xf32>
    %67 = arith.truncf %66 : vector<16x16xf32> to vector<16x16xbf16>
    %68 = vector.shape_cast %67 : vector<16x16xbf16> to vector<8x2x16xbf16>
    "tpu.trace_start"() <{level = 10 : i32, message = "nld,nmd->nlm"}> : () -> ()
    %cst_17 = arith.constant dense<0.000000e+00> : vector<8x2x2xf32>
    %69 = tpu.matmul %62, %65, %cst_17 {dimension_numbers = #tpu.dot_dimension_numbers<[2], [2], [1], [1], [0, 0, 0, 1, 1, 1], [0], [0]>} : vector<8x2x16xbf16>, vector<8x2x16xbf16>, vector<8x2x2xf32> -> vector<8x2x2xf32>
    "tpu.trace_stop"() : () -> ()
    %cst_18 = arith.constant dense<0xFF800000> : vector<8x2xf32>
    %70 = vector.multi_reduction <maximumf>, %69, %cst_18 [2] : vector<8x2x2xf32> to vector<8x2xf32>
    %71 = vector.shape_cast %70 : vector<8x2xf32> to vector<8x2x1xf32>
    %72 = vector.broadcast %71 : vector<8x2x1xf32> to vector<8x2x2xf32>
    %73 = arith.subf %69, %72 : vector<8x2x2xf32>
    %74 = math.exp %73 : vector<8x2x2xf32>
    %cst_19 = arith.constant dense<0.000000e+00> : vector<8x2xf32>
    %75 = vector.multi_reduction <add>, %74, %cst_19 [2] : vector<8x2x2xf32> to vector<8x2xf32>
    %76 = vector.shape_cast %75 : vector<8x2xf32> to vector<8x2x1xf32>
    %77 = tpu.reciprocal %76 {approx = true} : vector<8x2x1xf32> -> vector<8x2x1xf32>
    %78 = vector.broadcast %77 : vector<8x2x1xf32> to vector<8x2x2xf32>
    %79 = arith.mulf %74, %78 : vector<8x2x2xf32>
    %80 = arith.truncf %79 : vector<8x2x2xf32> to vector<8x2x2xbf16>
    "tpu.trace_start"() <{level = 10 : i32, message = "nlm,nmd->nld"}> : () -> ()
    %cst_20 = arith.constant dense<0.000000e+00> : vector<8x2x16xf32>
    %81 = tpu.matmul %80, %68, %cst_20 {dimension_numbers = #tpu.dot_dimension_numbers<[2], [1], [1], [2], [0, 0, 0, 1, 1, 2], [0], [0]>} : vector<8x2x2xbf16>, vector<8x2x16xbf16>, vector<8x2x16xf32> -> vector<8x2x16xf32>
    "tpu.trace_stop"() : () -> ()
    %82 = vector.shape_cast %81 : vector<8x2x16xf32> to vector<16x16xf32>
    %83 = vector.extract_strided_slice %7 {offsets = [0, 48], sizes = [16, 16], strides = [1, 1]} : vector<16x192xf32> to vector<16x16xf32>
    %cst_21 = arith.constant 2.500000e-01 : f32
    %84 = vector.broadcast %cst_21 : f32 to vector<16x16xf32>
    %85 = arith.mulf %83, %84 : vector<16x16xf32>
    %86 = arith.truncf %85 : vector<16x16xf32> to vector<16x16xbf16>
    %87 = vector.shape_cast %86 : vector<16x16xbf16> to vector<8x2x16xbf16>
    %88 = vector.extract_strided_slice %7 {offsets = [0, 112], sizes = [16, 16], strides = [1, 1]} : vector<16x192xf32> to vector<16x16xf32>
    %89 = arith.truncf %88 : vector<16x16xf32> to vector<16x16xbf16>
    %90 = vector.shape_cast %89 : vector<16x16xbf16> to vector<8x2x16xbf16>
    %91 = vector.extract_strided_slice %7 {offsets = [0, 176], sizes = [16, 16], strides = [1, 1]} : vector<16x192xf32> to vector<16x16xf32>
    %92 = arith.truncf %91 : vector<16x16xf32> to vector<16x16xbf16>
    %93 = vector.shape_cast %92 : vector<16x16xbf16> to vector<8x2x16xbf16>
    "tpu.trace_start"() <{level = 10 : i32, message = "nld,nmd->nlm"}> : () -> ()
    %cst_22 = arith.constant dense<0.000000e+00> : vector<8x2x2xf32>
    %94 = tpu.matmul %87, %90, %cst_22 {dimension_numbers = #tpu.dot_dimension_numbers<[2], [2], [1], [1], [0, 0, 0, 1, 1, 1], [0], [0]>} : vector<8x2x16xbf16>, vector<8x2x16xbf16>, vector<8x2x2xf32> -> vector<8x2x2xf32>
    "tpu.trace_stop"() : () -> ()
    %cst_23 = arith.constant dense<0xFF800000> : vector<8x2xf32>
    %95 = vector.multi_reduction <maximumf>, %94, %cst_23 [2] : vector<8x2x2xf32> to vector<8x2xf32>
    %96 = vector.shape_cast %95 : vector<8x2xf32> to vector<8x2x1xf32>
    %97 = vector.broadcast %96 : vector<8x2x1xf32> to vector<8x2x2xf32>
    %98 = arith.subf %94, %97 : vector<8x2x2xf32>
    %99 = math.exp %98 : vector<8x2x2xf32>
    %cst_24 = arith.constant dense<0.000000e+00> : vector<8x2xf32>
    %100 = vector.multi_reduction <add>, %99, %cst_24 [2] : vector<8x2x2xf32> to vector<8x2xf32>
    %101 = vector.shape_cast %100 : vector<8x2xf32> to vector<8x2x1xf32>
    %102 = tpu.reciprocal %101 {approx = true} : vector<8x2x1xf32> -> vector<8x2x1xf32>
    %103 = vector.broadcast %102 : vector<8x2x1xf32> to vector<8x2x2xf32>
    %104 = arith.mulf %99, %103 : vector<8x2x2xf32>
    %105 = arith.truncf %104 : vector<8x2x2xf32> to vector<8x2x2xbf16>
    "tpu.trace_start"() <{level = 10 : i32, message = "nlm,nmd->nld"}> : () -> ()
    %cst_25 = arith.constant dense<0.000000e+00> : vector<8x2x16xf32>
    %106 = tpu.matmul %105, %93, %cst_25 {dimension_numbers = #tpu.dot_dimension_numbers<[2], [1], [1], [2], [0, 0, 0, 1, 1, 2], [0], [0]>} : vector<8x2x2xbf16>, vector<8x2x16xbf16>, vector<8x2x16xf32> -> vector<8x2x16xf32>
    "tpu.trace_stop"() : () -> ()
    %107 = vector.shape_cast %106 : vector<8x2x16xf32> to vector<16x16xf32>
    %108 = tpu.concatenate %32, %57, %82, %107 in 1 : vector<16x16xf32>, vector<16x16xf32>, vector<16x16xf32>, vector<16x16xf32> -> vector<16x64xf32>
    %109 = arith.truncf %108 : vector<16x64xf32> to vector<16x64xbf16>
    %c0_26 = arith.constant 0 : index
    %c0_27 = arith.constant 0 : index
    %110 = vector.load %arg4[%c0_26, %c0_27] : memref<64x64xbf16, #tpu.memory_space<vmem>>, vector<64x64xbf16>
    %cst_28 = arith.constant dense<0.000000e+00> : vector<16x64xf32>
    %111 = tpu.matmul %109, %110, %cst_28 {dimension_numbers = #tpu.dot_dimension_numbers<[1], [0], [0], [1], [0, 0, 1, 1], [], []>} : vector<16x64xbf16>, vector<64x64xbf16>, vector<16x64xf32> -> vector<16x64xf32>
    %c0_29 = arith.constant 0 : index
    %c0_30 = arith.constant 0 : index
    %112 = vector.load %arg5[%c0_29, %c0_30] : memref<1x64xf32, #tpu.memory_space<vmem>>, vector<1x64xf32>
    %113 = vector.broadcast %112 : vector<1x64xf32> to vector<16x64xf32>
    %114 = arith.addf %111, %113 : vector<16x64xf32>
    %115 = arith.addf %114, %2 : vector<16x64xf32>
    %cst_31 = arith.constant dense<0.000000e+00> : vector<16xf32>
    %116 = vector.multi_reduction <add>, %115, %cst_31 [1] : vector<16x64xf32> to vector<16xf32>
    %117 = vector.shape_cast %116 : vector<16xf32> to vector<16x1xf32>
    %cst_32 = arith.constant 6.400000e+01 : f32
    %118 = vector.broadcast %cst_32 : f32 to vector<16x1xf32>
    %119 = arith.divf %117, %118 : vector<16x1xf32>
    %120 = vector.broadcast %119 : vector<16x1xf32> to vector<16x64xf32>
    %121 = arith.subf %115, %120 : vector<16x64xf32>
    %122 = arith.mulf %121, %121 : vector<16x64xf32>
    %cst_33 = arith.constant dense<0.000000e+00> : vector<16xf32>
    %123 = vector.multi_reduction <add>, %122, %cst_33 [1] : vector<16x64xf32> to vector<16xf32>
    %124 = vector.shape_cast %123 : vector<16xf32> to vector<16x1xf32>
    %cst_34 = arith.constant 6.400000e+01 : f32
    %125 = vector.broadcast %cst_34 : f32 to vector<16x1xf32>
    %126 = arith.divf %124, %125 : vector<16x1xf32>
    %cst_35 = arith.constant 9.99999974E-6 : f32
    %127 = vector.broadcast %cst_35 : f32 to vector<16x1xf32>
    %128 = arith.addf %126, %127 : vector<16x1xf32>
    %129 = math.rsqrt %128 : vector<16x1xf32>
    %130 = vector.broadcast %129 : vector<16x1xf32> to vector<16x64xf32>
    %131 = arith.mulf %121, %130 : vector<16x64xf32>
    %c0_36 = arith.constant 0 : index
    %c0_37 = arith.constant 0 : index
    %132 = vector.load %arg6[%c0_36, %c0_37] : memref<1x64xf32, #tpu.memory_space<vmem>>, vector<1x64xf32>
    %133 = vector.broadcast %132 : vector<1x64xf32> to vector<16x64xf32>
    %134 = arith.mulf %131, %133 : vector<16x64xf32>
    %c0_38 = arith.constant 0 : index
    %c0_39 = arith.constant 0 : index
    %135 = vector.load %arg7[%c0_38, %c0_39] : memref<1x64xf32, #tpu.memory_space<vmem>>, vector<1x64xf32>
    %136 = vector.broadcast %135 : vector<1x64xf32> to vector<16x64xf32>
    %137 = arith.addf %134, %136 : vector<16x64xf32>
    %138 = arith.truncf %137 : vector<16x64xf32> to vector<16x64xbf16>
    %c0_40 = arith.constant 0 : index
    %c0_41 = arith.constant 0 : index
    %139 = vector.load %arg8[%c0_40, %c0_41] : memref<64x128xbf16, #tpu.memory_space<vmem>>, vector<64x128xbf16>
    %cst_42 = arith.constant dense<0.000000e+00> : vector<16x128xf32>
    %140 = tpu.matmul %138, %139, %cst_42 {dimension_numbers = #tpu.dot_dimension_numbers<[1], [0], [0], [1], [0, 0, 1, 1], [], []>} : vector<16x64xbf16>, vector<64x128xbf16>, vector<16x128xf32> -> vector<16x128xf32>
    %c0_43 = arith.constant 0 : index
    %c0_44 = arith.constant 0 : index
    %141 = vector.load %arg9[%c0_43, %c0_44] : memref<1x128xf32, #tpu.memory_space<vmem>>, vector<1x128xf32>
    %142 = vector.broadcast %141 : vector<1x128xf32> to vector<16x128xf32>
    %143 = arith.addf %140, %142 : vector<16x128xf32>
    %cst_45 = arith.constant 0.000000e+00 : f32
    %144 = vector.broadcast %cst_45 : f32 to vector<16x128xf32>
    %145 = arith.maximumf %143, %144 : vector<16x128xf32>
    %146 = arith.truncf %145 : vector<16x128xf32> to vector<16x128xbf16>
    %c0_46 = arith.constant 0 : index
    %c0_47 = arith.constant 0 : index
    %147 = vector.load %arg10[%c0_46, %c0_47] : memref<128x64xbf16, #tpu.memory_space<vmem>>, vector<128x64xbf16>
    %cst_48 = arith.constant dense<0.000000e+00> : vector<16x64xf32>
    %148 = tpu.matmul %146, %147, %cst_48 {dimension_numbers = #tpu.dot_dimension_numbers<[1], [0], [0], [1], [0, 0, 1, 1], [], []>} : vector<16x128xbf16>, vector<128x64xbf16>, vector<16x64xf32> -> vector<16x64xf32>
    %c0_49 = arith.constant 0 : index
    %c0_50 = arith.constant 0 : index
    %149 = vector.load %arg11[%c0_49, %c0_50] : memref<1x64xf32, #tpu.memory_space<vmem>>, vector<1x64xf32>
    %150 = vector.broadcast %149 : vector<1x64xf32> to vector<16x64xf32>
    %151 = arith.addf %148, %150 : vector<16x64xf32>
    %152 = arith.addf %151, %137 : vector<16x64xf32>
    %cst_51 = arith.constant dense<0.000000e+00> : vector<16xf32>
    %153 = vector.multi_reduction <add>, %152, %cst_51 [1] : vector<16x64xf32> to vector<16xf32>
    %154 = vector.shape_cast %153 : vector<16xf32> to vector<16x1xf32>
    %cst_52 = arith.constant 6.400000e+01 : f32
    %155 = vector.broadcast %cst_52 : f32 to vector<16x1xf32>
    %156 = arith.divf %154, %155 : vector<16x1xf32>
    %157 = vector.broadcast %156 : vector<16x1xf32> to vector<16x64xf32>
    %158 = arith.subf %152, %157 : vector<16x64xf32>
    %159 = arith.mulf %158, %158 : vector<16x64xf32>
    %cst_53 = arith.constant dense<0.000000e+00> : vector<16xf32>
    %160 = vector.multi_reduction <add>, %159, %cst_53 [1] : vector<16x64xf32> to vector<16xf32>
    %161 = vector.shape_cast %160 : vector<16xf32> to vector<16x1xf32>
    %cst_54 = arith.constant 6.400000e+01 : f32
    %162 = vector.broadcast %cst_54 : f32 to vector<16x1xf32>
    %163 = arith.divf %161, %162 : vector<16x1xf32>
    %cst_55 = arith.constant 9.99999974E-6 : f32
    %164 = vector.broadcast %cst_55 : f32 to vector<16x1xf32>
    %165 = arith.addf %163, %164 : vector<16x1xf32>
    %166 = math.rsqrt %165 : vector<16x1xf32>
    %167 = vector.broadcast %166 : vector<16x1xf32> to vector<16x64xf32>
    %168 = arith.mulf %158, %167 : vector<16x64xf32>
    %c0_56 = arith.constant 0 : index
    %c0_57 = arith.constant 0 : index
    %169 = vector.load %arg12[%c0_56, %c0_57] : memref<1x64xf32, #tpu.memory_space<vmem>>, vector<1x64xf32>
    %170 = vector.broadcast %169 : vector<1x64xf32> to vector<16x64xf32>
    %171 = arith.mulf %168, %170 : vector<16x64xf32>
    %c0_58 = arith.constant 0 : index
    %c0_59 = arith.constant 0 : index
    %172 = vector.load %arg13[%c0_58, %c0_59] : memref<1x64xf32, #tpu.memory_space<vmem>>, vector<1x64xf32>
    %173 = vector.broadcast %172 : vector<1x64xf32> to vector<16x64xf32>
    %174 = arith.addf %171, %173 : vector<16x64xf32>
    %175 = vector.shape_cast %174 : vector<16x64xf32> to vector<8x2x64xf32>
    %176 = arith.truncf %175 : vector<8x2x64xf32> to vector<8x2x64xbf16>
    %c0_60 = arith.constant 0 : index
    %c0_61 = arith.constant 0 : index
    %c0_62 = arith.constant 0 : index
    %177 = vector.load %arg14[%c0_60, %c0_61, %c0_62] : memref<8x2x64xbf16, #tpu.memory_space<vmem>>, vector<8x2x64xbf16>
    tpu.vector_store %arg14[%c0_60, %c0_61, %c0_62], %176 {strides = array<i32>} : memref<8x2x64xbf16, #tpu.memory_space<vmem>>, vector<8x2x64xbf16>,
    return
  }
  func.func @transform_0(%arg0: i32) -> (i32, i32, i32) {
    %c0_i32 = arith.constant 0 : i32
    %c0_i32_0 = arith.constant 0 : i32
    %c0_i32_1 = arith.constant 0 : i32
    return %arg0, %c0_i32, %c0_i32_0 : i32, i32, i32
  }
  func.func @transform_1(%arg0: i32) -> (i32, i32) {
    %c0_i32 = arith.constant 0 : i32
    %c0_i32_0 = arith.constant 0 : i32
    %c0_i32_1 = arith.constant 0 : i32
    return %c0_i32, %c0_i32_0 : i32, i32
  }
  func.func @transform_2(%arg0: i32) -> (i32, i32) {
    %c0_i32 = arith.constant 0 : i32
    %c0_i32_0 = arith.constant 0 : i32
    %c0_i32_1 = arith.constant 0 : i32
    return %c0_i32, %c0_i32_0 : i32, i32
  }
  func.func @transform_3(%arg0: i32) -> (i32, i32) {
    %c0_i32 = arith.constant 0 : i32
    %c0_i32_0 = arith.constant 0 : i32
    %c0_i32_1 = arith.constant 0 : i32
    return %c0_i32, %c0_i32_0 : i32, i32
  }
  func.func @transform_4(%arg0: i32) -> (i32, i32) {
    %c0_i32 = arith.constant 0 : i32
    %c0_i32_0 = arith.constant 0 : i32
    %c0_i32_1 = arith.constant 0 : i32
    return %c0_i32, %c0_i32_0 : i32, i32
  }
  func.func @transform_5(%arg0: i32) -> (i32, i32) {
    %c0_i32 = arith.constant 0 : i32
    %c0_i32_0 = arith.constant 0 : i32
    %c0_i32_1 = arith.constant 0 : i32
    return %c0_i32, %c0_i32_0 : i32, i32
  }
  func.func @transform_6(%arg0: i32) -> (i32, i32) {
    %c0_i32 = arith.constant 0 : i32
    %c0_i32_0 = arith.constant 0 : i32
    %c0_i32_1 = arith.constant 0 : i32
    return %c0_i32, %c0_i32_0 : i32, i32
  }
  func.func @transform_7(%arg0: i32) -> (i32, i32) {
    %c0_i32 = arith.constant 0 : i32
    %c0_i32_0 = arith.constant 0 : i32
    %c0_i32_1 = arith.constant 0 : i32
    return %c0_i32, %c0_i32_0 : i32, i32
  }
  func.func @transform_8(%arg0: i32) -> (i32, i32) {
    %c0_i32 = arith.constant 0 : i32
    %c0_i32_0 = arith.constant 0 : i32
    %c0_i32_1 = arith.constant 0 : i32
    return %c0_i32, %c0_i32_0 : i32, i32
  }
  func.func @transform_9(%arg0: i32) -> (i32, i32) {
    %c0_i32 = arith.constant 0 : i32
    %c0_i32_0 = arith.constant 0 : i32
    %c0_i32_1 = arith.constant 0 : i32
    return %c0_i32, %c0_i32_0 : i32, i32
  }
  func.func @transform_10(%arg0: i32) -> (i32, i32) {
    %c0_i32 = arith.constant 0 : i32
    %c0_i32_0 = arith.constant 0 : i32
    %c0_i32_1 = arith.constant 0 : i32
    return %c0_i32, %c0_i32_0 : i32, i32
  }
  func.func @transform_11(%arg0: i32) -> (i32, i32) {
    %c0_i32 = arith.constant 0 : i32
    %c0_i32_0 = arith.constant 0 : i32
    %c0_i32_1 = arith.constant 0 : i32
    return %c0_i32, %c0_i32_0 : i32, i32
  }
  func.func @transform_12(%arg0: i32) -> (i32, i32) {
    %c0_i32 = arith.constant 0 : i32
    %c0_i32_0 = arith.constant 0 : i32
    %c0_i32_1 = arith.constant 0 : i32
    return %c0_i32, %c0_i32_0 : i32, i32
  }
  func.func @transform_13(%arg0: i32) -> (i32, i32, i32) {
    %c0_i32 = arith.constant 0 : i32
    %c0_i32_0 = arith.constant 0 : i32
    %c0_i32_1 = arith.constant 0 : i32
    return %arg0, %c0_i32, %c0_i32_0 : i32, i32, i32
  }
}

</mosaic_0001>

<llo_original>
// kernel: model_forward.11
$region0: #{model_forward.11}
  #allocation0 [shape = 'u32[]', space=smem, size = 0x4, offset = 0x4, fixed_abs, tag = 'smem constant byte address 0x4 - core index']
  #allocation1 [shape = 'u32[72,128]{1,0:T(1,128)}', space=vmem, size = 0x9000, scoped, tag = 'internal scratch']
  %s0 = inlined_call_operand.vmem [shape: bf16[16,32], index: 0, kind: input, shape index: {}]
  %s1 = inlined_call_operand.vmem [shape: bf16[32,128], index: 1, kind: input, shape index: {}]
  %s2 = inlined_call_operand.vmem [shape: f32[1,128], index: 2, kind: input, shape index: {}]
  %s3 = inlined_call_operand.vmem [shape: bf16[16,128], index: 3, kind: output, shape index: {}]
  %s4 = sld [smem:[#allocation0]]
  $region22: #{model_forward.11} parent=0
    _
  %s6 = ssub.s32 1, %s4
  %s7 = scalar_select 0, %s6, %s4
  // Predicated region
  $region2: #{model_forward.11} parent=0 // pred_check
    _
  $region3: #{model_forward.11} parent=0 // pred_check_branch
    %9 = sbr.rel (0) target = $region5
  $region4: #{model_forward.11} parent=0 // pred_region
    _
  $region5: #{model_forward.11} parent=0 // pred_fallthru
    _
  // Predicated region
  $region6: #{model_forward.11} parent=0 // pred_check
    _
  $region7: #{model_forward.11} parent=0 // pred_check_branch
    %11 = sbr.rel (0) target = $region9
  $region8: #{model_forward.11} parent=0 // pred_region
    _
  $region9: #{model_forward.11} parent=0 // pred_fallthru
    _
  // Predicated region
  $region10: #{model_forward.11} parent=0 // pred_check
    _
  $region11: #{model_forward.11} parent=0 // pred_check_branch
    %13 = sbr.rel (0) target = $region13
  $region12: #{model_forward.11} parent=0 // pred_region
    _
  $region13: #{model_forward.11} parent=0 // pred_fallthru
    _
  %v15 = vld [vmem:[%s0] sm:$0xf]
  %v16 = vld [vmem:[%s0 + $0x4] sm:$0xf]
  %v17 = vld [vmem:[%s1] sm:$0xf]
  %v18 = vld [vmem:[%s1 + $0x4] sm:$0xf]
  %v19 = vld [vmem:[%s1 + $0x8] sm:$0xf]
  %v20 = vld [vmem:[%s1 + $0xc] sm:$0xf]
  %v21 = vld [vmem:[%s2] sm:$0x1]
  %v23 = vperm.slane %v21, 0
  %v27 = vunpack.c.l.b16 %v15
  %v28 = vunpack.c.l.b16 %v16
  %v29 = vpack.c.b16 %v28, %v27
  %v34 = vunpack.c.l.b16 %v17
  %v35 = vunpack.c.l.b16 %v18
  %v36 = vunpack.c.l.b16 %v19
  %v37 = vunpack.c.l.b16 %v20
  %v38 = vpack.c.b16 %v35, %v34
  %v39 = vpack.c.b16 %v37, %v36
  %vm42 = vcmask 261120
  %v44 = vsel %vm42, %v29, 0
  %46 = vmatpush.bf16.msra.mxu0 0
  %47 = vmatpush.bf16.msra.mxu0 0
  %48 = vmatpush.bf16.msra.mxu0 0
  %49 = vmatpush.bf16.msra.mxu0 0
  %50 = vmatpush.bf16.msra.mxu0 0
  %51 = vmatpush.bf16.msra.mxu0 0
  %52 = vmatpush.bf16.msra.mxu0 %v39
  %53 = vmatpush.bf16.msra.mxu0 %v38
  %54 = vmatmul.bf16.gmra.mxu0 %v44
  %v55 = vpop.f32.mrf.mxu0
  %v56 = vadd.f32 %v23, %v55
  %v57 = vpop.f32.mrf.mxu0
  %v58 = vadd.f32 %v23, %v57
  %59 = vdwg.mxu0
  %v60 = vpack.c.bf16 %v56, %v56
  %v61 = vpack.c.bf16 %v58, %v58
  %62 = vst [vmem:[%s3] sm:$0xf] %v60
  %63 = vst [vmem:[%s3 + $0x4] sm:$0xf] %v61
  // Predicated region
  $region14: #{model_forward.11} parent=0 // pred_check
    _
  $region15: #{model_forward.11} parent=0 // pred_check_branch
    %65 = sbr.rel (0) target = $region17
  $region16: #{model_forward.11} parent=0 // pred_region
    _
  $region17: #{model_forward.11} parent=0 // pred_fallthru
    _
  // Predicated region
  $region18: #{model_forward.11} parent=0 // pred_check
    _
  $region19: #{model_forward.11} parent=0 // pred_check_branch
    %67 = sbr.rel (0) target = $region21
  $region20: #{model_forward.11} parent=0 // pred_region
    _
  $region21: #{model_forward.11} parent=0 // pred_fallthru
    _

// kernel: model_forward.12
$region0: #{model_forward.12}
  #allocation0 [shape = 'u32[]', space=smem, size = 0x4, offset = 0x4, fixed_abs, tag = 'smem constant byte address 0x4 - core index']
  #allocation1 [shape = 'u32[72,128]{1,0:T(1,128)}', space=vmem, size = 0x9000, scoped, tag = 'internal scratch']
  #allocation2 [shape = 'f32[8,2,16]{2,1,0:T(2,128)}', space=vmem, size = 0x2000, scoped, tag = 'scratch operand']
  %s0 = inlined_call_operand.vmem [shape: bf16[8,2,128], index: 0, kind: input, shape index: {}]
  %s1 = inlined_call_operand.vmem [shape: bf16[2,16,64], index: 1, kind: input, shape index: {}]
  %s2 = inlined_call_operand.vmem [shape: bf16[8,2,32], index: 2, kind: output, shape index: {}]
  %s3 = sld [smem:[#allocation0]]
  $region32: #{model_forward.12} parent=0
    _
  %s5 = ssub.s32 1, %s3
  %s6 = scalar_select 0, %s5, %s3
  // Predicated region
  $region2: #{model_forward.12} parent=0 // pred_check
    _
  $region3: #{model_forward.12} parent=0 // pred_check_branch
    %8 = sbr.rel (0) target = $region5
  $region4: #{model_forward.12} parent=0 // pred_region
    _
  $region5: #{model_forward.12} parent=0 // pred_fallthru
    _
  // Predicated region
  $region6: #{model_forward.12} parent=0 // pred_check
    _
  $region7: #{model_forward.12} parent=0 // pred_check_branch
    %10 = sbr.rel (0) target = $region9
  $region8: #{model_forward.12} parent=0 // pred_region
    _
  $region9: #{model_forward.12} parent=0 // pred_fallthru
    _
  %v12 = vld [vmem:[%s1] sm:$0xf]
  %v13 = vld [vmem:[%s1 + $0x4] sm:$0xf]
  %s14 = scalar_lea.vmem %s1, 8
  %v15 = vld [vmem:[%s14] sm:$0xf]
  %v16 = vld [vmem:[%s14 + $0x4] sm:$0xf]
  loop: start=0, step=1, limit=8
  $region10: #{model_forward.12} parent=0 // loop_pre_header
    _
  $region11: #{model_forward.12} parent=0 // loop_header
    %s18 = sphi 0, %s22
    %p19 = scmp.ge.s32.totalorder %s18, 8
    %v23 = vphi 0.0, %v97
    %v24 = vphi 0.0, %v91
  $region12: #{model_forward.12} parent=0 // loop_header_branch
    %21 = sbr.rel (%p19) target = $region16
  $region13: #{model_forward.12} parent=0 // loop_body
    %s25 = ssub.s32 7, %s18
    %s26 = scalar_lea.vmem %s0, %s25
    %v27 = vld [vmem:[%s26] sm:$0x1]
    %v28 = vunpack.c.l.bf16 %v27
    %v29 = vpack.c.bf16 %v23, %v23
    %31 = vrot.lane.b32.xlu0 %v29, 16
    %v32 = vpop.permute.xlu0 %31
    %v35 = vunpack.c.l.b16 %v15
    %v36 = vunpack.c.l.b16 %v16
    %v37 = vpack.c.b16 %v36, %v35
    %vm39 = vcmask 130048
    %v41 = vsel %vm39, %v32, 0
    %43 = vmatpush.bf16.msra.mxu0 0
    %44 = vmatpush.bf16.msra.mxu0 0
    %45 = vmatpush.bf16.msra.mxu0 0
    %46 = vmatpush.bf16.msra.mxu0 0
    %47 = vmatpush.bf16.msra.mxu0 0
    %48 = vmatpush.bf16.msra.mxu0 0
    %49 = vmatpush.bf16.msra.mxu0 0
    %50 = vmatpush.bf16.msra.mxu0 %v37
    %51 = vmatmul.bf16.gmra.mxu0 %v41
    %v52 = vpop.f32.mrf.mxu0
    %v53 = vadd.f32 0.0, %v52
    %v54 = vpop.f32.mrf.mxu0
    %55 = vdwg.mxu0
    %57 = vrot.lane.b32.xlu0 %v53, 64
    %v58 = vpop.permute.xlu0 %57
    %v60 = vadd.f32 %v28, %v58
    %v61 = vxor.u32 %v60, 2147483648
    %v62 = vmul.f32 %v61, 1.442695
    %v63 = vpow.pop %v62
    %v64 = vadd.f32 %v63, 1.0
    %v65 = vrcp.pop %v64
    %v66 = vmul.f32 %v64, %v65
    %v67 = vsub.f32 1.0, %v66
    %v68 = vmul.f32 %v65, %v67
    %v69 = vadd.f32 %v65, %v68
    %vm70 = vweird.f32 %v64
    %vm71 = vweird.f32 %v65
    %vm72 = vmor %vm70, %vm71
    %v73 = vsel %vm72, %v65, %v69
    %v74 = vand.u32 2147483647, %v64
    %vm75 = vcmp.eq.f32.partialorder %v74, 8.507059e+37
    %v76 = vand.u32 %v64, 2147483648
    %v77 = vor.u32 1.1754944e-38, %v76
    %v78 = vsel %vm75, %v77, %v73
    %v79 = vmul.f32 1.0, %v78
    %v80 = vtanh.pop %v60
    %v81 = vmul.f32 %v79, %v24
    %83 = vrot.lane.b32.xlu0 %v80, 96
    %v84 = vpop.permute.xlu0 %83
    %v86 = vmul.f32 %v79, %v84
    %88 = vrot.lane.b32.xlu0 %v86, 16
    %v89 = vpop.permute.xlu0 %88
    %v91 = vadd.f32 %v81, %v89
    %v92 = vtanh.pop %v91
    %94 = vrot.lane.b32.xlu0 %v92, 32
    %v95 = vpop.permute.xlu0 %94
    %v97 = vmul.f32 %v79, %v95
    %99 = vst [vmem:[#allocation1] ss:$4 sm:$0xff] %v97
    %v100 = vld.sshfl [vmem:[#allocation1] sm:$0xff pattern:$0x73625140]
    %101 = vrot.lane.b32.xlu0 %v100, 16
    %v102 = vpop.permute.xlu0 %101
    %s104 = smul.u32 %s25, 2
    %s105 = scalar_lea.vmem [#allocation2], %s104
    %vm106 = vcmask 123904
    %107 = vst.msk [vmem:[%s105] sm:$0x3] %vm106, %v102
  $region14: #{model_forward.12} parent=0 // loop_footer
    %s22 = sadd.s32 1, %s18
  $region15: #{model_forward.12} parent=0 // loop_footer_branch
    %17 = sbr.rel target = $region11
  $region16: #{model_forward.12} parent=0 // loop_exit
    _
  loop: start=0, step=1, limit=8
  $region17: #{model_forward.12} parent=0 // loop_pre_header
    _
  $region18: #{model_forward.12} parent=0 // loop_header
    %s109 = sphi 0, %s113
    %p110 = scmp.ge.s32.totalorder %s109, 8
    %v114 = vphi 0.0, %v183
    %v115 = vphi 0.0, %v177
  $region19: #{model_forward.12} parent=0 // loop_header_branch
    %112 = sbr.rel (%p110) target = $region23
  $region20: #{model_forward.12} parent=0 // loop_body
    %s116 = scalar_lea.vmem %s0, %s109
    %v117 = vld [vmem:[%s116] sm:$0x1]
    %v118 = vunpack.c.l.bf16 %v117
    %v119 = vpack.c.bf16 %v114, %v114
    %121 = vrot.lane.b32.xlu0 %v119, 80
    %v122 = vpop.permute.xlu0 %121
    %v125 = vunpack.c.l.b16 %v12
    %v126 = vunpack.c.l.b16 %v13
    %v127 = vpack.c.b16 %v126, %v125
    %vm129 = vcmask 130048
    %v131 = vsel %vm129, %v122, 0
    %133 = vmatpush.bf16.msra.mxu0 0
    %134 = vmatpush.bf16.msra.mxu0 0
    %135 = vmatpush.bf16.msra.mxu0 0
    %136 = vmatpush.bf16.msra.mxu0 0
    %137 = vmatpush.bf16.msra.mxu0 0
    %138 = vmatpush.bf16.msra.mxu0 0
    %139 = vmatpush.bf16.msra.mxu0 0
    %140 = vmatpush.bf16.msra.mxu0 %v127
    %141 = vmatmul.bf16.gmra.mxu0 %v131
    %v142 = vpop.f32.mrf.mxu0
    %v143 = vadd.f32 0.0, %v142
    %v144 = vpop.f32.mrf.mxu0
    %145 = vdwg.mxu0
    %v146 = vadd.f32 %v118, %v143
    %v147 = vxor.u32 %v146, 2147483648
    %v148 = vmul.f32 %v147, 1.442695
    %v149 = vpow.pop %v148
    %v150 = vadd.f32 %v149, 1.0
    %v151 = vrcp.pop %v150
    %v152 = vmul.f32 %v150, %v151
    %v153 = vsub.f32 1.0, %v152
    %v154 = vmul.f32 %v151, %v153
    %v155 = vadd.f32 %v151, %v154
    %vm156 = vweird.f32 %v150
    %vm157 = vweird.f32 %v151
    %vm158 = vmor %vm156, %vm157
    %v159 = vsel %vm158, %v151, %v155
    %v160 = vand.u32 2147483647, %v150
    %vm161 = vcmp.eq.f32.partialorder %v160, 8.507059e+37
    %v162 = vand.u32 %v150, 2147483648
    %v163 = vor.u32 1.1754944e-38, %v162
    %v164 = vsel %vm161, %v163, %v159
    %v165 = vmul.f32 1.0, %v164
    %v166 = vtanh.pop %v146
    %v167 = vmul.f32 %v165, %v115
    %169 = vrot.lane.b32.xlu0 %v166, 96
    %v170 = vpop.permute.xlu0 %169
    %v172 = vmul.f32 %v165, %v170
    %174 = vrot.lane.b32.xlu0 %v172, 16
    %v175 = vpop.permute.xlu0 %174
    %v177 = vadd.f32 %v167, %v175
    %v178 = vtanh.pop %v177
    %180 = vrot.lane.b32.xlu0 %v178, 32
    %v181 = vpop.permute.xlu0 %180
    %v183 = vmul.f32 %v165, %v181
    %s184 = smul.u32 %s109, 2
    %s185 = scalar_lea.vmem [#allocation2], %s184
    %v186 = vld [vmem:[%s185] sm:$0x3]
    %188 = vst [vmem:[#allocation1] ss:$4 sm:$0xff] %v183
    %v189 = vld.sshfl [vmem:[#allocation1] sm:$0xff pattern:$0x73625140]
    %190 = vrot.lane.b32.xlu0 %v189, 80
    %v191 = vpop.permute.xlu0 %190
    %194 = vrot.lane.b32.xlu0 %v186, 16
    %v195 = vpop.permute.xlu0 %194
    %v197 = vsel %vm129, %v191, %v195
    %v198 = vpack.c.bf16 %v197, %v197
    %s199 = scalar_lea.vmem %s2, %s109
    %vm200 = vcmask 253952
    %201 = vst.msk [vmem:[%s199] sm:$0x1] %vm200, %v198
  $region21: #{model_forward.12} parent=0 // loop_footer
    %s113 = sadd.s32 1, %s109
  $region22: #{model_forward.12} parent=0 // loop_footer_branch
    %108 = sbr.rel target = $region18
  $region23: #{model_forward.12} parent=0 // loop_exit
    _
  // Predicated region
  $region24: #{model_forward.12} parent=0 // pred_check
    _
  $region25: #{model_forward.12} parent=0 // pred_check_branch
    %203 = sbr.rel (0) target = $region27
  $region26: #{model_forward.12} parent=0 // pred_region
    _
  $region27: #{model_forward.12} parent=0 // pred_fallthru
    _
  // Predicated region
  $region28: #{model_forward.12} parent=0 // pred_check
    _
  $region29: #{model_forward.12} parent=0 // pred_check_branch
    %205 = sbr.rel (0) target = $region31
  $region30: #{model_forward.12} parent=0 // pred_region
    _
  $region31: #{model_forward.12} parent=0 // pred_fallthru
    _

// kernel: model_forward.13
$region0: #{model_forward.13}
  #allocation0 [shape = 'u32[]', space=smem, size = 0x4, offset = 0x4, fixed_abs, tag = 'smem constant byte address 0x4 - core index']
  #allocation1 [shape = 'u32[72,128]{1,0:T(1,128)}', space=vmem, size = 0x9000, scoped, tag = 'internal scratch']
  %s0 = inlined_call_operand.vmem [shape: bf16[16,32], index: 0, kind: input, shape index: {}]
  %s1 = inlined_call_operand.hbm [shape: bf16[32,128], index: 1, kind: input, shape index: {}]
  %s2 = inlined_call_operand.vmem [shape: f32[1,128], index: 2, kind: input, shape index: {}]
  %s3 = inlined_call_operand.vmem [shape: bf16[16,128], index: 3, kind: output, shape index: {}]
  %s4 = sld [smem:[#allocation0]]
  $region26: #{model_forward.13} parent=0
    _
  %s6 = ssub.s32 1, %s4
  %s7 = scalar_select 0, %s6, %s4
  $region1: #{model_forward.13} parent=0
    #allocation2 [shape = 'u8[8192]{0}', space=vmem, size = 0x2000, scoped, tag = 'input window, operand 1, single buffered']
    #allocation3 [shape = 's32[1]{0}', space=sflag, size = 0x4, scoped, tag = 'scoped memory for model_forward.13']
    %8 = vsyncpa [#allocation3], 0
    // Predicated region
    $region2: #{model_forward.13} parent=1 // pred_check
      _
    $region3: #{model_forward.13} parent=1 // pred_check_branch
      %10 = sbr.rel (0) target = $region5
    $region4: #{model_forward.13} parent=1 // pred_region
      _
    $region5: #{model_forward.13} parent=1 // pred_fallthru
      _
    // Predicated region
    $region6: #{model_forward.13} parent=1 // pred_check
      _
    $region7: #{model_forward.13} parent=1 // pred_check_branch
      %12 = sbr.rel (0) target = $region9
    $region8: #{model_forward.13} parent=1 // pred_region
      %14 = vsyncadd [#allocation3], 0
      %s15 = sshll.u32 %s1, 4
      %s16 = int_to_ptr.hbm [resolvable:$true] %s15
      %s17 = sshll.u32 [#allocation2], 4
      %s18 = int_to_ptr.vmem [resolvable:$true] %s17
      %23 = dma.hbm_to_vmem [thread:$0]  %s16, 256, %s18, [#allocation3], 64, 64, 4
    $region9: #{model_forward.13} parent=1 // pred_fallthru
      _
    // Predicated region
    $region10: #{model_forward.13} parent=1 // pred_check
      _
    $region11: #{model_forward.13} parent=1 // pred_check_branch
      %25 = sbr.rel (0) target = $region13
    $region12: #{model_forward.13} parent=1 // pred_region
      _
    $region13: #{model_forward.13} parent=1 // pred_fallthru
      _
    // Predicated region
    $region14: #{model_forward.13} parent=1 // pred_check
      _
    $region15: #{model_forward.13} parent=1 // pred_check_branch
      %27 = sbr.rel (0) target = $region17
    $region16: #{model_forward.13} parent=1 // pred_region
      %29 = dma.done [#allocation3], 256
    $region17: #{model_forward.13} parent=1 // pred_fallthru
      _
    %v31 = vld [vmem:[%s0] sm:$0xf]
    %v32 = vld [vmem:[%s0 + $0x4] sm:$0xf]
    %v33 = vld [vmem:[#allocation2] sm:$0xf]
    %v34 = vld [vmem:[#allocation2 + $0x4] sm:$0xf]
    %v35 = vld [vmem:[#allocation2 + $0x8] sm:$0xf]
    %v36 = vld [vmem:[#allocation2 + $0xc] sm:$0xf]
    %v37 = vld [vmem:[%s2] sm:$0x1]
    %v39 = vperm.slane %v37, 0
    %v43 = vunpack.c.l.b16 %v31
    %v44 = vunpack.c.l.b16 %v32
    %v45 = vpack.c.b16 %v44, %v43
    %v50 = vunpack.c.l.b16 %v33
    %v51 = vunpack.c.l.b16 %v34
    %v52 = vunpack.c.l.b16 %v35
    %v53 = vunpack.c.l.b16 %v36
    %v54 = vpack.c.b16 %v51, %v50
    %v55 = vpack.c.b16 %v53, %v52
    %vm58 = vcmask 261120
    %v60 = vsel %vm58, %v45, 0
    %62 = vmatpush.bf16.msra.mxu0 0
    %63 = vmatpush.bf16.msra.mxu0 0
    %64 = vmatpush.bf16.msra.mxu0 0
    %65 = vmatpush.bf16.msra.mxu0 0
    %66 = vmatpush.bf16.msra.mxu0 0
    %67 = vmatpush.bf16.msra.mxu0 0
    %68 = vmatpush.bf16.msra.mxu0 %v55
    %69 = vmatpush.bf16.msra.mxu0 %v54
    %70 = vmatmul.bf16.gmra.mxu0 %v60
    %v71 = vpop.f32.mrf.mxu0
    %v72 = vadd.f32 %v39, %v71
    %v73 = vpop.f32.mrf.mxu0
    %v74 = vadd.f32 %v39, %v73
    %75 = vdwg.mxu0
    %v76 = vpack.c.bf16 %v72, %v72
    %v77 = vpack.c.bf16 %v74, %v74
    %78 = vst [vmem:[%s3] sm:$0xf] %v76
    %79 = vst [vmem:[%s3 + $0x4] sm:$0xf] %v77
    // Predicated region
    $region18: #{model_forward.13} parent=1 // pred_check
      _
    $region19: #{model_forward.13} parent=1 // pred_check_branch
      %81 = sbr.rel (0) target = $region21
    $region20: #{model_forward.13} parent=1 // pred_region
      _
    $region21: #{model_forward.13} parent=1 // pred_fallthru
      _
    // Predicated region
    $region22: #{model_forward.13} parent=1 // pred_check
      _
    $region23: #{model_forward.13} parent=1 // pred_check_branch
      %83 = sbr.rel (0) target = $region25
    $region24: #{model_forward.13} parent=1 // pred_region
      _
    $region25: #{model_forward.13} parent=1 // pred_fallthru
      _
    %84 = vsyncpa [#allocation3], 1

// kernel: model_forward.14
$region0: #{model_forward.14}
  #allocation0 [shape = 'u32[]', space=smem, size = 0x4, offset = 0x4, fixed_abs, tag = 'smem constant byte address 0x4 - core index']
  #allocation1 [shape = 'u32[72,128]{1,0:T(1,128)}', space=vmem, size = 0x9000, scoped, tag = 'internal scratch']
  #allocation2 [shape = 'f32[8,2,16]{2,1,0:T(2,128)}', space=vmem, size = 0x2000, scoped, tag = 'scratch operand']
  %s0 = inlined_call_operand.vmem [shape: bf16[8,2,128], index: 0, kind: input, shape index: {}]
  %s1 = inlined_call_operand.hbm [shape: bf16[2,16,64], index: 1, kind: input, shape index: {}]
  %s2 = inlined_call_operand.vmem [shape: bf16[8,2,32], index: 2, kind: output, shape index: {}]
  %s3 = sld [smem:[#allocation0]]
  $region36: #{model_forward.14} parent=0
    _
  %s5 = ssub.s32 1, %s3
  %s6 = scalar_select 0, %s5, %s3
  $region1: #{model_forward.14} parent=0
    #allocation3 [shape = 'u8[8192]{0}', space=vmem, size = 0x2000, scoped, tag = 'input window, operand 1, single buffered']
    #allocation4 [shape = 's32[1]{0}', space=sflag, size = 0x4, scoped, tag = 'scoped memory for model_forward.14']
    %7 = vsyncpa [#allocation4], 0
    // Predicated region
    $region2: #{model_forward.14} parent=1 // pred_check
      _
    $region3: #{model_forward.14} parent=1 // pred_check_branch
      %9 = sbr.rel (0) target = $region5
    $region4: #{model_forward.14} parent=1 // pred_region
      _
    $region5: #{model_forward.14} parent=1 // pred_fallthru
      _
    // Predicated region
    $region6: #{model_forward.14} parent=1 // pred_check
      _
    $region7: #{model_forward.14} parent=1 // pred_check_branch
      %11 = sbr.rel (0) target = $region9
    $region8: #{model_forward.14} parent=1 // pred_region
      %13 = vsyncadd [#allocation4], 0
      %s14 = sshll.u32 %s1, 4
      %s15 = int_to_ptr.hbm [resolvable:$true] %s14
      %s16 = sshll.u32 [#allocation3], 4
      %s17 = int_to_ptr.vmem [resolvable:$true] %s16
      %22 = dma.hbm_to_vmem [thread:$0]  %s15, 256, %s17, [#allocation4], 64, 64, 4
    $region9: #{model_forward.14} parent=1 // pred_fallthru
      _
    // Predicated region
    $region10: #{model_forward.14} parent=1 // pred_check
      _
    $region11: #{model_forward.14} parent=1 // pred_check_branch
      %24 = sbr.rel (0) target = $region13
    $region12: #{model_forward.14} parent=1 // pred_region
      %26 = dma.done [#allocation4], 256
    $region13: #{model_forward.14} parent=1 // pred_fallthru
      _
    %v28 = vld [vmem:[#allocation3] sm:$0xf]
    %v29 = vld [vmem:[#allocation3 + $0x4] sm:$0xf]
    %s30 = scalar_lea.vmem [#allocation3], 8
    %v31 = vld [vmem:[%s30] sm:$0xf]
    %v32 = vld [vmem:[%s30 + $0x4] sm:$0xf]
    loop: start=0, step=1, limit=8
    $region14: #{model_forward.14} parent=1 // loop_pre_header
      _
    $region15: #{model_forward.14} parent=1 // loop_header
      %s34 = sphi 0, %s38
      %p35 = scmp.ge.s32.totalorder %s34, 8
      %v39 = vphi 0.0, %v113
      %v40 = vphi 0.0, %v107
    $region16: #{model_forward.14} parent=1 // loop_header_branch
      %37 = sbr.rel (%p35) target = $region20
    $region17: #{model_forward.14} parent=1 // loop_body
      %s41 = ssub.s32 7, %s34
      %s42 = scalar_lea.vmem %s0, %s41
      %v43 = vld [vmem:[%s42] sm:$0x1]
      %v44 = vunpack.c.l.bf16 %v43
      %v45 = vpack.c.bf16 %v39, %v39
      %47 = vrot.lane.b32.xlu0 %v45, 16
      %v48 = vpop.permute.xlu0 %47
      %v51 = vunpack.c.l.b16 %v31
      %v52 = vunpack.c.l.b16 %v32
      %v53 = vpack.c.b16 %v52, %v51
      %vm55 = vcmask 130048
      %v57 = vsel %vm55, %v48, 0
      %59 = vmatpush.bf16.msra.mxu0 0
      %60 = vmatpush.bf16.msra.mxu0 0
      %61 = vmatpush.bf16.msra.mxu0 0
      %62 = vmatpush.bf16.msra.mxu0 0
      %63 = vmatpush.bf16.msra.mxu0 0
      %64 = vmatpush.bf16.msra.mxu0 0
      %65 = vmatpush.bf16.msra.mxu0 0
      %66 = vmatpush.bf16.msra.mxu0 %v53
      %67 = vmatmul.bf16.gmra.mxu0 %v57
      %v68 = vpop.f32.mrf.mxu0
      %v69 = vadd.f32 0.0, %v68
      %v70 = vpop.f32.mrf.mxu0
      %71 = vdwg.mxu0
      %73 = vrot.lane.b32.xlu0 %v69, 64
      %v74 = vpop.permute.xlu0 %73
      %v76 = vadd.f32 %v44, %v74
      %v77 = vxor.u32 %v76, 2147483648
      %v78 = vmul.f32 %v77, 1.442695
      %v79 = vpow.pop %v78
      %v80 = vadd.f32 %v79, 1.0
      %v81 = vrcp.pop %v80
      %v82 = vmul.f32 %v80, %v81
      %v83 = vsub.f32 1.0, %v82
      %v84 = vmul.f32 %v81, %v83
      %v85 = vadd.f32 %v81, %v84
      %vm86 = vweird.f32 %v80
      %vm87 = vweird.f32 %v81
      %vm88 = vmor %vm86, %vm87
      %v89 = vsel %vm88, %v81, %v85
      %v90 = vand.u32 2147483647, %v80
      %vm91 = vcmp.eq.f32.partialorder %v90, 8.507059e+37
      %v92 = vand.u32 %v80, 2147483648
      %v93 = vor.u32 1.1754944e-38, %v92
      %v94 = vsel %vm91, %v93, %v89
      %v95 = vmul.f32 1.0, %v94
      %v96 = vtanh.pop %v76
      %v97 = vmul.f32 %v95, %v40
      %99 = vrot.lane.b32.xlu0 %v96, 96
      %v100 = vpop.permute.xlu0 %99
      %v102 = vmul.f32 %v95, %v100
      %104 = vrot.lane.b32.xlu0 %v102, 16
      %v105 = vpop.permute.xlu0 %104
      %v107 = vadd.f32 %v97, %v105
      %v108 = vtanh.pop %v107
      %110 = vrot.lane.b32.xlu0 %v108, 32
      %v111 = vpop.permute.xlu0 %110
      %v113 = vmul.f32 %v95, %v111
      %115 = vst [vmem:[#allocation1] ss:$4 sm:$0xff] %v113
      %v116 = vld.sshfl [vmem:[#allocation1] sm:$0xff pattern:$0x73625140]
      %117 = vrot.lane.b32.xlu0 %v116, 16
      %v118 = vpop.permute.xlu0 %117
      %s120 = smul.u32 %s41, 2
      %s121 = scalar_lea.vmem [#allocation2], %s120
      %vm122 = vcmask 123904
      %123 = vst.msk [vmem:[%s121] sm:$0x3] %vm122, %v118
    $region18: #{model_forward.14} parent=1 // loop_footer
      %s38 = sadd.s32 1, %s34
    $region19: #{model_forward.14} parent=1 // loop_footer_branch
      %33 = sbr.rel target = $region15
    $region20: #{model_forward.14} parent=1 // loop_exit
      _
    loop: start=0, step=1, limit=8
    $region21: #{model_forward.14} parent=1 // loop_pre_header
      _
    $region22: #{model_forward.14} parent=1 // loop_header
      %s125 = sphi 0, %s129
      %p126 = scmp.ge.s32.totalorder %s125, 8
      %v130 = vphi 0.0, %v199
      %v131 = vphi 0.0, %v193
    $region23: #{model_forward.14} parent=1 // loop_header_branch
      %128 = sbr.rel (%p126) target = $region27
    $region24: #{model_forward.14} parent=1 // loop_body
      %s132 = scalar_lea.vmem %s0, %s125
      %v133 = vld [vmem:[%s132] sm:$0x1]
      %v134 = vunpack.c.l.bf16 %v133
      %v135 = vpack.c.bf16 %v130, %v130
      %137 = vrot.lane.b32.xlu0 %v135, 80
      %v138 = vpop.permute.xlu0 %137
      %v141 = vunpack.c.l.b16 %v28
      %v142 = vunpack.c.l.b16 %v29
      %v143 = vpack.c.b16 %v142, %v141
      %vm145 = vcmask 130048
      %v147 = vsel %vm145, %v138, 0
      %149 = vmatpush.bf16.msra.mxu0 0
      %150 = vmatpush.bf16.msra.mxu0 0
      %151 = vmatpush.bf16.msra.mxu0 0
      %152 = vmatpush.bf16.msra.mxu0 0
      %153 = vmatpush.bf16.msra.mxu0 0
      %154 = vmatpush.bf16.msra.mxu0 0
      %155 = vmatpush.bf16.msra.mxu0 0
      %156 = vmatpush.bf16.msra.mxu0 %v143
      %157 = vmatmul.bf16.gmra.mxu0 %v147
      %v158 = vpop.f32.mrf.mxu0
      %v159 = vadd.f32 0.0, %v158
      %v160 = vpop.f32.mrf.mxu0
      %161 = vdwg.mxu0
      %v162 = vadd.f32 %v134, %v159
      %v163 = vxor.u32 %v162, 2147483648
      %v164 = vmul.f32 %v163, 1.442695
      %v165 = vpow.pop %v164
      %v166 = vadd.f32 %v165, 1.0
      %v167 = vrcp.pop %v166
      %v168 = vmul.f32 %v166, %v167
      %v169 = vsub.f32 1.0, %v168
      %v170 = vmul.f32 %v167, %v169
      %v171 = vadd.f32 %v167, %v170
      %vm172 = vweird.f32 %v166
      %vm173 = vweird.f32 %v167
      %vm174 = vmor %vm172, %vm173
      %v175 = vsel %vm174, %v167, %v171
      %v176 = vand.u32 2147483647, %v166
      %vm177 = vcmp.eq.f32.partialorder %v176, 8.507059e+37
      %v178 = vand.u32 %v166, 2147483648
      %v179 = vor.u32 1.1754944e-38, %v178
      %v180 = vsel %vm177, %v179, %v175
      %v181 = vmul.f32 1.0, %v180
      %v182 = vtanh.pop %v162
      %v183 = vmul.f32 %v181, %v131
      %185 = vrot.lane.b32.xlu0 %v182, 96
      %v186 = vpop.permute.xlu0 %185
      %v188 = vmul.f32 %v181, %v186
      %190 = vrot.lane.b32.xlu0 %v188, 16
      %v191 = vpop.permute.xlu0 %190
      %v193 = vadd.f32 %v183, %v191
      %v194 = vtanh.pop %v193
      %196 = vrot.lane.b32.xlu0 %v194, 32
      %v197 = vpop.permute.xlu0 %196
      %v199 = vmul.f32 %v181, %v197
      %s200 = smul.u32 %s125, 2
      %s201 = scalar_lea.vmem [#allocation2], %s200
      %v202 = vld [vmem:[%s201] sm:$0x3]
      %204 = vst [vmem:[#allocation1] ss:$4 sm:$0xff] %v199
      %v205 = vld.sshfl [vmem:[#allocation1] sm:$0xff pattern:$0x73625140]
      %206 = vrot.lane.b32.xlu0 %v205, 80
      %v207 = vpop.permute.xlu0 %206
      %210 = vrot.lane.b32.xlu0 %v202, 16
      %v211 = vpop.permute.xlu0 %210
      %v213 = vsel %vm145, %v207, %v211
      %v214 = vpack.c.bf16 %v213, %v213
      %s215 = scalar_lea.vmem %s2, %s125
      %vm216 = vcmask 253952
      %217 = vst.msk [vmem:[%s215] sm:$0x1] %vm216, %v214
    $region25: #{model_forward.14} parent=1 // loop_footer
      %s129 = sadd.s32 1, %s125
    $region26: #{model_forward.14} parent=1 // loop_footer_branch
      %124 = sbr.rel target = $region22
    $region27: #{model_forward.14} parent=1 // loop_exit
      _
    // Predicated region
    $region28: #{model_forward.14} parent=1 // pred_check
      _
    $region29: #{model_forward.14} parent=1 // pred_check_branch
      %219 = sbr.rel (0) target = $region31
    $region30: #{model_forward.14} parent=1 // pred_region
      _
    $region31: #{model_forward.14} parent=1 // pred_fallthru
      _
    // Predicated region
    $region32: #{model_forward.14} parent=1 // pred_check
      _
    $region33: #{model_forward.14} parent=1 // pred_check_branch
      %221 = sbr.rel (0) target = $region35
    $region34: #{model_forward.14} parent=1 // pred_region
      _
    $region35: #{model_forward.14} parent=1 // pred_fallthru
      _
    %222 = vsyncpa [#allocation4], 1

// kernel: model_forward.15
$region0: #{model_forward.15}
  #allocation0 [shape = 'u32[]', space=smem, size = 0x4, offset = 0x4, fixed_abs, tag = 'smem constant byte address 0x4 - core index']
  #allocation1 [shape = 'u32[72,128]{1,0:T(1,128)}', space=vmem, size = 0x9000, scoped, tag = 'internal scratch']
  %s0 = inlined_call_operand.vmem [shape: bf16[16,32], index: 0, kind: input, shape index: {}]
  %s1 = inlined_call_operand.hbm [shape: bf16[32,128], index: 1, kind: input, shape index: {}]
  %s2 = inlined_call_operand.hbm [shape: f32[1,128], index: 2, kind: input, shape index: {}]
  %s3 = inlined_call_operand.vmem [shape: bf16[16,128], index: 3, kind: output, shape index: {}]
  %s4 = sld [smem:[#allocation0]]
  $region30: #{model_forward.15} parent=0
    _
  %s6 = ssub.s32 1, %s4
  %s7 = scalar_select 0, %s6, %s4
  $region1: #{model_forward.15} parent=0
    #allocation2 [shape = 'u8[8192]{0}', space=vmem, size = 0x2000, scoped, tag = 'input window, operand 1, single buffered']
    #allocation3 [shape = 's32[1]{0}', space=sflag, size = 0x4, scoped, tag = 'scoped memory for model_forward.15']
    #allocation4 [shape = 'u8[512]{0}', space=vmem, size = 0x400, scoped, tag = 'input window, operand 2, single buffered']
    #allocation5 [shape = 's32[1]{0}', space=sflag, size = 0x4, scoped, tag = 'scoped memory for model_forward.15']
    %8 = vsyncpa [#allocation3], 0
    %9 = vsyncpa [#allocation5], 0
    // Predicated region
    $region2: #{model_forward.15} parent=1 // pred_check
      _
    $region3: #{model_forward.15} parent=1 // pred_check_branch
      %11 = sbr.rel (0) target = $region5
    $region4: #{model_forward.15} parent=1 // pred_region
      _
    $region5: #{model_forward.15} parent=1 // pred_fallthru
      _
    // Predicated region
    $region6: #{model_forward.15} parent=1 // pred_check
      _
    $region7: #{model_forward.15} parent=1 // pred_check_branch
      %13 = sbr.rel (0) target = $region9
    $region8: #{model_forward.15} parent=1 // pred_region
      %15 = vsyncadd [#allocation3], 0
      %s16 = sshll.u32 %s1, 4
      %s17 = int_to_ptr.hbm [resolvable:$true] %s16
      %s18 = sshll.u32 [#allocation2], 4
      %s19 = int_to_ptr.vmem [resolvable:$true] %s18
      %24 = dma.hbm_to_vmem [thread:$0]  %s17, 256, %s19, [#allocation3], 64, 64, 4
    $region9: #{model_forward.15} parent=1 // pred_fallthru
      _
    // Predicated region
    $region10: #{model_forward.15} parent=1 // pred_check
      _
    $region11: #{model_forward.15} parent=1 // pred_check_branch
      %26 = sbr.rel (0) target = $region13
    $region12: #{model_forward.15} parent=1 // pred_region
      %28 = vsyncadd [#allocation5], 0
      %s30 = sshll.u32 %s2, 4
      %s31 = int_to_ptr.hbm [resolvable:$true] %s30
      %s32 = sshll.u32 [#allocation4], 4
      %s33 = int_to_ptr.vmem [resolvable:$true] %s32
      %35 = dma.hbm_to_vmem [thread:$0]  %s31, 16, %s33, [#allocation5]
    $region13: #{model_forward.15} parent=1 // pred_fallthru
      _
    // Predicated region
    $region14: #{model_forward.15} parent=1 // pred_check
      _
    $region15: #{model_forward.15} parent=1 // pred_check_branch
      %37 = sbr.rel (0) target = $region17
    $region16: #{model_forward.15} parent=1 // pred_region
      %39 = dma.done [#allocation3], 256
    $region17: #{model_forward.15} parent=1 // pred_fallthru
      _
    // Predicated region
    $region18: #{model_forward.15} parent=1 // pred_check
      _
    $region19: #{model_forward.15} parent=1 // pred_check_branch
      %41 = sbr.rel (0) target = $region21
    $region20: #{model_forward.15} parent=1 // pred_region
      %43 = dma.done [#allocation5], 16
    $region21: #{model_forward.15} parent=1 // pred_fallthru
      _
    %v45 = vld [vmem:[%s0] sm:$0xf]
    %v46 = vld [vmem:[%s0 + $0x4] sm:$0xf]
    %v47 = vld [vmem:[#allocation2] sm:$0xf]
    %v48 = vld [vmem:[#allocation2 + $0x4] sm:$0xf]
    %v49 = vld [vmem:[#allocation2 + $0x8] sm:$0xf]
    %v50 = vld [vmem:[#allocation2 + $0xc] sm:$0xf]
    %v51 = vld [vmem:[#allocation4] sm:$0x1]
    %v53 = vperm.slane %v51, 0
    %v57 = vunpack.c.l.b16 %v45
    %v58 = vunpack.c.l.b16 %v46
    %v59 = vpack.c.b16 %v58, %v57
    %v64 = vunpack.c.l.b16 %v47
    %v65 = vunpack.c.l.b16 %v48
    %v66 = vunpack.c.l.b16 %v49
    %v67 = vunpack.c.l.b16 %v50
    %v68 = vpack.c.b16 %v65, %v64
    %v69 = vpack.c.b16 %v67, %v66
    %vm72 = vcmask 261120
    %v74 = vsel %vm72, %v59, 0
    %76 = vmatpush.bf16.msra.mxu0 0
    %77 = vmatpush.bf16.msra.mxu0 0
    %78 = vmatpush.bf16.msra.mxu0 0
    %79 = vmatpush.bf16.msra.mxu0 0
    %80 = vmatpush.bf16.msra.mxu0 0
    %81 = vmatpush.bf16.msra.mxu0 0
    %82 = vmatpush.bf16.msra.mxu0 %v69
    %83 = vmatpush.bf16.msra.mxu0 %v68
    %84 = vmatmul.bf16.gmra.mxu0 %v74
    %v85 = vpop.f32.mrf.mxu0
    %v86 = vadd.f32 %v53, %v85
    %v87 = vpop.f32.mrf.mxu0
    %v88 = vadd.f32 %v53, %v87
    %89 = vdwg.mxu0
    %v90 = vpack.c.bf16 %v86, %v86
    %v91 = vpack.c.bf16 %v88, %v88
    %92 = vst [vmem:[%s3] sm:$0xf] %v90
    %93 = vst [vmem:[%s3 + $0x4] sm:$0xf] %v91
    // Predicated region
    $region22: #{model_forward.15} parent=1 // pred_check
      _
    $region23: #{model_forward.15} parent=1 // pred_check_branch
      %95 = sbr.rel (0) target = $region25
    $region24: #{model_forward.15} parent=1 // pred_region
      _
    $region25: #{model_forward.15} parent=1 // pred_fallthru
      _
    // Predicated region
    $region26: #{model_forward.15} parent=1 // pred_check
      _
    $region27: #{model_forward.15} parent=1 // pred_check_branch
      %97 = sbr.rel (0) target = $region29
    $region28: #{model_forward.15} parent=1 // pred_region
      _
    $region29: #{model_forward.15} parent=1 // pred_fallthru
      _
    %98 = vsyncpa [#allocation3], 1
    %99 = vsyncpa [#allocation5], 1

// kernel: model_forward.21
$region0: #{model_forward.21}
  #allocation0 [shape = 'u32[]', space=smem, size = 0x4, offset = 0x4, fixed_abs, tag = 'smem constant byte address 0x4 - core index']
  #allocation1 [shape = 'u32[72,128]{1,0:T(1,128)}', space=vmem, size = 0x9000, scoped, tag = 'internal scratch']
  %s0 = inlined_call_operand.vmem [shape: bf16[8,2,64], index: 0, kind: input, shape index: {}]
  %s1 = inlined_call_operand.vmem [shape: bf16[64,512], index: 1, kind: input, shape index: {}]
  %s2 = inlined_call_operand.vmem [shape: f32[1,512], index: 2, kind: input, shape index: {}]
  %s3 = inlined_call_operand.hbm [shape: bf16[512,256], index: 3, kind: input, shape index: {}]
  %s4 = inlined_call_operand.vmem [shape: f32[1,256], index: 4, kind: input, shape index: {}]
  %s5 = inlined_call_operand.hbm [shape: bf16[256,128], index: 5, kind: input, shape index: {}]
  %s6 = inlined_call_operand.vmem [shape: f32[1,128], index: 6, kind: input, shape index: {}]
  %s7 = inlined_call_operand.vmem [shape: bf16[128,5], index: 7, kind: input, shape index: {}]
  %s8 = inlined_call_operand.vmem [shape: f32[1,5], index: 8, kind: input, shape index: {}]
  %s9 = inlined_call_operand.hbm [shape: f32[2,5], index: 9, kind: output, shape index: {}]
  %s10 = sld [smem:[#allocation0]]
  $region54: #{model_forward.21} parent=0
    _
  %s12 = ssub.s32 1, %s10
  %s13 = scalar_select 0, %s12, %s10
  $region1: #{model_forward.21} parent=0
    #allocation2 [shape = 'u8[262144]{0}', space=vmem, size = 0x40000, scoped, tag = 'input window, operand 3, single buffered']
    #allocation3 [shape = 's32[1]{0}', space=sflag, size = 0x4, scoped, tag = 'scoped memory for model_forward.21']
    #allocation4 [shape = 's32[1]{0}', space=sflag, size = 0x4, scoped, tag = 'scoped memory for model_forward.21']
    #allocation5 [shape = 'u8[65536]{0}', space=vmem, size = 0x10000, scoped, tag = 'input window, operand 5, single buffered']
    #allocation6 [shape = 's32[1]{0}', space=sflag, size = 0x4, scoped, tag = 'scoped memory for model_forward.21']
    #allocation7 [shape = 'u8[1024]{0}', space=vmem, size = 0x400, scoped, tag = 'output window, operand 0, single buffered']
    %14 = vsyncpa [#allocation3], 0
    %15 = vsyncpa [#allocation6], 0
    %16 = vsyncpa [#allocation4], 0
    // Predicated region
    $region2: #{model_forward.21} parent=1 // pred_check
      _
    $region3: #{model_forward.21} parent=1 // pred_check_branch
      %18 = sbr.rel (0) target = $region5
    $region4: #{model_forward.21} parent=1 // pred_region
      %s19 = scalar_lea.vmem %s0, 7
    $region5: #{model_forward.21} parent=1 // pred_fallthru
      _
    // Predicated region
    $region6: #{model_forward.21} parent=1 // pred_check
      _
    $region7: #{model_forward.21} parent=1 // pred_check_branch
      %21 = sbr.rel (0) target = $region9
    $region8: #{model_forward.21} parent=1 // pred_region
      _
    $region9: #{model_forward.21} parent=1 // pred_fallthru
      _
    // Predicated region
    $region10: #{model_forward.21} parent=1 // pred_check
      _
    $region11: #{model_forward.21} parent=1 // pred_check_branch
      %23 = sbr.rel (0) target = $region13
    $region12: #{model_forward.21} parent=1 // pred_region
      _
    $region13: #{model_forward.21} parent=1 // pred_fallthru
      _
    // Predicated region
    $region14: #{model_forward.21} parent=1 // pred_check
      _
    $region15: #{model_forward.21} parent=1 // pred_check_branch
      %25 = sbr.rel (0) target = $region17
    $region16: #{model_forward.21} parent=1 // pred_region
      %27 = vsyncadd [#allocation3], 0
      %s28 = sshll.u32 %s3, 4
      %s29 = int_to_ptr.hbm [resolvable:$true] %s28
      %s30 = sshll.u32 [#allocation2], 4
      %s31 = int_to_ptr.vmem [resolvable:$true] %s30
      %36 = dma.hbm_to_vmem [thread:$0]  %s29, 8192, %s31, [#allocation3], 128, 128, 8
    $region17: #{model_forward.21} parent=1 // pred_fallthru
      _
    // Predicated region
    $region18: #{model_forward.21} parent=1 // pred_check
      _
    $region19: #{model_forward.21} parent=1 // pred_check_branch
      %38 = sbr.rel (0) target = $region21
    $region20: #{model_forward.21} parent=1 // pred_region
      _
    $region21: #{model_forward.21} parent=1 // pred_fallthru
      _
    // Predicated region
    $region22: #{model_forward.21} parent=1 // pred_check
      _
    $region23: #{model_forward.21} parent=1 // pred_check_branch
      %40 = sbr.rel (0) target = $region25
    $region24: #{model_forward.21} parent=1 // pred_region
      %42 = vsyncadd [#allocation6], 0
      %s43 = sshll.u32 %s5, 4
      %s44 = int_to_ptr.hbm [resolvable:$true] %s43
      %s45 = sshll.u32 [#allocation5], 4
      %s46 = int_to_ptr.vmem [resolvable:$true] %s45
      %51 = dma.hbm_to_vmem [thread:$0]  %s44, 2048, %s46, [#allocation6], 64, 64, 4
    $region25: #{model_forward.21} parent=1 // pred_fallthru
      _
    // Predicated region
    $region26: #{model_forward.21} parent=1 // pred_check
      _
    $region27: #{model_forward.21} parent=1 // pred_check_branch
      %53 = sbr.rel (0) target = $region29
    $region28: #{model_forward.21} parent=1 // pred_region
      _
    $region29: #{model_forward.21} parent=1 // pred_fallthru
      _
    // Predicated region
    $region30: #{model_forward.21} parent=1 // pred_check
      _
    $region31: #{model_forward.21} parent=1 // pred_check_branch
      %55 = sbr.rel (0) target = $region33
    $region32: #{model_forward.21} parent=1 // pred_region
      _
    $region33: #{model_forward.21} parent=1 // pred_fallthru
      _
    // Predicated region
    $region34: #{model_forward.21} parent=1 // pred_check
      _
    $region35: #{model_forward.21} parent=1 // pred_check_branch
      %57 = sbr.rel (0) target = $region37
    $region36: #{model_forward.21} parent=1 // pred_region
      _
    $region37: #{model_forward.21} parent=1 // pred_fallthru
      _
    // Predicated region
    $region38: #{model_forward.21} parent=1 // pred_check
      _
    $region39: #{model_forward.21} parent=1 // pred_check_branch
      %59 = sbr.rel (0) target = $region41
    $region40: #{model_forward.21} parent=1 // pred_region
      %61 = dma.done [#allocation3], 8192
    $region41: #{model_forward.21} parent=1 // pred_fallthru
      _
    // Predicated region
    $region42: #{model_forward.21} parent=1 // pred_check
      _
    $region43: #{model_forward.21} parent=1 // pred_check_branch
      %63 = sbr.rel (0) target = $region45
    $region44: #{model_forward.21} parent=1 // pred_region
      %65 = dma.done [#allocation6], 2048
    $region45: #{model_forward.21} parent=1 // pred_fallthru
      _
    %s66 = scalar_lea.vmem %s0, 7
    %s67 = scalar_lea.vmem %s0, 7
    %v69 = vld [vmem:[%s67] sm:$0x1]
    %v70 = vld [vmem:[%s1] sm:$0xff]
    %v71 = vld [vmem:[%s1 + $0x8] sm:$0xff]
    %v72 = vld [vmem:[%s1 + $0x10] sm:$0xff]
    %v73 = vld [vmem:[%s1 + $0x18] sm:$0xff]
    %v74 = vld [vmem:[%s1 + $0x20] sm:$0xff]
    %v75 = vld [vmem:[%s1 + $0x28] sm:$0xff]
    %v76 = vld [vmem:[%s1 + $0x30] sm:$0xff]
    %v77 = vld [vmem:[%s1 + $0x38] sm:$0xff]
    %v78 = vld [vmem:[%s1 + $0x40] sm:$0xff]
    %v79 = vld [vmem:[%s1 + $0x48] sm:$0xff]
    %v80 = vld [vmem:[%s1 + $0x50] sm:$0xff]
    %v81 = vld [vmem:[%s1 + $0x58] sm:$0xff]
    %v82 = vld [vmem:[%s1 + $0x60] sm:$0xff]
    %v83 = vld [vmem:[%s1 + $0x68] sm:$0xff]
    %v84 = vld [vmem:[%s1 + $0x70] sm:$0xff]
    %v85 = vld [vmem:[%s1 + $0x78] sm:$0xff]
    %v86 = vld [vmem:[%s2] sm:$0xf]
    %v88 = vperm.slane %v86, 0
    %v89 = vperm.slane %v86, 1
    %v90 = vperm.slane %v86, 2
    %v91 = vperm.slane %v86, 3
    %v112 = vunpack.c.l.b16 %v70
    %v113 = vunpack.c.h.b16 %v70
    %v114 = vunpack.c.l.b16 %v71
    %v115 = vunpack.c.h.b16 %v71
    %v116 = vunpack.c.l.b16 %v72
    %v117 = vunpack.c.h.b16 %v72
    %v118 = vunpack.c.l.b16 %v73
    %v119 = vunpack.c.h.b16 %v73
    %v120 = vunpack.c.l.b16 %v74
    %v121 = vunpack.c.h.b16 %v74
    %v122 = vunpack.c.l.b16 %v75
    %v123 = vunpack.c.h.b16 %v75
    %v124 = vunpack.c.l.b16 %v76
    %v125 = vunpack.c.h.b16 %v76
    %v126 = vunpack.c.l.b16 %v77
    %v127 = vunpack.c.h.b16 %v77
    %v128 = vunpack.c.l.b16 %v78
    %v129 = vunpack.c.h.b16 %v78
    %v130 = vunpack.c.l.b16 %v79
    %v131 = vunpack.c.h.b16 %v79
    %v132 = vunpack.c.l.b16 %v80
    %v133 = vunpack.c.h.b16 %v80
    %v134 = vunpack.c.l.b16 %v81
    %v135 = vunpack.c.h.b16 %v81
    %v136 = vunpack.c.l.b16 %v82
    %v137 = vunpack.c.h.b16 %v82
    %v138 = vunpack.c.l.b16 %v83
    %v139 = vunpack.c.h.b16 %v83
    %v140 = vunpack.c.l.b16 %v84
    %v141 = vunpack.c.h.b16 %v84
    %v142 = vunpack.c.l.b16 %v85
    %v143 = vunpack.c.h.b16 %v85
    %v144 = vpack.c.b16 %v116, %v112
    %v145 = vpack.c.b16 %v117, %v113
    %v146 = vpack.c.b16 %v118, %v114
    %v147 = vpack.c.b16 %v119, %v115
    %v148 = vpack.c.b16 %v124, %v120
    %v149 = vpack.c.b16 %v125, %v121
    %v150 = vpack.c.b16 %v126, %v122
    %v151 = vpack.c.b16 %v127, %v123
    %v152 = vpack.c.b16 %v132, %v128
    %v153 = vpack.c.b16 %v133, %v129
    %v154 = vpack.c.b16 %v134, %v130
    %v155 = vpack.c.b16 %v135, %v131
    %v156 = vpack.c.b16 %v140, %v136
    %v157 = vpack.c.b16 %v141, %v137
    %v158 = vpack.c.b16 %v142, %v138
    %v159 = vpack.c.b16 %v143, %v139
    %vm176 = vcmask 523264
    %v178 = vsel %vm176, %v69, 0
    %180 = vmatpush.bf16.msra.mxu0 0
    %181 = vmatpush.bf16.msra.mxu0 0
    %182 = vmatpush.bf16.msra.mxu0 0
    %183 = vmatpush.bf16.msra.mxu0 0
    %184 = vmatpush.bf16.msra.mxu0 %v156
    %185 = vmatpush.bf16.msra.mxu0 %v152
    %186 = vmatpush.bf16.msra.mxu0 %v148
    %187 = vmatpush.bf16.msra.mxu0 %v144
    %188 = vmatmul.bf16.gmra.mxu0 %v178
    %v189 = vpop.f32.mrf.mxu0
    %v190 = vadd.f32 %v88, %v189
    %v191 = vpop.f32.mrf.mxu0
    %192 = vdwg.mxu0
    %193 = vmatpush.bf16.msra.mxu0 0
    %194 = vmatpush.bf16.msra.mxu0 0
    %195 = vmatpush.bf16.msra.mxu0 0
    %196 = vmatpush.bf16.msra.mxu0 0
    %197 = vmatpush.bf16.msra.mxu0 %v157
    %198 = vmatpush.bf16.msra.mxu0 %v153
    %199 = vmatpush.bf16.msra.mxu0 %v149
    %200 = vmatpush.bf16.msra.mxu0 %v145
    %201 = vmatmul.bf16.gmra.mxu0 %v178
    %v202 = vpop.f32.mrf.mxu0
    %v203 = vadd.f32 %v89, %v202
    %v204 = vpop.f32.mrf.mxu0
    %205 = vdwg.mxu0
    %206 = vmatpush.bf16.msra.mxu0 0
    %207 = vmatpush.bf16.msra.mxu0 0
    %208 = vmatpush.bf16.msra.mxu0 0
    %209 = vmatpush.bf16.msra.mxu0 0
    %210 = vmatpush.bf16.msra.mxu0 %v158
    %211 = vmatpush.bf16.msra.mxu0 %v154
    %212 = vmatpush.bf16.msra.mxu0 %v150
    %213 = vmatpush.bf16.msra.mxu0 %v146
    %214 = vmatmul.bf16.gmra.mxu0 %v178
    %v215 = vpop.f32.mrf.mxu0
    %v216 = vadd.f32 %v90, %v215
    %v217 = vpop.f32.mrf.mxu0
    %218 = vdwg.mxu0
    %219 = vmatpush.bf16.msra.mxu0 0
    %220 = vmatpush.bf16.msra.mxu0 0
    %221 = vmatpush.bf16.msra.mxu0 0
    %222 = vmatpush.bf16.msra.mxu0 0
    %223 = vmatpush.bf16.msra.mxu0 %v159
    %224 = vmatpush.bf16.msra.mxu0 %v155
    %225 = vmatpush.bf16.msra.mxu0 %v151
    %226 = vmatpush.bf16.msra.mxu0 %v147
    %227 = vmatmul.bf16.gmra.mxu0 %v178
    %v228 = vpop.f32.mrf.mxu0
    %v229 = vadd.f32 %v91, %v228
    %v230 = vpop.f32.mrf.mxu0
    %231 = vdwg.mxu0
    %v232 = vmax.f32 %v190, 0.0
    %v233 = vmax.f32 %v203, 0.0
    %v234 = vmax.f32 %v216, 0.0
    %v235 = vmax.f32 %v229, 0.0
    %v236 = vpack.c.bf16 %v232, %v232
    %v237 = vpack.c.bf16 %v233, %v233
    %v238 = vpack.c.bf16 %v234, %v234
    %v239 = vpack.c.bf16 %v235, %v235
    %v240 = vld [vmem:[#allocation2] sm:$0xff]
    %v241 = vld [vmem:[#allocation2 + $0x8] sm:$0xff]
    %v242 = vld [vmem:[#allocation2 + $0x10] sm:$0xff]
    %v243 = vld [vmem:[#allocation2 + $0x18] sm:$0xff]
    %v244 = vld [vmem:[#allocation2 + $0x20] sm:$0xff]
    %v245 = vld [vmem:[#allocation2 + $0x28] sm:$0xff]
    %v246 = vld [vmem:[#allocation2 + $0x30] sm:$0xff]
    %v247 = vld [vmem:[#allocation2 + $0x38] sm:$0xff]
    %v248 = vld [vmem:[#allocation2 + $0x40] sm:$0xff]
    %v249 = vld [vmem:[#allocation2 + $0x48] sm:$0xff]
    %v250 = vld [vmem:[#allocation2 + $0x50] sm:$0xff]
    %v251 = vld [vmem:[#allocation2 + $0x58] sm:$0xff]
    %v252 = vld [vmem:[#allocation2 + $0x60] sm:$0xff]
    %v253 = vld [vmem:[#allocation2 + $0x68] sm:$0xff]
    %v254 = vld [vmem:[#allocation2 + $0x70] sm:$0xff]
    %v255 = vld [vmem:[#allocation2 + $0x78] sm:$0xff]
    %v256 = vld [vmem:[#allocation2 + $0x80] sm:$0xff]
    %v257 = vld [vmem:[#allocation2 + $0x88] sm:$0xff]
    %v258 = vld [vmem:[#allocation2 + $0x90] sm:$0xff]
    %v259 = vld [vmem:[#allocation2 + $0x98] sm:$0xff]
    %v260 = vld [vmem:[#allocation2 + $0xa0] sm:$0xff]
    %v261 = vld [vmem:[#allocation2 + $0xa8] sm:$0xff]
    %v262 = vld [vmem:[#allocation2 + $0xb0] sm:$0xff]
    %v263 = vld [vmem:[#allocation2 + $0xb8] sm:$0xff]
    %v264 = vld [vmem:[#allocation2 + $0xc0] sm:$0xff]
    %v265 = vld [vmem:[#allocation2 + $0xc8] sm:$0xff]
    %v266 = vld [vmem:[#allocation2 + $0xd0] sm:$0xff]
    %v267 = vld [vmem:[#allocation2 + $0xd8] sm:$0xff]
    %v268 = vld [vmem:[#allocation2 + $0xe0] sm:$0xff]
    %v269 = vld [vmem:[#allocation2 + $0xe8] sm:$0xff]
    %v270 = vld [vmem:[#allocation2 + $0xf0] sm:$0xff]
    %v271 = vld [vmem:[#allocation2 + $0xf8] sm:$0xff]
    %v272 = vld [vmem:[#allocation2 + $0x100] sm:$0xff]
    %v273 = vld [vmem:[#allocation2 + $0x108] sm:$0xff]
    %v274 = vld [vmem:[#allocation2 + $0x110] sm:$0xff]
    %v275 = vld [vmem:[#allocation2 + $0x118] sm:$0xff]
    %v276 = vld [vmem:[#allocation2 + $0x120] sm:$0xff]
    %v277 = vld [vmem:[#allocation2 + $0x128] sm:$0xff]
    %v278 = vld [vmem:[#allocation2 + $0x130] sm:$0xff]
    %v279 = vld [vmem:[#allocation2 + $0x138] sm:$0xff]
    %v280 = vld [vmem:[#allocation2 + $0x140] sm:$0xff]
    %v281 = vld [vmem:[#allocation2 + $0x148] sm:$0xff]
    %v282 = vld [vmem:[#allocation2 + $0x150] sm:$0xff]
    %v283 = vld [vmem:[#allocation2 + $0x158] sm:$0xff]
    %v284 = vld [vmem:[#allocation2 + $0x160] sm:$0xff]
    %v285 = vld [vmem:[#allocation2 + $0x168] sm:$0xff]
    %v286 = vld [vmem:[#allocation2 + $0x170] sm:$0xff]
    %v287 = vld [vmem:[#allocation2 + $0x178] sm:$0xff]
    %v288 = vld [vmem:[#allocation2 + $0x180] sm:$0xff]
    %v289 = vld [vmem:[#allocation2 + $0x188] sm:$0xff]
    %v290 = vld [vmem:[#allocation2 + $0x190] sm:$0xff]
    %v291 = vld [vmem:[#allocation2 + $0x198] sm:$0xff]
    %v292 = vld [vmem:[#allocation2 + $0x1a0] sm:$0xff]
    %v293 = vld [vmem:[#allocation2 + $0x1a8] sm:$0xff]
    %v294 = vld [vmem:[#allocation2 + $0x1b0] sm:$0xff]
    %v295 = vld [vmem:[#allocation2 + $0x1b8] sm:$0xff]
    %v296 = vld [vmem:[#allocation2 + $0x1c0] sm:$0xff]
    %v297 = vld [vmem:[#allocation2 + $0x1c8] sm:$0xff]
    %v298 = vld [vmem:[#allocation2 + $0x1d0] sm:$0xff]
    %v299 = vld [vmem:[#allocation2 + $0x1d8] sm:$0xff]
    %v300 = vld [vmem:[#allocation2 + $0x1e0] sm:$0xff]
    %v301 = vld [vmem:[#allocation2 + $0x1e8] sm:$0xff]
    %v302 = vld [vmem:[#allocation2 + $0x1f0] sm:$0xff]
    %v303 = vld [vmem:[#allocation2 + $0x1f8] sm:$0xff]
    %v304 = vld [vmem:[%s4] sm:$0x3]
    %v306 = vperm.slane %v304, 0
    %v307 = vperm.slane %v304, 1
    %v374 = vunpack.c.l.b16 %v240
    %v375 = vunpack.c.h.b16 %v240
    %v376 = vunpack.c.l.b16 %v241
    %v377 = vunpack.c.h.b16 %v241
    %v378 = vunpack.c.l.b16 %v242
    %v379 = vunpack.c.h.b16 %v242
    %v380 = vunpack.c.l.b16 %v243
    %v381 = vunpack.c.h.b16 %v243
    %v382 = vunpack.c.l.b16 %v244
    %v383 = vunpack.c.h.b16 %v244
    %v384 = vunpack.c.l.b16 %v245
    %v385 = vunpack.c.h.b16 %v245
    %v386 = vunpack.c.l.b16 %v246
    %v387 = vunpack.c.h.b16 %v246
    %v388 = vunpack.c.l.b16 %v247
    %v389 = vunpack.c.h.b16 %v247
    %v390 = vunpack.c.l.b16 %v248
    %v391 = vunpack.c.h.b16 %v248
    %v392 = vunpack.c.l.b16 %v249
    %v393 = vunpack.c.h.b16 %v249
    %v394 = vunpack.c.l.b16 %v250
    %v395 = vunpack.c.h.b16 %v250
    %v396 = vunpack.c.l.b16 %v251
    %v397 = vunpack.c.h.b16 %v251
    %v398 = vunpack.c.l.b16 %v252
    %v399 = vunpack.c.h.b16 %v252
    %v400 = vunpack.c.l.b16 %v253
    %v401 = vunpack.c.h.b16 %v253
    %v402 = vunpack.c.l.b16 %v254
    %v403 = vunpack.c.h.b16 %v254
    %v404 = vunpack.c.l.b16 %v255
    %v405 = vunpack.c.h.b16 %v255
    %v406 = vunpack.c.l.b16 %v256
    %v407 = vunpack.c.h.b16 %v256
    %v408 = vunpack.c.l.b16 %v257
    %v409 = vunpack.c.h.b16 %v257
    %v410 = vunpack.c.l.b16 %v258
    %v411 = vunpack.c.h.b16 %v258
    %v412 = vunpack.c.l.b16 %v259
    %v413 = vunpack.c.h.b16 %v259
    %v414 = vunpack.c.l.b16 %v260
    %v415 = vunpack.c.h.b16 %v260
    %v416 = vunpack.c.l.b16 %v261
    %v417 = vunpack.c.h.b16 %v261
    %v418 = vunpack.c.l.b16 %v262
    %v419 = vunpack.c.h.b16 %v262
    %v420 = vunpack.c.l.b16 %v263
    %v421 = vunpack.c.h.b16 %v263
    %v422 = vunpack.c.l.b16 %v264
    %v423 = vunpack.c.h.b16 %v264
    %v424 = vunpack.c.l.b16 %v265
    %v425 = vunpack.c.h.b16 %v265
    %v426 = vunpack.c.l.b16 %v266
    %v427 = vunpack.c.h.b16 %v266
    %v428 = vunpack.c.l.b16 %v267
    %v429 = vunpack.c.h.b16 %v267
    %v430 = vunpack.c.l.b16 %v268
    %v431 = vunpack.c.h.b16 %v268
    %v432 = vunpack.c.l.b16 %v269
    %v433 = vunpack.c.h.b16 %v269
    %v434 = vunpack.c.l.b16 %v270
    %v435 = vunpack.c.h.b16 %v270
    %v436 = vunpack.c.l.b16 %v271
    %v437 = vunpack.c.h.b16 %v271
    %v438 = vunpack.c.l.b16 %v272
    %v439 = vunpack.c.h.b16 %v272
    %v440 = vunpack.c.l.b16 %v273
    %v441 = vunpack.c.h.b16 %v273
    %v442 = vunpack.c.l.b16 %v274
    %v443 = vunpack.c.h.b16 %v274
    %v444 = vunpack.c.l.b16 %v275
    %v445 = vunpack.c.h.b16 %v275
    %v446 = vunpack.c.l.b16 %v276
    %v447 = vunpack.c.h.b16 %v276
    %v448 = vunpack.c.l.b16 %v277
    %v449 = vunpack.c.h.b16 %v277
    %v450 = vunpack.c.l.b16 %v278
    %v451 = vunpack.c.h.b16 %v278
    %v452 = vunpack.c.l.b16 %v279
    %v453 = vunpack.c.h.b16 %v279
    %v454 = vunpack.c.l.b16 %v280
    %v455 = vunpack.c.h.b16 %v280
    %v456 = vunpack.c.l.b16 %v281
    %v457 = vunpack.c.h.b16 %v281
    %v458 = vunpack.c.l.b16 %v282
    %v459 = vunpack.c.h.b16 %v282
    %v460 = vunpack.c.l.b16 %v283
    %v461 = vunpack.c.h.b16 %v283
    %v462 = vunpack.c.l.b16 %v284
    %v463 = vunpack.c.h.b16 %v284
    %v464 = vunpack.c.l.b16 %v285
    %v465 = vunpack.c.h.b16 %v285
    %v466 = vunpack.c.l.b16 %v286
    %v467 = vunpack.c.h.b16 %v286
    %v468 = vunpack.c.l.b16 %v287
    %v469 = vunpack.c.h.b16 %v287
    %v470 = vunpack.c.l.b16 %v288
    %v471 = vunpack.c.h.b16 %v288
    %v472 = vunpack.c.l.b16 %v289
    %v473 = vunpack.c.h.b16 %v289
    %v474 = vunpack.c.l.b16 %v290
    %v475 = vunpack.c.h.b16 %v290
    %v476 = vunpack.c.l.b16 %v291
    %v477 = vunpack.c.h.b16 %v291
    %v478 = vunpack.c.l.b16 %v292
    %v479 = vunpack.c.h.b16 %v292
    %v480 = vunpack.c.l.b16 %v293
    %v481 = vunpack.c.h.b16 %v293
    %v482 = vunpack.c.l.b16 %v294
    %v483 = vunpack.c.h.b16 %v294
    %v484 = vunpack.c.l.b16 %v295
    %v485 = vunpack.c.h.b16 %v295
    %v486 = vunpack.c.l.b16 %v296
    %v487 = vunpack.c.h.b16 %v296
    %v488 = vunpack.c.l.b16 %v297
    %v489 = vunpack.c.h.b16 %v297
    %v490 = vunpack.c.l.b16 %v298
    %v491 = vunpack.c.h.b16 %v298
    %v492 = vunpack.c.l.b16 %v299
    %v493 = vunpack.c.h.b16 %v299
    %v494 = vunpack.c.l.b16 %v300
    %v495 = vunpack.c.h.b16 %v300
    %v496 = vunpack.c.l.b16 %v301
    %v497 = vunpack.c.h.b16 %v301
    %v498 = vunpack.c.l.b16 %v302
    %v499 = vunpack.c.h.b16 %v302
    %v500 = vunpack.c.l.b16 %v303
    %v501 = vunpack.c.h.b16 %v303
    %v502 = vpack.c.b16 %v376, %v374
    %v503 = vpack.c.b16 %v377, %v375
    %v504 = vpack.c.b16 %v380, %v378
    %v505 = vpack.c.b16 %v381, %v379
    %v506 = vpack.c.b16 %v384, %v382
    %v507 = vpack.c.b16 %v385, %v383
    %v508 = vpack.c.b16 %v388, %v386
    %v509 = vpack.c.b16 %v389, %v387
    %v510 = vpack.c.b16 %v392, %v390
    %v511 = vpack.c.b16 %v393, %v391
    %v512 = vpack.c.b16 %v396, %v394
    %v513 = vpack.c.b16 %v397, %v395
    %v514 = vpack.c.b16 %v400, %v398
    %v515 = vpack.c.b16 %v401, %v399
    %v516 = vpack.c.b16 %v404, %v402
    %v517 = vpack.c.b16 %v405, %v403
    %v518 = vpack.c.b16 %v408, %v406
    %v519 = vpack.c.b16 %v409, %v407
    %v520 = vpack.c.b16 %v412, %v410
    %v521 = vpack.c.b16 %v413, %v411
    %v522 = vpack.c.b16 %v416, %v414
    %v523 = vpack.c.b16 %v417, %v415
    %v524 = vpack.c.b16 %v420, %v418
    %v525 = vpack.c.b16 %v421, %v419
    %v526 = vpack.c.b16 %v424, %v422
    %v527 = vpack.c.b16 %v425, %v423
    %v528 = vpack.c.b16 %v428, %v426
    %v529 = vpack.c.b16 %v429, %v427
    %v530 = vpack.c.b16 %v432, %v430
    %v531 = vpack.c.b16 %v433, %v431
    %v532 = vpack.c.b16 %v436, %v434
    %v533 = vpack.c.b16 %v437, %v435
    %v534 = vpack.c.b16 %v440, %v438
    %v535 = vpack.c.b16 %v441, %v439
    %v536 = vpack.c.b16 %v444, %v442
    %v537 = vpack.c.b16 %v445, %v443
    %v538 = vpack.c.b16 %v448, %v446
    %v539 = vpack.c.b16 %v449, %v447
    %v540 = vpack.c.b16 %v452, %v450
    %v541 = vpack.c.b16 %v453, %v451
    %v542 = vpack.c.b16 %v456, %v454
    %v543 = vpack.c.b16 %v457, %v455
    %v544 = vpack.c.b16 %v460, %v458
    %v545 = vpack.c.b16 %v461, %v459
    %v546 = vpack.c.b16 %v464, %v462
    %v547 = vpack.c.b16 %v465, %v463
    %v548 = vpack.c.b16 %v468, %v466
    %v549 = vpack.c.b16 %v469, %v467
    %v550 = vpack.c.b16 %v472, %v470
    %v551 = vpack.c.b16 %v473, %v471
    %v552 = vpack.c.b16 %v476, %v474
    %v553 = vpack.c.b16 %v477, %v475
    %v554 = vpack.c.b16 %v480, %v478
    %v555 = vpack.c.b16 %v481, %v479
    %v556 = vpack.c.b16 %v484, %v482
    %v557 = vpack.c.b16 %v485, %v483
    %v558 = vpack.c.b16 %v488, %v486
    %v559 = vpack.c.b16 %v489, %v487
    %v560 = vpack.c.b16 %v492, %v490
    %v561 = vpack.c.b16 %v493, %v491
    %v562 = vpack.c.b16 %v496, %v494
    %v563 = vpack.c.b16 %v497, %v495
    %v564 = vpack.c.b16 %v500, %v498
    %v565 = vpack.c.b16 %v501, %v499
    %630 = vmatpush.bf16.msra.mxu0 %v516
    %631 = vmatpush.bf16.msra.mxu0 %v514
    %632 = vmatpush.bf16.msra.mxu0 %v512
    %633 = vmatpush.bf16.msra.mxu0 %v510
    %634 = vmatpush.bf16.msra.mxu0 %v508
    %635 = vmatpush.bf16.msra.mxu0 %v506
    %636 = vmatpush.bf16.msra.mxu0 %v504
    %637 = vmatpush.bf16.msra.mxu0 %v502
    %638 = vmatmul.bf16.gmra.mxu0 %v236
    %v639 = vpop.f32.mrf.mxu0
    %v640 = vadd.f32 %v306, %v639
    %v641 = vpop.f32.mrf.mxu0
    %642 = vdwg.mxu0
    %643 = vmatpush.bf16.msra.mxu0 %v532
    %644 = vmatpush.bf16.msra.mxu0 %v530
    %645 = vmatpush.bf16.msra.mxu0 %v528
    %646 = vmatpush.bf16.msra.mxu0 %v526
    %647 = vmatpush.bf16.msra.mxu0 %v524
    %648 = vmatpush.bf16.msra.mxu0 %v522
    %649 = vmatpush.bf16.msra.mxu0 %v520
    %650 = vmatpush.bf16.msra.mxu0 %v518
    %651 = vmatmul.bf16.gmra.mxu0 %v237
    %v652 = vpop.f32.mrf.mxu0
    %v653 = vadd.f32 %v640, %v652
    %v654 = vpop.f32.mrf.mxu0
    %655 = vdwg.mxu0
    %656 = vmatpush.bf16.msra.mxu0 %v548
    %657 = vmatpush.bf16.msra.mxu0 %v546
    %658 = vmatpush.bf16.msra.mxu0 %v544
    %659 = vmatpush.bf16.msra.mxu0 %v542
    %660 = vmatpush.bf16.msra.mxu0 %v540
    %661 = vmatpush.bf16.msra.mxu0 %v538
    %662 = vmatpush.bf16.msra.mxu0 %v536
    %663 = vmatpush.bf16.msra.mxu0 %v534
    %664 = vmatmul.bf16.gmra.mxu0 %v238
    %v665 = vpop.f32.mrf.mxu0
    %v666 = vadd.f32 %v653, %v665
    %v667 = vpop.f32.mrf.mxu0
    %668 = vdwg.mxu0
    %669 = vmatpush.bf16.msra.mxu0 %v564
    %670 = vmatpush.bf16.msra.mxu0 %v562
    %671 = vmatpush.bf16.msra.mxu0 %v560
    %672 = vmatpush.bf16.msra.mxu0 %v558
    %673 = vmatpush.bf16.msra.mxu0 %v556
    %674 = vmatpush.bf16.msra.mxu0 %v554
    %675 = vmatpush.bf16.msra.mxu0 %v552
    %676 = vmatpush.bf16.msra.mxu0 %v550
    %677 = vmatmul.bf16.gmra.mxu0 %v239
    %v678 = vpop.f32.mrf.mxu0
    %v679 = vadd.f32 %v666, %v678
    %v680 = vpop.f32.mrf.mxu0
    %681 = vdwg.mxu0
    %682 = vmatpush.bf16.msra.mxu0 %v517
    %683 = vmatpush.bf16.msra.mxu0 %v515
    %684 = vmatpush.bf16.msra.mxu0 %v513
    %685 = vmatpush.bf16.msra.mxu0 %v511
    %686 = vmatpush.bf16.msra.mxu0 %v509
    %687 = vmatpush.bf16.msra.mxu0 %v507
    %688 = vmatpush.bf16.msra.mxu0 %v505
    %689 = vmatpush.bf16.msra.mxu0 %v503
    %690 = vmatmul.bf16.gmra.mxu0 %v236
    %v691 = vpop.f32.mrf.mxu0
    %v692 = vadd.f32 %v307, %v691
    %v693 = vpop.f32.mrf.mxu0
    %694 = vdwg.mxu0
    %695 = vmatpush.bf16.msra.mxu0 %v533
    %696 = vmatpush.bf16.msra.mxu0 %v531
    %697 = vmatpush.bf16.msra.mxu0 %v529
    %698 = vmatpush.bf16.msra.mxu0 %v527
    %699 = vmatpush.bf16.msra.mxu0 %v525
    %700 = vmatpush.bf16.msra.mxu0 %v523
    %701 = vmatpush.bf16.msra.mxu0 %v521
    %702 = vmatpush.bf16.msra.mxu0 %v519
    %703 = vmatmul.bf16.gmra.mxu0 %v237
    %v704 = vpop.f32.mrf.mxu0
    %v705 = vadd.f32 %v692, %v704
    %v706 = vpop.f32.mrf.mxu0
    %707 = vdwg.mxu0
    %708 = vmatpush.bf16.msra.mxu0 %v549
    %709 = vmatpush.bf16.msra.mxu0 %v547
    %710 = vmatpush.bf16.msra.mxu0 %v545
    %711 = vmatpush.bf16.msra.mxu0 %v543
    %712 = vmatpush.bf16.msra.mxu0 %v541
    %713 = vmatpush.bf16.msra.mxu0 %v539
    %714 = vmatpush.bf16.msra.mxu0 %v537
    %715 = vmatpush.bf16.msra.mxu0 %v535
    %716 = vmatmul.bf16.gmra.mxu0 %v238
    %v717 = vpop.f32.mrf.mxu0
    %v718 = vadd.f32 %v705, %v717
    %v719 = vpop.f32.mrf.mxu0
    %720 = vdwg.mxu0
    %721 = vmatpush.bf16.msra.mxu0 %v565
    %722 = vmatpush.bf16.msra.mxu0 %v563
    %723 = vmatpush.bf16.msra.mxu0 %v561
    %724 = vmatpush.bf16.msra.mxu0 %v559
    %725 = vmatpush.bf16.msra.mxu0 %v557
    %726 = vmatpush.bf16.msra.mxu0 %v555
    %727 = vmatpush.bf16.msra.mxu0 %v553
    %728 = vmatpush.bf16.msra.mxu0 %v551
    %729 = vmatmul.bf16.gmra.mxu0 %v239
    %v730 = vpop.f32.mrf.mxu0
    %v731 = vadd.f32 %v718, %v730
    %v732 = vpop.f32.mrf.mxu0
    %733 = vdwg.mxu0
    %v734 = vmax.f32 %v679, 0.0
    %v735 = vmax.f32 %v731, 0.0
    %v736 = vpack.c.bf16 %v734, %v734
    %v737 = vpack.c.bf16 %v735, %v735
    %v738 = vld [vmem:[#allocation5] sm:$0xf]
    %v739 = vld [vmem:[#allocation5 + $0x4] sm:$0xf]
    %v740 = vld [vmem:[#allocation5 + $0x8] sm:$0xf]
    %v741 = vld [vmem:[#allocation5 + $0xc] sm:$0xf]
    %v742 = vld [vmem:[#allocation5 + $0x10] sm:$0xf]
    %v743 = vld [vmem:[#allocation5 + $0x14] sm:$0xf]
    %v744 = vld [vmem:[#allocation5 + $0x18] sm:$0xf]
    %v745 = vld [vmem:[#allocation5 + $0x1c] sm:$0xf]
    %v746 = vld [vmem:[#allocation5 + $0x20] sm:$0xf]
    %v747 = vld [vmem:[#allocation5 + $0x24] sm:$0xf]
    %v748 = vld [vmem:[#allocation5 + $0x28] sm:$0xf]
    %v749 = vld [vmem:[#allocation5 + $0x2c] sm:$0xf]
    %v750 = vld [vmem:[#allocation5 + $0x30] sm:$0xf]
    %v751 = vld [vmem:[#allocation5 + $0x34] sm:$0xf]
    %v752 = vld [vmem:[#allocation5 + $0x38] sm:$0xf]
    %v753 = vld [vmem:[#allocation5 + $0x3c] sm:$0xf]
    %v754 = vld [vmem:[#allocation5 + $0x40] sm:$0xf]
    %v755 = vld [vmem:[#allocation5 + $0x44] sm:$0xf]
    %v756 = vld [vmem:[#allocation5 + $0x48] sm:$0xf]
    %v757 = vld [vmem:[#allocation5 + $0x4c] sm:$0xf]
    %v758 = vld [vmem:[#allocation5 + $0x50] sm:$0xf]
    %v759 = vld [vmem:[#allocation5 + $0x54] sm:$0xf]
    %v760 = vld [vmem:[#allocation5 + $0x58] sm:$0xf]
    %v761 = vld [vmem:[#allocation5 + $0x5c] sm:$0xf]
    %v762 = vld [vmem:[#allocation5 + $0x60] sm:$0xf]
    %v763 = vld [vmem:[#allocation5 + $0x64] sm:$0xf]
    %v764 = vld [vmem:[#allocation5 + $0x68] sm:$0xf]
    %v765 = vld [vmem:[#allocation5 + $0x6c] sm:$0xf]
    %v766 = vld [vmem:[#allocation5 + $0x70] sm:$0xf]
    %v767 = vld [vmem:[#allocation5 + $0x74] sm:$0xf]
    %v768 = vld [vmem:[#allocation5 + $0x78] sm:$0xf]
    %v769 = vld [vmem:[#allocation5 + $0x7c] sm:$0xf]
    %v770 = vld [vmem:[%s6] sm:$0x1]
    %v772 = vperm.slane %v770, 0
    %v806 = vunpack.c.l.b16 %v738
    %v807 = vunpack.c.l.b16 %v739
    %v808 = vunpack.c.l.b16 %v740
    %v809 = vunpack.c.l.b16 %v741
    %v810 = vunpack.c.l.b16 %v742
    %v811 = vunpack.c.l.b16 %v743
    %v812 = vunpack.c.l.b16 %v744
    %v813 = vunpack.c.l.b16 %v745
    %v814 = vunpack.c.l.b16 %v746
    %v815 = vunpack.c.l.b16 %v747
    %v816 = vunpack.c.l.b16 %v748
    %v817 = vunpack.c.l.b16 %v749
    %v818 = vunpack.c.l.b16 %v750
    %v819 = vunpack.c.l.b16 %v751
    %v820 = vunpack.c.l.b16 %v752
    %v821 = vunpack.c.l.b16 %v753
    %v822 = vunpack.c.l.b16 %v754
    %v823 = vunpack.c.l.b16 %v755
    %v824 = vunpack.c.l.b16 %v756
    %v825 = vunpack.c.l.b16 %v757
    %v826 = vunpack.c.l.b16 %v758
    %v827 = vunpack.c.l.b16 %v759
    %v828 = vunpack.c.l.b16 %v760
    %v829 = vunpack.c.l.b16 %v761
    %v830 = vunpack.c.l.b16 %v762
    %v831 = vunpack.c.l.b16 %v763
    %v832 = vunpack.c.l.b16 %v764
    %v833 = vunpack.c.l.b16 %v765
    %v834 = vunpack.c.l.b16 %v766
    %v835 = vunpack.c.l.b16 %v767
    %v836 = vunpack.c.l.b16 %v768
    %v837 = vunpack.c.l.b16 %v769
    %v838 = vpack.c.b16 %v807, %v806
    %v839 = vpack.c.b16 %v809, %v808
    %v840 = vpack.c.b16 %v811, %v810
    %v841 = vpack.c.b16 %v813, %v812
    %v842 = vpack.c.b16 %v815, %v814
    %v843 = vpack.c.b16 %v817, %v816
    %v844 = vpack.c.b16 %v819, %v818
    %v845 = vpack.c.b16 %v821, %v820
    %v846 = vpack.c.b16 %v823, %v822
    %v847 = vpack.c.b16 %v825, %v824
    %v848 = vpack.c.b16 %v827, %v826
    %v849 = vpack.c.b16 %v829, %v828
    %v850 = vpack.c.b16 %v831, %v830
    %v851 = vpack.c.b16 %v833, %v832
    %v852 = vpack.c.b16 %v835, %v834
    %v853 = vpack.c.b16 %v837, %v836
    %870 = vmatpush.bf16.msra.mxu0 %v845
    %871 = vmatpush.bf16.msra.mxu0 %v844
    %872 = vmatpush.bf16.msra.mxu0 %v843
    %873 = vmatpush.bf16.msra.mxu0 %v842
    %874 = vmatpush.bf16.msra.mxu0 %v841
    %875 = vmatpush.bf16.msra.mxu0 %v840
    %876 = vmatpush.bf16.msra.mxu0 %v839
    %877 = vmatpush.bf16.msra.mxu0 %v838
    %878 = vmatmul.bf16.gmra.mxu0 %v736
    %v879 = vpop.f32.mrf.mxu0
    %v880 = vadd.f32 %v772, %v879
    %v881 = vpop.f32.mrf.mxu0
    %882 = vdwg.mxu0
    %883 = vmatpush.bf16.msra.mxu0 %v853
    %884 = vmatpush.bf16.msra.mxu0 %v852
    %885 = vmatpush.bf16.msra.mxu0 %v851
    %886 = vmatpush.bf16.msra.mxu0 %v850
    %887 = vmatpush.bf16.msra.mxu0 %v849
    %888 = vmatpush.bf16.msra.mxu0 %v848
    %889 = vmatpush.bf16.msra.mxu0 %v847
    %890 = vmatpush.bf16.msra.mxu0 %v846
    %891 = vmatmul.bf16.gmra.mxu0 %v737
    %v892 = vpop.f32.mrf.mxu0
    %v893 = vadd.f32 %v880, %v892
    %v894 = vpop.f32.mrf.mxu0
    %895 = vdwg.mxu0
    %v896 = vmax.f32 %v893, 0.0
    %v897 = vpack.c.bf16 %v896, %v896
    %v898 = vld [vmem:[%s7] sm:$0xf]
    %v899 = vld [vmem:[%s7 + $0x4] sm:$0xf]
    %v900 = vld [vmem:[%s7 + $0x8] sm:$0xf]
    %v901 = vld [vmem:[%s7 + $0xc] sm:$0xf]
    %v902 = vld [vmem:[%s7 + $0x10] sm:$0xf]
    %v903 = vld [vmem:[%s7 + $0x14] sm:$0xf]
    %v904 = vld [vmem:[%s7 + $0x18] sm:$0xf]
    %v905 = vld [vmem:[%s7 + $0x1c] sm:$0xf]
    %v906 = vld [vmem:[%s7 + $0x20] sm:$0xf]
    %v907 = vld [vmem:[%s7 + $0x24] sm:$0xf]
    %v908 = vld [vmem:[%s7 + $0x28] sm:$0xf]
    %v909 = vld [vmem:[%s7 + $0x2c] sm:$0xf]
    %v910 = vld [vmem:[%s7 + $0x30] sm:$0xf]
    %v911 = vld [vmem:[%s7 + $0x34] sm:$0xf]
    %v912 = vld [vmem:[%s7 + $0x38] sm:$0xf]
    %v913 = vld [vmem:[%s7 + $0x3c] sm:$0xf]
    %v914 = vld [vmem:[%s8] sm:$0x1]
    %v916 = vperm.slane %v914, 0
    %v934 = vunpack.c.l.b16 %v898
    %v935 = vunpack.c.l.b16 %v899
    %v936 = vunpack.c.l.b16 %v900
    %v937 = vunpack.c.l.b16 %v901
    %v938 = vunpack.c.l.b16 %v902
    %v939 = vunpack.c.l.b16 %v903
    %v940 = vunpack.c.l.b16 %v904
    %v941 = vunpack.c.l.b16 %v905
    %v942 = vunpack.c.l.b16 %v906
    %v943 = vunpack.c.l.b16 %v907
    %v944 = vunpack.c.l.b16 %v908
    %v945 = vunpack.c.l.b16 %v909
    %v946 = vunpack.c.l.b16 %v910
    %v947 = vunpack.c.l.b16 %v911
    %v948 = vunpack.c.l.b16 %v912
    %v949 = vunpack.c.l.b16 %v913
    %v950 = vpack.c.b16 %v935, %v934
    %v951 = vpack.c.b16 %v937, %v936
    %v952 = vpack.c.b16 %v939, %v938
    %v953 = vpack.c.b16 %v941, %v940
    %v954 = vpack.c.b16 %v943, %v942
    %v955 = vpack.c.b16 %v945, %v944
    %v956 = vpack.c.b16 %v947, %v946
    %v957 = vpack.c.b16 %v949, %v948
    %966 = vmatpush.bf16.msra.mxu0 %v957
    %967 = vmatpush.bf16.msra.mxu0 %v956
    %968 = vmatpush.bf16.msra.mxu0 %v955
    %969 = vmatpush.bf16.msra.mxu0 %v954
    %970 = vmatpush.bf16.msra.mxu0 %v953
    %971 = vmatpush.bf16.msra.mxu0 %v952
    %972 = vmatpush.bf16.msra.mxu0 %v951
    %973 = vmatpush.bf16.msra.mxu0 %v950
    %974 = vmatmul.bf16.gmra.mxu0 %v897
    %v975 = vpop.f32.mrf.mxu0
    %v976 = vadd.f32 %v916, %v975
    %v977 = vpop.f32.mrf.mxu0
    %978 = vdwg.mxu0
    %vm979 = vcmask 33792
    %980 = vst.msk [vmem:[#allocation7] sm:$0x3] %vm979, %v976
    // Predicated region
    $region46: #{model_forward.21} parent=1 // pred_check
      _
    $region47: #{model_forward.21} parent=1 // pred_check_branch
      %982 = sbr.rel (0) target = $region49
    $region48: #{model_forward.21} parent=1 // pred_region
      %984 = vsyncadd [#allocation4], 0
      %s986 = sshll.u32 [#allocation7], 4
      %s987 = int_to_ptr.vmem [resolvable:$true] %s986
      %s988 = sshll.u32 %s9, 4
      %s989 = int_to_ptr.hbm [resolvable:$true] %s988
      %991 = dma.vmem_to_hbm [thread:$0]  %s987, 32, %s989, [#allocation4]
    $region49: #{model_forward.21} parent=1 // pred_fallthru
      _
    // Predicated region
    $region50: #{model_forward.21} parent=1 // pred_check
      _
    $region51: #{model_forward.21} parent=1 // pred_check_branch
      %993 = sbr.rel (0) target = $region53
    $region52: #{model_forward.21} parent=1 // pred_region
      %995 = dma.done [#allocation4], 32
    $region53: #{model_forward.21} parent=1 // pred_fallthru
      _
    %996 = vsyncpa [#allocation3], 1
    %997 = vsyncpa [#allocation6], 1
    %998 = vsyncpa [#allocation4], 1

// kernel: model_forward.19
$region0: #{model_forward.19}
  #allocation0 [shape = 'u32[]', space=smem, size = 0x4, offset = 0x4, fixed_abs, tag = 'smem constant byte address 0x4 - core index']
  #allocation1 [shape = 'u32[72,128]{1,0:T(1,128)}', space=vmem, size = 0x9000, scoped, tag = 'internal scratch']
  %s0 = inlined_call_operand.vmem [shape: bf16[8,2,64], index: 0, kind: input, shape index: {}]
  %s1 = inlined_call_operand.hbm [shape: bf16[64,192], index: 1, kind: input, shape index: {}]
  %s2 = inlined_call_operand.hbm [shape: f32[1,192], index: 2, kind: input, shape index: {}]
  %s3 = inlined_call_operand.vmem [shape: bf16[64,64], index: 3, kind: input, shape index: {}]
  %s4 = inlined_call_operand.hbm [shape: f32[1,64], index: 4, kind: input, shape index: {}]
  %s5 = inlined_call_operand.hbm [shape: f32[1,64], index: 5, kind: input, shape index: {}]
  %s6 = inlined_call_operand.hbm [shape: f32[1,64], index: 6, kind: input, shape index: {}]
  %s7 = inlined_call_operand.vmem [shape: bf16[64,128], index: 7, kind: input, shape index: {}]
  %s8 = inlined_call_operand.hbm [shape: f32[1,128], index: 8, kind: input, shape index: {}]
  %s9 = inlined_call_operand.vmem [shape: bf16[128,64], index: 9, kind: input, shape index: {}]
  %s10 = inlined_call_operand.hbm [shape: f32[1,64], index: 10, kind: input, shape index: {}]
  %s11 = inlined_call_operand.hbm [shape: f32[1,64], index: 11, kind: input, shape index: {}]
  %s12 = inlined_call_operand.hbm [shape: f32[1,64], index: 12, kind: input, shape index: {}]
  %s13 = inlined_call_operand.vmem [shape: bf16[8,2,64], index: 13, kind: output, shape index: {}]
  %s14 = sld [smem:[#allocation0]]
  $region98: #{model_forward.19} parent=0
    _
  %s16 = ssub.s32 1, %s14
  %s17 = scalar_select 0, %s16, %s14
  $region1: #{model_forward.19} parent=0
    #allocation2 [shape = 'u8[32768]{0}', space=vmem, size = 0x8000, scoped, tag = 'input window, operand 1, single buffered']
    #allocation3 [shape = 's32[1]{0}', space=sflag, size = 0x4, scoped, tag = 'scoped memory for model_forward.19']
    #allocation4 [shape = 'u8[1024]{0}', space=vmem, size = 0x400, scoped, tag = 'input window, operand 2, single buffered']
    #allocation5 [shape = 's32[1]{0}', space=sflag, size = 0x4, scoped, tag = 'scoped memory for model_forward.19']
    #allocation6 [shape = 'u8[512]{0}', space=vmem, size = 0x400, scoped, tag = 'input window, operand 4, single buffered']
    #allocation7 [shape = 'u8[512]{0}', space=vmem, size = 0x400, scoped, tag = 'input window, operand 5, single buffered']
    #allocation8 [shape = 's32[1]{0}', space=sflag, size = 0x4, scoped, tag = 'scoped memory for model_forward.19']
    #allocation9 [shape = 'u8[512]{0}', space=vmem, size = 0x400, scoped, tag = 'input window, operand 6, single buffered']
    #allocation10 [shape = 'u8[512]{0}', space=vmem, size = 0x400, scoped, tag = 'input window, operand 8, single buffered']
    #allocation11 [shape = 's32[1]{0}', space=sflag, size = 0x4, scoped, tag = 'scoped memory for model_forward.19']
    #allocation12 [shape = 'u8[512]{0}', space=vmem, size = 0x400, scoped, tag = 'input window, operand 10, single buffered']
    #allocation13 [shape = 'u8[512]{0}', space=vmem, size = 0x400, scoped, tag = 'input window, operand 11, single buffered']
    #allocation14 [shape = 's32[1]{0}', space=sflag, size = 0x4, scoped, tag = 'scoped memory for model_forward.19']
    #allocation15 [shape = 'u8[512]{0}', space=vmem, size = 0x400, scoped, tag = 'input window, operand 12, single buffered']
    %18 = vsyncpa [#allocation3], 0
    %19 = vsyncpa [#allocation5], 0
    %20 = vsyncpa [#allocation8], 0
    %21 = vsyncpa [#allocation11], 0
    %22 = vsyncpa [#allocation14], 0
    // Predicated region
    $region2: #{model_forward.19} parent=1 // pred_check
      _
    $region3: #{model_forward.19} parent=1 // pred_check_branch
      %24 = sbr.rel (0) target = $region5
    $region4: #{model_forward.19} parent=1 // pred_region
      _
    $region5: #{model_forward.19} parent=1 // pred_fallthru
      _
    // Predicated region
    $region6: #{model_forward.19} parent=1 // pred_check
      _
    $region7: #{model_forward.19} parent=1 // pred_check_branch
      %26 = sbr.rel (0) target = $region9
    $region8: #{model_forward.19} parent=1 // pred_region
      %28 = vsyncadd [#allocation3], 0
      %s29 = sshll.u32 %s1, 4
      %s30 = int_to_ptr.hbm [resolvable:$true] %s29
      %s31 = sshll.u32 [#allocation2], 4
      %s32 = int_to_ptr.vmem [resolvable:$true] %s31
      %37 = dma.hbm_to_vmem [thread:$0]  %s30, 1024, %s32, [#allocation3], 128, 128, 8
    $region9: #{model_forward.19} parent=1 // pred_fallthru
      _
    // Predicated region
    $region10: #{model_forward.19} parent=1 // pred_check
      _
    $region11: #{model_forward.19} parent=1 // pred_check_branch
      %39 = sbr.rel (0) target = $region13
    $region12: #{model_forward.19} parent=1 // pred_region
      %41 = vsyncadd [#allocation5], 0
      %s43 = sshll.u32 %s2, 4
      %s44 = int_to_ptr.hbm [resolvable:$true] %s43
      %s45 = sshll.u32 [#allocation4], 4
      %s46 = int_to_ptr.vmem [resolvable:$true] %s45
      %48 = dma.hbm_to_vmem [thread:$0]  %s44, 32, %s46, [#allocation5]
    $region13: #{model_forward.19} parent=1 // pred_fallthru
      _
    // Predicated region
    $region14: #{model_forward.19} parent=1 // pred_check
      _
    $region15: #{model_forward.19} parent=1 // pred_check_branch
      %50 = sbr.rel (0) target = $region17
    $region16: #{model_forward.19} parent=1 // pred_region
      _
    $region17: #{model_forward.19} parent=1 // pred_fallthru
      _
    // Predicated region
    $region18: #{model_forward.19} parent=1 // pred_check
      _
    $region19: #{model_forward.19} parent=1 // pred_check_branch
      %52 = sbr.rel (0) target = $region21
    $region20: #{model_forward.19} parent=1 // pred_region
      %54 = vsyncadd [#allocation5], 0
      %s56 = sshll.u32 %s4, 4
      %s57 = int_to_ptr.hbm [resolvable:$true] %s56
      %s58 = sshll.u32 [#allocation6], 4
      %s59 = int_to_ptr.vmem [resolvable:$true] %s58
      %61 = dma.hbm_to_vmem [thread:$0]  %s57, 16, %s59, [#allocation5]
    $region21: #{model_forward.19} parent=1 // pred_fallthru
      _
    // Predicated region
    $region22: #{model_forward.19} parent=1 // pred_check
      _
    $region23: #{model_forward.19} parent=1 // pred_check_branch
      %63 = sbr.rel (0) target = $region25
    $region24: #{model_forward.19} parent=1 // pred_region
      %65 = vsyncadd [#allocation8], 0
      %s67 = sshll.u32 %s5, 4
      %s68 = int_to_ptr.hbm [resolvable:$true] %s67
      %s69 = sshll.u32 [#allocation7], 4
      %s70 = int_to_ptr.vmem [resolvable:$true] %s69
      %72 = dma.hbm_to_vmem [thread:$0]  %s68, 16, %s70, [#allocation8]
    $region25: #{model_forward.19} parent=1 // pred_fallthru
      _
    // Predicated region
    $region26: #{model_forward.19} parent=1 // pred_check
      _
    $region27: #{model_forward.19} parent=1 // pred_check_branch
      %74 = sbr.rel (0) target = $region29
    $region28: #{model_forward.19} parent=1 // pred_region
      %76 = vsyncadd [#allocation8], 0
      %s78 = sshll.u32 %s6, 4
      %s79 = int_to_ptr.hbm [resolvable:$true] %s78
      %s80 = sshll.u32 [#allocation9], 4
      %s81 = int_to_ptr.vmem [resolvable:$true] %s80
      %83 = dma.hbm_to_vmem [thread:$0]  %s79, 16, %s81, [#allocation8]
    $region29: #{model_forward.19} parent=1 // pred_fallthru
      _
    // Predicated region
    $region30: #{model_forward.19} parent=1 // pred_check
      _
    $region31: #{model_forward.19} parent=1 // pred_check_branch
      %85 = sbr.rel (0) target = $region33
    $region32: #{model_forward.19} parent=1 // pred_region
      _
    $region33: #{model_forward.19} parent=1 // pred_fallthru
      _
    // Predicated region
    $region34: #{model_forward.19} parent=1 // pred_check
      _
    $region35: #{model_forward.19} parent=1 // pred_check_branch
      %87 = sbr.rel (0) target = $region37
    $region36: #{model_forward.19} parent=1 // pred_region
      %89 = vsyncadd [#allocation11], 0
      %s91 = sshll.u32 %s8, 4
      %s92 = int_to_ptr.hbm [resolvable:$true] %s91
      %s93 = sshll.u32 [#allocation10], 4
      %s94 = int_to_ptr.vmem [resolvable:$true] %s93
      %96 = dma.hbm_to_vmem [thread:$0]  %s92, 16, %s94, [#allocation11]
    $region37: #{model_forward.19} parent=1 // pred_fallthru
      _
    // Predicated region
    $region38: #{model_forward.19} parent=1 // pred_check
      _
    $region39: #{model_forward.19} parent=1 // pred_check_branch
      %98 = sbr.rel (0) target = $region41
    $region40: #{model_forward.19} parent=1 // pred_region
      _
    $region41: #{model_forward.19} parent=1 // pred_fallthru
      _
    // Predicated region
    $region42: #{model_forward.19} parent=1 // pred_check
      _
    $region43: #{model_forward.19} parent=1 // pred_check_branch
      %100 = sbr.rel (0) target = $region45
    $region44: #{model_forward.19} parent=1 // pred_region
      %102 = vsyncadd [#allocation11], 0
      %s104 = sshll.u32 %s10, 4
      %s105 = int_to_ptr.hbm [resolvable:$true] %s104
      %s106 = sshll.u32 [#allocation12], 4
      %s107 = int_to_ptr.vmem [resolvable:$true] %s106
      %109 = dma.hbm_to_vmem [thread:$0]  %s105, 16, %s107, [#allocation11]
    $region45: #{model_forward.19} parent=1 // pred_fallthru
      _
    // Predicated region
    $region46: #{model_forward.19} parent=1 // pred_check
      _
    $region47: #{model_forward.19} parent=1 // pred_check_branch
      %111 = sbr.rel (0) target = $region49
    $region48: #{model_forward.19} parent=1 // pred_region
      %113 = vsyncadd [#allocation14], 0
      %s115 = sshll.u32 %s11, 4
      %s116 = int_to_ptr.hbm [resolvable:$true] %s115
      %s117 = sshll.u32 [#allocation13], 4
      %s118 = int_to_ptr.vmem [resolvable:$true] %s117
      %120 = dma.hbm_to_vmem [thread:$0]  %s116, 16, %s118, [#allocation14]
    $region49: #{model_forward.19} parent=1 // pred_fallthru
      _
    // Predicated region
    $region50: #{model_forward.19} parent=1 // pred_check
      _
    $region51: #{model_forward.19} parent=1 // pred_check_branch
      %122 = sbr.rel (0) target = $region53
    $region52: #{model_forward.19} parent=1 // pred_region
      %124 = vsyncadd [#allocation14], 0
      %s126 = sshll.u32 %s12, 4
      %s127 = int_to_ptr.hbm [resolvable:$true] %s126
      %s128 = sshll.u32 [#allocation15], 4
      %s129 = int_to_ptr.vmem [resolvable:$true] %s128
      %131 = dma.hbm_to_vmem [thread:$0]  %s127, 16, %s129, [#allocation14]
    $region53: #{model_forward.19} parent=1 // pred_fallthru
      _
    // Predicated region
    $region54: #{model_forward.19} parent=1 // pred_check
      _
    $region55: #{model_forward.19} parent=1 // pred_check_branch
      %133 = sbr.rel (0) target = $region57
    $region56: #{model_forward.19} parent=1 // pred_region
      %135 = dma.done [#allocation3], 1024
    $region57: #{model_forward.19} parent=1 // pred_fallthru
      _
    // Predicated region
    $region58: #{model_forward.19} parent=1 // pred_check
      _
    $region59: #{model_forward.19} parent=1 // pred_check_branch
      %137 = sbr.rel (0) target = $region61
    $region60: #{model_forward.19} parent=1 // pred_region
      %139 = dma.done [#allocation5], 32
    $region61: #{model_forward.19} parent=1 // pred_fallthru
      _
    // Predicated region
    $region62: #{model_forward.19} parent=1 // pred_check
      _
    $region63: #{model_forward.19} parent=1 // pred_check_branch
      %141 = sbr.rel (0) target = $region65
    $region64: #{model_forward.19} parent=1 // pred_region
      %143 = dma.done [#allocation5], 16
    $region65: #{model_forward.19} parent=1 // pred_fallthru
      _
    // Predicated region
    $region66: #{model_forward.19} parent=1 // pred_check
      _
    $region67: #{model_forward.19} parent=1 // pred_check_branch
      %145 = sbr.rel (0) target = $region69
    $region68: #{model_forward.19} parent=1 // pred_region
      %147 = dma.done [#allocation8], 16
    $region69: #{model_forward.19} parent=1 // pred_fallthru
      _
    // Predicated region
    $region70: #{model_forward.19} parent=1 // pred_check
      _
    $region71: #{model_forward.19} parent=1 // pred_check_branch
      %149 = sbr.rel (0) target = $region73
    $region72: #{model_forward.19} parent=1 // pred_region
      %151 = dma.done [#allocation8], 16
    $region73: #{model_forward.19} parent=1 // pred_fallthru
      _
    // Predicated region
    $region74: #{model_forward.19} parent=1 // pred_check
      _
    $region75: #{model_forward.19} parent=1 // pred_check_branch
      %153 = sbr.rel (0) target = $region77
    $region76: #{model_forward.19} parent=1 // pred_region
      %155 = dma.done [#allocation11], 16
    $region77: #{model_forward.19} parent=1 // pred_fallthru
      _
    // Predicated region
    $region78: #{model_forward.19} parent=1 // pred_check
      _
    $region79: #{model_forward.19} parent=1 // pred_check_branch
      %157 = sbr.rel (0) target = $region81
    $region80: #{model_forward.19} parent=1 // pred_region
      %159 = dma.done [#allocation11], 16
    $region81: #{model_forward.19} parent=1 // pred_fallthru
      _
    // Predicated region
    $region82: #{model_forward.19} parent=1 // pred_check
      _
    $region83: #{model_forward.19} parent=1 // pred_check_branch
      %161 = sbr.rel (0) target = $region85
    $region84: #{model_forward.19} parent=1 // pred_region
      %163 = dma.done [#allocation14], 16
    $region85: #{model_forward.19} parent=1 // pred_fallthru
      _
    // Predicated region
    $region86: #{model_forward.19} parent=1 // pred_check
      _
    $region87: #{model_forward.19} parent=1 // pred_check_branch
      %165 = sbr.rel (0) target = $region89
    $region88: #{model_forward.19} parent=1 // pred_region
      %167 = dma.done [#allocation14], 16
    $region89: #{model_forward.19} parent=1 // pred_fallthru
      _
    %v169 = vld [vmem:[%s0] sm:$0x1]
    %v170 = vld [vmem:[%s0 + $0x1] sm:$0x1]
    %v171 = vld [vmem:[%s0 + $0x2] sm:$0x1]
    %v172 = vld [vmem:[%s0 + $0x3] sm:$0x1]
    %v173 = vld [vmem:[%s0 + $0x4] sm:$0x1]
    %v174 = vld [vmem:[%s0 + $0x5] sm:$0x1]
    %v175 = vld [vmem:[%s0 + $0x6] sm:$0x1]
    %v176 = vld [vmem:[%s0 + $0x7] sm:$0x1]
    %v177 = vunpack.c.l.bf16 %v169
    %v178 = vunpack.c.l.bf16 %v170
    %v179 = vunpack.c.l.bf16 %v171
    %v180 = vunpack.c.l.bf16 %v172
    %v181 = vunpack.c.l.bf16 %v173
    %v182 = vunpack.c.l.bf16 %v174
    %v183 = vunpack.c.l.bf16 %v175
    %v184 = vunpack.c.l.bf16 %v176
    %v185 = vld [vmem:[#allocation2] sm:$0xff]
    %v186 = vld [vmem:[#allocation2 + $0x8] sm:$0xff]
    %v187 = vld [vmem:[#allocation2 + $0x10] sm:$0xff]
    %v188 = vld [vmem:[#allocation2 + $0x18] sm:$0xff]
    %v189 = vld [vmem:[#allocation2 + $0x20] sm:$0xff]
    %v190 = vld [vmem:[#allocation2 + $0x28] sm:$0xff]
    %v191 = vld [vmem:[#allocation2 + $0x30] sm:$0xff]
    %v192 = vld [vmem:[#allocation2 + $0x38] sm:$0xff]
    %v193 = vld [vmem:[#allocation4] sm:$0x3]
    %v195 = vperm.slane %v193, 0
    %v196 = vperm.slane %v193, 1
    %200 = vst [vmem:[#allocation1] ss:$9 sm:$0xff] %v169
    %s202 = scalar_lea.vmem [#allocation1], 1
    %203 = vst [vmem:[%s202] ss:$9 sm:$0xff] %v170
    %s205 = scalar_lea.vmem [#allocation1], 2
    %206 = vst [vmem:[%s205] ss:$9 sm:$0xff] %v171
    %s208 = scalar_lea.vmem [#allocation1], 3
    %209 = vst [vmem:[%s208] ss:$9 sm:$0xff] %v172
    %s211 = scalar_lea.vmem [#allocation1], 4
    %212 = vst [vmem:[%s211] ss:$9 sm:$0xff] %v173
    %s214 = scalar_lea.vmem [#allocation1], 5
    %215 = vst [vmem:[%s214] ss:$9 sm:$0xff] %v174
    %s217 = scalar_lea.vmem [#allocation1], 6
    %218 = vst [vmem:[%s217] ss:$9 sm:$0xff] %v175
    %s220 = scalar_lea.vmem [#allocation1], 7
    %221 = vst [vmem:[%s220] ss:$9 sm:$0xff] %v176
    %v222 = vld [vmem:[#allocation1] sm:$0xff]
    %v231 = vunpack.c.l.b16 %v185
    %v232 = vunpack.c.h.b16 %v185
    %v233 = vunpack.c.l.b16 %v186
    %v234 = vunpack.c.h.b16 %v186
    %v235 = vunpack.c.l.b16 %v187
    %v236 = vunpack.c.h.b16 %v187
    %v237 = vunpack.c.l.b16 %v188
    %v238 = vunpack.c.h.b16 %v188
    %v239 = vunpack.c.l.b16 %v189
    %v240 = vunpack.c.h.b16 %v189
    %v241 = vunpack.c.l.b16 %v190
    %v242 = vunpack.c.h.b16 %v190
    %v243 = vunpack.c.l.b16 %v191
    %v244 = vunpack.c.h.b16 %v191
    %v245 = vunpack.c.l.b16 %v192
    %v246 = vunpack.c.h.b16 %v192
    %v247 = vpack.c.b16 %v233, %v231
    %v248 = vpack.c.b16 %v234, %v232
    %v249 = vpack.c.b16 %v237, %v235
    %v250 = vpack.c.b16 %v238, %v236
    %v251 = vpack.c.b16 %v241, %v239
    %v252 = vpack.c.b16 %v242, %v240
    %v253 = vpack.c.b16 %v245, %v243
    %v254 = vpack.c.b16 %v246, %v244
    %vm263 = vcmask 523264
    %v264 = vsel %vm263, %v222, 0
    %266 = vmatpush.bf16.msra.mxu0 0
    %267 = vmatpush.bf16.msra.mxu0 0
    %268 = vmatpush.bf16.msra.mxu0 0
    %269 = vmatpush.bf16.msra.mxu0 0
    %270 = vmatpush.bf16.msra.mxu0 %v253
    %271 = vmatpush.bf16.msra.mxu0 %v251
    %272 = vmatpush.bf16.msra.mxu0 %v249
    %273 = vmatpush.bf16.msra.mxu0 %v247
    %274 = vmatmul.bf16.gmra.mxu0 %v264
    %v275 = vpop.f32.mrf.mxu0
    %v276 = vadd.f32 %v195, %v275
    %v277 = vpop.f32.mrf.mxu0
    %v278 = vadd.f32 %v195, %v277
    %279 = vdwg.mxu0
    %280 = vmatpush.bf16.msra.mxu0 0
    %281 = vmatpush.bf16.msra.mxu0 0
    %282 = vmatpush.bf16.msra.mxu0 0
    %283 = vmatpush.bf16.msra.mxu0 0
    %284 = vmatpush.bf16.msra.mxu0 %v254
    %285 = vmatpush.bf16.msra.mxu0 %v252
    %286 = vmatpush.bf16.msra.mxu0 %v250
    %287 = vmatpush.bf16.msra.mxu0 %v248
    %288 = vmatmul.bf16.gmra.mxu0 %v264
    %v289 = vpop.f32.mrf.mxu0
    %v290 = vadd.f32 %v196, %v289
    %v291 = vpop.f32.mrf.mxu0
    %v292 = vadd.f32 %v196, %v291
    %293 = vdwg.mxu0
    %v294 = vmul.f32 %v276, 0.25
    %v295 = vmul.f32 %v278, 0.25
    %v296 = vpack.c.bf16 %v294, %v294
    %v297 = vpack.c.bf16 %v295, %v295
    %v300 = vrot.slane %v296, 3
    %v301 = vrot.slane %v297, 3
    %vm302 = vcmask 1040384
    %v305 = vsel %vm302, %v296, %v300
    %vm306 = vcmask 1041409
    %v307 = vsel %vm306, %v296, %v300
    %v309 = vrot.slane %v307, 1
    %vm310 = vcmask 1042434
    %v311 = vsel %vm310, %v296, %v300
    %v313 = vrot.slane %v311, 2
    %vm314 = vcmask 1043459
    %v315 = vsel %vm314, %v296, %v300
    %v317 = vrot.slane %v315, 3
    %v320 = vsel %vm302, %v297, %v301
    %v321 = vsel %vm306, %v297, %v301
    %v323 = vrot.slane %v321, 1
    %v324 = vsel %vm310, %v297, %v301
    %v326 = vrot.slane %v324, 2
    %v327 = vsel %vm314, %v297, %v301
    %v329 = vrot.slane %v327, 3
    %v330 = vpack.c.bf16 %v276, %v276
    %v331 = vpack.c.bf16 %v278, %v278
    %v334 = vrot.slane %v330, 3
    %v335 = vrot.slane %v331, 3
    %v338 = vsel %vm302, %v330, %v334
    %v339 = vsel %vm306, %v330, %v334
    %v341 = vrot.slane %v339, 1
    %v342 = vsel %vm310, %v330, %v334
    %v344 = vrot.slane %v342, 2
    %v345 = vsel %vm314, %v330, %v334
    %v347 = vrot.slane %v345, 3
    %v350 = vsel %vm302, %v331, %v335
    %v351 = vsel %vm306, %v331, %v335
    %v353 = vrot.slane %v351, 1
    %v354 = vsel %vm310, %v331, %v335
    %v356 = vrot.slane %v354, 2
    %v357 = vsel %vm314, %v331, %v335
    %v359 = vrot.slane %v357, 3
    %v360 = vpack.c.bf16 %v290, %v290
    %v361 = vpack.c.bf16 %v292, %v292
    %v364 = vrot.slane %v360, 3
    %v365 = vrot.slane %v361, 3
    %v368 = vsel %vm302, %v360, %v364
    %v369 = vsel %vm306, %v360, %v364
    %v371 = vrot.slane %v369, 1
    %v372 = vsel %vm310, %v360, %v364
    %v374 = vrot.slane %v372, 2
    %v375 = vsel %vm314, %v360, %v364
    %v377 = vrot.slane %v375, 3
    %v380 = vsel %vm302, %v361, %v365
    %v381 = vsel %vm306, %v361, %v365
    %v383 = vrot.slane %v381, 1
    %v384 = vsel %vm310, %v361, %v365
    %v386 = vrot.slane %v384, 2
    %v387 = vsel %vm314, %v361, %v365
    %v389 = vrot.slane %v387, 3
    %390 = vst [vmem:[#allocation1] ss:$9 sm:$0xff] %v338
    %v391 = vld [vmem:[#allocation1] sm:$0xff]
    %393 = vrot.lane.b32.xlu0 %v391, 64
    %v394 = vpop.permute.xlu0 %393
    %vm395 = vcmask 130048
    %v396 = vsel %vm395, %v305, 0
    %v399 = vsel %vm395, %v394, 0
    %401 = vmatpush.bf16.xpose.msra.mxu0 0
    %402 = vmatpush.bf16.xpose.msra.mxu0 0
    %403 = vmatpush.bf16.xpose.msra.mxu0 0
    %404 = vmatpush.bf16.xpose.msra.mxu0 0
    %405 = vmatpush.bf16.xpose.msra.mxu0 0
    %406 = vmatpush.bf16.xpose.msra.mxu0 0
    %407 = vmatpush.bf16.xpose.msra.mxu0 0
    %408 = vmatpush.bf16.xpose.msra.mxu0 %v399
    %409 = vmatmul.bf16.gmra.mxu0 %v396
    %v410 = vpop.f32.mrf.mxu0
    %v411 = vadd.f32 0.0, %v410
    %v412 = vpop.f32.mrf.mxu0
    %413 = vdwg.mxu0
    %415 = vst [vmem:[#allocation1] ss:$9 sm:$0xff] %v341
    %v416 = vld [vmem:[#allocation1] sm:$0xff]
    %418 = vrot.lane.b32.xlu0 %v416, 64
    %v419 = vpop.permute.xlu0 %418
    %v421 = vsel %vm395, %v309, 0
    %v424 = vsel %vm395, %v419, 0
    %426 = vmatpush.bf16.xpose.msra.mxu0 0
    %427 = vmatpush.bf16.xpose.msra.mxu0 0
    %428 = vmatpush.bf16.xpose.msra.mxu0 0
    %429 = vmatpush.bf16.xpose.msra.mxu0 0
    %430 = vmatpush.bf16.xpose.msra.mxu0 0
    %431 = vmatpush.bf16.xpose.msra.mxu0 0
    %432 = vmatpush.bf16.xpose.msra.mxu0 0
    %433 = vmatpush.bf16.xpose.msra.mxu0 %v424
    %434 = vmatmul.bf16.gmra.mxu0 %v421
    %v435 = vpop.f32.mrf.mxu0
    %v436 = vadd.f32 0.0, %v435
    %v437 = vpop.f32.mrf.mxu0
    %438 = vdwg.mxu0
    %440 = vst [vmem:[#allocation1] ss:$9 sm:$0xff] %v344
    %v441 = vld [vmem:[#allocation1] sm:$0xff]
    %443 = vrot.lane.b32.xlu0 %v441, 64
    %v444 = vpop.permute.xlu0 %443
    %v446 = vsel %vm395, %v313, 0
    %v449 = vsel %vm395, %v444, 0
    %451 = vmatpush.bf16.xpose.msra.mxu0 0
    %452 = vmatpush.bf16.xpose.msra.mxu0 0
    %453 = vmatpush.bf16.xpose.msra.mxu0 0
    %454 = vmatpush.bf16.xpose.msra.mxu0 0
    %455 = vmatpush.bf16.xpose.msra.mxu0 0
    %456 = vmatpush.bf16.xpose.msra.mxu0 0
    %457 = vmatpush.bf16.xpose.msra.mxu0 0
    %458 = vmatpush.bf16.xpose.msra.mxu0 %v449
    %459 = vmatmul.bf16.gmra.mxu0 %v446
    %v460 = vpop.f32.mrf.mxu0
    %v461 = vadd.f32 0.0, %v460
    %v462 = vpop.f32.mrf.mxu0
    %463 = vdwg.mxu0
    %465 = vst [vmem:[#allocation1] ss:$9 sm:$0xff] %v347
    %v466 = vld [vmem:[#allocation1] sm:$0xff]
    %468 = vrot.lane.b32.xlu0 %v466, 64
    %v469 = vpop.permute.xlu0 %468
    %v471 = vsel %vm395, %v317, 0
    %v474 = vsel %vm395, %v469, 0
    %476 = vmatpush.bf16.xpose.msra.mxu0 0
    %477 = vmatpush.bf16.xpose.msra.mxu0 0
    %478 = vmatpush.bf16.xpose.msra.mxu0 0
    %479 = vmatpush.bf16.xpose.msra.mxu0 0
    %480 = vmatpush.bf16.xpose.msra.mxu0 0
    %481 = vmatpush.bf16.xpose.msra.mxu0 0
    %482 = vmatpush.bf16.xpose.msra.mxu0 0
    %483 = vmatpush.bf16.xpose.msra.mxu0 %v474
    %484 = vmatmul.bf16.gmra.mxu0 %v471
    %v485 = vpop.f32.mrf.mxu0
    %v486 = vadd.f32 0.0, %v485
    %v487 = vpop.f32.mrf.mxu0
    %488 = vdwg.mxu0
    %489 = vst [vmem:[#allocation1] ss:$9 sm:$0xff] %v350
    %v490 = vld [vmem:[#allocation1] sm:$0xff]
    %492 = vrot.lane.b32.xlu0 %v490, 64
    %v493 = vpop.permute.xlu0 %492
    %v494 = vsel %vm395, %v320, 0
    %v497 = vsel %vm395, %v493, 0
    %499 = vmatpush.bf16.xpose.msra.mxu0 0
    %500 = vmatpush.bf16.xpose.msra.mxu0 0
    %501 = vmatpush.bf16.xpose.msra.mxu0 0
    %502 = vmatpush.bf16.xpose.msra.mxu0 0
    %503 = vmatpush.bf16.xpose.msra.mxu0 0
    %504 = vmatpush.bf16.xpose.msra.mxu0 0
    %505 = vmatpush.bf16.xpose.msra.mxu0 0
    %506 = vmatpush.bf16.xpose.msra.mxu0 %v497
    %507 = vmatmul.bf16.gmra.mxu0 %v494
    %v508 = vpop.f32.mrf.mxu0
    %v509 = vadd.f32 0.0, %v508
    %v510 = vpop.f32.mrf.mxu0
    %511 = vdwg.mxu0
    %513 = vst [vmem:[#allocation1] ss:$9 sm:$0xff] %v353
    %v514 = vld [vmem:[#allocation1] sm:$0xff]
    %516 = vrot.lane.b32.xlu0 %v514, 64
    %v517 = vpop.permute.xlu0 %516
    %v519 = vsel %vm395, %v323, 0
    %v522 = vsel %vm395, %v517, 0
    %524 = vmatpush.bf16.xpose.msra.mxu0 0
    %525 = vmatpush.bf16.xpose.msra.mxu0 0
    %526 = vmatpush.bf16.xpose.msra.mxu0 0
    %527 = vmatpush.bf16.xpose.msra.mxu0 0
    %528 = vmatpush.bf16.xpose.msra.mxu0 0
    %529 = vmatpush.bf16.xpose.msra.mxu0 0
    %530 = vmatpush.bf16.xpose.msra.mxu0 0
    %531 = vmatpush.bf16.xpose.msra.mxu0 %v522
    %532 = vmatmul.bf16.gmra.mxu0 %v519
    %v533 = vpop.f32.mrf.mxu0
    %v534 = vadd.f32 0.0, %v533
    %v535 = vpop.f32.mrf.mxu0
    %536 = vdwg.mxu0
    %538 = vst [vmem:[#allocation1] ss:$9 sm:$0xff] %v356
    %v539 = vld [vmem:[#allocation1] sm:$0xff]
    %541 = vrot.lane.b32.xlu0 %v539, 64
    %v542 = vpop.permute.xlu0 %541
    %v544 = vsel %vm395, %v326, 0
    %v547 = vsel %vm395, %v542, 0
    %549 = vmatpush.bf16.xpose.msra.mxu0 0
    %550 = vmatpush.bf16.xpose.msra.mxu0 0
    %551 = vmatpush.bf16.xpose.msra.mxu0 0
    %552 = vmatpush.bf16.xpose.msra.mxu0 0
    %553 = vmatpush.bf16.xpose.msra.mxu0 0
    %554 = vmatpush.bf16.xpose.msra.mxu0 0
    %555 = vmatpush.bf16.xpose.msra.mxu0 0
    %556 = vmatpush.bf16.xpose.msra.mxu0 %v547
    %557 = vmatmul.bf16.gmra.mxu0 %v544
    %v558 = vpop.f32.mrf.mxu0
    %v559 = vadd.f32 0.0, %v558
    %v560 = vpop.f32.mrf.mxu0
    %561 = vdwg.mxu0
    %563 = vst [vmem:[#allocation1] ss:$9 sm:$0xff] %v359
    %v564 = vld [vmem:[#allocation1] sm:$0xff]
    %566 = vrot.lane.b32.xlu0 %v564, 64
    %v567 = vpop.permute.xlu0 %566
    %v569 = vsel %vm395, %v329, 0
    %v572 = vsel %vm395, %v567, 0
    %574 = vmatpush.bf16.xpose.msra.mxu0 0
    %575 = vmatpush.bf16.xpose.msra.mxu0 0
    %576 = vmatpush.bf16.xpose.msra.mxu0 0
    %577 = vmatpush.bf16.xpose.msra.mxu0 0
    %578 = vmatpush.bf16.xpose.msra.mxu0 0
    %579 = vmatpush.bf16.xpose.msra.mxu0 0
    %580 = vmatpush.bf16.xpose.msra.mxu0 0
    %581 = vmatpush.bf16.xpose.msra.mxu0 %v572
    %582 = vmatmul.bf16.gmra.mxu0 %v569
    %v583 = vpop.f32.mrf.mxu0
    %v584 = vadd.f32 0.0, %v583
    %v585 = vpop.f32.mrf.mxu0
    %586 = vdwg.mxu0
    %vm587 = vcmask 9216
    %v588 = vsel %vm587, %v411, -inf
    %589 = vmax.xlane.f32.xlu0 %v588
    %v590 = vpop.xlane.xlu0 %589
    %v591 = vsel %vm587, %v436, -inf
    %592 = vmax.xlane.f32.xlu0 %v591
    %v593 = vpop.xlane.xlu0 %592
    %v594 = vsel %vm587, %v461, -inf
    %595 = vmax.xlane.f32.xlu0 %v594
    %v596 = vpop.xlane.xlu0 %595
    %v597 = vsel %vm587, %v486, -inf
    %598 = vmax.xlane.f32.xlu0 %v597
    %v599 = vpop.xlane.xlu0 %598
    %v600 = vsel %vm587, %v509, -inf
    %601 = vmax.xlane.f32.xlu0 %v600
    %v602 = vpop.xlane.xlu0 %601
    %v603 = vsel %vm587, %v534, -inf
    %604 = vmax.xlane.f32.xlu0 %v603
    %v605 = vpop.xlane.xlu0 %604
    %v606 = vsel %vm587, %v559, -inf
    %607 = vmax.xlane.f32.xlu0 %v606
    %v608 = vpop.xlane.xlu0 %607
    %v609 = vsel %vm587, %v584, -inf
    %610 = vmax.xlane.f32.xlu0 %v609
    %v611 = vpop.xlane.xlu0 %610
    %v612 = vsub.f32 %v411, %v590
    %v613 = vsub.f32 %v436, %v593
    %v614 = vsub.f32 %v461, %v596
    %v615 = vsub.f32 %v486, %v599
    %v616 = vsub.f32 %v509, %v602
    %v617 = vsub.f32 %v534, %v605
    %v618 = vsub.f32 %v559, %v608
    %v619 = vsub.f32 %v584, %v611
    %v620 = vmul.f32 %v612, 1.442695
    %v621 = vpow.pop %v620
    %v622 = vmul.f32 %v613, 1.442695
    %v623 = vpow.pop %v622
    %v624 = vmul.f32 %v614, 1.442695
    %v625 = vpow.pop %v624
    %v626 = vmul.f32 %v615, 1.442695
    %v627 = vpow.pop %v626
    %v628 = vmul.f32 %v616, 1.442695
    %v629 = vpow.pop %v628
    %v630 = vmul.f32 %v617, 1.442695
    %v631 = vpow.pop %v630
    %v632 = vmul.f32 %v618, 1.442695
    %v633 = vpow.pop %v632
    %v634 = vmul.f32 %v619, 1.442695
    %v635 = vpow.pop %v634
    %v636 = vsel %vm587, %v621, 0.0
    %637 = vadd.xlane.f32.xlu0 %v636
    %v638 = vpop.xlane.xlu0 %637
    %v639 = vsel %vm587, %v623, 0.0
    %640 = vadd.xlane.f32.xlu0 %v639
    %v641 = vpop.xlane.xlu0 %640
    %v642 = vsel %vm587, %v625, 0.0
    %643 = vadd.xlane.f32.xlu0 %v642
    %v644 = vpop.xlane.xlu0 %643
    %v645 = vsel %vm587, %v627, 0.0
    %646 = vadd.xlane.f32.xlu0 %v645
    %v647 = vpop.xlane.xlu0 %646
    %v648 = vsel %vm587, %v629, 0.0
    %649 = vadd.xlane.f32.xlu0 %v648
    %v650 = vpop.xlane.xlu0 %649
    %v651 = vsel %vm587, %v631, 0.0
    %652 = vadd.xlane.f32.xlu0 %v651
    %v653 = vpop.xlane.xlu0 %652
    %v654 = vsel %vm587, %v633, 0.0
    %655 = vadd.xlane.f32.xlu0 %v654
    %v656 = vpop.xlane.xlu0 %655
    %v657 = vsel %vm587, %v635, 0.0
    %658 = vadd.xlane.f32.xlu0 %v657
    %v659 = vpop.xlane.xlu0 %658
    %v660 = vrcp.pop %v638
    %v661 = vrcp.pop %v641
    %v662 = vrcp.pop %v644
    %v663 = vrcp.pop %v647
    %v664 = vrcp.pop %v650
    %v665 = vrcp.pop %v653
    %v666 = vrcp.pop %v656
    %v667 = vrcp.pop %v659
    %v668 = vmul.f32 %v621, %v660
    %v669 = vmul.f32 %v623, %v661
    %v670 = vmul.f32 %v625, %v662
    %v671 = vmul.f32 %v627, %v663
    %v672 = vmul.f32 %v629, %v664
    %v673 = vmul.f32 %v631, %v665
    %v674 = vmul.f32 %v633, %v666
    %v675 = vmul.f32 %v635, %v667
    %v676 = vpack.c.bf16 %v668, %v668
    %v677 = vpack.c.bf16 %v669, %v669
    %v678 = vpack.c.bf16 %v670, %v670
    %v679 = vpack.c.bf16 %v671, %v671
    %v680 = vpack.c.bf16 %v672, %v672
    %v681 = vpack.c.bf16 %v673, %v673
    %v682 = vpack.c.bf16 %v674, %v674
    %v683 = vpack.c.bf16 %v675, %v675
    %vm684 = vcmask 15360
    %v686 = vsel %vm684, %v676, 0
    %v688 = vsel %vm302, %v368, 0
    %690 = vmatpush.bf16.msra.mxu0 0
    %691 = vmatpush.bf16.msra.mxu0 0
    %692 = vmatpush.bf16.msra.mxu0 0
    %693 = vmatpush.bf16.msra.mxu0 0
    %694 = vmatpush.bf16.msra.mxu0 0
    %695 = vmatpush.bf16.msra.mxu0 0
    %696 = vmatpush.bf16.msra.mxu0 0
    %697 = vmatpush.bf16.msra.mxu0 %v688
    %698 = vmatmul.bf16.gmra.mxu0 %v686
    %v699 = vpop.f32.mrf.mxu0
    %v700 = vadd.f32 0.0, %v699
    %v701 = vpop.f32.mrf.mxu0
    %702 = vdwg.mxu0
    %v704 = vsel %vm684, %v677, 0
    %v707 = vsel %vm302, %v371, 0
    %709 = vmatpush.bf16.msra.mxu0 0
    %710 = vmatpush.bf16.msra.mxu0 0
    %711 = vmatpush.bf16.msra.mxu0 0
    %712 = vmatpush.bf16.msra.mxu0 0
    %713 = vmatpush.bf16.msra.mxu0 0
    %714 = vmatpush.bf16.msra.mxu0 0
    %715 = vmatpush.bf16.msra.mxu0 0
    %716 = vmatpush.bf16.msra.mxu0 %v707
    %717 = vmatmul.bf16.gmra.mxu0 %v704
    %v718 = vpop.f32.mrf.mxu0
    %v719 = vadd.f32 0.0, %v718
    %v720 = vpop.f32.mrf.mxu0
    %721 = vdwg.mxu0
    %v723 = vsel %vm684, %v678, 0
    %v726 = vsel %vm302, %v374, 0
    %728 = vmatpush.bf16.msra.mxu0 0
    %729 = vmatpush.bf16.msra.mxu0 0
    %730 = vmatpush.bf16.msra.mxu0 0
    %731 = vmatpush.bf16.msra.mxu0 0
    %732 = vmatpush.bf16.msra.mxu0 0
    %733 = vmatpush.bf16.msra.mxu0 0
    %734 = vmatpush.bf16.msra.mxu0 0
    %735 = vmatpush.bf16.msra.mxu0 %v726
    %736 = vmatmul.bf16.gmra.mxu0 %v723
    %v737 = vpop.f32.mrf.mxu0
    %v738 = vadd.f32 0.0, %v737
    %v739 = vpop.f32.mrf.mxu0
    %740 = vdwg.mxu0
    %v742 = vsel %vm684, %v679, 0
    %v745 = vsel %vm302, %v377, 0
    %747 = vmatpush.bf16.msra.mxu0 0
    %748 = vmatpush.bf16.msra.mxu0 0
    %749 = vmatpush.bf16.msra.mxu0 0
    %750 = vmatpush.bf16.msra.mxu0 0
    %751 = vmatpush.bf16.msra.mxu0 0
    %752 = vmatpush.bf16.msra.mxu0 0
    %753 = vmatpush.bf16.msra.mxu0 0
    %754 = vmatpush.bf16.msra.mxu0 %v745
    %755 = vmatmul.bf16.gmra.mxu0 %v742
    %v756 = vpop.f32.mrf.mxu0
    %v757 = vadd.f32 0.0, %v756
    %v758 = vpop.f32.mrf.mxu0
    %759 = vdwg.mxu0
    %v761 = vsel %vm684, %v680, 0
    %v763 = vsel %vm302, %v380, 0
    %765 = vmatpush.bf16.msra.mxu0 0
    %766 = vmatpush.bf16.msra.mxu0 0
    %767 = vmatpush.bf16.msra.mxu0 0
    %768 = vmatpush.bf16.msra.mxu0 0
    %769 = vmatpush.bf16.msra.mxu0 0
    %770 = vmatpush.bf16.msra.mxu0 0
    %771 = vmatpush.bf16.msra.mxu0 0
    %772 = vmatpush.bf16.msra.mxu0 %v763
    %773 = vmatmul.bf16.gmra.mxu0 %v761
    %v774 = vpop.f32.mrf.mxu0
    %v775 = vadd.f32 0.0, %v774
    %v776 = vpop.f32.mrf.mxu0
    %777 = vdwg.mxu0
    %v779 = vsel %vm684, %v681, 0
    %v782 = vsel %vm302, %v383, 0
    %784 = vmatpush.bf16.msra.mxu0 0
    %785 = vmatpush.bf16.msra.mxu0 0
    %786 = vmatpush.bf16.msra.mxu0 0
    %787 = vmatpush.bf16.msra.mxu0 0
    %788 = vmatpush.bf16.msra.mxu0 0
    %789 = vmatpush.bf16.msra.mxu0 0
    %790 = vmatpush.bf16.msra.mxu0 0
    %791 = vmatpush.bf16.msra.mxu0 %v782
    %792 = vmatmul.bf16.gmra.mxu0 %v779
    %v793 = vpop.f32.mrf.mxu0
    %v794 = vadd.f32 0.0, %v793
    %v795 = vpop.f32.mrf.mxu0
    %796 = vdwg.mxu0
    %v798 = vsel %vm684, %v682, 0
    %v801 = vsel %vm302, %v386, 0
    %803 = vmatpush.bf16.msra.mxu0 0
    %804 = vmatpush.bf16.msra.mxu0 0
    %805 = vmatpush.bf16.msra.mxu0 0
    %806 = vmatpush.bf16.msra.mxu0 0
    %807 = vmatpush.bf16.msra.mxu0 0
    %808 = vmatpush.bf16.msra.mxu0 0
    %809 = vmatpush.bf16.msra.mxu0 0
    %810 = vmatpush.bf16.msra.mxu0 %v801
    %811 = vmatmul.bf16.gmra.mxu0 %v798
    %v812 = vpop.f32.mrf.mxu0
    %v813 = vadd.f32 0.0, %v812
    %v814 = vpop.f32.mrf.mxu0
    %815 = vdwg.mxu0
    %v817 = vsel %vm684, %v683, 0
    %v820 = vsel %vm302, %v389, 0
    %822 = vmatpush.bf16.msra.mxu0 0
    %823 = vmatpush.bf16.msra.mxu0 0
    %824 = vmatpush.bf16.msra.mxu0 0
    %825 = vmatpush.bf16.msra.mxu0 0
    %826 = vmatpush.bf16.msra.mxu0 0
    %827 = vmatpush.bf16.msra.mxu0 0
    %828 = vmatpush.bf16.msra.mxu0 0
    %829 = vmatpush.bf16.msra.mxu0 %v820
    %830 = vmatmul.bf16.gmra.mxu0 %v817
    %v831 = vpop.f32.mrf.mxu0
    %v832 = vadd.f32 0.0, %v831
    %v833 = vpop.f32.mrf.mxu0
    %834 = vdwg.mxu0
    %835 = vst [vmem:[#allocation1] ss:$9 sm:$0xff] %v305
    %v836 = vld [vmem:[#allocation1] sm:$0xff]
    %838 = vrot.lane.b32.xlu0 %v836, 112
    %v839 = vpop.permute.xlu0 %838
    %840 = vst [vmem:[#allocation1] ss:$9 sm:$0xff] %v338
    %v841 = vld [vmem:[#allocation1] sm:$0xff]
    %843 = vrot.lane.b32.xlu0 %v841, 48
    %v844 = vpop.permute.xlu0 %843
    %v846 = vsel %vm395, %v839, 0
    %v849 = vsel %vm395, %v844, 0
    %851 = vmatpush.bf16.xpose.msra.mxu0 0
    %852 = vmatpush.bf16.xpose.msra.mxu0 0
    %853 = vmatpush.bf16.xpose.msra.mxu0 0
    %854 = vmatpush.bf16.xpose.msra.mxu0 0
    %855 = vmatpush.bf16.xpose.msra.mxu0 0
    %856 = vmatpush.bf16.xpose.msra.mxu0 0
    %857 = vmatpush.bf16.xpose.msra.mxu0 0
    %858 = vmatpush.bf16.xpose.msra.mxu0 %v849
    %859 = vmatmul.bf16.gmra.mxu0 %v846
    %v860 = vpop.f32.mrf.mxu0
    %v861 = vadd.f32 0.0, %v860
    %v862 = vpop.f32.mrf.mxu0
    %863 = vdwg.mxu0
    %864 = vst [vmem:[#allocation1] ss:$9 sm:$0xff] %v309
    %v865 = vld [vmem:[#allocation1] sm:$0xff]
    %867 = vrot.lane.b32.xlu0 %v865, 112
    %v868 = vpop.permute.xlu0 %867
    %869 = vst [vmem:[#allocation1] ss:$9 sm:$0xff] %v341
    %v870 = vld [vmem:[#allocation1] sm:$0xff]
    %872 = vrot.lane.b32.xlu0 %v870, 48
    %v873 = vpop.permute.xlu0 %872
    %v875 = vsel %vm395, %v868, 0
    %v878 = vsel %vm395, %v873, 0
    %880 = vmatpush.bf16.xpose.msra.mxu0 0
    %881 = vmatpush.bf16.xpose.msra.mxu0 0
    %882 = vmatpush.bf16.xpose.msra.mxu0 0
    %883 = vmatpush.bf16.xpose.msra.mxu0 0
    %884 = vmatpush.bf16.xpose.msra.mxu0 0
    %885 = vmatpush.bf16.xpose.msra.mxu0 0
    %886 = vmatpush.bf16.xpose.msra.mxu0 0
    %887 = vmatpush.bf16.xpose.msra.mxu0 %v878
    %888 = vmatmul.bf16.gmra.mxu0 %v875
    %v889 = vpop.f32.mrf.mxu0
    %v890 = vadd.f32 0.0, %v889
    %v891 = vpop.f32.mrf.mxu0
    %892 = vdwg.mxu0
    %893 = vst [vmem:[#allocation1] ss:$9 sm:$0xff] %v313
    %v894 = vld [vmem:[#allocation1] sm:$0xff]
    %896 = vrot.lane.b32.xlu0 %v894, 112
    %v897 = vpop.permute.xlu0 %896
    %898 = vst [vmem:[#allocation1] ss:$9 sm:$0xff] %v344
    %v899 = vld [vmem:[#allocation1] sm:$0xff]
    %901 = vrot.lane.b32.xlu0 %v899, 48
    %v902 = vpop.permute.xlu0 %901
    %v904 = vsel %vm395, %v897, 0
    %v907 = vsel %vm395, %v902, 0
    %909 = vmatpush.bf16.xpose.msra.mxu0 0
    %910 = vmatpush.bf16.xpose.msra.mxu0 0
    %911 = vmatpush.bf16.xpose.msra.mxu0 0
    %912 = vmatpush.bf16.xpose.msra.mxu0 0
    %913 = vmatpush.bf16.xpose.msra.mxu0 0
    %914 = vmatpush.bf16.xpose.msra.mxu0 0
    %915 = vmatpush.bf16.xpose.msra.mxu0 0
    %916 = vmatpush.bf16.xpose.msra.mxu0 %v907
    %917 = vmatmul.bf16.gmra.mxu0 %v904
    %v918 = vpop.f32.mrf.mxu0
    %v919 = vadd.f32 0.0, %v918
    %v920 = vpop.f32.mrf.mxu0
    %921 = vdwg.mxu0
    %922 = vst [vmem:[#allocation1] ss:$9 sm:$0xff] %v317
    %v923 = vld [vmem:[#allocation1] sm:$0xff]
    %925 = vrot.lane.b32.xlu0 %v923, 112
    %v926 = vpop.permute.xlu0 %925
    %927 = vst [vmem:[#allocation1] ss:$9 sm:$0xff] %v347
    %v928 = vld [vmem:[#allocation1] sm:$0xff]
    %930 = vrot.lane.b32.xlu0 %v928, 48
    %v931 = vpop.permute.xlu0 %930
    %v933 = vsel %vm395, %v926, 0
    %v936 = vsel %vm395, %v931, 0
    %938 = vmatpush.bf16.xpose.msra.mxu0 0
    %939 = vmatpush.bf16.xpose.msra.mxu0 0
    %940 = vmatpush.bf16.xpose.msra.mxu0 0
    %941 = vmatpush.bf16.xpose.msra.mxu0 0
    %942 = vmatpush.bf16.xpose.msra.mxu0 0
    %943 = vmatpush.bf16.xpose.msra.mxu0 0
    %944 = vmatpush.bf16.xpose.msra.mxu0 0
    %945 = vmatpush.bf16.xpose.msra.mxu0 %v936
    %946 = vmatmul.bf16.gmra.mxu0 %v933
    %v947 = vpop.f32.mrf.mxu0
    %v948 = vadd.f32 0.0, %v947
    %v949 = vpop.f32.mrf.mxu0
    %950 = vdwg.mxu0
    %951 = vst [vmem:[#allocation1] ss:$9 sm:$0xff] %v320
    %v952 = vld [vmem:[#allocation1] sm:$0xff]
    %954 = vrot.lane.b32.xlu0 %v952, 112
    %v955 = vpop.permute.xlu0 %954
    %956 = vst [vmem:[#allocation1] ss:$9 sm:$0xff] %v350
    %v957 = vld [vmem:[#allocation1] sm:$0xff]
    %959 = vrot.lane.b32.xlu0 %v957, 48
    %v960 = vpop.permute.xlu0 %959
    %v962 = vsel %vm395, %v955, 0
    %v965 = vsel %vm395, %v960, 0
    %967 = vmatpush.bf16.xpose.msra.mxu0 0
    %968 = vmatpush.bf16.xpose.msra.mxu0 0
    %969 = vmatpush.bf16.xpose.msra.mxu0 0
    %970 = vmatpush.bf16.xpose.msra.mxu0 0
    %971 = vmatpush.bf16.xpose.msra.mxu0 0
    %972 = vmatpush.bf16.xpose.msra.mxu0 0
    %973 = vmatpush.bf16.xpose.msra.mxu0 0
    %974 = vmatpush.bf16.xpose.msra.mxu0 %v965
    %975 = vmatmul.bf16.gmra.mxu0 %v962
    %v976 = vpop.f32.mrf.mxu0
    %v977 = vadd.f32 0.0, %v976
    %v978 = vpop.f32.mrf.mxu0
    %979 = vdwg.mxu0
    %980 = vst [vmem:[#allocation1] ss:$9 sm:$0xff] %v323
    %v981 = vld [vmem:[#allocation1] sm:$0xff]
    %983 = vrot.lane.b32.xlu0 %v981, 112
    %v984 = vpop.permute.xlu0 %983
    %985 = vst [vmem:[#allocation1] ss:$9 sm:$0xff] %v353
    %v986 = vld [vmem:[#allocation1] sm:$0xff]
    %988 = vrot.lane.b32.xlu0 %v986, 48
    %v989 = vpop.permute.xlu0 %988
    %v991 = vsel %vm395, %v984, 0
    %v994 = vsel %vm395, %v989, 0
    %996 = vmatpush.bf16.xpose.msra.mxu0 0
    %997 = vmatpush.bf16.xpose.msra.mxu0 0
    %998 = vmatpush.bf16.xpose.msra.mxu0 0
    %999 = vmatpush.bf16.xpose.msra.mxu0 0
    %1000 = vmatpush.bf16.xpose.msra.mxu0 0
    %1001 = vmatpush.bf16.xpose.msra.mxu0 0
    %1002 = vmatpush.bf16.xpose.msra.mxu0 0
    %1003 = vmatpush.bf16.xpose.msra.mxu0 %v994
    %1004 = vmatmul.bf16.gmra.mxu0 %v991
    %v1005 = vpop.f32.mrf.mxu0
    %v1006 = vadd.f32 0.0, %v1005
    %v1007 = vpop.f32.mrf.mxu0
    %1008 = vdwg.mxu0
    %1009 = vst [vmem:[#allocation1] ss:$9 sm:$0xff] %v326
    %v1010 = vld [vmem:[#allocation1] sm:$0xff]
    %1012 = vrot.lane.b32.xlu0 %v1010, 112
    %v1013 = vpop.permute.xlu0 %1012
    %1014 = vst [vmem:[#allocation1] ss:$9 sm:$0xff] %v356
    %v1015 = vld [vmem:[#allocation1] sm:$0xff]
    %1017 = vrot.lane.b32.xlu0 %v1015, 48
    %v1018 = vpop.permute.xlu0 %1017
    %v1020 = vsel %vm395, %v1013, 0
    %v1023 = vsel %vm395, %v1018, 0
    %1025 = vmatpush.bf16.xpose.msra.mxu0 0
    %1026 = vmatpush.bf16.xpose.msra.mxu0 0
    %1027 = vmatpush.bf16.xpose.msra.mxu0 0
    %1028 = vmatpush.bf16.xpose.msra.mxu0 0
    %1029 = vmatpush.bf16.xpose.msra.mxu0 0
    %1030 = vmatpush.bf16.xpose.msra.mxu0 0
    %1031 = vmatpush.bf16.xpose.msra.mxu0 0
    %1032 = vmatpush.bf16.xpose.msra.mxu0 %v1023
    %1033 = vmatmul.bf16.gmra.mxu0 %v1020
    %v1034 = vpop.f32.mrf.mxu0
    %v1035 = vadd.f32 0.0, %v1034
    %v1036 = vpop.f32.mrf.mxu0
    %1037 = vdwg.mxu0
    %1038 = vst [vmem:[#allocation1] ss:$9 sm:$0xff] %v329
    %v1039 = vld [vmem:[#allocation1] sm:$0xff]
    %1041 = vrot.lane.b32.xlu0 %v1039, 112
    %v1042 = vpop.permute.xlu0 %1041
    %1043 = vst [vmem:[#allocation1] ss:$9 sm:$0xff] %v359
    %v1044 = vld [vmem:[#allocation1] sm:$0xff]
    %1046 = vrot.lane.b32.xlu0 %v1044, 48
    %v1047 = vpop.permute.xlu0 %1046
    %v1049 = vsel %vm395, %v1042, 0
    %v1052 = vsel %vm395, %v1047, 0
    %1054 = vmatpush.bf16.xpose.msra.mxu0 0
    %1055 = vmatpush.bf16.xpose.msra.mxu0 0
    %1056 = vmatpush.bf16.xpose.msra.mxu0 0
    %1057 = vmatpush.bf16.xpose.msra.mxu0 0
    %1058 = vmatpush.bf16.xpose.msra.mxu0 0
    %1059 = vmatpush.bf16.xpose.msra.mxu0 0
    %1060 = vmatpush.bf16.xpose.msra.mxu0 0
    %1061 = vmatpush.bf16.xpose.msra.mxu0 %v1052
    %1062 = vmatmul.bf16.gmra.mxu0 %v1049
    %v1063 = vpop.f32.mrf.mxu0
    %v1064 = vadd.f32 0.0, %v1063
    %v1065 = vpop.f32.mrf.mxu0
    %1066 = vdwg.mxu0
    %v1067 = vsel %vm587, %v861, -inf
    %1068 = vmax.xlane.f32.xlu0 %v1067
    %v1069 = vpop.xlane.xlu0 %1068
    %v1070 = vsel %vm587, %v890, -inf
    %1071 = vmax.xlane.f32.xlu0 %v1070
    %v1072 = vpop.xlane.xlu0 %1071
    %v1073 = vsel %vm587, %v919, -inf
    %1074 = vmax.xlane.f32.xlu0 %v1073
    %v1075 = vpop.xlane.xlu0 %1074
    %v1076 = vsel %vm587, %v948, -inf
    %1077 = vmax.xlane.f32.xlu0 %v1076
    %v1078 = vpop.xlane.xlu0 %1077
    %v1079 = vsel %vm587, %v977, -inf
    %1080 = vmax.xlane.f32.xlu0 %v1079
    %v1081 = vpop.xlane.xlu0 %1080
    %v1082 = vsel %vm587, %v1006, -inf
    %1083 = vmax.xlane.f32.xlu0 %v1082
    %v1084 = vpop.xlane.xlu0 %1083
    %v1085 = vsel %vm587, %v1035, -inf
    %1086 = vmax.xlane.f32.xlu0 %v1085
    %v1087 = vpop.xlane.xlu0 %1086
    %v1088 = vsel %vm587, %v1064, -inf
    %1089 = vmax.xlane.f32.xlu0 %v1088
    %v1090 = vpop.xlane.xlu0 %1089
    %v1091 = vsub.f32 %v861, %v1069
    %v1092 = vsub.f32 %v890, %v1072
    %v1093 = vsub.f32 %v919, %v1075
    %v1094 = vsub.f32 %v948, %v1078
    %v1095 = vsub.f32 %v977, %v1081
    %v1096 = vsub.f32 %v1006, %v1084
    %v1097 = vsub.f32 %v1035, %v1087
    %v1098 = vsub.f32 %v1064, %v1090
    %v1099 = vmul.f32 %v1091, 1.442695
    %v1100 = vpow.pop %v1099
    %v1101 = vmul.f32 %v1092, 1.442695
    %v1102 = vpow.pop %v1101
    %v1103 = vmul.f32 %v1093, 1.442695
    %v1104 = vpow.pop %v1103
    %v1105 = vmul.f32 %v1094, 1.442695
    %v1106 = vpow.pop %v1105
    %v1107 = vmul.f32 %v1095, 1.442695
    %v1108 = vpow.pop %v1107
    %v1109 = vmul.f32 %v1096, 1.442695
    %v1110 = vpow.pop %v1109
    %v1111 = vmul.f32 %v1097, 1.442695
    %v1112 = vpow.pop %v1111
    %v1113 = vmul.f32 %v1098, 1.442695
    %v1114 = vpow.pop %v1113
    %v1115 = vsel %vm587, %v1100, 0.0
    %1116 = vadd.xlane.f32.xlu0 %v1115
    %v1117 = vpop.xlane.xlu0 %1116
    %v1118 = vsel %vm587, %v1102, 0.0
    %1119 = vadd.xlane.f32.xlu0 %v1118
    %v1120 = vpop.xlane.xlu0 %1119
    %v1121 = vsel %vm587, %v1104, 0.0
    %1122 = vadd.xlane.f32.xlu0 %v1121
    %v1123 = vpop.xlane.xlu0 %1122
    %v1124 = vsel %vm587, %v1106, 0.0
    %1125 = vadd.xlane.f32.xlu0 %v1124
    %v1126 = vpop.xlane.xlu0 %1125
    %v1127 = vsel %vm587, %v1108, 0.0
    %1128 = vadd.xlane.f32.xlu0 %v1127
    %v1129 = vpop.xlane.xlu0 %1128
    %v1130 = vsel %vm587, %v1110, 0.0
    %1131 = vadd.xlane.f32.xlu0 %v1130
    %v1132 = vpop.xlane.xlu0 %1131
    %v1133 = vsel %vm587, %v1112, 0.0
    %1134 = vadd.xlane.f32.xlu0 %v1133
    %v1135 = vpop.xlane.xlu0 %1134
    %v1136 = vsel %vm587, %v1114, 0.0
    %1137 = vadd.xlane.f32.xlu0 %v1136
    %v1138 = vpop.xlane.xlu0 %1137
    %v1139 = vrcp.pop %v1117
    %v1140 = vrcp.pop %v1120
    %v1141 = vrcp.pop %v1123
    %v1142 = vrcp.pop %v1126
    %v1143 = vrcp.pop %v1129
    %v1144 = vrcp.pop %v1132
    %v1145 = vrcp.pop %v1135
    %v1146 = vrcp.pop %v1138
    %v1147 = vmul.f32 %v1100, %v1139
    %v1148 = vmul.f32 %v1102, %v1140
    %v1149 = vmul.f32 %v1104, %v1141
    %v1150 = vmul.f32 %v1106, %v1142
    %v1151 = vmul.f32 %v1108, %v1143
    %v1152 = vmul.f32 %v1110, %v1144
    %v1153 = vmul.f32 %v1112, %v1145
    %v1154 = vmul.f32 %v1114, %v1146
    %v1155 = vpack.c.bf16 %v1147, %v1147
    %v1156 = vpack.c.bf16 %v1148, %v1148
    %v1157 = vpack.c.bf16 %v1149, %v1149
    %v1158 = vpack.c.bf16 %v1150, %v1150
    %v1159 = vpack.c.bf16 %v1151, %v1151
    %v1160 = vpack.c.bf16 %v1152, %v1152
    %v1161 = vpack.c.bf16 %v1153, %v1153
    %v1162 = vpack.c.bf16 %v1154, %v1154
    %1163 = vst [vmem:[#allocation1] ss:$9 sm:$0xff] %v368
    %v1164 = vld [vmem:[#allocation1] sm:$0xff]
    %1166 = vrot.lane.b32.xlu0 %v1164, 112
    %v1167 = vpop.permute.xlu0 %1166
    %v1169 = vsel %vm684, %v1155, 0
    %v1172 = vsel %vm302, %v1167, 0
    %1174 = vmatpush.bf16.msra.mxu0 0
    %1175 = vmatpush.bf16.msra.mxu0 0
    %1176 = vmatpush.bf16.msra.mxu0 0
    %1177 = vmatpush.bf16.msra.mxu0 0
    %1178 = vmatpush.bf16.msra.mxu0 0
    %1179 = vmatpush.bf16.msra.mxu0 0
    %1180 = vmatpush.bf16.msra.mxu0 0
    %1181 = vmatpush.bf16.msra.mxu0 %v1172
    %1182 = vmatmul.bf16.gmra.mxu0 %v1169
    %v1183 = vpop.f32.mrf.mxu0
    %v1184 = vadd.f32 0.0, %v1183
    %v1185 = vpop.f32.mrf.mxu0
    %1186 = vdwg.mxu0
    %1187 = vst [vmem:[#allocation1] ss:$9 sm:$0xff] %v371
    %v1188 = vld [vmem:[#allocation1] sm:$0xff]
    %1190 = vrot.lane.b32.xlu0 %v1188, 112
    %v1191 = vpop.permute.xlu0 %1190
    %v1193 = vsel %vm684, %v1156, 0
    %v1196 = vsel %vm302, %v1191, 0
    %1198 = vmatpush.bf16.msra.mxu0 0
    %1199 = vmatpush.bf16.msra.mxu0 0
    %1200 = vmatpush.bf16.msra.mxu0 0
    %1201 = vmatpush.bf16.msra.mxu0 0
    %1202 = vmatpush.bf16.msra.mxu0 0
    %1203 = vmatpush.bf16.msra.mxu0 0
    %1204 = vmatpush.bf16.msra.mxu0 0
    %1205 = vmatpush.bf16.msra.mxu0 %v1196
    %1206 = vmatmul.bf16.gmra.mxu0 %v1193
    %v1207 = vpop.f32.mrf.mxu0
    %v1208 = vadd.f32 0.0, %v1207
    %v1209 = vpop.f32.mrf.mxu0
    %1210 = vdwg.mxu0
    %1211 = vst [vmem:[#allocation1] ss:$9 sm:$0xff] %v374
    %v1212 = vld [vmem:[#allocation1] sm:$0xff]
    %1214 = vrot.lane.b32.xlu0 %v1212, 112
    %v1215 = vpop.permute.xlu0 %1214
    %v1217 = vsel %vm684, %v1157, 0
    %v1220 = vsel %vm302, %v1215, 0
    %1222 = vmatpush.bf16.msra.mxu0 0
    %1223 = vmatpush.bf16.msra.mxu0 0
    %1224 = vmatpush.bf16.msra.mxu0 0
    %1225 = vmatpush.bf16.msra.mxu0 0
    %1226 = vmatpush.bf16.msra.mxu0 0
    %1227 = vmatpush.bf16.msra.mxu0 0
    %1228 = vmatpush.bf16.msra.mxu0 0
    %1229 = vmatpush.bf16.msra.mxu0 %v1220
    %1230 = vmatmul.bf16.gmra.mxu0 %v1217
    %v1231 = vpop.f32.mrf.mxu0
    %v1232 = vadd.f32 0.0, %v1231
    %v1233 = vpop.f32.mrf.mxu0
    %1234 = vdwg.mxu0
    %1235 = vst [vmem:[#allocation1] ss:$9 sm:$0xff] %v377
    %v1236 = vld [vmem:[#allocation1] sm:$0xff]
    %1238 = vrot.lane.b32.xlu0 %v1236, 112
    %v1239 = vpop.permute.xlu0 %1238
    %v1241 = vsel %vm684, %v1158, 0
    %v1244 = vsel %vm302, %v1239, 0
    %1246 = vmatpush.bf16.msra.mxu0 0
    %1247 = vmatpush.bf16.msra.mxu0 0
    %1248 = vmatpush.bf16.msra.mxu0 0
    %1249 = vmatpush.bf16.msra.mxu0 0
    %1250 = vmatpush.bf16.msra.mxu0 0
    %1251 = vmatpush.bf16.msra.mxu0 0
    %1252 = vmatpush.bf16.msra.mxu0 0
    %1253 = vmatpush.bf16.msra.mxu0 %v1244
    %1254 = vmatmul.bf16.gmra.mxu0 %v1241
    %v1255 = vpop.f32.mrf.mxu0
    %v1256 = vadd.f32 0.0, %v1255
    %v1257 = vpop.f32.mrf.mxu0
    %1258 = vdwg.mxu0
    %1259 = vst [vmem:[#allocation1] ss:$9 sm:$0xff] %v380
    %v1260 = vld [vmem:[#allocation1] sm:$0xff]
    %1262 = vrot.lane.b32.xlu0 %v1260, 112
    %v1263 = vpop.permute.xlu0 %1262
    %v1265 = vsel %vm684, %v1159, 0
    %v1268 = vsel %vm302, %v1263, 0
    %1270 = vmatpush.bf16.msra.mxu0 0
    %1271 = vmatpush.bf16.msra.mxu0 0
    %1272 = vmatpush.bf16.msra.mxu0 0
    %1273 = vmatpush.bf16.msra.mxu0 0
    %1274 = vmatpush.bf16.msra.mxu0 0
    %1275 = vmatpush.bf16.msra.mxu0 0
    %1276 = vmatpush.bf16.msra.mxu0 0
    %1277 = vmatpush.bf16.msra.mxu0 %v1268
    %1278 = vmatmul.bf16.gmra.mxu0 %v1265
    %v1279 = vpop.f32.mrf.mxu0
    %v1280 = vadd.f32 0.0, %v1279
    %v1281 = vpop.f32.mrf.mxu0
    %1282 = vdwg.mxu0
    %1283 = vst [vmem:[#allocation1] ss:$9 sm:$0xff] %v383
    %v1284 = vld [vmem:[#allocation1] sm:$0xff]
    %1286 = vrot.lane.b32.xlu0 %v1284, 112
    %v1287 = vpop.permute.xlu0 %1286
    %v1289 = vsel %vm684, %v1160, 0
    %v1292 = vsel %vm302, %v1287, 0
    %1294 = vmatpush.bf16.msra.mxu0 0
    %1295 = vmatpush.bf16.msra.mxu0 0
    %1296 = vmatpush.bf16.msra.mxu0 0
    %1297 = vmatpush.bf16.msra.mxu0 0
    %1298 = vmatpush.bf16.msra.mxu0 0
    %1299 = vmatpush.bf16.msra.mxu0 0
    %1300 = vmatpush.bf16.msra.mxu0 0
    %1301 = vmatpush.bf16.msra.mxu0 %v1292
    %1302 = vmatmul.bf16.gmra.mxu0 %v1289
    %v1303 = vpop.f32.mrf.mxu0
    %v1304 = vadd.f32 0.0, %v1303
    %v1305 = vpop.f32.mrf.mxu0
    %1306 = vdwg.mxu0
    %1307 = vst [vmem:[#allocation1] ss:$9 sm:$0xff] %v386
    %v1308 = vld [vmem:[#allocation1] sm:$0xff]
    %1310 = vrot.lane.b32.xlu0 %v1308, 112
    %v1311 = vpop.permute.xlu0 %1310
    %v1313 = vsel %vm684, %v1161, 0
    %v1316 = vsel %vm302, %v1311, 0
    %1318 = vmatpush.bf16.msra.mxu0 0
    %1319 = vmatpush.bf16.msra.mxu0 0
    %1320 = vmatpush.bf16.msra.mxu0 0
    %1321 = vmatpush.bf16.msra.mxu0 0
    %1322 = vmatpush.bf16.msra.mxu0 0
    %1323 = vmatpush.bf16.msra.mxu0 0
    %1324 = vmatpush.bf16.msra.mxu0 0
    %1325 = vmatpush.bf16.msra.mxu0 %v1316
    %1326 = vmatmul.bf16.gmra.mxu0 %v1313
    %v1327 = vpop.f32.mrf.mxu0
    %v1328 = vadd.f32 0.0, %v1327
    %v1329 = vpop.f32.mrf.mxu0
    %1330 = vdwg.mxu0
    %1331 = vst [vmem:[#allocation1] ss:$9 sm:$0xff] %v389
    %v1332 = vld [vmem:[#allocation1] sm:$0xff]
    %1334 = vrot.lane.b32.xlu0 %v1332, 112
    %v1335 = vpop.permute.xlu0 %1334
    %v1337 = vsel %vm684, %v1162, 0
    %v1340 = vsel %vm302, %v1335, 0
    %1342 = vmatpush.bf16.msra.mxu0 0
    %1343 = vmatpush.bf16.msra.mxu0 0
    %1344 = vmatpush.bf16.msra.mxu0 0
    %1345 = vmatpush.bf16.msra.mxu0 0
    %1346 = vmatpush.bf16.msra.mxu0 0
    %1347 = vmatpush.bf16.msra.mxu0 0
    %1348 = vmatpush.bf16.msra.mxu0 0
    %1349 = vmatpush.bf16.msra.mxu0 %v1340
    %1350 = vmatmul.bf16.gmra.mxu0 %v1337
    %v1351 = vpop.f32.mrf.mxu0
    %v1352 = vadd.f32 0.0, %v1351
    %v1353 = vpop.f32.mrf.mxu0
    %1354 = vdwg.mxu0
    %1355 = vst [vmem:[#allocation1] ss:$9 sm:$0xff] %v305
    %v1356 = vld [vmem:[#allocation1] sm:$0xff]
    %1358 = vrot.lane.b32.xlu0 %v1356, 96
    %v1359 = vpop.permute.xlu0 %1358
    %1360 = vst [vmem:[#allocation1] ss:$9 sm:$0xff] %v338
    %v1361 = vld [vmem:[#allocation1] sm:$0xff]
    %1363 = vrot.lane.b32.xlu0 %v1361, 32
    %v1364 = vpop.permute.xlu0 %1363
    %v1366 = vsel %vm395, %v1359, 0
    %v1369 = vsel %vm395, %v1364, 0
    %1371 = vmatpush.bf16.xpose.msra.mxu0 0
    %1372 = vmatpush.bf16.xpose.msra.mxu0 0
    %1373 = vmatpush.bf16.xpose.msra.mxu0 0
    %1374 = vmatpush.bf16.xpose.msra.mxu0 0
    %1375 = vmatpush.bf16.xpose.msra.mxu0 0
    %1376 = vmatpush.bf16.xpose.msra.mxu0 0
    %1377 = vmatpush.bf16.xpose.msra.mxu0 0
    %1378 = vmatpush.bf16.xpose.msra.mxu0 %v1369
    %1379 = vmatmul.bf16.gmra.mxu0 %v1366
    %v1380 = vpop.f32.mrf.mxu0
    %v1381 = vadd.f32 0.0, %v1380
    %v1382 = vpop.f32.mrf.mxu0
    %1383 = vdwg.mxu0
    %1384 = vst [vmem:[#allocation1] ss:$9 sm:$0xff] %v309
    %v1385 = vld [vmem:[#allocation1] sm:$0xff]
    %1387 = vrot.lane.b32.xlu0 %v1385, 96
    %v1388 = vpop.permute.xlu0 %1387
    %1389 = vst [vmem:[#allocation1] ss:$9 sm:$0xff] %v341
    %v1390 = vld [vmem:[#allocation1] sm:$0xff]
    %1392 = vrot.lane.b32.xlu0 %v1390, 32
    %v1393 = vpop.permute.xlu0 %1392
    %v1395 = vsel %vm395, %v1388, 0
    %v1398 = vsel %vm395, %v1393, 0
    %1400 = vmatpush.bf16.xpose.msra.mxu0 0
    %1401 = vmatpush.bf16.xpose.msra.mxu0 0
    %1402 = vmatpush.bf16.xpose.msra.mxu0 0
    %1403 = vmatpush.bf16.xpose.msra.mxu0 0
    %1404 = vmatpush.bf16.xpose.msra.mxu0 0
    %1405 = vmatpush.bf16.xpose.msra.mxu0 0
    %1406 = vmatpush.bf16.xpose.msra.mxu0 0
    %1407 = vmatpush.bf16.xpose.msra.mxu0 %v1398
    %1408 = vmatmul.bf16.gmra.mxu0 %v1395
    %v1409 = vpop.f32.mrf.mxu0
    %v1410 = vadd.f32 0.0, %v1409
    %v1411 = vpop.f32.mrf.mxu0
    %1412 = vdwg.mxu0
    %1413 = vst [vmem:[#allocation1] ss:$9 sm:$0xff] %v313
    %v1414 = vld [vmem:[#allocation1] sm:$0xff]
    %1416 = vrot.lane.b32.xlu0 %v1414, 96
    %v1417 = vpop.permute.xlu0 %1416
    %1418 = vst [vmem:[#allocation1] ss:$9 sm:$0xff] %v344
    %v1419 = vld [vmem:[#allocation1] sm:$0xff]
    %1421 = vrot.lane.b32.xlu0 %v1419, 32
    %v1422 = vpop.permute.xlu0 %1421
    %v1424 = vsel %vm395, %v1417, 0
    %v1427 = vsel %vm395, %v1422, 0
    %1429 = vmatpush.bf16.xpose.msra.mxu0 0
    %1430 = vmatpush.bf16.xpose.msra.mxu0 0
    %1431 = vmatpush.bf16.xpose.msra.mxu0 0
    %1432 = vmatpush.bf16.xpose.msra.mxu0 0
    %1433 = vmatpush.bf16.xpose.msra.mxu0 0
    %1434 = vmatpush.bf16.xpose.msra.mxu0 0
    %1435 = vmatpush.bf16.xpose.msra.mxu0 0
    %1436 = vmatpush.bf16.xpose.msra.mxu0 %v1427
    %1437 = vmatmul.bf16.gmra.mxu0 %v1424
    %v1438 = vpop.f32.mrf.mxu0
    %v1439 = vadd.f32 0.0, %v1438
    %v1440 = vpop.f32.mrf.mxu0
    %1441 = vdwg.mxu0
    %1442 = vst [vmem:[#allocation1] ss:$9 sm:$0xff] %v317
    %v1443 = vld [vmem:[#allocation1] sm:$0xff]
    %1445 = vrot.lane.b32.xlu0 %v1443, 96
    %v1446 = vpop.permute.xlu0 %1445
    %1447 = vst [vmem:[#allocation1] ss:$9 sm:$0xff] %v347
    %v1448 = vld [vmem:[#allocation1] sm:$0xff]
    %1450 = vrot.lane.b32.xlu0 %v1448, 32
    %v1451 = vpop.permute.xlu0 %1450
    %v1453 = vsel %vm395, %v1446, 0
    %v1456 = vsel %vm395, %v1451, 0
    %1458 = vmatpush.bf16.xpose.msra.mxu0 0
    %1459 = vmatpush.bf16.xpose.msra.mxu0 0
    %1460 = vmatpush.bf16.xpose.msra.mxu0 0
    %1461 = vmatpush.bf16.xpose.msra.mxu0 0
    %1462 = vmatpush.bf16.xpose.msra.mxu0 0
    %1463 = vmatpush.bf16.xpose.msra.mxu0 0
    %1464 = vmatpush.bf16.xpose.msra.mxu0 0
    %1465 = vmatpush.bf16.xpose.msra.mxu0 %v1456
    %1466 = vmatmul.bf16.gmra.mxu0 %v1453
    %v1467 = vpop.f32.mrf.mxu0
    %v1468 = vadd.f32 0.0, %v1467
    %v1469 = vpop.f32.mrf.mxu0
    %1470 = vdwg.mxu0
    %1471 = vst [vmem:[#allocation1] ss:$9 sm:$0xff] %v320
    %v1472 = vld [vmem:[#allocation1] sm:$0xff]
    %1474 = vrot.lane.b32.xlu0 %v1472, 96
    %v1475 = vpop.permute.xlu0 %1474
    %1476 = vst [vmem:[#allocation1] ss:$9 sm:$0xff] %v350
    %v1477 = vld [vmem:[#allocation1] sm:$0xff]
    %1479 = vrot.lane.b32.xlu0 %v1477, 32
    %v1480 = vpop.permute.xlu0 %1479
    %v1482 = vsel %vm395, %v1475, 0
    %v1485 = vsel %vm395, %v1480, 0
    %1487 = vmatpush.bf16.xpose.msra.mxu0 0
    %1488 = vmatpush.bf16.xpose.msra.mxu0 0
    %1489 = vmatpush.bf16.xpose.msra.mxu0 0
    %1490 = vmatpush.bf16.xpose.msra.mxu0 0
    %1491 = vmatpush.bf16.xpose.msra.mxu0 0
    %1492 = vmatpush.bf16.xpose.msra.mxu0 0
    %1493 = vmatpush.bf16.xpose.msra.mxu0 0
    %1494 = vmatpush.bf16.xpose.msra.mxu0 %v1485
    %1495 = vmatmul.bf16.gmra.mxu0 %v1482
    %v1496 = vpop.f32.mrf.mxu0
    %v1497 = vadd.f32 0.0, %v1496
    %v1498 = vpop.f32.mrf.mxu0
    %1499 = vdwg.mxu0
    %1500 = vst [vmem:[#allocation1] ss:$9 sm:$0xff] %v323
    %v1501 = vld [vmem:[#allocation1] sm:$0xff]
    %1503 = vrot.lane.b32.xlu0 %v1501, 96
    %v1504 = vpop.permute.xlu0 %1503
    %1505 = vst [vmem:[#allocation1] ss:$9 sm:$0xff] %v353
    %v1506 = vld [vmem:[#allocation1] sm:$0xff]
    %1508 = vrot.lane.b32.xlu0 %v1506, 32
    %v1509 = vpop.permute.xlu0 %1508
    %v1511 = vsel %vm395, %v1504, 0
    %v1514 = vsel %vm395, %v1509, 0
    %1516 = vmatpush.bf16.xpose.msra.mxu0 0
    %1517 = vmatpush.bf16.xpose.msra.mxu0 0
    %1518 = vmatpush.bf16.xpose.msra.mxu0 0
    %1519 = vmatpush.bf16.xpose.msra.mxu0 0
    %1520 = vmatpush.bf16.xpose.msra.mxu0 0
    %1521 = vmatpush.bf16.xpose.msra.mxu0 0
    %1522 = vmatpush.bf16.xpose.msra.mxu0 0
    %1523 = vmatpush.bf16.xpose.msra.mxu0 %v1514
    %1524 = vmatmul.bf16.gmra.mxu0 %v1511
    %v1525 = vpop.f32.mrf.mxu0
    %v1526 = vadd.f32 0.0, %v1525
    %v1527 = vpop.f32.mrf.mxu0
    %1528 = vdwg.mxu0
    %1529 = vst [vmem:[#allocation1] ss:$9 sm:$0xff] %v326
    %v1530 = vld [vmem:[#allocation1] sm:$0xff]
    %1532 = vrot.lane.b32.xlu0 %v1530, 96
    %v1533 = vpop.permute.xlu0 %1532
    %1534 = vst [vmem:[#allocation1] ss:$9 sm:$0xff] %v356
    %v1535 = vld [vmem:[#allocation1] sm:$0xff]
    %1537 = vrot.lane.b32.xlu0 %v1535, 32
    %v1538 = vpop.permute.xlu0 %1537
    %v1540 = vsel %vm395, %v1533, 0
    %v1543 = vsel %vm395, %v1538, 0
    %1545 = vmatpush.bf16.xpose.msra.mxu0 0
    %1546 = vmatpush.bf16.xpose.msra.mxu0 0
    %1547 = vmatpush.bf16.xpose.msra.mxu0 0
    %1548 = vmatpush.bf16.xpose.msra.mxu0 0
    %1549 = vmatpush.bf16.xpose.msra.mxu0 0
    %1550 = vmatpush.bf16.xpose.msra.mxu0 0
    %1551 = vmatpush.bf16.xpose.msra.mxu0 0
    %1552 = vmatpush.bf16.xpose.msra.mxu0 %v1543
    %1553 = vmatmul.bf16.gmra.mxu0 %v1540
    %v1554 = vpop.f32.mrf.mxu0
    %v1555 = vadd.f32 0.0, %v1554
    %v1556 = vpop.f32.mrf.mxu0
    %1557 = vdwg.mxu0
    %1558 = vst [vmem:[#allocation1] ss:$9 sm:$0xff] %v329
    %v1559 = vld [vmem:[#allocation1] sm:$0xff]
    %1561 = vrot.lane.b32.xlu0 %v1559, 96
    %v1562 = vpop.permute.xlu0 %1561
    %1563 = vst [vmem:[#allocation1] ss:$9 sm:$0xff] %v359
    %v1564 = vld [vmem:[#allocation1] sm:$0xff]
    %1566 = vrot.lane.b32.xlu0 %v1564, 32
    %v1567 = vpop.permute.xlu0 %1566
    %v1569 = vsel %vm395, %v1562, 0
    %v1572 = vsel %vm395, %v1567, 0
    %1574 = vmatpush.bf16.xpose.msra.mxu0 0
    %1575 = vmatpush.bf16.xpose.msra.mxu0 0
    %1576 = vmatpush.bf16.xpose.msra.mxu0 0
    %1577 = vmatpush.bf16.xpose.msra.mxu0 0
    %1578 = vmatpush.bf16.xpose.msra.mxu0 0
    %1579 = vmatpush.bf16.xpose.msra.mxu0 0
    %1580 = vmatpush.bf16.xpose.msra.mxu0 0
    %1581 = vmatpush.bf16.xpose.msra.mxu0 %v1572
    %1582 = vmatmul.bf16.gmra.mxu0 %v1569
    %v1583 = vpop.f32.mrf.mxu0
    %v1584 = vadd.f32 0.0, %v1583
    %v1585 = vpop.f32.mrf.mxu0
    %1586 = vdwg.mxu0
    %v1587 = vsel %vm587, %v1381, -inf
    %1588 = vmax.xlane.f32.xlu0 %v1587
    %v1589 = vpop.xlane.xlu0 %1588
    %v1590 = vsel %vm587, %v1410, -inf
    %1591 = vmax.xlane.f32.xlu0 %v1590
    %v1592 = vpop.xlane.xlu0 %1591
    %v1593 = vsel %vm587, %v1439, -inf
    %1594 = vmax.xlane.f32.xlu0 %v1593
    %v1595 = vpop.xlane.xlu0 %1594
    %v1596 = vsel %vm587, %v1468, -inf
    %1597 = vmax.xlane.f32.xlu0 %v1596
    %v1598 = vpop.xlane.xlu0 %1597
    %v1599 = vsel %vm587, %v1497, -inf
    %1600 = vmax.xlane.f32.xlu0 %v1599
    %v1601 = vpop.xlane.xlu0 %1600
    %v1602 = vsel %vm587, %v1526, -inf
    %1603 = vmax.xlane.f32.xlu0 %v1602
    %v1604 = vpop.xlane.xlu0 %1603
    %v1605 = vsel %vm587, %v1555, -inf
    %1606 = vmax.xlane.f32.xlu0 %v1605
    %v1607 = vpop.xlane.xlu0 %1606
    %v1608 = vsel %vm587, %v1584, -inf
    %1609 = vmax.xlane.f32.xlu0 %v1608
    %v1610 = vpop.xlane.xlu0 %1609
    %v1611 = vsub.f32 %v1381, %v1589
    %v1612 = vsub.f32 %v1410, %v1592
    %v1613 = vsub.f32 %v1439, %v1595
    %v1614 = vsub.f32 %v1468, %v1598
    %v1615 = vsub.f32 %v1497, %v1601
    %v1616 = vsub.f32 %v1526, %v1604
    %v1617 = vsub.f32 %v1555, %v1607
    %v1618 = vsub.f32 %v1584, %v1610
    %v1619 = vmul.f32 %v1611, 1.442695
    %v1620 = vpow.pop %v1619
    %v1621 = vmul.f32 %v1612, 1.442695
    %v1622 = vpow.pop %v1621
    %v1623 = vmul.f32 %v1613, 1.442695
    %v1624 = vpow.pop %v1623
    %v1625 = vmul.f32 %v1614, 1.442695
    %v1626 = vpow.pop %v1625
    %v1627 = vmul.f32 %v1615, 1.442695
    %v1628 = vpow.pop %v1627
    %v1629 = vmul.f32 %v1616, 1.442695
    %v1630 = vpow.pop %v1629
    %v1631 = vmul.f32 %v1617, 1.442695
    %v1632 = vpow.pop %v1631
    %v1633 = vmul.f32 %v1618, 1.442695
    %v1634 = vpow.pop %v1633
    %v1635 = vsel %vm587, %v1620, 0.0
    %1636 = vadd.xlane.f32.xlu0 %v1635
    %v1637 = vpop.xlane.xlu0 %1636
    %v1638 = vsel %vm587, %v1622, 0.0
    %1639 = vadd.xlane.f32.xlu0 %v1638
    %v1640 = vpop.xlane.xlu0 %1639
    %v1641 = vsel %vm587, %v1624, 0.0
    %1642 = vadd.xlane.f32.xlu0 %v1641
    %v1643 = vpop.xlane.xlu0 %1642
    %v1644 = vsel %vm587, %v1626, 0.0
    %1645 = vadd.xlane.f32.xlu0 %v1644
    %v1646 = vpop.xlane.xlu0 %1645
    %v1647 = vsel %vm587, %v1628, 0.0
    %1648 = vadd.xlane.f32.xlu0 %v1647
    %v1649 = vpop.xlane.xlu0 %1648
    %v1650 = vsel %vm587, %v1630, 0.0
    %1651 = vadd.xlane.f32.xlu0 %v1650
    %v1652 = vpop.xlane.xlu0 %1651
    %v1653 = vsel %vm587, %v1632, 0.0
    %1654 = vadd.xlane.f32.xlu0 %v1653
    %v1655 = vpop.xlane.xlu0 %1654
    %v1656 = vsel %vm587, %v1634, 0.0
    %1657 = vadd.xlane.f32.xlu0 %v1656
    %v1658 = vpop.xlane.xlu0 %1657
    %v1659 = vrcp.pop %v1637
    %v1660 = vrcp.pop %v1640
    %v1661 = vrcp.pop %v1643
    %v1662 = vrcp.pop %v1646
    %v1663 = vrcp.pop %v1649
    %v1664 = vrcp.pop %v1652
    %v1665 = vrcp.pop %v1655
    %v1666 = vrcp.pop %v1658
    %v1667 = vmul.f32 %v1620, %v1659
    %v1668 = vmul.f32 %v1622, %v1660
    %v1669 = vmul.f32 %v1624, %v1661
    %v1670 = vmul.f32 %v1626, %v1662
    %v1671 = vmul.f32 %v1628, %v1663
    %v1672 = vmul.f32 %v1630, %v1664
    %v1673 = vmul.f32 %v1632, %v1665
    %v1674 = vmul.f32 %v1634, %v1666
    %v1675 = vpack.c.bf16 %v1667, %v1667
    %v1676 = vpack.c.bf16 %v1668, %v1668
    %v1677 = vpack.c.bf16 %v1669, %v1669
    %v1678 = vpack.c.bf16 %v1670, %v1670
    %v1679 = vpack.c.bf16 %v1671, %v1671
    %v1680 = vpack.c.bf16 %v1672, %v1672
    %v1681 = vpack.c.bf16 %v1673, %v1673
    %v1682 = vpack.c.bf16 %v1674, %v1674
    %1683 = vst [vmem:[#allocation1] ss:$9 sm:$0xff] %v368
    %v1684 = vld [vmem:[#allocation1] sm:$0xff]
    %1686 = vrot.lane.b32.xlu0 %v1684, 96
    %v1687 = vpop.permute.xlu0 %1686
    %v1689 = vsel %vm684, %v1675, 0
    %v1692 = vsel %vm302, %v1687, 0
    %1694 = vmatpush.bf16.msra.mxu0 0
    %1695 = vmatpush.bf16.msra.mxu0 0
    %1696 = vmatpush.bf16.msra.mxu0 0
    %1697 = vmatpush.bf16.msra.mxu0 0
    %1698 = vmatpush.bf16.msra.mxu0 0
    %1699 = vmatpush.bf16.msra.mxu0 0
    %1700 = vmatpush.bf16.msra.mxu0 0
    %1701 = vmatpush.bf16.msra.mxu0 %v1692
    %1702 = vmatmul.bf16.gmra.mxu0 %v1689
    %v1703 = vpop.f32.mrf.mxu0
    %v1704 = vadd.f32 0.0, %v1703
    %v1705 = vpop.f32.mrf.mxu0
    %1706 = vdwg.mxu0
    %1707 = vst [vmem:[#allocation1] ss:$9 sm:$0xff] %v371
    %v1708 = vld [vmem:[#allocation1] sm:$0xff]
    %1710 = vrot.lane.b32.xlu0 %v1708, 96
    %v1711 = vpop.permute.xlu0 %1710
    %v1713 = vsel %vm684, %v1676, 0
    %v1716 = vsel %vm302, %v1711, 0
    %1718 = vmatpush.bf16.msra.mxu0 0
    %1719 = vmatpush.bf16.msra.mxu0 0
    %1720 = vmatpush.bf16.msra.mxu0 0
    %1721 = vmatpush.bf16.msra.mxu0 0
    %1722 = vmatpush.bf16.msra.mxu0 0
    %1723 = vmatpush.bf16.msra.mxu0 0
    %1724 = vmatpush.bf16.msra.mxu0 0
    %1725 = vmatpush.bf16.msra.mxu0 %v1716
    %1726 = vmatmul.bf16.gmra.mxu0 %v1713
    %v1727 = vpop.f32.mrf.mxu0
    %v1728 = vadd.f32 0.0, %v1727
    %v1729 = vpop.f32.mrf.mxu0
    %1730 = vdwg.mxu0
    %1731 = vst [vmem:[#allocation1] ss:$9 sm:$0xff] %v374
    %v1732 = vld [vmem:[#allocation1] sm:$0xff]
    %1734 = vrot.lane.b32.xlu0 %v1732, 96
    %v1735 = vpop.permute.xlu0 %1734
    %v1737 = vsel %vm684, %v1677, 0
    %v1740 = vsel %vm302, %v1735, 0
    %1742 = vmatpush.bf16.msra.mxu0 0
    %1743 = vmatpush.bf16.msra.mxu0 0
    %1744 = vmatpush.bf16.msra.mxu0 0
    %1745 = vmatpush.bf16.msra.mxu0 0
    %1746 = vmatpush.bf16.msra.mxu0 0
    %1747 = vmatpush.bf16.msra.mxu0 0
    %1748 = vmatpush.bf16.msra.mxu0 0
    %1749 = vmatpush.bf16.msra.mxu0 %v1740
    %1750 = vmatmul.bf16.gmra.mxu0 %v1737
    %v1751 = vpop.f32.mrf.mxu0
    %v1752 = vadd.f32 0.0, %v1751
    %v1753 = vpop.f32.mrf.mxu0
    %1754 = vdwg.mxu0
    %1755 = vst [vmem:[#allocation1] ss:$9 sm:$0xff] %v377
    %v1756 = vld [vmem:[#allocation1] sm:$0xff]
    %1758 = vrot.lane.b32.xlu0 %v1756, 96
    %v1759 = vpop.permute.xlu0 %1758
    %v1761 = vsel %vm684, %v1678, 0
    %v1764 = vsel %vm302, %v1759, 0
    %1766 = vmatpush.bf16.msra.mxu0 0
    %1767 = vmatpush.bf16.msra.mxu0 0
    %1768 = vmatpush.bf16.msra.mxu0 0
    %1769 = vmatpush.bf16.msra.mxu0 0
    %1770 = vmatpush.bf16.msra.mxu0 0
    %1771 = vmatpush.bf16.msra.mxu0 0
    %1772 = vmatpush.bf16.msra.mxu0 0
    %1773 = vmatpush.bf16.msra.mxu0 %v1764
    %1774 = vmatmul.bf16.gmra.mxu0 %v1761
    %v1775 = vpop.f32.mrf.mxu0
    %v1776 = vadd.f32 0.0, %v1775
    %v1777 = vpop.f32.mrf.mxu0
    %1778 = vdwg.mxu0
    %1779 = vst [vmem:[#allocation1] ss:$9 sm:$0xff] %v380
    %v1780 = vld [vmem:[#allocation1] sm:$0xff]
    %1782 = vrot.lane.b32.xlu0 %v1780, 96
    %v1783 = vpop.permute.xlu0 %1782
    %v1785 = vsel %vm684, %v1679, 0
    %v1788 = vsel %vm302, %v1783, 0
    %1790 = vmatpush.bf16.msra.mxu0 0
    %1791 = vmatpush.bf16.msra.mxu0 0
    %1792 = vmatpush.bf16.msra.mxu0 0
    %1793 = vmatpush.bf16.msra.mxu0 0
    %1794 = vmatpush.bf16.msra.mxu0 0
    %1795 = vmatpush.bf16.msra.mxu0 0
    %1796 = vmatpush.bf16.msra.mxu0 0
    %1797 = vmatpush.bf16.msra.mxu0 %v1788
    %1798 = vmatmul.bf16.gmra.mxu0 %v1785
    %v1799 = vpop.f32.mrf.mxu0
    %v1800 = vadd.f32 0.0, %v1799
    %v1801 = vpop.f32.mrf.mxu0
    %1802 = vdwg.mxu0
    %1803 = vst [vmem:[#allocation1] ss:$9 sm:$0xff] %v383
    %v1804 = vld [vmem:[#allocation1] sm:$0xff]
    %1806 = vrot.lane.b32.xlu0 %v1804, 96
    %v1807 = vpop.permute.xlu0 %1806
    %v1809 = vsel %vm684, %v1680, 0
    %v1812 = vsel %vm302, %v1807, 0
    %1814 = vmatpush.bf16.msra.mxu0 0
    %1815 = vmatpush.bf16.msra.mxu0 0
    %1816 = vmatpush.bf16.msra.mxu0 0
    %1817 = vmatpush.bf16.msra.mxu0 0
    %1818 = vmatpush.bf16.msra.mxu0 0
    %1819 = vmatpush.bf16.msra.mxu0 0
    %1820 = vmatpush.bf16.msra.mxu0 0
    %1821 = vmatpush.bf16.msra.mxu0 %v1812
    %1822 = vmatmul.bf16.gmra.mxu0 %v1809
    %v1823 = vpop.f32.mrf.mxu0
    %v1824 = vadd.f32 0.0, %v1823
    %v1825 = vpop.f32.mrf.mxu0
    %1826 = vdwg.mxu0
    %1827 = vst [vmem:[#allocation1] ss:$9 sm:$0xff] %v386
    %v1828 = vld [vmem:[#allocation1] sm:$0xff]
    %1830 = vrot.lane.b32.xlu0 %v1828, 96
    %v1831 = vpop.permute.xlu0 %1830
    %v1833 = vsel %vm684, %v1681, 0
    %v1836 = vsel %vm302, %v1831, 0
    %1838 = vmatpush.bf16.msra.mxu0 0
    %1839 = vmatpush.bf16.msra.mxu0 0
    %1840 = vmatpush.bf16.msra.mxu0 0
    %1841 = vmatpush.bf16.msra.mxu0 0
    %1842 = vmatpush.bf16.msra.mxu0 0
    %1843 = vmatpush.bf16.msra.mxu0 0
    %1844 = vmatpush.bf16.msra.mxu0 0
    %1845 = vmatpush.bf16.msra.mxu0 %v1836
    %1846 = vmatmul.bf16.gmra.mxu0 %v1833
    %v1847 = vpop.f32.mrf.mxu0
    %v1848 = vadd.f32 0.0, %v1847
    %v1849 = vpop.f32.mrf.mxu0
    %1850 = vdwg.mxu0
    %1851 = vst [vmem:[#allocation1] ss:$9 sm:$0xff] %v389
    %v1852 = vld [vmem:[#allocation1] sm:$0xff]
    %1854 = vrot.lane.b32.xlu0 %v1852, 96
    %v1855 = vpop.permute.xlu0 %1854
    %v1857 = vsel %vm684, %v1682, 0
    %v1860 = vsel %vm302, %v1855, 0
    %1862 = vmatpush.bf16.msra.mxu0 0
    %1863 = vmatpush.bf16.msra.mxu0 0
    %1864 = vmatpush.bf16.msra.mxu0 0
    %1865 = vmatpush.bf16.msra.mxu0 0
    %1866 = vmatpush.bf16.msra.mxu0 0
    %1867 = vmatpush.bf16.msra.mxu0 0
    %1868 = vmatpush.bf16.msra.mxu0 0
    %1869 = vmatpush.bf16.msra.mxu0 %v1860
    %1870 = vmatmul.bf16.gmra.mxu0 %v1857
    %v1871 = vpop.f32.mrf.mxu0
    %v1872 = vadd.f32 0.0, %v1871
    %v1873 = vpop.f32.mrf.mxu0
    %1874 = vdwg.mxu0
    %1875 = vst [vmem:[#allocation1] ss:$9 sm:$0xff] %v305
    %v1876 = vld [vmem:[#allocation1] sm:$0xff]
    %1878 = vrot.lane.b32.xlu0 %v1876, 80
    %v1879 = vpop.permute.xlu0 %1878
    %1880 = vst [vmem:[#allocation1] ss:$9 sm:$0xff] %v338
    %v1881 = vld [vmem:[#allocation1] sm:$0xff]
    %1883 = vrot.lane.b32.xlu0 %v1881, 16
    %v1884 = vpop.permute.xlu0 %1883
    %v1886 = vsel %vm395, %v1879, 0
    %v1889 = vsel %vm395, %v1884, 0
    %1891 = vmatpush.bf16.xpose.msra.mxu0 0
    %1892 = vmatpush.bf16.xpose.msra.mxu0 0
    %1893 = vmatpush.bf16.xpose.msra.mxu0 0
    %1894 = vmatpush.bf16.xpose.msra.mxu0 0
    %1895 = vmatpush.bf16.xpose.msra.mxu0 0
    %1896 = vmatpush.bf16.xpose.msra.mxu0 0
    %1897 = vmatpush.bf16.xpose.msra.mxu0 0
    %1898 = vmatpush.bf16.xpose.msra.mxu0 %v1889
    %1899 = vmatmul.bf16.gmra.mxu0 %v1886
    %v1900 = vpop.f32.mrf.mxu0
    %v1901 = vadd.f32 0.0, %v1900
    %v1902 = vpop.f32.mrf.mxu0
    %1903 = vdwg.mxu0
    %1904 = vst [vmem:[#allocation1] ss:$9 sm:$0xff] %v309
    %v1905 = vld [vmem:[#allocation1] sm:$0xff]
    %1907 = vrot.lane.b32.xlu0 %v1905, 80
    %v1908 = vpop.permute.xlu0 %1907
    %1909 = vst [vmem:[#allocation1] ss:$9 sm:$0xff] %v341
    %v1910 = vld [vmem:[#allocation1] sm:$0xff]
    %1912 = vrot.lane.b32.xlu0 %v1910, 16
    %v1913 = vpop.permute.xlu0 %1912
    %v1915 = vsel %vm395, %v1908, 0
    %v1918 = vsel %vm395, %v1913, 0
    %1920 = vmatpush.bf16.xpose.msra.mxu0 0
    %1921 = vmatpush.bf16.xpose.msra.mxu0 0
    %1922 = vmatpush.bf16.xpose.msra.mxu0 0
    %1923 = vmatpush.bf16.xpose.msra.mxu0 0
    %1924 = vmatpush.bf16.xpose.msra.mxu0 0
    %1925 = vmatpush.bf16.xpose.msra.mxu0 0
    %1926 = vmatpush.bf16.xpose.msra.mxu0 0
    %1927 = vmatpush.bf16.xpose.msra.mxu0 %v1918
    %1928 = vmatmul.bf16.gmra.mxu0 %v1915
    %v1929 = vpop.f32.mrf.mxu0
    %v1930 = vadd.f32 0.0, %v1929
    %v1931 = vpop.f32.mrf.mxu0
    %1932 = vdwg.mxu0
    %1933 = vst [vmem:[#allocation1] ss:$9 sm:$0xff] %v313
    %v1934 = vld [vmem:[#allocation1] sm:$0xff]
    %1936 = vrot.lane.b32.xlu0 %v1934, 80
    %v1937 = vpop.permute.xlu0 %1936
    %1938 = vst [vmem:[#allocation1] ss:$9 sm:$0xff] %v344
    %v1939 = vld [vmem:[#allocation1] sm:$0xff]
    %1941 = vrot.lane.b32.xlu0 %v1939, 16
    %v1942 = vpop.permute.xlu0 %1941
    %v1944 = vsel %vm395, %v1937, 0
    %v1947 = vsel %vm395, %v1942, 0
    %1949 = vmatpush.bf16.xpose.msra.mxu0 0
    %1950 = vmatpush.bf16.xpose.msra.mxu0 0
    %1951 = vmatpush.bf16.xpose.msra.mxu0 0
    %1952 = vmatpush.bf16.xpose.msra.mxu0 0
    %1953 = vmatpush.bf16.xpose.msra.mxu0 0
    %1954 = vmatpush.bf16.xpose.msra.mxu0 0
    %1955 = vmatpush.bf16.xpose.msra.mxu0 0
    %1956 = vmatpush.bf16.xpose.msra.mxu0 %v1947
    %1957 = vmatmul.bf16.gmra.mxu0 %v1944
    %v1958 = vpop.f32.mrf.mxu0
    %v1959 = vadd.f32 0.0, %v1958
    %v1960 = vpop.f32.mrf.mxu0
    %1961 = vdwg.mxu0
    %1962 = vst [vmem:[#allocation1] ss:$9 sm:$0xff] %v317
    %v1963 = vld [vmem:[#allocation1] sm:$0xff]
    %1965 = vrot.lane.b32.xlu0 %v1963, 80
    %v1966 = vpop.permute.xlu0 %1965
    %1967 = vst [vmem:[#allocation1] ss:$9 sm:$0xff] %v347
    %v1968 = vld [vmem:[#allocation1] sm:$0xff]
    %1970 = vrot.lane.b32.xlu0 %v1968, 16
    %v1971 = vpop.permute.xlu0 %1970
    %v1973 = vsel %vm395, %v1966, 0
    %v1976 = vsel %vm395, %v1971, 0
    %1978 = vmatpush.bf16.xpose.msra.mxu0 0
    %1979 = vmatpush.bf16.xpose.msra.mxu0 0
    %1980 = vmatpush.bf16.xpose.msra.mxu0 0
    %1981 = vmatpush.bf16.xpose.msra.mxu0 0
    %1982 = vmatpush.bf16.xpose.msra.mxu0 0
    %1983 = vmatpush.bf16.xpose.msra.mxu0 0
    %1984 = vmatpush.bf16.xpose.msra.mxu0 0
    %1985 = vmatpush.bf16.xpose.msra.mxu0 %v1976
    %1986 = vmatmul.bf16.gmra.mxu0 %v1973
    %v1987 = vpop.f32.mrf.mxu0
    %v1988 = vadd.f32 0.0, %v1987
    %v1989 = vpop.f32.mrf.mxu0
    %1990 = vdwg.mxu0
    %1991 = vst [vmem:[#allocation1] ss:$9 sm:$0xff] %v320
    %v1992 = vld [vmem:[#allocation1] sm:$0xff]
    %1994 = vrot.lane.b32.xlu0 %v1992, 80
    %v1995 = vpop.permute.xlu0 %1994
    %1996 = vst [vmem:[#allocation1] ss:$9 sm:$0xff] %v350
    %v1997 = vld [vmem:[#allocation1] sm:$0xff]
    %1999 = vrot.lane.b32.xlu0 %v1997, 16
    %v2000 = vpop.permute.xlu0 %1999
    %v2002 = vsel %vm395, %v1995, 0
    %v2005 = vsel %vm395, %v2000, 0
    %2007 = vmatpush.bf16.xpose.msra.mxu0 0
    %2008 = vmatpush.bf16.xpose.msra.mxu0 0
    %2009 = vmatpush.bf16.xpose.msra.mxu0 0
    %2010 = vmatpush.bf16.xpose.msra.mxu0 0
    %2011 = vmatpush.bf16.xpose.msra.mxu0 0
    %2012 = vmatpush.bf16.xpose.msra.mxu0 0
    %2013 = vmatpush.bf16.xpose.msra.mxu0 0
    %2014 = vmatpush.bf16.xpose.msra.mxu0 %v2005
    %2015 = vmatmul.bf16.gmra.mxu0 %v2002
    %v2016 = vpop.f32.mrf.mxu0
    %v2017 = vadd.f32 0.0, %v2016
    %v2018 = vpop.f32.mrf.mxu0
    %2019 = vdwg.mxu0
    %2020 = vst [vmem:[#allocation1] ss:$9 sm:$0xff] %v323
    %v2021 = vld [vmem:[#allocation1] sm:$0xff]
    %2023 = vrot.lane.b32.xlu0 %v2021, 80
    %v2024 = vpop.permute.xlu0 %2023
    %2025 = vst [vmem:[#allocation1] ss:$9 sm:$0xff] %v353
    %v2026 = vld [vmem:[#allocation1] sm:$0xff]
    %2028 = vrot.lane.b32.xlu0 %v2026, 16
    %v2029 = vpop.permute.xlu0 %2028
    %v2031 = vsel %vm395, %v2024, 0
    %v2034 = vsel %vm395, %v2029, 0
    %2036 = vmatpush.bf16.xpose.msra.mxu0 0
    %2037 = vmatpush.bf16.xpose.msra.mxu0 0
    %2038 = vmatpush.bf16.xpose.msra.mxu0 0
    %2039 = vmatpush.bf16.xpose.msra.mxu0 0
    %2040 = vmatpush.bf16.xpose.msra.mxu0 0
    %2041 = vmatpush.bf16.xpose.msra.mxu0 0
    %2042 = vmatpush.bf16.xpose.msra.mxu0 0
    %2043 = vmatpush.bf16.xpose.msra.mxu0 %v2034
    %2044 = vmatmul.bf16.gmra.mxu0 %v2031
    %v2045 = vpop.f32.mrf.mxu0
    %v2046 = vadd.f32 0.0, %v2045
    %v2047 = vpop.f32.mrf.mxu0
    %2048 = vdwg.mxu0
    %2049 = vst [vmem:[#allocation1] ss:$9 sm:$0xff] %v326
    %v2050 = vld [vmem:[#allocation1] sm:$0xff]
    %2052 = vrot.lane.b32.xlu0 %v2050, 80
    %v2053 = vpop.permute.xlu0 %2052
    %2054 = vst [vmem:[#allocation1] ss:$9 sm:$0xff] %v356
    %v2055 = vld [vmem:[#allocation1] sm:$0xff]
    %2057 = vrot.lane.b32.xlu0 %v2055, 16
    %v2058 = vpop.permute.xlu0 %2057
    %v2060 = vsel %vm395, %v2053, 0
    %v2063 = vsel %vm395, %v2058, 0
    %2065 = vmatpush.bf16.xpose.msra.mxu0 0
    %2066 = vmatpush.bf16.xpose.msra.mxu0 0
    %2067 = vmatpush.bf16.xpose.msra.mxu0 0
    %2068 = vmatpush.bf16.xpose.msra.mxu0 0
    %2069 = vmatpush.bf16.xpose.msra.mxu0 0
    %2070 = vmatpush.bf16.xpose.msra.mxu0 0
    %2071 = vmatpush.bf16.xpose.msra.mxu0 0
    %2072 = vmatpush.bf16.xpose.msra.mxu0 %v2063
    %2073 = vmatmul.bf16.gmra.mxu0 %v2060
    %v2074 = vpop.f32.mrf.mxu0
    %v2075 = vadd.f32 0.0, %v2074
    %v2076 = vpop.f32.mrf.mxu0
    %2077 = vdwg.mxu0
    %2078 = vst [vmem:[#allocation1] ss:$9 sm:$0xff] %v329
    %v2079 = vld [vmem:[#allocation1] sm:$0xff]
    %2081 = vrot.lane.b32.xlu0 %v2079, 80
    %v2082 = vpop.permute.xlu0 %2081
    %2083 = vst [vmem:[#allocation1] ss:$9 sm:$0xff] %v359
    %v2084 = vld [vmem:[#allocation1] sm:$0xff]
    %2086 = vrot.lane.b32.xlu0 %v2084, 16
    %v2087 = vpop.permute.xlu0 %2086
    %v2089 = vsel %vm395, %v2082, 0
    %v2092 = vsel %vm395, %v2087, 0
    %2094 = vmatpush.bf16.xpose.msra.mxu0 0
    %2095 = vmatpush.bf16.xpose.msra.mxu0 0
    %2096 = vmatpush.bf16.xpose.msra.mxu0 0
    %2097 = vmatpush.bf16.xpose.msra.mxu0 0
    %2098 = vmatpush.bf16.xpose.msra.mxu0 0
    %2099 = vmatpush.bf16.xpose.msra.mxu0 0
    %2100 = vmatpush.bf16.xpose.msra.mxu0 0
    %2101 = vmatpush.bf16.xpose.msra.mxu0 %v2092
    %2102 = vmatmul.bf16.gmra.mxu0 %v2089
    %v2103 = vpop.f32.mrf.mxu0
    %v2104 = vadd.f32 0.0, %v2103
    %v2105 = vpop.f32.mrf.mxu0
    %2106 = vdwg.mxu0
    %v2107 = vsel %vm587, %v1901, -inf
    %2108 = vmax.xlane.f32.xlu0 %v2107
    %v2109 = vpop.xlane.xlu0 %2108
    %v2110 = vsel %vm587, %v1930, -inf
    %2111 = vmax.xlane.f32.xlu0 %v2110
    %v2112 = vpop.xlane.xlu0 %2111
    %v2113 = vsel %vm587, %v1959, -inf
    %2114 = vmax.xlane.f32.xlu0 %v2113
    %v2115 = vpop.xlane.xlu0 %2114
    %v2116 = vsel %vm587, %v1988, -inf
    %2117 = vmax.xlane.f32.xlu0 %v2116
    %v2118 = vpop.xlane.xlu0 %2117
    %v2119 = vsel %vm587, %v2017, -inf
    %2120 = vmax.xlane.f32.xlu0 %v2119
    %v2121 = vpop.xlane.xlu0 %2120
    %v2122 = vsel %vm587, %v2046, -inf
    %2123 = vmax.xlane.f32.xlu0 %v2122
    %v2124 = vpop.xlane.xlu0 %2123
    %v2125 = vsel %vm587, %v2075, -inf
    %2126 = vmax.xlane.f32.xlu0 %v2125
    %v2127 = vpop.xlane.xlu0 %2126
    %v2128 = vsel %vm587, %v2104, -inf
    %2129 = vmax.xlane.f32.xlu0 %v2128
    %v2130 = vpop.xlane.xlu0 %2129
    %v2131 = vsub.f32 %v1901, %v2109
    %v2132 = vsub.f32 %v1930, %v2112
    %v2133 = vsub.f32 %v1959, %v2115
    %v2134 = vsub.f32 %v1988, %v2118
    %v2135 = vsub.f32 %v2017, %v2121
    %v2136 = vsub.f32 %v2046, %v2124
    %v2137 = vsub.f32 %v2075, %v2127
    %v2138 = vsub.f32 %v2104, %v2130
    %v2139 = vmul.f32 %v2131, 1.442695
    %v2140 = vpow.pop %v2139
    %v2141 = vmul.f32 %v2132, 1.442695
    %v2142 = vpow.pop %v2141
    %v2143 = vmul.f32 %v2133, 1.442695
    %v2144 = vpow.pop %v2143
    %v2145 = vmul.f32 %v2134, 1.442695
    %v2146 = vpow.pop %v2145
    %v2147 = vmul.f32 %v2135, 1.442695
    %v2148 = vpow.pop %v2147
    %v2149 = vmul.f32 %v2136, 1.442695
    %v2150 = vpow.pop %v2149
    %v2151 = vmul.f32 %v2137, 1.442695
    %v2152 = vpow.pop %v2151
    %v2153 = vmul.f32 %v2138, 1.442695
    %v2154 = vpow.pop %v2153
    %v2155 = vsel %vm587, %v2140, 0.0
    %2156 = vadd.xlane.f32.xlu0 %v2155
    %v2157 = vpop.xlane.xlu0 %2156
    %v2158 = vsel %vm587, %v2142, 0.0
    %2159 = vadd.xlane.f32.xlu0 %v2158
    %v2160 = vpop.xlane.xlu0 %2159
    %v2161 = vsel %vm587, %v2144, 0.0
    %2162 = vadd.xlane.f32.xlu0 %v2161
    %v2163 = vpop.xlane.xlu0 %2162
    %v2164 = vsel %vm587, %v2146, 0.0
    %2165 = vadd.xlane.f32.xlu0 %v2164
    %v2166 = vpop.xlane.xlu0 %2165
    %v2167 = vsel %vm587, %v2148, 0.0
    %2168 = vadd.xlane.f32.xlu0 %v2167
    %v2169 = vpop.xlane.xlu0 %2168
    %v2170 = vsel %vm587, %v2150, 0.0
    %2171 = vadd.xlane.f32.xlu0 %v2170
    %v2172 = vpop.xlane.xlu0 %2171
    %v2173 = vsel %vm587, %v2152, 0.0
    %2174 = vadd.xlane.f32.xlu0 %v2173
    %v2175 = vpop.xlane.xlu0 %2174
    %v2176 = vsel %vm587, %v2154, 0.0
    %2177 = vadd.xlane.f32.xlu0 %v2176
    %v2178 = vpop.xlane.xlu0 %2177
    %v2179 = vrcp.pop %v2157
    %v2180 = vrcp.pop %v2160
    %v2181 = vrcp.pop %v2163
    %v2182 = vrcp.pop %v2166
    %v2183 = vrcp.pop %v2169
    %v2184 = vrcp.pop %v2172
    %v2185 = vrcp.pop %v2175
    %v2186 = vrcp.pop %v2178
    %v2187 = vmul.f32 %v2140, %v2179
    %v2188 = vmul.f32 %v2142, %v2180
    %v2189 = vmul.f32 %v2144, %v2181
    %v2190 = vmul.f32 %v2146, %v2182
    %v2191 = vmul.f32 %v2148, %v2183
    %v2192 = vmul.f32 %v2150, %v2184
    %v2193 = vmul.f32 %v2152, %v2185
    %v2194 = vmul.f32 %v2154, %v2186
    %v2195 = vpack.c.bf16 %v2187, %v2187
    %v2196 = vpack.c.bf16 %v2188, %v2188
    %v2197 = vpack.c.bf16 %v2189, %v2189
    %v2198 = vpack.c.bf16 %v2190, %v2190
    %v2199 = vpack.c.bf16 %v2191, %v2191
    %v2200 = vpack.c.bf16 %v2192, %v2192
    %v2201 = vpack.c.bf16 %v2193, %v2193
    %v2202 = vpack.c.bf16 %v2194, %v2194
    %2203 = vst [vmem:[#allocation1] ss:$9 sm:$0xff] %v368
    %v2204 = vld [vmem:[#allocation1] sm:$0xff]
    %2206 = vrot.lane.b32.xlu0 %v2204, 80
    %v2207 = vpop.permute.xlu0 %2206
    %v2209 = vsel %vm684, %v2195, 0
    %v2212 = vsel %vm302, %v2207, 0
    %2214 = vmatpush.bf16.msra.mxu0 0
    %2215 = vmatpush.bf16.msra.mxu0 0
    %2216 = vmatpush.bf16.msra.mxu0 0
    %2217 = vmatpush.bf16.msra.mxu0 0
    %2218 = vmatpush.bf16.msra.mxu0 0
    %2219 = vmatpush.bf16.msra.mxu0 0
    %2220 = vmatpush.bf16.msra.mxu0 0
    %2221 = vmatpush.bf16.msra.mxu0 %v2212
    %2222 = vmatmul.bf16.gmra.mxu0 %v2209
    %v2223 = vpop.f32.mrf.mxu0
    %v2224 = vadd.f32 0.0, %v2223
    %v2225 = vpop.f32.mrf.mxu0
    %2226 = vdwg.mxu0
    %2227 = vst [vmem:[#allocation1] ss:$9 sm:$0xff] %v371
    %v2228 = vld [vmem:[#allocation1] sm:$0xff]
    %2230 = vrot.lane.b32.xlu0 %v2228, 80
    %v2231 = vpop.permute.xlu0 %2230
    %v2233 = vsel %vm684, %v2196, 0
    %v2236 = vsel %vm302, %v2231, 0
    %2238 = vmatpush.bf16.msra.mxu0 0
    %2239 = vmatpush.bf16.msra.mxu0 0
    %2240 = vmatpush.bf16.msra.mxu0 0
    %2241 = vmatpush.bf16.msra.mxu0 0
    %2242 = vmatpush.bf16.msra.mxu0 0
    %2243 = vmatpush.bf16.msra.mxu0 0
    %2244 = vmatpush.bf16.msra.mxu0 0
    %2245 = vmatpush.bf16.msra.mxu0 %v2236
    %2246 = vmatmul.bf16.gmra.mxu0 %v2233
    %v2247 = vpop.f32.mrf.mxu0
    %v2248 = vadd.f32 0.0, %v2247
    %v2249 = vpop.f32.mrf.mxu0
    %2250 = vdwg.mxu0
    %2251 = vst [vmem:[#allocation1] ss:$9 sm:$0xff] %v374
    %v2252 = vld [vmem:[#allocation1] sm:$0xff]
    %2254 = vrot.lane.b32.xlu0 %v2252, 80
    %v2255 = vpop.permute.xlu0 %2254
    %v2257 = vsel %vm684, %v2197, 0
    %v2260 = vsel %vm302, %v2255, 0
    %2262 = vmatpush.bf16.msra.mxu0 0
    %2263 = vmatpush.bf16.msra.mxu0 0
    %2264 = vmatpush.bf16.msra.mxu0 0
    %2265 = vmatpush.bf16.msra.mxu0 0
    %2266 = vmatpush.bf16.msra.mxu0 0
    %2267 = vmatpush.bf16.msra.mxu0 0
    %2268 = vmatpush.bf16.msra.mxu0 0
    %2269 = vmatpush.bf16.msra.mxu0 %v2260
    %2270 = vmatmul.bf16.gmra.mxu0 %v2257
    %v2271 = vpop.f32.mrf.mxu0
    %v2272 = vadd.f32 0.0, %v2271
    %v2273 = vpop.f32.mrf.mxu0
    %2274 = vdwg.mxu0
    %2275 = vst [vmem:[#allocation1] ss:$9 sm:$0xff] %v377
    %v2276 = vld [vmem:[#allocation1] sm:$0xff]
    %2278 = vrot.lane.b32.xlu0 %v2276, 80
    %v2279 = vpop.permute.xlu0 %2278
    %v2281 = vsel %vm684, %v2198, 0
    %v2284 = vsel %vm302, %v2279, 0
    %2286 = vmatpush.bf16.msra.mxu0 0
    %2287 = vmatpush.bf16.msra.mxu0 0
    %2288 = vmatpush.bf16.msra.mxu0 0
    %2289 = vmatpush.bf16.msra.mxu0 0
    %2290 = vmatpush.bf16.msra.mxu0 0
    %2291 = vmatpush.bf16.msra.mxu0 0
    %2292 = vmatpush.bf16.msra.mxu0 0
    %2293 = vmatpush.bf16.msra.mxu0 %v2284
    %2294 = vmatmul.bf16.gmra.mxu0 %v2281
    %v2295 = vpop.f32.mrf.mxu0
    %v2296 = vadd.f32 0.0, %v2295
    %v2297 = vpop.f32.mrf.mxu0
    %2298 = vdwg.mxu0
    %2299 = vst [vmem:[#allocation1] ss:$9 sm:$0xff] %v380
    %v2300 = vld [vmem:[#allocation1] sm:$0xff]
    %2302 = vrot.lane.b32.xlu0 %v2300, 80
    %v2303 = vpop.permute.xlu0 %2302
    %v2305 = vsel %vm684, %v2199, 0
    %v2308 = vsel %vm302, %v2303, 0
    %2310 = vmatpush.bf16.msra.mxu0 0
    %2311 = vmatpush.bf16.msra.mxu0 0
    %2312 = vmatpush.bf16.msra.mxu0 0
    %2313 = vmatpush.bf16.msra.mxu0 0
    %2314 = vmatpush.bf16.msra.mxu0 0
    %2315 = vmatpush.bf16.msra.mxu0 0
    %2316 = vmatpush.bf16.msra.mxu0 0
    %2317 = vmatpush.bf16.msra.mxu0 %v2308
    %2318 = vmatmul.bf16.gmra.mxu0 %v2305
    %v2319 = vpop.f32.mrf.mxu0
    %v2320 = vadd.f32 0.0, %v2319
    %v2321 = vpop.f32.mrf.mxu0
    %2322 = vdwg.mxu0
    %2323 = vst [vmem:[#allocation1] ss:$9 sm:$0xff] %v383
    %v2324 = vld [vmem:[#allocation1] sm:$0xff]
    %2326 = vrot.lane.b32.xlu0 %v2324, 80
    %v2327 = vpop.permute.xlu0 %2326
    %v2329 = vsel %vm684, %v2200, 0
    %v2332 = vsel %vm302, %v2327, 0
    %2334 = vmatpush.bf16.msra.mxu0 0
    %2335 = vmatpush.bf16.msra.mxu0 0
    %2336 = vmatpush.bf16.msra.mxu0 0
    %2337 = vmatpush.bf16.msra.mxu0 0
    %2338 = vmatpush.bf16.msra.mxu0 0
    %2339 = vmatpush.bf16.msra.mxu0 0
    %2340 = vmatpush.bf16.msra.mxu0 0
    %2341 = vmatpush.bf16.msra.mxu0 %v2332
    %2342 = vmatmul.bf16.gmra.mxu0 %v2329
    %v2343 = vpop.f32.mrf.mxu0
    %v2344 = vadd.f32 0.0, %v2343
    %v2345 = vpop.f32.mrf.mxu0
    %2346 = vdwg.mxu0
    %2347 = vst [vmem:[#allocation1] ss:$9 sm:$0xff] %v386
    %v2348 = vld [vmem:[#allocation1] sm:$0xff]
    %2350 = vrot.lane.b32.xlu0 %v2348, 80
    %v2351 = vpop.permute.xlu0 %2350
    %v2353 = vsel %vm684, %v2201, 0
    %v2356 = vsel %vm302, %v2351, 0
    %2358 = vmatpush.bf16.msra.mxu0 0
    %2359 = vmatpush.bf16.msra.mxu0 0
    %2360 = vmatpush.bf16.msra.mxu0 0
    %2361 = vmatpush.bf16.msra.mxu0 0
    %2362 = vmatpush.bf16.msra.mxu0 0
    %2363 = vmatpush.bf16.msra.mxu0 0
    %2364 = vmatpush.bf16.msra.mxu0 0
    %2365 = vmatpush.bf16.msra.mxu0 %v2356
    %2366 = vmatmul.bf16.gmra.mxu0 %v2353
    %v2367 = vpop.f32.mrf.mxu0
    %v2368 = vadd.f32 0.0, %v2367
    %v2369 = vpop.f32.mrf.mxu0
    %2370 = vdwg.mxu0
    %2371 = vst [vmem:[#allocation1] ss:$9 sm:$0xff] %v389
    %v2372 = vld [vmem:[#allocation1] sm:$0xff]
    %2374 = vrot.lane.b32.xlu0 %v2372, 80
    %v2375 = vpop.permute.xlu0 %2374
    %v2377 = vsel %vm684, %v2202, 0
    %v2380 = vsel %vm302, %v2375, 0
    %2382 = vmatpush.bf16.msra.mxu0 0
    %2383 = vmatpush.bf16.msra.mxu0 0
    %2384 = vmatpush.bf16.msra.mxu0 0
    %2385 = vmatpush.bf16.msra.mxu0 0
    %2386 = vmatpush.bf16.msra.mxu0 0
    %2387 = vmatpush.bf16.msra.mxu0 0
    %2388 = vmatpush.bf16.msra.mxu0 0
    %2389 = vmatpush.bf16.msra.mxu0 %v2380
    %2390 = vmatmul.bf16.gmra.mxu0 %v2377
    %v2391 = vpop.f32.mrf.mxu0
    %v2392 = vadd.f32 0.0, %v2391
    %v2393 = vpop.f32.mrf.mxu0
    %2394 = vdwg.mxu0
    %2403 = vst [vmem:[#allocation1] ss:$4 sm:$0xff] %v700
    %s2404 = scalar_lea.vmem [#allocation1], 1
    %2405 = vst [vmem:[%s2404] ss:$4 sm:$0xff] %v719
    %s2406 = scalar_lea.vmem [#allocation1], 2
    %2407 = vst [vmem:[%s2406] ss:$4 sm:$0xff] %v738
    %s2408 = scalar_lea.vmem [#allocation1], 3
    %2409 = vst [vmem:[%s2408] ss:$4 sm:$0xff] %v757
    %s2410 = scalar_lea.vmem [#allocation1], 32
    %2411 = vst [vmem:[%s2410] ss:$4 sm:$0xff] %v775
    %s2412 = scalar_lea.vmem [#allocation1], 33
    %2413 = vst [vmem:[%s2412] ss:$4 sm:$0xff] %v794
    %s2414 = scalar_lea.vmem [#allocation1], 34
    %2415 = vst [vmem:[%s2414] ss:$4 sm:$0xff] %v813
    %s2416 = scalar_lea.vmem [#allocation1], 35
    %2417 = vst [vmem:[%s2416] ss:$4 sm:$0xff] %v832
    %v2418 = vld.sshfl [vmem:[#allocation1] sm:$0xff pattern:$0x73625140]
    %v2419 = vld.sshfl [vmem:[#allocation1 + $0x20] sm:$0xff pattern:$0x73625140]
    %2430 = vst [vmem:[#allocation1] ss:$4 sm:$0xff] %v1184
    %s2431 = scalar_lea.vmem [#allocation1], 1
    %2432 = vst [vmem:[%s2431] ss:$4 sm:$0xff] %v1208
    %s2433 = scalar_lea.vmem [#allocation1], 2
    %2434 = vst [vmem:[%s2433] ss:$4 sm:$0xff] %v1232
    %s2435 = scalar_lea.vmem [#allocation1], 3
    %2436 = vst [vmem:[%s2435] ss:$4 sm:$0xff] %v1256
    %s2437 = scalar_lea.vmem [#allocation1], 32
    %2438 = vst [vmem:[%s2437] ss:$4 sm:$0xff] %v1280
    %s2439 = scalar_lea.vmem [#allocation1], 33
    %2440 = vst [vmem:[%s2439] ss:$4 sm:$0xff] %v1304
    %s2441 = scalar_lea.vmem [#allocation1], 34
    %2442 = vst [vmem:[%s2441] ss:$4 sm:$0xff] %v1328
    %s2443 = scalar_lea.vmem [#allocation1], 35
    %2444 = vst [vmem:[%s2443] ss:$4 sm:$0xff] %v1352
    %v2445 = vld.sshfl [vmem:[#allocation1] sm:$0xff pattern:$0x73625140]
    %v2446 = vld.sshfl [vmem:[#allocation1 + $0x20] sm:$0xff pattern:$0x73625140]
    %2447 = vrot.lane.b32.xlu0 %v2445, 16
    %v2448 = vpop.permute.xlu0 %2447
    %2449 = vrot.lane.b32.xlu0 %v2446, 16
    %v2450 = vpop.permute.xlu0 %2449
    %2461 = vst [vmem:[#allocation1] ss:$4 sm:$0xff] %v1704
    %s2462 = scalar_lea.vmem [#allocation1], 1
    %2463 = vst [vmem:[%s2462] ss:$4 sm:$0xff] %v1728
    %s2464 = scalar_lea.vmem [#allocation1], 2
    %2465 = vst [vmem:[%s2464] ss:$4 sm:$0xff] %v1752
    %s2466 = scalar_lea.vmem [#allocation1], 3
    %2467 = vst [vmem:[%s2466] ss:$4 sm:$0xff] %v1776
    %s2468 = scalar_lea.vmem [#allocation1], 32
    %2469 = vst [vmem:[%s2468] ss:$4 sm:$0xff] %v1800
    %s2470 = scalar_lea.vmem [#allocation1], 33
    %2471 = vst [vmem:[%s2470] ss:$4 sm:$0xff] %v1824
    %s2472 = scalar_lea.vmem [#allocation1], 34
    %2473 = vst [vmem:[%s2472] ss:$4 sm:$0xff] %v1848
    %s2474 = scalar_lea.vmem [#allocation1], 35
    %2475 = vst [vmem:[%s2474] ss:$4 sm:$0xff] %v1872
    %v2476 = vld.sshfl [vmem:[#allocation1] sm:$0xff pattern:$0x73625140]
    %v2477 = vld.sshfl [vmem:[#allocation1 + $0x20] sm:$0xff pattern:$0x73625140]
    %2478 = vrot.lane.b32.xlu0 %v2476, 32
    %v2479 = vpop.permute.xlu0 %2478
    %2480 = vrot.lane.b32.xlu0 %v2477, 32
    %v2481 = vpop.permute.xlu0 %2480
    %2492 = vst [vmem:[#allocation1] ss:$4 sm:$0xff] %v2224
    %s2493 = scalar_lea.vmem [#allocation1], 1
    %2494 = vst [vmem:[%s2493] ss:$4 sm:$0xff] %v2248
    %s2495 = scalar_lea.vmem [#allocation1], 2
    %2496 = vst [vmem:[%s2495] ss:$4 sm:$0xff] %v2272
    %s2497 = scalar_lea.vmem [#allocation1], 3
    %2498 = vst [vmem:[%s2497] ss:$4 sm:$0xff] %v2296
    %s2499 = scalar_lea.vmem [#allocation1], 32
    %2500 = vst [vmem:[%s2499] ss:$4 sm:$0xff] %v2320
    %s2501 = scalar_lea.vmem [#allocation1], 33
    %2502 = vst [vmem:[%s2501] ss:$4 sm:$0xff] %v2344
    %s2503 = scalar_lea.vmem [#allocation1], 34
    %2504 = vst [vmem:[%s2503] ss:$4 sm:$0xff] %v2368
    %s2505 = scalar_lea.vmem [#allocation1], 35
    %2506 = vst [vmem:[%s2505] ss:$4 sm:$0xff] %v2392
    %v2507 = vld.sshfl [vmem:[#allocation1] sm:$0xff pattern:$0x73625140]
    %v2508 = vld.sshfl [vmem:[#allocation1 + $0x20] sm:$0xff pattern:$0x73625140]
    %2509 = vrot.lane.b32.xlu0 %v2507, 48
    %v2510 = vpop.permute.xlu0 %2509
    %2511 = vrot.lane.b32.xlu0 %v2508, 48
    %v2512 = vpop.permute.xlu0 %2511
    %v2515 = vsel %vm395, %v2418, %v2448
    %v2516 = vsel %vm395, %v2419, %v2450
    %vm2517 = vcmask 261120
    %v2518 = vsel %vm2517, %v2515, %v2479
    %v2519 = vsel %vm2517, %v2516, %v2481
    %vm2520 = vcmask 392192
    %v2521 = vsel %vm2520, %v2518, %v2510
    %v2522 = vsel %vm2520, %v2519, %v2512
    %v2523 = vpack.c.bf16 %v2522, %v2521
    %v2524 = vld [vmem:[%s3] sm:$0xf]
    %v2525 = vld [vmem:[%s3 + $0x4] sm:$0xf]
    %v2526 = vld [vmem:[%s3 + $0x8] sm:$0xf]
    %v2527 = vld [vmem:[%s3 + $0xc] sm:$0xf]
    %v2528 = vld [vmem:[%s3 + $0x10] sm:$0xf]
    %v2529 = vld [vmem:[%s3 + $0x14] sm:$0xf]
    %v2530 = vld [vmem:[%s3 + $0x18] sm:$0xf]
    %v2531 = vld [vmem:[%s3 + $0x1c] sm:$0xf]
    %v2532 = vld [vmem:[#allocation6] sm:$0x1]
    %v2534 = vperm.slane %v2532, 0
    %v2544 = vunpack.c.l.b16 %v2524
    %v2545 = vunpack.c.l.b16 %v2525
    %v2546 = vunpack.c.l.b16 %v2526
    %v2547 = vunpack.c.l.b16 %v2527
    %v2548 = vunpack.c.l.b16 %v2528
    %v2549 = vunpack.c.l.b16 %v2529
    %v2550 = vunpack.c.l.b16 %v2530
    %v2551 = vunpack.c.l.b16 %v2531
    %v2552 = vpack.c.b16 %v2545, %v2544
    %v2553 = vpack.c.b16 %v2547, %v2546
    %v2554 = vpack.c.b16 %v2549, %v2548
    %v2555 = vpack.c.b16 %v2551, %v2550
    %v2561 = vsel %vm263, %v2523, 0
    %2563 = vmatpush.bf16.msra.mxu0 0
    %2564 = vmatpush.bf16.msra.mxu0 0
    %2565 = vmatpush.bf16.msra.mxu0 0
    %2566 = vmatpush.bf16.msra.mxu0 0
    %2567 = vmatpush.bf16.msra.mxu0 %v2555
    %2568 = vmatpush.bf16.msra.mxu0 %v2554
    %2569 = vmatpush.bf16.msra.mxu0 %v2553
    %2570 = vmatpush.bf16.msra.mxu0 %v2552
    %2571 = vmatmul.bf16.gmra.mxu0 %v2561
    %v2572 = vpop.f32.mrf.mxu0
    %v2573 = vadd.f32 %v2534, %v2572
    %v2574 = vpop.f32.mrf.mxu0
    %v2575 = vadd.f32 %v2534, %v2574
    %2576 = vdwg.mxu0
    %2585 = vst [vmem:[#allocation1] ss:$4 sm:$0xff] %v177
    %s2586 = scalar_lea.vmem [#allocation1], 1
    %2587 = vst [vmem:[%s2586] ss:$4 sm:$0xff] %v178
    %s2588 = scalar_lea.vmem [#allocation1], 2
    %2589 = vst [vmem:[%s2588] ss:$4 sm:$0xff] %v179
    %s2590 = scalar_lea.vmem [#allocation1], 3
    %2591 = vst [vmem:[%s2590] ss:$4 sm:$0xff] %v180
    %s2592 = scalar_lea.vmem [#allocation1], 32
    %2593 = vst [vmem:[%s2592] ss:$4 sm:$0xff] %v181
    %s2594 = scalar_lea.vmem [#allocation1], 33
    %2595 = vst [vmem:[%s2594] ss:$4 sm:$0xff] %v182
    %s2596 = scalar_lea.vmem [#allocation1], 34
    %2597 = vst [vmem:[%s2596] ss:$4 sm:$0xff] %v183
    %s2598 = scalar_lea.vmem [#allocation1], 35
    %2599 = vst [vmem:[%s2598] ss:$4 sm:$0xff] %v184
    %v2600 = vld.sshfl [vmem:[#allocation1] sm:$0xff pattern:$0x73625140]
    %v2601 = vld.sshfl [vmem:[#allocation1 + $0x20] sm:$0xff pattern:$0x73625140]
    %v2604 = vadd.f32 %v2573, %v2600
    %v2605 = vadd.f32 %v2575, %v2601
    %v2606 = vsel %vm263, %v2604, 0.0
    %2607 = vadd.xlane.f32.xlu0 %v2606
    %v2608 = vpop.xlane.xlu0 %2607
    %v2609 = vsel %vm263, %v2605, 0.0
    %2610 = vadd.xlane.f32.xlu0 %v2609
    %v2611 = vpop.xlane.xlu0 %2610
    %v2612 = vrcp.pop 64.0
    %v2613 = vmul.f32 64.0, %v2612
    %v2614 = vsub.f32 1.0, %v2613
    %v2615 = vmul.f32 %v2612, %v2614
    %v2616 = vadd.f32 %v2612, %v2615
    %vm2617 = vweird.f32 %v2612
    %v2618 = vsel %vm2617, %v2612, %v2616
    %v2619 = vmul.f32 %v2608, %v2618
    %v2620 = vmul.f32 %v2611, %v2618
    %v2621 = vsub.f32 %v2604, %v2619
    %v2622 = vsub.f32 %v2605, %v2620
    %v2623 = vmul.f32 %v2621, %v2621
    %v2624 = vmul.f32 %v2622, %v2622
    %v2625 = vsel %vm263, %v2623, 0.0
    %2626 = vadd.xlane.f32.xlu0 %v2625
    %v2627 = vpop.xlane.xlu0 %2626
    %v2628 = vsel %vm263, %v2624, 0.0
    %2629 = vadd.xlane.f32.xlu0 %v2628
    %v2630 = vpop.xlane.xlu0 %2629
    %v2631 = vmul.f32 %v2627, %v2618
    %v2632 = vmul.f32 %v2630, %v2618
    %v2633 = vadd.f32 %v2631, 1e-05
    %v2634 = vadd.f32 %v2632, 1e-05
    %v2635 = vrsqrt.pop %v2633
    %v2636 = vmul.f32 %v2635, %v2633
    %v2637 = vmul.f32 %v2636, %v2635
    %v2638 = vmul.f32 0.5, %v2637
    %v2639 = vsub.f32 1.5, %v2638
    %v2640 = vmul.f32 %v2635, %v2639
    %vm2641 = vweird.f32 %v2633
    %vm2642 = vweird.f32 %v2635
    %vm2643 = vmor %vm2641, %vm2642
    %v2644 = vsel %vm2643, %v2635, %v2640
    %v2645 = vrsqrt.pop %v2634
    %v2646 = vmul.f32 %v2645, %v2634
    %v2647 = vmul.f32 %v2646, %v2645
    %v2648 = vmul.f32 0.5, %v2647
    %v2649 = vsub.f32 1.5, %v2648
    %v2650 = vmul.f32 %v2645, %v2649
    %vm2651 = vweird.f32 %v2634
    %vm2652 = vweird.f32 %v2645
    %vm2653 = vmor %vm2651, %vm2652
    %v2654 = vsel %vm2653, %v2645, %v2650
    %v2655 = vmul.f32 %v2621, %v2644
    %v2656 = vmul.f32 %v2622, %v2654
    %v2657 = vld [vmem:[#allocation7] sm:$0x1]
    %v2659 = vperm.slane %v2657, 0
    %v2661 = vmul.f32 %v2655, %v2659
    %v2662 = vmul.f32 %v2656, %v2659
    %v2663 = vld [vmem:[#allocation9] sm:$0x1]
    %v2665 = vperm.slane %v2663, 0
    %v2667 = vadd.f32 %v2661, %v2665
    %v2668 = vadd.f32 %v2662, %v2665
    %v2669 = vpack.c.bf16 %v2668, %v2667
    %v2670 = vld [vmem:[%s7] sm:$0xf]
    %v2671 = vld [vmem:[%s7 + $0x4] sm:$0xf]
    %v2672 = vld [vmem:[%s7 + $0x8] sm:$0xf]
    %v2673 = vld [vmem:[%s7 + $0xc] sm:$0xf]
    %v2674 = vld [vmem:[%s7 + $0x10] sm:$0xf]
    %v2675 = vld [vmem:[%s7 + $0x14] sm:$0xf]
    %v2676 = vld [vmem:[%s7 + $0x18] sm:$0xf]
    %v2677 = vld [vmem:[%s7 + $0x1c] sm:$0xf]
    %v2678 = vld [vmem:[#allocation10] sm:$0x1]
    %v2680 = vperm.slane %v2678, 0
    %v2690 = vunpack.c.l.b16 %v2670
    %v2691 = vunpack.c.l.b16 %v2671
    %v2692 = vunpack.c.l.b16 %v2672
    %v2693 = vunpack.c.l.b16 %v2673
    %v2694 = vunpack.c.l.b16 %v2674
    %v2695 = vunpack.c.l.b16 %v2675
    %v2696 = vunpack.c.l.b16 %v2676
    %v2697 = vunpack.c.l.b16 %v2677
    %v2698 = vpack.c.b16 %v2691, %v2690
    %v2699 = vpack.c.b16 %v2693, %v2692
    %v2700 = vpack.c.b16 %v2695, %v2694
    %v2701 = vpack.c.b16 %v2697, %v2696
    %v2707 = vsel %vm263, %v2669, 0
    %2709 = vmatpush.bf16.msra.mxu0 0
    %2710 = vmatpush.bf16.msra.mxu0 0
    %2711 = vmatpush.bf16.msra.mxu0 0
    %2712 = vmatpush.bf16.msra.mxu0 0
    %2713 = vmatpush.bf16.msra.mxu0 %v2701
    %2714 = vmatpush.bf16.msra.mxu0 %v2700
    %2715 = vmatpush.bf16.msra.mxu0 %v2699
    %2716 = vmatpush.bf16.msra.mxu0 %v2698
    %2717 = vmatmul.bf16.gmra.mxu0 %v2707
    %v2718 = vpop.f32.mrf.mxu0
    %v2719 = vadd.f32 %v2680, %v2718
    %v2720 = vpop.f32.mrf.mxu0
    %v2721 = vadd.f32 %v2680, %v2720
    %2722 = vdwg.mxu0
    %v2723 = vmax.f32 %v2719, 0.0
    %v2724 = vmax.f32 %v2721, 0.0
    %v2725 = vpack.c.bf16 %v2724, %v2723
    %v2726 = vld [vmem:[%s9] sm:$0xf]
    %v2727 = vld [vmem:[%s9 + $0x4] sm:$0xf]
    %v2728 = vld [vmem:[%s9 + $0x8] sm:$0xf]
    %v2729 = vld [vmem:[%s9 + $0xc] sm:$0xf]
    %v2730 = vld [vmem:[%s9 + $0x10] sm:$0xf]
    %v2731 = vld [vmem:[%s9 + $0x14] sm:$0xf]
    %v2732 = vld [vmem:[%s9 + $0x18] sm:$0xf]
    %v2733 = vld [vmem:[%s9 + $0x1c] sm:$0xf]
    %v2734 = vld [vmem:[%s9 + $0x20] sm:$0xf]
    %v2735 = vld [vmem:[%s9 + $0x24] sm:$0xf]
    %v2736 = vld [vmem:[%s9 + $0x28] sm:$0xf]
    %v2737 = vld [vmem:[%s9 + $0x2c] sm:$0xf]
    %v2738 = vld [vmem:[%s9 + $0x30] sm:$0xf]
    %v2739 = vld [vmem:[%s9 + $0x34] sm:$0xf]
    %v2740 = vld [vmem:[%s9 + $0x38] sm:$0xf]
    %v2741 = vld [vmem:[%s9 + $0x3c] sm:$0xf]
    %v2742 = vld [vmem:[#allocation12] sm:$0x1]
    %v2744 = vperm.slane %v2742, 0
    %v2762 = vunpack.c.l.b16 %v2726
    %v2763 = vunpack.c.l.b16 %v2727
    %v2764 = vunpack.c.l.b16 %v2728
    %v2765 = vunpack.c.l.b16 %v2729
    %v2766 = vunpack.c.l.b16 %v2730
    %v2767 = vunpack.c.l.b16 %v2731
    %v2768 = vunpack.c.l.b16 %v2732
    %v2769 = vunpack.c.l.b16 %v2733
    %v2770 = vunpack.c.l.b16 %v2734
    %v2771 = vunpack.c.l.b16 %v2735
    %v2772 = vunpack.c.l.b16 %v2736
    %v2773 = vunpack.c.l.b16 %v2737
    %v2774 = vunpack.c.l.b16 %v2738
    %v2775 = vunpack.c.l.b16 %v2739
    %v2776 = vunpack.c.l.b16 %v2740
    %v2777 = vunpack.c.l.b16 %v2741
    %v2778 = vpack.c.b16 %v2763, %v2762
    %v2779 = vpack.c.b16 %v2765, %v2764
    %v2780 = vpack.c.b16 %v2767, %v2766
    %v2781 = vpack.c.b16 %v2769, %v2768
    %v2782 = vpack.c.b16 %v2771, %v2770
    %v2783 = vpack.c.b16 %v2773, %v2772
    %v2784 = vpack.c.b16 %v2775, %v2774
    %v2785 = vpack.c.b16 %v2777, %v2776
    %2794 = vmatpush.bf16.msra.mxu0 %v2785
    %2795 = vmatpush.bf16.msra.mxu0 %v2784
    %2796 = vmatpush.bf16.msra.mxu0 %v2783
    %2797 = vmatpush.bf16.msra.mxu0 %v2782
    %2798 = vmatpush.bf16.msra.mxu0 %v2781
    %2799 = vmatpush.bf16.msra.mxu0 %v2780
    %2800 = vmatpush.bf16.msra.mxu0 %v2779
    %2801 = vmatpush.bf16.msra.mxu0 %v2778
    %2802 = vmatmul.bf16.gmra.mxu0 %v2725
    %v2803 = vpop.f32.mrf.mxu0
    %v2804 = vadd.f32 %v2744, %v2803
    %v2805 = vpop.f32.mrf.mxu0
    %v2806 = vadd.f32 %v2744, %v2805
    %2807 = vdwg.mxu0
    %v2808 = vadd.f32 %v2804, %v2667
    %v2809 = vadd.f32 %v2806, %v2668
    %v2810 = vsel %vm263, %v2808, 0.0
    %2811 = vadd.xlane.f32.xlu0 %v2810
    %v2812 = vpop.xlane.xlu0 %2811
    %v2813 = vsel %vm263, %v2809, 0.0
    %2814 = vadd.xlane.f32.xlu0 %v2813
    %v2815 = vpop.xlane.xlu0 %2814
    %v2816 = vmul.f32 %v2812, %v2618
    %v2817 = vmul.f32 %v2815, %v2618
    %v2818 = vsub.f32 %v2808, %v2816
    %v2819 = vsub.f32 %v2809, %v2817
    %v2820 = vmul.f32 %v2818, %v2818
    %v2821 = vmul.f32 %v2819, %v2819
    %v2822 = vsel %vm263, %v2820, 0.0
    %2823 = vadd.xlane.f32.xlu0 %v2822
    %v2824 = vpop.xlane.xlu0 %2823
    %v2825 = vsel %vm263, %v2821, 0.0
    %2826 = vadd.xlane.f32.xlu0 %v2825
    %v2827 = vpop.xlane.xlu0 %2826
    %v2828 = vmul.f32 %v2824, %v2618
    %v2829 = vmul.f32 %v2827, %v2618
    %v2830 = vadd.f32 %v2828, 1e-05
    %v2831 = vadd.f32 %v2829, 1e-05
    %v2832 = vrsqrt.pop %v2830
    %v2833 = vmul.f32 %v2832, %v2830
    %v2834 = vmul.f32 %v2833, %v2832
    %v2835 = vmul.f32 0.5, %v2834
    %v2836 = vsub.f32 1.5, %v2835
    %v2837 = vmul.f32 %v2832, %v2836
    %vm2838 = vweird.f32 %v2830
    %vm2839 = vweird.f32 %v2832
    %vm2840 = vmor %vm2838, %vm2839
    %v2841 = vsel %vm2840, %v2832, %v2837
    %v2842 = vrsqrt.pop %v2831
    %v2843 = vmul.f32 %v2842, %v2831
    %v2844 = vmul.f32 %v2843, %v2842
    %v2845 = vmul.f32 0.5, %v2844
    %v2846 = vsub.f32 1.5, %v2845
    %v2847 = vmul.f32 %v2842, %v2846
    %vm2848 = vweird.f32 %v2831
    %vm2849 = vweird.f32 %v2842
    %vm2850 = vmor %vm2848, %vm2849
    %v2851 = vsel %vm2850, %v2842, %v2847
    %v2852 = vmul.f32 %v2818, %v2841
    %v2853 = vmul.f32 %v2819, %v2851
    %v2854 = vld [vmem:[#allocation13] sm:$0x1]
    %v2856 = vperm.slane %v2854, 0
    %v2858 = vmul.f32 %v2852, %v2856
    %v2859 = vmul.f32 %v2853, %v2856
    %v2860 = vld [vmem:[#allocation15] sm:$0x1]
    %v2862 = vperm.slane %v2860, 0
    %v2864 = vadd.f32 %v2858, %v2862
    %v2865 = vadd.f32 %v2859, %v2862
    %v2868 = vrot.slane %v2864, 2
    %v2869 = vrot.slane %v2864, 4
    %v2870 = vrot.slane %v2864, 6
    %v2871 = vrot.slane %v2865, 2
    %v2872 = vrot.slane %v2865, 4
    %v2873 = vrot.slane %v2865, 6
    %v2880 = vpack.c.bf16 %v2864, %v2864
    %v2881 = vpack.c.bf16 %v2868, %v2868
    %v2882 = vpack.c.bf16 %v2869, %v2869
    %v2883 = vpack.c.bf16 %v2870, %v2870
    %v2884 = vpack.c.bf16 %v2865, %v2865
    %v2885 = vpack.c.bf16 %v2871, %v2871
    %v2886 = vpack.c.bf16 %v2872, %v2872
    %v2887 = vpack.c.bf16 %v2873, %v2873
    %vm2888 = vcmask 516096
    %2889 = vst.msk [vmem:[%s13] sm:$0x1] %vm2888, %v2880
    %2890 = vst.msk [vmem:[%s13 + $0x1] sm:$0x1] %vm2888, %v2881
    %2891 = vst.msk [vmem:[%s13 + $0x2] sm:$0x1] %vm2888, %v2882
    %2892 = vst.msk [vmem:[%s13 + $0x3] sm:$0x1] %vm2888, %v2883
    %2893 = vst.msk [vmem:[%s13 + $0x4] sm:$0x1] %vm2888, %v2884
    %2894 = vst.msk [vmem:[%s13 + $0x5] sm:$0x1] %vm2888, %v2885
    %2895 = vst.msk [vmem:[%s13 + $0x6] sm:$0x1] %vm2888, %v2886
    %2896 = vst.msk [vmem:[%s13 + $0x7] sm:$0x1] %vm2888, %v2887
    // Predicated region
    $region90: #{model_forward.19} parent=1 // pred_check
      _
    $region91: #{model_forward.19} parent=1 // pred_check_branch
      %2898 = sbr.rel (0) target = $region93
    $region92: #{model_forward.19} parent=1 // pred_region
      _
    $region93: #{model_forward.19} parent=1 // pred_fallthru
      _
    // Predicated region
    $region94: #{model_forward.19} parent=1 // pred_check
      _
    $region95: #{model_forward.19} parent=1 // pred_check_branch
      %2900 = sbr.rel (0) target = $region97
    $region96: #{model_forward.19} parent=1 // pred_region
      _
    $region97: #{model_forward.19} parent=1 // pred_fallthru
      _
    %2901 = vsyncpa [#allocation3], 1
    %2902 = vsyncpa [#allocation5], 1
    %2903 = vsyncpa [#allocation8], 1
    %2904 = vsyncpa [#allocation11], 1
    %2905 = vsyncpa [#allocation14], 1

// kernel: model_forward.20
$region0: #{model_forward.20}
  #allocation0 [shape = 'u32[]', space=smem, size = 0x4, offset = 0x4, fixed_abs, tag = 'smem constant byte address 0x4 - core index']
  #allocation1 [shape = 'u32[72,128]{1,0:T(1,128)}', space=vmem, size = 0x9000, scoped, tag = 'internal scratch']
  %s0 = inlined_call_operand.vmem [shape: bf16[8,2,64], index: 0, kind: input, shape index: {}]
  %s1 = inlined_call_operand.hbm [shape: bf16[64,192], index: 1, kind: input, shape index: {}]
  %s2 = inlined_call_operand.hbm [shape: f32[1,192], index: 2, kind: input, shape index: {}]
  %s3 = inlined_call_operand.hbm [shape: bf16[64,64], index: 3, kind: input, shape index: {}]
  %s4 = inlined_call_operand.hbm [shape: f32[1,64], index: 4, kind: input, shape index: {}]
  %s5 = inlined_call_operand.hbm [shape: f32[1,64], index: 5, kind: input, shape index: {}]
  %s6 = inlined_call_operand.hbm [shape: f32[1,64], index: 6, kind: input, shape index: {}]
  %s7 = inlined_call_operand.hbm [shape: bf16[64,128], index: 7, kind: input, shape index: {}]
  %s8 = inlined_call_operand.hbm [shape: f32[1,128], index: 8, kind: input, shape index: {}]
  %s9 = inlined_call_operand.vmem [shape: bf16[128,64], index: 9, kind: input, shape index: {}]
  %s10 = inlined_call_operand.hbm [shape: f32[1,64], index: 10, kind: input, shape index: {}]
  %s11 = inlined_call_operand.hbm [shape: f32[1,64], index: 11, kind: input, shape index: {}]
  %s12 = inlined_call_operand.hbm [shape: f32[1,64], index: 12, kind: input, shape index: {}]
  %s13 = inlined_call_operand.vmem [shape: bf16[8,2,64], index: 13, kind: output, shape index: {}]
  %s14 = sld [smem:[#allocation0]]
  $region106: #{model_forward.20} parent=0
    _
  %s16 = ssub.s32 1, %s14
  %s17 = scalar_select 0, %s16, %s14
  $region1: #{model_forward.20} parent=0
    #allocation2 [shape = 'u8[32768]{0}', space=vmem, size = 0x8000, scoped, tag = 'input window, operand 1, single buffered']
    #allocation3 [shape = 's32[1]{0}', space=sflag, size = 0x4, scoped, tag = 'scoped memory for model_forward.20']
    #allocation4 [shape = 'u8[1024]{0}', space=vmem, size = 0x400, scoped, tag = 'input window, operand 2, single buffered']
    #allocation5 [shape = 's32[1]{0}', space=sflag, size = 0x4, scoped, tag = 'scoped memory for model_forward.20']
    #allocation6 [shape = 'u8[16384]{0}', space=vmem, size = 0x4000, scoped, tag = 'input window, operand 3, single buffered']
    #allocation7 [shape = 'u8[512]{0}', space=vmem, size = 0x400, scoped, tag = 'input window, operand 4, single buffered']
    #allocation8 [shape = 's32[1]{0}', space=sflag, size = 0x4, scoped, tag = 'scoped memory for model_forward.20']
    #allocation9 [shape = 'u8[512]{0}', space=vmem, size = 0x400, scoped, tag = 'input window, operand 5, single buffered']
    #allocation10 [shape = 'u8[512]{0}', space=vmem, size = 0x400, scoped, tag = 'input window, operand 6, single buffered']
    #allocation11 [shape = 's32[1]{0}', space=sflag, size = 0x4, scoped, tag = 'scoped memory for model_forward.20']
    #allocation12 [shape = 'u8[16384]{0}', space=vmem, size = 0x4000, scoped, tag = 'input window, operand 7, single buffered']
    #allocation13 [shape = 'u8[512]{0}', space=vmem, size = 0x400, scoped, tag = 'input window, operand 8, single buffered']
    #allocation14 [shape = 's32[1]{0}', space=sflag, size = 0x4, scoped, tag = 'scoped memory for model_forward.20']
    #allocation15 [shape = 'u8[512]{0}', space=vmem, size = 0x400, scoped, tag = 'input window, operand 10, single buffered']
    #allocation16 [shape = 'u8[512]{0}', space=vmem, size = 0x400, scoped, tag = 'input window, operand 11, single buffered']
    #allocation17 [shape = 's32[1]{0}', space=sflag, size = 0x4, scoped, tag = 'scoped memory for model_forward.20']
    #allocation18 [shape = 'u8[512]{0}', space=vmem, size = 0x400, scoped, tag = 'input window, operand 12, single buffered']
    %18 = vsyncpa [#allocation3], 0
    %19 = vsyncpa [#allocation5], 0
    %20 = vsyncpa [#allocation8], 0
    %21 = vsyncpa [#allocation11], 0
    %22 = vsyncpa [#allocation14], 0
    %23 = vsyncpa [#allocation17], 0
    // Predicated region
    $region2: #{model_forward.20} parent=1 // pred_check
      _
    $region3: #{model_forward.20} parent=1 // pred_check_branch
      %25 = sbr.rel (0) target = $region5
    $region4: #{model_forward.20} parent=1 // pred_region
      _
    $region5: #{model_forward.20} parent=1 // pred_fallthru
      _
    // Predicated region
    $region6: #{model_forward.20} parent=1 // pred_check
      _
    $region7: #{model_forward.20} parent=1 // pred_check_branch
      %27 = sbr.rel (0) target = $region9
    $region8: #{model_forward.20} parent=1 // pred_region
      %29 = vsyncadd [#allocation3], 0
      %s30 = sshll.u32 %s1, 4
      %s31 = int_to_ptr.hbm [resolvable:$true] %s30
      %s32 = sshll.u32 [#allocation2], 4
      %s33 = int_to_ptr.vmem [resolvable:$true] %s32
      %38 = dma.hbm_to_vmem [thread:$0]  %s31, 1024, %s33, [#allocation3], 128, 128, 8
    $region9: #{model_forward.20} parent=1 // pred_fallthru
      _
    // Predicated region
    $region10: #{model_forward.20} parent=1 // pred_check
      _
    $region11: #{model_forward.20} parent=1 // pred_check_branch
      %40 = sbr.rel (0) target = $region13
    $region12: #{model_forward.20} parent=1 // pred_region
      %42 = vsyncadd [#allocation5], 0
      %s44 = sshll.u32 %s2, 4
      %s45 = int_to_ptr.hbm [resolvable:$true] %s44
      %s46 = sshll.u32 [#allocation4], 4
      %s47 = int_to_ptr.vmem [resolvable:$true] %s46
      %49 = dma.hbm_to_vmem [thread:$0]  %s45, 32, %s47, [#allocation5]
    $region13: #{model_forward.20} parent=1 // pred_fallthru
      _
    // Predicated region
    $region14: #{model_forward.20} parent=1 // pred_check
      _
    $region15: #{model_forward.20} parent=1 // pred_check_branch
      %51 = sbr.rel (0) target = $region17
    $region16: #{model_forward.20} parent=1 // pred_region
      %53 = vsyncadd [#allocation5], 0
      %s54 = sshll.u32 %s3, 4
      %s55 = int_to_ptr.hbm [resolvable:$true] %s54
      %s56 = sshll.u32 [#allocation6], 4
      %s57 = int_to_ptr.vmem [resolvable:$true] %s56
      %62 = dma.hbm_to_vmem [thread:$0]  %s55, 512, %s57, [#allocation5], 64, 64, 4
    $region17: #{model_forward.20} parent=1 // pred_fallthru
      _
    // Predicated region
    $region18: #{model_forward.20} parent=1 // pred_check
      _
    $region19: #{model_forward.20} parent=1 // pred_check_branch
      %64 = sbr.rel (0) target = $region21
    $region20: #{model_forward.20} parent=1 // pred_region
      %66 = vsyncadd [#allocation8], 0
      %s68 = sshll.u32 %s4, 4
      %s69 = int_to_ptr.hbm [resolvable:$true] %s68
      %s70 = sshll.u32 [#allocation7], 4
      %s71 = int_to_ptr.vmem [resolvable:$true] %s70
      %73 = dma.hbm_to_vmem [thread:$0]  %s69, 16, %s71, [#allocation8]
    $region21: #{model_forward.20} parent=1 // pred_fallthru
      _
    // Predicated region
    $region22: #{model_forward.20} parent=1 // pred_check
      _
    $region23: #{model_forward.20} parent=1 // pred_check_branch
      %75 = sbr.rel (0) target = $region25
    $region24: #{model_forward.20} parent=1 // pred_region
      %77 = vsyncadd [#allocation8], 0
      %s79 = sshll.u32 %s5, 4
      %s80 = int_to_ptr.hbm [resolvable:$true] %s79
      %s81 = sshll.u32 [#allocation9], 4
      %s82 = int_to_ptr.vmem [resolvable:$true] %s81
      %84 = dma.hbm_to_vmem [thread:$0]  %s80, 16, %s82, [#allocation8]
    $region25: #{model_forward.20} parent=1 // pred_fallthru
      _
    // Predicated region
    $region26: #{model_forward.20} parent=1 // pred_check
      _
    $region27: #{model_forward.20} parent=1 // pred_check_branch
      %86 = sbr.rel (0) target = $region29
    $region28: #{model_forward.20} parent=1 // pred_region
      %88 = vsyncadd [#allocation11], 0
      %s90 = sshll.u32 %s6, 4
      %s91 = int_to_ptr.hbm [resolvable:$true] %s90
      %s92 = sshll.u32 [#allocation10], 4
      %s93 = int_to_ptr.vmem [resolvable:$true] %s92
      %95 = dma.hbm_to_vmem [thread:$0]  %s91, 16, %s93, [#allocation11]
    $region29: #{model_forward.20} parent=1 // pred_fallthru
      _
    // Predicated region
    $region30: #{model_forward.20} parent=1 // pred_check
      _
    $region31: #{model_forward.20} parent=1 // pred_check_branch
      %97 = sbr.rel (0) target = $region33
    $region32: #{model_forward.20} parent=1 // pred_region
      %99 = vsyncadd [#allocation11], 0
      %s100 = sshll.u32 %s7, 4
      %s101 = int_to_ptr.hbm [resolvable:$true] %s100
      %s102 = sshll.u32 [#allocation12], 4
      %s103 = int_to_ptr.vmem [resolvable:$true] %s102
      %108 = dma.hbm_to_vmem [thread:$0]  %s101, 512, %s103, [#allocation11], 64, 64, 4
    $region33: #{model_forward.20} parent=1 // pred_fallthru
      _
    // Predicated region
    $region34: #{model_forward.20} parent=1 // pred_check
      _
    $region35: #{model_forward.20} parent=1 // pred_check_branch
      %110 = sbr.rel (0) target = $region37
    $region36: #{model_forward.20} parent=1 // pred_region
      %112 = vsyncadd [#allocation14], 0
      %s114 = sshll.u32 %s8, 4
      %s115 = int_to_ptr.hbm [resolvable:$true] %s114
      %s116 = sshll.u32 [#allocation13], 4
      %s117 = int_to_ptr.vmem [resolvable:$true] %s116
      %119 = dma.hbm_to_vmem [thread:$0]  %s115, 16, %s117, [#allocation14]
    $region37: #{model_forward.20} parent=1 // pred_fallthru
      _
    // Predicated region
    $region38: #{model_forward.20} parent=1 // pred_check
      _
    $region39: #{model_forward.20} parent=1 // pred_check_branch
      %121 = sbr.rel (0) target = $region41
    $region40: #{model_forward.20} parent=1 // pred_region
      _
    $region41: #{model_forward.20} parent=1 // pred_fallthru
      _
    // Predicated region
    $region42: #{model_forward.20} parent=1 // pred_check
      _
    $region43: #{model_forward.20} parent=1 // pred_check_branch
      %123 = sbr.rel (0) target = $region45
    $region44: #{model_forward.20} parent=1 // pred_region
      %125 = vsyncadd [#allocation14], 0
      %s127 = sshll.u32 %s10, 4
      %s128 = int_to_ptr.hbm [resolvable:$true] %s127
      %s129 = sshll.u32 [#allocation15], 4
      %s130 = int_to_ptr.vmem [resolvable:$true] %s129
      %132 = dma.hbm_to_vmem [thread:$0]  %s128, 16, %s130, [#allocation14]
    $region45: #{model_forward.20} parent=1 // pred_fallthru
      _
    // Predicated region
    $region46: #{model_forward.20} parent=1 // pred_check
      _
    $region47: #{model_forward.20} parent=1 // pred_check_branch
      %134 = sbr.rel (0) target = $region49
    $region48: #{model_forward.20} parent=1 // pred_region
      %136 = vsyncadd [#allocation17], 0
      %s138 = sshll.u32 %s11, 4
      %s139 = int_to_ptr.hbm [resolvable:$true] %s138
      %s140 = sshll.u32 [#allocation16], 4
      %s141 = int_to_ptr.vmem [resolvable:$true] %s140
      %143 = dma.hbm_to_vmem [thread:$0]  %s139, 16, %s141, [#allocation17]
    $region49: #{model_forward.20} parent=1 // pred_fallthru
      _
    // Predicated region
    $region50: #{model_forward.20} parent=1 // pred_check
      _
    $region51: #{model_forward.20} parent=1 // pred_check_branch
      %145 = sbr.rel (0) target = $region53
    $region52: #{model_forward.20} parent=1 // pred_region
      %147 = vsyncadd [#allocation17], 0
      %s149 = sshll.u32 %s12, 4
      %s150 = int_to_ptr.hbm [resolvable:$true] %s149
      %s151 = sshll.u32 [#allocation18], 4
      %s152 = int_to_ptr.vmem [resolvable:$true] %s151
      %154 = dma.hbm_to_vmem [thread:$0]  %s150, 16, %s152, [#allocation17]
    $region53: #{model_forward.20} parent=1 // pred_fallthru
      _
    // Predicated region
    $region54: #{model_forward.20} parent=1 // pred_check
      _
    $region55: #{model_forward.20} parent=1 // pred_check_branch
      %156 = sbr.rel (0) target = $region57
    $region56: #{model_forward.20} parent=1 // pred_region
      %158 = dma.done [#allocation3], 1024
    $region57: #{model_forward.20} parent=1 // pred_fallthru
      _
    // Predicated region
    $region58: #{model_forward.20} parent=1 // pred_check
      _
    $region59: #{model_forward.20} parent=1 // pred_check_branch
      %160 = sbr.rel (0) target = $region61
    $region60: #{model_forward.20} parent=1 // pred_region
      %162 = dma.done [#allocation5], 32
    $region61: #{model_forward.20} parent=1 // pred_fallthru
      _
    // Predicated region
    $region62: #{model_forward.20} parent=1 // pred_check
      _
    $region63: #{model_forward.20} parent=1 // pred_check_branch
      %164 = sbr.rel (0) target = $region65
    $region64: #{model_forward.20} parent=1 // pred_region
      %166 = dma.done [#allocation5], 512
    $region65: #{model_forward.20} parent=1 // pred_fallthru
      _
    // Predicated region
    $region66: #{model_forward.20} parent=1 // pred_check
      _
    $region67: #{model_forward.20} parent=1 // pred_check_branch
      %168 = sbr.rel (0) target = $region69
    $region68: #{model_forward.20} parent=1 // pred_region
      %170 = dma.done [#allocation8], 16
    $region69: #{model_forward.20} parent=1 // pred_fallthru
      _
    // Predicated region
    $region70: #{model_forward.20} parent=1 // pred_check
      _
    $region71: #{model_forward.20} parent=1 // pred_check_branch
      %172 = sbr.rel (0) target = $region73
    $region72: #{model_forward.20} parent=1 // pred_region
      %174 = dma.done [#allocation8], 16
    $region73: #{model_forward.20} parent=1 // pred_fallthru
      _
    // Predicated region
    $region74: #{model_forward.20} parent=1 // pred_check
      _
    $region75: #{model_forward.20} parent=1 // pred_check_branch
      %176 = sbr.rel (0) target = $region77
    $region76: #{model_forward.20} parent=1 // pred_region
      %178 = dma.done [#allocation11], 16
    $region77: #{model_forward.20} parent=1 // pred_fallthru
      _
    // Predicated region
    $region78: #{model_forward.20} parent=1 // pred_check
      _
    $region79: #{model_forward.20} parent=1 // pred_check_branch
      %180 = sbr.rel (0) target = $region81
    $region80: #{model_forward.20} parent=1 // pred_region
      %182 = dma.done [#allocation11], 512
    $region81: #{model_forward.20} parent=1 // pred_fallthru
      _
    // Predicated region
    $region82: #{model_forward.20} parent=1 // pred_check
      _
    $region83: #{model_forward.20} parent=1 // pred_check_branch
      %184 = sbr.rel (0) target = $region85
    $region84: #{model_forward.20} parent=1 // pred_region
      %186 = dma.done [#allocation14], 16
    $region85: #{model_forward.20} parent=1 // pred_fallthru
      _
    // Predicated region
    $region86: #{model_forward.20} parent=1 // pred_check
      _
    $region87: #{model_forward.20} parent=1 // pred_check_branch
      %188 = sbr.rel (0) target = $region89
    $region88: #{model_forward.20} parent=1 // pred_region
      %190 = dma.done [#allocation14], 16
    $region89: #{model_forward.20} parent=1 // pred_fallthru
      _
    // Predicated region
    $region90: #{model_forward.20} parent=1 // pred_check
      _
    $region91: #{model_forward.20} parent=1 // pred_check_branch
      %192 = sbr.rel (0) target = $region93
    $region92: #{model_forward.20} parent=1 // pred_region
      %194 = dma.done [#allocation17], 16
    $region93: #{model_forward.20} parent=1 // pred_fallthru
      _
    // Predicated region
    $region94: #{model_forward.20} parent=1 // pred_check
      _
    $region95: #{model_forward.20} parent=1 // pred_check_branch
      %196 = sbr.rel (0) target = $region97
    $region96: #{model_forward.20} parent=1 // pred_region
      %198 = dma.done [#allocation17], 16
    $region97: #{model_forward.20} parent=1 // pred_fallthru
      _
    %v200 = vld [vmem:[%s0] sm:$0x1]
    %v201 = vld [vmem:[%s0 + $0x1] sm:$0x1]
    %v202 = vld [vmem:[%s0 + $0x2] sm:$0x1]
    %v203 = vld [vmem:[%s0 + $0x3] sm:$0x1]
    %v204 = vld [vmem:[%s0 + $0x4] sm:$0x1]
    %v205 = vld [vmem:[%s0 + $0x5] sm:$0x1]
    %v206 = vld [vmem:[%s0 + $0x6] sm:$0x1]
    %v207 = vld [vmem:[%s0 + $0x7] sm:$0x1]
    %v208 = vunpack.c.l.bf16 %v200
    %v209 = vunpack.c.l.bf16 %v201
    %v210 = vunpack.c.l.bf16 %v202
    %v211 = vunpack.c.l.bf16 %v203
    %v212 = vunpack.c.l.bf16 %v204
    %v213 = vunpack.c.l.bf16 %v205
    %v214 = vunpack.c.l.bf16 %v206
    %v215 = vunpack.c.l.bf16 %v207
    %v216 = vld [vmem:[#allocation2] sm:$0xff]
    %v217 = vld [vmem:[#allocation2 + $0x8] sm:$0xff]
    %v218 = vld [vmem:[#allocation2 + $0x10] sm:$0xff]
    %v219 = vld [vmem:[#allocation2 + $0x18] sm:$0xff]
    %v220 = vld [vmem:[#allocation2 + $0x20] sm:$0xff]
    %v221 = vld [vmem:[#allocation2 + $0x28] sm:$0xff]
    %v222 = vld [vmem:[#allocation2 + $0x30] sm:$0xff]
    %v223 = vld [vmem:[#allocation2 + $0x38] sm:$0xff]
    %v224 = vld [vmem:[#allocation4] sm:$0x3]
    %v226 = vperm.slane %v224, 0
    %v227 = vperm.slane %v224, 1
    %231 = vst [vmem:[#allocation1] ss:$9 sm:$0xff] %v200
    %s233 = scalar_lea.vmem [#allocation1], 1
    %234 = vst [vmem:[%s233] ss:$9 sm:$0xff] %v201
    %s236 = scalar_lea.vmem [#allocation1], 2
    %237 = vst [vmem:[%s236] ss:$9 sm:$0xff] %v202
    %s239 = scalar_lea.vmem [#allocation1], 3
    %240 = vst [vmem:[%s239] ss:$9 sm:$0xff] %v203
    %s242 = scalar_lea.vmem [#allocation1], 4
    %243 = vst [vmem:[%s242] ss:$9 sm:$0xff] %v204
    %s245 = scalar_lea.vmem [#allocation1], 5
    %246 = vst [vmem:[%s245] ss:$9 sm:$0xff] %v205
    %s248 = scalar_lea.vmem [#allocation1], 6
    %249 = vst [vmem:[%s248] ss:$9 sm:$0xff] %v206
    %s251 = scalar_lea.vmem [#allocation1], 7
    %252 = vst [vmem:[%s251] ss:$9 sm:$0xff] %v207
    %v253 = vld [vmem:[#allocation1] sm:$0xff]
    %v262 = vunpack.c.l.b16 %v216
    %v263 = vunpack.c.h.b16 %v216
    %v264 = vunpack.c.l.b16 %v217
    %v265 = vunpack.c.h.b16 %v217
    %v266 = vunpack.c.l.b16 %v218
    %v267 = vunpack.c.h.b16 %v218
    %v268 = vunpack.c.l.b16 %v219
    %v269 = vunpack.c.h.b16 %v219
    %v270 = vunpack.c.l.b16 %v220
    %v271 = vunpack.c.h.b16 %v220
    %v272 = vunpack.c.l.b16 %v221
    %v273 = vunpack.c.h.b16 %v221
    %v274 = vunpack.c.l.b16 %v222
    %v275 = vunpack.c.h.b16 %v222
    %v276 = vunpack.c.l.b16 %v223
    %v277 = vunpack.c.h.b16 %v223
    %v278 = vpack.c.b16 %v264, %v262
    %v279 = vpack.c.b16 %v265, %v263
    %v280 = vpack.c.b16 %v268, %v266
    %v281 = vpack.c.b16 %v269, %v267
    %v282 = vpack.c.b16 %v272, %v270
    %v283 = vpack.c.b16 %v273, %v271
    %v284 = vpack.c.b16 %v276, %v274
    %v285 = vpack.c.b16 %v277, %v275
    %vm294 = vcmask 523264
    %v295 = vsel %vm294, %v253, 0
    %297 = vmatpush.bf16.msra.mxu0 0
    %298 = vmatpush.bf16.msra.mxu0 0
    %299 = vmatpush.bf16.msra.mxu0 0
    %300 = vmatpush.bf16.msra.mxu0 0
    %301 = vmatpush.bf16.msra.mxu0 %v284
    %302 = vmatpush.bf16.msra.mxu0 %v282
    %303 = vmatpush.bf16.msra.mxu0 %v280
    %304 = vmatpush.bf16.msra.mxu0 %v278
    %305 = vmatmul.bf16.gmra.mxu0 %v295
    %v306 = vpop.f32.mrf.mxu0
    %v307 = vadd.f32 %v226, %v306
    %v308 = vpop.f32.mrf.mxu0
    %v309 = vadd.f32 %v226, %v308
    %310 = vdwg.mxu0
    %311 = vmatpush.bf16.msra.mxu0 0
    %312 = vmatpush.bf16.msra.mxu0 0
    %313 = vmatpush.bf16.msra.mxu0 0
    %314 = vmatpush.bf16.msra.mxu0 0
    %315 = vmatpush.bf16.msra.mxu0 %v285
    %316 = vmatpush.bf16.msra.mxu0 %v283
    %317 = vmatpush.bf16.msra.mxu0 %v281
    %318 = vmatpush.bf16.msra.mxu0 %v279
    %319 = vmatmul.bf16.gmra.mxu0 %v295
    %v320 = vpop.f32.mrf.mxu0
    %v321 = vadd.f32 %v227, %v320
    %v322 = vpop.f32.mrf.mxu0
    %v323 = vadd.f32 %v227, %v322
    %324 = vdwg.mxu0
    %v325 = vmul.f32 %v307, 0.25
    %v326 = vmul.f32 %v309, 0.25
    %v327 = vpack.c.bf16 %v325, %v325
    %v328 = vpack.c.bf16 %v326, %v326
    %v331 = vrot.slane %v327, 3
    %v332 = vrot.slane %v328, 3
    %vm333 = vcmask 1040384
    %v336 = vsel %vm333, %v327, %v331
    %vm337 = vcmask 1041409
    %v338 = vsel %vm337, %v327, %v331
    %v340 = vrot.slane %v338, 1
    %vm341 = vcmask 1042434
    %v342 = vsel %vm341, %v327, %v331
    %v344 = vrot.slane %v342, 2
    %vm345 = vcmask 1043459
    %v346 = vsel %vm345, %v327, %v331
    %v348 = vrot.slane %v346, 3
    %v351 = vsel %vm333, %v328, %v332
    %v352 = vsel %vm337, %v328, %v332
    %v354 = vrot.slane %v352, 1
    %v355 = vsel %vm341, %v328, %v332
    %v357 = vrot.slane %v355, 2
    %v358 = vsel %vm345, %v328, %v332
    %v360 = vrot.slane %v358, 3
    %v361 = vpack.c.bf16 %v307, %v307
    %v362 = vpack.c.bf16 %v309, %v309
    %v365 = vrot.slane %v361, 3
    %v366 = vrot.slane %v362, 3
    %v369 = vsel %vm333, %v361, %v365
    %v370 = vsel %vm337, %v361, %v365
    %v372 = vrot.slane %v370, 1
    %v373 = vsel %vm341, %v361, %v365
    %v375 = vrot.slane %v373, 2
    %v376 = vsel %vm345, %v361, %v365
    %v378 = vrot.slane %v376, 3
    %v381 = vsel %vm333, %v362, %v366
    %v382 = vsel %vm337, %v362, %v366
    %v384 = vrot.slane %v382, 1
    %v385 = vsel %vm341, %v362, %v366
    %v387 = vrot.slane %v385, 2
    %v388 = vsel %vm345, %v362, %v366
    %v390 = vrot.slane %v388, 3
    %v391 = vpack.c.bf16 %v321, %v321
    %v392 = vpack.c.bf16 %v323, %v323
    %v395 = vrot.slane %v391, 3
    %v396 = vrot.slane %v392, 3
    %v399 = vsel %vm333, %v391, %v395
    %v400 = vsel %vm337, %v391, %v395
    %v402 = vrot.slane %v400, 1
    %v403 = vsel %vm341, %v391, %v395
    %v405 = vrot.slane %v403, 2
    %v406 = vsel %vm345, %v391, %v395
    %v408 = vrot.slane %v406, 3
    %v411 = vsel %vm333, %v392, %v396
    %v412 = vsel %vm337, %v392, %v396
    %v414 = vrot.slane %v412, 1
    %v415 = vsel %vm341, %v392, %v396
    %v417 = vrot.slane %v415, 2
    %v418 = vsel %vm345, %v392, %v396
    %v420 = vrot.slane %v418, 3
    %421 = vst [vmem:[#allocation1] ss:$9 sm:$0xff] %v369
    %v422 = vld [vmem:[#allocation1] sm:$0xff]
    %424 = vrot.lane.b32.xlu0 %v422, 64
    %v425 = vpop.permute.xlu0 %424
    %vm426 = vcmask 130048
    %v427 = vsel %vm426, %v336, 0
    %v430 = vsel %vm426, %v425, 0
    %432 = vmatpush.bf16.xpose.msra.mxu0 0
    %433 = vmatpush.bf16.xpose.msra.mxu0 0
    %434 = vmatpush.bf16.xpose.msra.mxu0 0
    %435 = vmatpush.bf16.xpose.msra.mxu0 0
    %436 = vmatpush.bf16.xpose.msra.mxu0 0
    %437 = vmatpush.bf16.xpose.msra.mxu0 0
    %438 = vmatpush.bf16.xpose.msra.mxu0 0
    %439 = vmatpush.bf16.xpose.msra.mxu0 %v430
    %440 = vmatmul.bf16.gmra.mxu0 %v427
    %v441 = vpop.f32.mrf.mxu0
    %v442 = vadd.f32 0.0, %v441
    %v443 = vpop.f32.mrf.mxu0
    %444 = vdwg.mxu0
    %446 = vst [vmem:[#allocation1] ss:$9 sm:$0xff] %v372
    %v447 = vld [vmem:[#allocation1] sm:$0xff]
    %449 = vrot.lane.b32.xlu0 %v447, 64
    %v450 = vpop.permute.xlu0 %449
    %v452 = vsel %vm426, %v340, 0
    %v455 = vsel %vm426, %v450, 0
    %457 = vmatpush.bf16.xpose.msra.mxu0 0
    %458 = vmatpush.bf16.xpose.msra.mxu0 0
    %459 = vmatpush.bf16.xpose.msra.mxu0 0
    %460 = vmatpush.bf16.xpose.msra.mxu0 0
    %461 = vmatpush.bf16.xpose.msra.mxu0 0
    %462 = vmatpush.bf16.xpose.msra.mxu0 0
    %463 = vmatpush.bf16.xpose.msra.mxu0 0
    %464 = vmatpush.bf16.xpose.msra.mxu0 %v455
    %465 = vmatmul.bf16.gmra.mxu0 %v452
    %v466 = vpop.f32.mrf.mxu0
    %v467 = vadd.f32 0.0, %v466
    %v468 = vpop.f32.mrf.mxu0
    %469 = vdwg.mxu0
    %471 = vst [vmem:[#allocation1] ss:$9 sm:$0xff] %v375
    %v472 = vld [vmem:[#allocation1] sm:$0xff]
    %474 = vrot.lane.b32.xlu0 %v472, 64
    %v475 = vpop.permute.xlu0 %474
    %v477 = vsel %vm426, %v344, 0
    %v480 = vsel %vm426, %v475, 0
    %482 = vmatpush.bf16.xpose.msra.mxu0 0
    %483 = vmatpush.bf16.xpose.msra.mxu0 0
    %484 = vmatpush.bf16.xpose.msra.mxu0 0
    %485 = vmatpush.bf16.xpose.msra.mxu0 0
    %486 = vmatpush.bf16.xpose.msra.mxu0 0
    %487 = vmatpush.bf16.xpose.msra.mxu0 0
    %488 = vmatpush.bf16.xpose.msra.mxu0 0
    %489 = vmatpush.bf16.xpose.msra.mxu0 %v480
    %490 = vmatmul.bf16.gmra.mxu0 %v477
    %v491 = vpop.f32.mrf.mxu0
    %v492 = vadd.f32 0.0, %v491
    %v493 = vpop.f32.mrf.mxu0
    %494 = vdwg.mxu0
    %496 = vst [vmem:[#allocation1] ss:$9 sm:$0xff] %v378
    %v497 = vld [vmem:[#allocation1] sm:$0xff]
    %499 = vrot.lane.b32.xlu0 %v497, 64
    %v500 = vpop.permute.xlu0 %499
    %v502 = vsel %vm426, %v348, 0
    %v505 = vsel %vm426, %v500, 0
    %507 = vmatpush.bf16.xpose.msra.mxu0 0
    %508 = vmatpush.bf16.xpose.msra.mxu0 0
    %509 = vmatpush.bf16.xpose.msra.mxu0 0
    %510 = vmatpush.bf16.xpose.msra.mxu0 0
    %511 = vmatpush.bf16.xpose.msra.mxu0 0
    %512 = vmatpush.bf16.xpose.msra.mxu0 0
    %513 = vmatpush.bf16.xpose.msra.mxu0 0
    %514 = vmatpush.bf16.xpose.msra.mxu0 %v505
    %515 = vmatmul.bf16.gmra.mxu0 %v502
    %v516 = vpop.f32.mrf.mxu0
    %v517 = vadd.f32 0.0, %v516
    %v518 = vpop.f32.mrf.mxu0
    %519 = vdwg.mxu0
    %520 = vst [vmem:[#allocation1] ss:$9 sm:$0xff] %v381
    %v521 = vld [vmem:[#allocation1] sm:$0xff]
    %523 = vrot.lane.b32.xlu0 %v521, 64
    %v524 = vpop.permute.xlu0 %523
    %v525 = vsel %vm426, %v351, 0
    %v528 = vsel %vm426, %v524, 0
    %530 = vmatpush.bf16.xpose.msra.mxu0 0
    %531 = vmatpush.bf16.xpose.msra.mxu0 0
    %532 = vmatpush.bf16.xpose.msra.mxu0 0
    %533 = vmatpush.bf16.xpose.msra.mxu0 0
    %534 = vmatpush.bf16.xpose.msra.mxu0 0
    %535 = vmatpush.bf16.xpose.msra.mxu0 0
    %536 = vmatpush.bf16.xpose.msra.mxu0 0
    %537 = vmatpush.bf16.xpose.msra.mxu0 %v528
    %538 = vmatmul.bf16.gmra.mxu0 %v525
    %v539 = vpop.f32.mrf.mxu0
    %v540 = vadd.f32 0.0, %v539
    %v541 = vpop.f32.mrf.mxu0
    %542 = vdwg.mxu0
    %544 = vst [vmem:[#allocation1] ss:$9 sm:$0xff] %v384
    %v545 = vld [vmem:[#allocation1] sm:$0xff]
    %547 = vrot.lane.b32.xlu0 %v545, 64
    %v548 = vpop.permute.xlu0 %547
    %v550 = vsel %vm426, %v354, 0
    %v553 = vsel %vm426, %v548, 0
    %555 = vmatpush.bf16.xpose.msra.mxu0 0
    %556 = vmatpush.bf16.xpose.msra.mxu0 0
    %557 = vmatpush.bf16.xpose.msra.mxu0 0
    %558 = vmatpush.bf16.xpose.msra.mxu0 0
    %559 = vmatpush.bf16.xpose.msra.mxu0 0
    %560 = vmatpush.bf16.xpose.msra.mxu0 0
    %561 = vmatpush.bf16.xpose.msra.mxu0 0
    %562 = vmatpush.bf16.xpose.msra.mxu0 %v553
    %563 = vmatmul.bf16.gmra.mxu0 %v550
    %v564 = vpop.f32.mrf.mxu0
    %v565 = vadd.f32 0.0, %v564
    %v566 = vpop.f32.mrf.mxu0
    %567 = vdwg.mxu0
    %569 = vst [vmem:[#allocation1] ss:$9 sm:$0xff] %v387
    %v570 = vld [vmem:[#allocation1] sm:$0xff]
    %572 = vrot.lane.b32.xlu0 %v570, 64
    %v573 = vpop.permute.xlu0 %572
    %v575 = vsel %vm426, %v357, 0
    %v578 = vsel %vm426, %v573, 0
    %580 = vmatpush.bf16.xpose.msra.mxu0 0
    %581 = vmatpush.bf16.xpose.msra.mxu0 0
    %582 = vmatpush.bf16.xpose.msra.mxu0 0
    %583 = vmatpush.bf16.xpose.msra.mxu0 0
    %584 = vmatpush.bf16.xpose.msra.mxu0 0
    %585 = vmatpush.bf16.xpose.msra.mxu0 0
    %586 = vmatpush.bf16.xpose.msra.mxu0 0
    %587 = vmatpush.bf16.xpose.msra.mxu0 %v578
    %588 = vmatmul.bf16.gmra.mxu0 %v575
    %v589 = vpop.f32.mrf.mxu0
    %v590 = vadd.f32 0.0, %v589
    %v591 = vpop.f32.mrf.mxu0
    %592 = vdwg.mxu0
    %594 = vst [vmem:[#allocation1] ss:$9 sm:$0xff] %v390
    %v595 = vld [vmem:[#allocation1] sm:$0xff]
    %597 = vrot.lane.b32.xlu0 %v595, 64
    %v598 = vpop.permute.xlu0 %597
    %v600 = vsel %vm426, %v360, 0
    %v603 = vsel %vm426, %v598, 0
    %605 = vmatpush.bf16.xpose.msra.mxu0 0
    %606 = vmatpush.bf16.xpose.msra.mxu0 0
    %607 = vmatpush.bf16.xpose.msra.mxu0 0
    %608 = vmatpush.bf16.xpose.msra.mxu0 0
    %609 = vmatpush.bf16.xpose.msra.mxu0 0
    %610 = vmatpush.bf16.xpose.msra.mxu0 0
    %611 = vmatpush.bf16.xpose.msra.mxu0 0
    %612 = vmatpush.bf16.xpose.msra.mxu0 %v603
    %613 = vmatmul.bf16.gmra.mxu0 %v600
    %v614 = vpop.f32.mrf.mxu0
    %v615 = vadd.f32 0.0, %v614
    %v616 = vpop.f32.mrf.mxu0
    %617 = vdwg.mxu0
    %vm618 = vcmask 9216
    %v619 = vsel %vm618, %v442, -inf
    %620 = vmax.xlane.f32.xlu0 %v619
    %v621 = vpop.xlane.xlu0 %620
    %v622 = vsel %vm618, %v467, -inf
    %623 = vmax.xlane.f32.xlu0 %v622
    %v624 = vpop.xlane.xlu0 %623
    %v625 = vsel %vm618, %v492, -inf
    %626 = vmax.xlane.f32.xlu0 %v625
    %v627 = vpop.xlane.xlu0 %626
    %v628 = vsel %vm618, %v517, -inf
    %629 = vmax.xlane.f32.xlu0 %v628
    %v630 = vpop.xlane.xlu0 %629
    %v631 = vsel %vm618, %v540, -inf
    %632 = vmax.xlane.f32.xlu0 %v631
    %v633 = vpop.xlane.xlu0 %632
    %v634 = vsel %vm618, %v565, -inf
    %635 = vmax.xlane.f32.xlu0 %v634
    %v636 = vpop.xlane.xlu0 %635
    %v637 = vsel %vm618, %v590, -inf
    %638 = vmax.xlane.f32.xlu0 %v637
    %v639 = vpop.xlane.xlu0 %638
    %v640 = vsel %vm618, %v615, -inf
    %641 = vmax.xlane.f32.xlu0 %v640
    %v642 = vpop.xlane.xlu0 %641
    %v643 = vsub.f32 %v442, %v621
    %v644 = vsub.f32 %v467, %v624
    %v645 = vsub.f32 %v492, %v627
    %v646 = vsub.f32 %v517, %v630
    %v647 = vsub.f32 %v540, %v633
    %v648 = vsub.f32 %v565, %v636
    %v649 = vsub.f32 %v590, %v639
    %v650 = vsub.f32 %v615, %v642
    %v651 = vmul.f32 %v643, 1.442695
    %v652 = vpow.pop %v651
    %v653 = vmul.f32 %v644, 1.442695
    %v654 = vpow.pop %v653
    %v655 = vmul.f32 %v645, 1.442695
    %v656 = vpow.pop %v655
    %v657 = vmul.f32 %v646, 1.442695
    %v658 = vpow.pop %v657
    %v659 = vmul.f32 %v647, 1.442695
    %v660 = vpow.pop %v659
    %v661 = vmul.f32 %v648, 1.442695
    %v662 = vpow.pop %v661
    %v663 = vmul.f32 %v649, 1.442695
    %v664 = vpow.pop %v663
    %v665 = vmul.f32 %v650, 1.442695
    %v666 = vpow.pop %v665
    %v667 = vsel %vm618, %v652, 0.0
    %668 = vadd.xlane.f32.xlu0 %v667
    %v669 = vpop.xlane.xlu0 %668
    %v670 = vsel %vm618, %v654, 0.0
    %671 = vadd.xlane.f32.xlu0 %v670
    %v672 = vpop.xlane.xlu0 %671
    %v673 = vsel %vm618, %v656, 0.0
    %674 = vadd.xlane.f32.xlu0 %v673
    %v675 = vpop.xlane.xlu0 %674
    %v676 = vsel %vm618, %v658, 0.0
    %677 = vadd.xlane.f32.xlu0 %v676
    %v678 = vpop.xlane.xlu0 %677
    %v679 = vsel %vm618, %v660, 0.0
    %680 = vadd.xlane.f32.xlu0 %v679
    %v681 = vpop.xlane.xlu0 %680
    %v682 = vsel %vm618, %v662, 0.0
    %683 = vadd.xlane.f32.xlu0 %v682
    %v684 = vpop.xlane.xlu0 %683
    %v685 = vsel %vm618, %v664, 0.0
    %686 = vadd.xlane.f32.xlu0 %v685
    %v687 = vpop.xlane.xlu0 %686
    %v688 = vsel %vm618, %v666, 0.0
    %689 = vadd.xlane.f32.xlu0 %v688
    %v690 = vpop.xlane.xlu0 %689
    %v691 = vrcp.pop %v669
    %v692 = vrcp.pop %v672
    %v693 = vrcp.pop %v675
    %v694 = vrcp.pop %v678
    %v695 = vrcp.pop %v681
    %v696 = vrcp.pop %v684
    %v697 = vrcp.pop %v687
    %v698 = vrcp.pop %v690
    %v699 = vmul.f32 %v652, %v691
    %v700 = vmul.f32 %v654, %v692
    %v701 = vmul.f32 %v656, %v693
    %v702 = vmul.f32 %v658, %v694
    %v703 = vmul.f32 %v660, %v695
    %v704 = vmul.f32 %v662, %v696
    %v705 = vmul.f32 %v664, %v697
    %v706 = vmul.f32 %v666, %v698
    %v707 = vpack.c.bf16 %v699, %v699
    %v708 = vpack.c.bf16 %v700, %v700
    %v709 = vpack.c.bf16 %v701, %v701
    %v710 = vpack.c.bf16 %v702, %v702
    %v711 = vpack.c.bf16 %v703, %v703
    %v712 = vpack.c.bf16 %v704, %v704
    %v713 = vpack.c.bf16 %v705, %v705
    %v714 = vpack.c.bf16 %v706, %v706
    %vm715 = vcmask 15360
    %v717 = vsel %vm715, %v707, 0
    %v719 = vsel %vm333, %v399, 0
    %721 = vmatpush.bf16.msra.mxu0 0
    %722 = vmatpush.bf16.msra.mxu0 0
    %723 = vmatpush.bf16.msra.mxu0 0
    %724 = vmatpush.bf16.msra.mxu0 0
    %725 = vmatpush.bf16.msra.mxu0 0
    %726 = vmatpush.bf16.msra.mxu0 0
    %727 = vmatpush.bf16.msra.mxu0 0
    %728 = vmatpush.bf16.msra.mxu0 %v719
    %729 = vmatmul.bf16.gmra.mxu0 %v717
    %v730 = vpop.f32.mrf.mxu0
    %v731 = vadd.f32 0.0, %v730
    %v732 = vpop.f32.mrf.mxu0
    %733 = vdwg.mxu0
    %v735 = vsel %vm715, %v708, 0
    %v738 = vsel %vm333, %v402, 0
    %740 = vmatpush.bf16.msra.mxu0 0
    %741 = vmatpush.bf16.msra.mxu0 0
    %742 = vmatpush.bf16.msra.mxu0 0
    %743 = vmatpush.bf16.msra.mxu0 0
    %744 = vmatpush.bf16.msra.mxu0 0
    %745 = vmatpush.bf16.msra.mxu0 0
    %746 = vmatpush.bf16.msra.mxu0 0
    %747 = vmatpush.bf16.msra.mxu0 %v738
    %748 = vmatmul.bf16.gmra.mxu0 %v735
    %v749 = vpop.f32.mrf.mxu0
    %v750 = vadd.f32 0.0, %v749
    %v751 = vpop.f32.mrf.mxu0
    %752 = vdwg.mxu0
    %v754 = vsel %vm715, %v709, 0
    %v757 = vsel %vm333, %v405, 0
    %759 = vmatpush.bf16.msra.mxu0 0
    %760 = vmatpush.bf16.msra.mxu0 0
    %761 = vmatpush.bf16.msra.mxu0 0
    %762 = vmatpush.bf16.msra.mxu0 0
    %763 = vmatpush.bf16.msra.mxu0 0
    %764 = vmatpush.bf16.msra.mxu0 0
    %765 = vmatpush.bf16.msra.mxu0 0
    %766 = vmatpush.bf16.msra.mxu0 %v757
    %767 = vmatmul.bf16.gmra.mxu0 %v754
    %v768 = vpop.f32.mrf.mxu0
    %v769 = vadd.f32 0.0, %v768
    %v770 = vpop.f32.mrf.mxu0
    %771 = vdwg.mxu0
    %v773 = vsel %vm715, %v710, 0
    %v776 = vsel %vm333, %v408, 0
    %778 = vmatpush.bf16.msra.mxu0 0
    %779 = vmatpush.bf16.msra.mxu0 0
    %780 = vmatpush.bf16.msra.mxu0 0
    %781 = vmatpush.bf16.msra.mxu0 0
    %782 = vmatpush.bf16.msra.mxu0 0
    %783 = vmatpush.bf16.msra.mxu0 0
    %784 = vmatpush.bf16.msra.mxu0 0
    %785 = vmatpush.bf16.msra.mxu0 %v776
    %786 = vmatmul.bf16.gmra.mxu0 %v773
    %v787 = vpop.f32.mrf.mxu0
    %v788 = vadd.f32 0.0, %v787
    %v789 = vpop.f32.mrf.mxu0
    %790 = vdwg.mxu0
    %v792 = vsel %vm715, %v711, 0
    %v794 = vsel %vm333, %v411, 0
    %796 = vmatpush.bf16.msra.mxu0 0
    %797 = vmatpush.bf16.msra.mxu0 0
    %798 = vmatpush.bf16.msra.mxu0 0
    %799 = vmatpush.bf16.msra.mxu0 0
    %800 = vmatpush.bf16.msra.mxu0 0
    %801 = vmatpush.bf16.msra.mxu0 0
    %802 = vmatpush.bf16.msra.mxu0 0
    %803 = vmatpush.bf16.msra.mxu0 %v794
    %804 = vmatmul.bf16.gmra.mxu0 %v792
    %v805 = vpop.f32.mrf.mxu0
    %v806 = vadd.f32 0.0, %v805
    %v807 = vpop.f32.mrf.mxu0
    %808 = vdwg.mxu0
    %v810 = vsel %vm715, %v712, 0
    %v813 = vsel %vm333, %v414, 0
    %815 = vmatpush.bf16.msra.mxu0 0
    %816 = vmatpush.bf16.msra.mxu0 0
    %817 = vmatpush.bf16.msra.mxu0 0
    %818 = vmatpush.bf16.msra.mxu0 0
    %819 = vmatpush.bf16.msra.mxu0 0
    %820 = vmatpush.bf16.msra.mxu0 0
    %821 = vmatpush.bf16.msra.mxu0 0
    %822 = vmatpush.bf16.msra.mxu0 %v813
    %823 = vmatmul.bf16.gmra.mxu0 %v810
    %v824 = vpop.f32.mrf.mxu0
    %v825 = vadd.f32 0.0, %v824
    %v826 = vpop.f32.mrf.mxu0
    %827 = vdwg.mxu0
    %v829 = vsel %vm715, %v713, 0
    %v832 = vsel %vm333, %v417, 0
    %834 = vmatpush.bf16.msra.mxu0 0
    %835 = vmatpush.bf16.msra.mxu0 0
    %836 = vmatpush.bf16.msra.mxu0 0
    %837 = vmatpush.bf16.msra.mxu0 0
    %838 = vmatpush.bf16.msra.mxu0 0
    %839 = vmatpush.bf16.msra.mxu0 0
    %840 = vmatpush.bf16.msra.mxu0 0
    %841 = vmatpush.bf16.msra.mxu0 %v832
    %842 = vmatmul.bf16.gmra.mxu0 %v829
    %v843 = vpop.f32.mrf.mxu0
    %v844 = vadd.f32 0.0, %v843
    %v845 = vpop.f32.mrf.mxu0
    %846 = vdwg.mxu0
    %v848 = vsel %vm715, %v714, 0
    %v851 = vsel %vm333, %v420, 0
    %853 = vmatpush.bf16.msra.mxu0 0
    %854 = vmatpush.bf16.msra.mxu0 0
    %855 = vmatpush.bf16.msra.mxu0 0
    %856 = vmatpush.bf16.msra.mxu0 0
    %857 = vmatpush.bf16.msra.mxu0 0
    %858 = vmatpush.bf16.msra.mxu0 0
    %859 = vmatpush.bf16.msra.mxu0 0
    %860 = vmatpush.bf16.msra.mxu0 %v851
    %861 = vmatmul.bf16.gmra.mxu0 %v848
    %v862 = vpop.f32.mrf.mxu0
    %v863 = vadd.f32 0.0, %v862
    %v864 = vpop.f32.mrf.mxu0
    %865 = vdwg.mxu0
    %866 = vst [vmem:[#allocation1] ss:$9 sm:$0xff] %v336
    %v867 = vld [vmem:[#allocation1] sm:$0xff]
    %869 = vrot.lane.b32.xlu0 %v867, 112
    %v870 = vpop.permute.xlu0 %869
    %871 = vst [vmem:[#allocation1] ss:$9 sm:$0xff] %v369
    %v872 = vld [vmem:[#allocation1] sm:$0xff]
    %874 = vrot.lane.b32.xlu0 %v872, 48
    %v875 = vpop.permute.xlu0 %874
    %v877 = vsel %vm426, %v870, 0
    %v880 = vsel %vm426, %v875, 0
    %882 = vmatpush.bf16.xpose.msra.mxu0 0
    %883 = vmatpush.bf16.xpose.msra.mxu0 0
    %884 = vmatpush.bf16.xpose.msra.mxu0 0
    %885 = vmatpush.bf16.xpose.msra.mxu0 0
    %886 = vmatpush.bf16.xpose.msra.mxu0 0
    %887 = vmatpush.bf16.xpose.msra.mxu0 0
    %888 = vmatpush.bf16.xpose.msra.mxu0 0
    %889 = vmatpush.bf16.xpose.msra.mxu0 %v880
    %890 = vmatmul.bf16.gmra.mxu0 %v877
    %v891 = vpop.f32.mrf.mxu0
    %v892 = vadd.f32 0.0, %v891
    %v893 = vpop.f32.mrf.mxu0
    %894 = vdwg.mxu0
    %895 = vst [vmem:[#allocation1] ss:$9 sm:$0xff] %v340
    %v896 = vld [vmem:[#allocation1] sm:$0xff]
    %898 = vrot.lane.b32.xlu0 %v896, 112
    %v899 = vpop.permute.xlu0 %898
    %900 = vst [vmem:[#allocation1] ss:$9 sm:$0xff] %v372
    %v901 = vld [vmem:[#allocation1] sm:$0xff]
    %903 = vrot.lane.b32.xlu0 %v901, 48
    %v904 = vpop.permute.xlu0 %903
    %v906 = vsel %vm426, %v899, 0
    %v909 = vsel %vm426, %v904, 0
    %911 = vmatpush.bf16.xpose.msra.mxu0 0
    %912 = vmatpush.bf16.xpose.msra.mxu0 0
    %913 = vmatpush.bf16.xpose.msra.mxu0 0
    %914 = vmatpush.bf16.xpose.msra.mxu0 0
    %915 = vmatpush.bf16.xpose.msra.mxu0 0
    %916 = vmatpush.bf16.xpose.msra.mxu0 0
    %917 = vmatpush.bf16.xpose.msra.mxu0 0
    %918 = vmatpush.bf16.xpose.msra.mxu0 %v909
    %919 = vmatmul.bf16.gmra.mxu0 %v906
    %v920 = vpop.f32.mrf.mxu0
    %v921 = vadd.f32 0.0, %v920
    %v922 = vpop.f32.mrf.mxu0
    %923 = vdwg.mxu0
    %924 = vst [vmem:[#allocation1] ss:$9 sm:$0xff] %v344
    %v925 = vld [vmem:[#allocation1] sm:$0xff]
    %927 = vrot.lane.b32.xlu0 %v925, 112
    %v928 = vpop.permute.xlu0 %927
    %929 = vst [vmem:[#allocation1] ss:$9 sm:$0xff] %v375
    %v930 = vld [vmem:[#allocation1] sm:$0xff]
    %932 = vrot.lane.b32.xlu0 %v930, 48
    %v933 = vpop.permute.xlu0 %932
    %v935 = vsel %vm426, %v928, 0
    %v938 = vsel %vm426, %v933, 0
    %940 = vmatpush.bf16.xpose.msra.mxu0 0
    %941 = vmatpush.bf16.xpose.msra.mxu0 0
    %942 = vmatpush.bf16.xpose.msra.mxu0 0
    %943 = vmatpush.bf16.xpose.msra.mxu0 0
    %944 = vmatpush.bf16.xpose.msra.mxu0 0
    %945 = vmatpush.bf16.xpose.msra.mxu0 0
    %946 = vmatpush.bf16.xpose.msra.mxu0 0
    %947 = vmatpush.bf16.xpose.msra.mxu0 %v938
    %948 = vmatmul.bf16.gmra.mxu0 %v935
    %v949 = vpop.f32.mrf.mxu0
    %v950 = vadd.f32 0.0, %v949
    %v951 = vpop.f32.mrf.mxu0
    %952 = vdwg.mxu0
    %953 = vst [vmem:[#allocation1] ss:$9 sm:$0xff] %v348
    %v954 = vld [vmem:[#allocation1] sm:$0xff]
    %956 = vrot.lane.b32.xlu0 %v954, 112
    %v957 = vpop.permute.xlu0 %956
    %958 = vst [vmem:[#allocation1] ss:$9 sm:$0xff] %v378
    %v959 = vld [vmem:[#allocation1] sm:$0xff]
    %961 = vrot.lane.b32.xlu0 %v959, 48
    %v962 = vpop.permute.xlu0 %961
    %v964 = vsel %vm426, %v957, 0
    %v967 = vsel %vm426, %v962, 0
    %969 = vmatpush.bf16.xpose.msra.mxu0 0
    %970 = vmatpush.bf16.xpose.msra.mxu0 0
    %971 = vmatpush.bf16.xpose.msra.mxu0 0
    %972 = vmatpush.bf16.xpose.msra.mxu0 0
    %973 = vmatpush.bf16.xpose.msra.mxu0 0
    %974 = vmatpush.bf16.xpose.msra.mxu0 0
    %975 = vmatpush.bf16.xpose.msra.mxu0 0
    %976 = vmatpush.bf16.xpose.msra.mxu0 %v967
    %977 = vmatmul.bf16.gmra.mxu0 %v964
    %v978 = vpop.f32.mrf.mxu0
    %v979 = vadd.f32 0.0, %v978
    %v980 = vpop.f32.mrf.mxu0
    %981 = vdwg.mxu0
    %982 = vst [vmem:[#allocation1] ss:$9 sm:$0xff] %v351
    %v983 = vld [vmem:[#allocation1] sm:$0xff]
    %985 = vrot.lane.b32.xlu0 %v983, 112
    %v986 = vpop.permute.xlu0 %985
    %987 = vst [vmem:[#allocation1] ss:$9 sm:$0xff] %v381
    %v988 = vld [vmem:[#allocation1] sm:$0xff]
    %990 = vrot.lane.b32.xlu0 %v988, 48
    %v991 = vpop.permute.xlu0 %990
    %v993 = vsel %vm426, %v986, 0
    %v996 = vsel %vm426, %v991, 0
    %998 = vmatpush.bf16.xpose.msra.mxu0 0
    %999 = vmatpush.bf16.xpose.msra.mxu0 0
    %1000 = vmatpush.bf16.xpose.msra.mxu0 0
    %1001 = vmatpush.bf16.xpose.msra.mxu0 0
    %1002 = vmatpush.bf16.xpose.msra.mxu0 0
    %1003 = vmatpush.bf16.xpose.msra.mxu0 0
    %1004 = vmatpush.bf16.xpose.msra.mxu0 0
    %1005 = vmatpush.bf16.xpose.msra.mxu0 %v996
    %1006 = vmatmul.bf16.gmra.mxu0 %v993
    %v1007 = vpop.f32.mrf.mxu0
    %v1008 = vadd.f32 0.0, %v1007
    %v1009 = vpop.f32.mrf.mxu0
    %1010 = vdwg.mxu0
    %1011 = vst [vmem:[#allocation1] ss:$9 sm:$0xff] %v354
    %v1012 = vld [vmem:[#allocation1] sm:$0xff]
    %1014 = vrot.lane.b32.xlu0 %v1012, 112
    %v1015 = vpop.permute.xlu0 %1014
    %1016 = vst [vmem:[#allocation1] ss:$9 sm:$0xff] %v384
    %v1017 = vld [vmem:[#allocation1] sm:$0xff]
    %1019 = vrot.lane.b32.xlu0 %v1017, 48
    %v1020 = vpop.permute.xlu0 %1019
    %v1022 = vsel %vm426, %v1015, 0
    %v1025 = vsel %vm426, %v1020, 0
    %1027 = vmatpush.bf16.xpose.msra.mxu0 0
    %1028 = vmatpush.bf16.xpose.msra.mxu0 0
    %1029 = vmatpush.bf16.xpose.msra.mxu0 0
    %1030 = vmatpush.bf16.xpose.msra.mxu0 0
    %1031 = vmatpush.bf16.xpose.msra.mxu0 0
    %1032 = vmatpush.bf16.xpose.msra.mxu0 0
    %1033 = vmatpush.bf16.xpose.msra.mxu0 0
    %1034 = vmatpush.bf16.xpose.msra.mxu0 %v1025
    %1035 = vmatmul.bf16.gmra.mxu0 %v1022
    %v1036 = vpop.f32.mrf.mxu0
    %v1037 = vadd.f32 0.0, %v1036
    %v1038 = vpop.f32.mrf.mxu0
    %1039 = vdwg.mxu0
    %1040 = vst [vmem:[#allocation1] ss:$9 sm:$0xff] %v357
    %v1041 = vld [vmem:[#allocation1] sm:$0xff]
    %1043 = vrot.lane.b32.xlu0 %v1041, 112
    %v1044 = vpop.permute.xlu0 %1043
    %1045 = vst [vmem:[#allocation1] ss:$9 sm:$0xff] %v387
    %v1046 = vld [vmem:[#allocation1] sm:$0xff]
    %1048 = vrot.lane.b32.xlu0 %v1046, 48
    %v1049 = vpop.permute.xlu0 %1048
    %v1051 = vsel %vm426, %v1044, 0
    %v1054 = vsel %vm426, %v1049, 0
    %1056 = vmatpush.bf16.xpose.msra.mxu0 0
    %1057 = vmatpush.bf16.xpose.msra.mxu0 0
    %1058 = vmatpush.bf16.xpose.msra.mxu0 0
    %1059 = vmatpush.bf16.xpose.msra.mxu0 0
    %1060 = vmatpush.bf16.xpose.msra.mxu0 0
    %1061 = vmatpush.bf16.xpose.msra.mxu0 0
    %1062 = vmatpush.bf16.xpose.msra.mxu0 0
    %1063 = vmatpush.bf16.xpose.msra.mxu0 %v1054
    %1064 = vmatmul.bf16.gmra.mxu0 %v1051
    %v1065 = vpop.f32.mrf.mxu0
    %v1066 = vadd.f32 0.0, %v1065
    %v1067 = vpop.f32.mrf.mxu0
    %1068 = vdwg.mxu0
    %1069 = vst [vmem:[#allocation1] ss:$9 sm:$0xff] %v360
    %v1070 = vld [vmem:[#allocation1] sm:$0xff]
    %1072 = vrot.lane.b32.xlu0 %v1070, 112
    %v1073 = vpop.permute.xlu0 %1072
    %1074 = vst [vmem:[#allocation1] ss:$9 sm:$0xff] %v390
    %v1075 = vld [vmem:[#allocation1] sm:$0xff]
    %1077 = vrot.lane.b32.xlu0 %v1075, 48
    %v1078 = vpop.permute.xlu0 %1077
    %v1080 = vsel %vm426, %v1073, 0
    %v1083 = vsel %vm426, %v1078, 0
    %1085 = vmatpush.bf16.xpose.msra.mxu0 0
    %1086 = vmatpush.bf16.xpose.msra.mxu0 0
    %1087 = vmatpush.bf16.xpose.msra.mxu0 0
    %1088 = vmatpush.bf16.xpose.msra.mxu0 0
    %1089 = vmatpush.bf16.xpose.msra.mxu0 0
    %1090 = vmatpush.bf16.xpose.msra.mxu0 0
    %1091 = vmatpush.bf16.xpose.msra.mxu0 0
    %1092 = vmatpush.bf16.xpose.msra.mxu0 %v1083
    %1093 = vmatmul.bf16.gmra.mxu0 %v1080
    %v1094 = vpop.f32.mrf.mxu0
    %v1095 = vadd.f32 0.0, %v1094
    %v1096 = vpop.f32.mrf.mxu0
    %1097 = vdwg.mxu0
    %v1098 = vsel %vm618, %v892, -inf
    %1099 = vmax.xlane.f32.xlu0 %v1098
    %v1100 = vpop.xlane.xlu0 %1099
    %v1101 = vsel %vm618, %v921, -inf
    %1102 = vmax.xlane.f32.xlu0 %v1101
    %v1103 = vpop.xlane.xlu0 %1102
    %v1104 = vsel %vm618, %v950, -inf
    %1105 = vmax.xlane.f32.xlu0 %v1104
    %v1106 = vpop.xlane.xlu0 %1105
    %v1107 = vsel %vm618, %v979, -inf
    %1108 = vmax.xlane.f32.xlu0 %v1107
    %v1109 = vpop.xlane.xlu0 %1108
    %v1110 = vsel %vm618, %v1008, -inf
    %1111 = vmax.xlane.f32.xlu0 %v1110
    %v1112 = vpop.xlane.xlu0 %1111
    %v1113 = vsel %vm618, %v1037, -inf
    %1114 = vmax.xlane.f32.xlu0 %v1113
    %v1115 = vpop.xlane.xlu0 %1114
    %v1116 = vsel %vm618, %v1066, -inf
    %1117 = vmax.xlane.f32.xlu0 %v1116
    %v1118 = vpop.xlane.xlu0 %1117
    %v1119 = vsel %vm618, %v1095, -inf
    %1120 = vmax.xlane.f32.xlu0 %v1119
    %v1121 = vpop.xlane.xlu0 %1120
    %v1122 = vsub.f32 %v892, %v1100
    %v1123 = vsub.f32 %v921, %v1103
    %v1124 = vsub.f32 %v950, %v1106
    %v1125 = vsub.f32 %v979, %v1109
    %v1126 = vsub.f32 %v1008, %v1112
    %v1127 = vsub.f32 %v1037, %v1115
    %v1128 = vsub.f32 %v1066, %v1118
    %v1129 = vsub.f32 %v1095, %v1121
    %v1130 = vmul.f32 %v1122, 1.442695
    %v1131 = vpow.pop %v1130
    %v1132 = vmul.f32 %v1123, 1.442695
    %v1133 = vpow.pop %v1132
    %v1134 = vmul.f32 %v1124, 1.442695
    %v1135 = vpow.pop %v1134
    %v1136 = vmul.f32 %v1125, 1.442695
    %v1137 = vpow.pop %v1136
    %v1138 = vmul.f32 %v1126, 1.442695
    %v1139 = vpow.pop %v1138
    %v1140 = vmul.f32 %v1127, 1.442695
    %v1141 = vpow.pop %v1140
    %v1142 = vmul.f32 %v1128, 1.442695
    %v1143 = vpow.pop %v1142
    %v1144 = vmul.f32 %v1129, 1.442695
    %v1145 = vpow.pop %v1144
    %v1146 = vsel %vm618, %v1131, 0.0
    %1147 = vadd.xlane.f32.xlu0 %v1146
    %v1148 = vpop.xlane.xlu0 %1147
    %v1149 = vsel %vm618, %v1133, 0.0
    %1150 = vadd.xlane.f32.xlu0 %v1149
    %v1151 = vpop.xlane.xlu0 %1150
    %v1152 = vsel %vm618, %v1135, 0.0
    %1153 = vadd.xlane.f32.xlu0 %v1152
    %v1154 = vpop.xlane.xlu0 %1153
    %v1155 = vsel %vm618, %v1137, 0.0
    %1156 = vadd.xlane.f32.xlu0 %v1155
    %v1157 = vpop.xlane.xlu0 %1156
    %v1158 = vsel %vm618, %v1139, 0.0
    %1159 = vadd.xlane.f32.xlu0 %v1158
    %v1160 = vpop.xlane.xlu0 %1159
    %v1161 = vsel %vm618, %v1141, 0.0
    %1162 = vadd.xlane.f32.xlu0 %v1161
    %v1163 = vpop.xlane.xlu0 %1162
    %v1164 = vsel %vm618, %v1143, 0.0
    %1165 = vadd.xlane.f32.xlu0 %v1164
    %v1166 = vpop.xlane.xlu0 %1165
    %v1167 = vsel %vm618, %v1145, 0.0
    %1168 = vadd.xlane.f32.xlu0 %v1167
    %v1169 = vpop.xlane.xlu0 %1168
    %v1170 = vrcp.pop %v1148
    %v1171 = vrcp.pop %v1151
    %v1172 = vrcp.pop %v1154
    %v1173 = vrcp.pop %v1157
    %v1174 = vrcp.pop %v1160
    %v1175 = vrcp.pop %v1163
    %v1176 = vrcp.pop %v1166
    %v1177 = vrcp.pop %v1169
    %v1178 = vmul.f32 %v1131, %v1170
    %v1179 = vmul.f32 %v1133, %v1171
    %v1180 = vmul.f32 %v1135, %v1172
    %v1181 = vmul.f32 %v1137, %v1173
    %v1182 = vmul.f32 %v1139, %v1174
    %v1183 = vmul.f32 %v1141, %v1175
    %v1184 = vmul.f32 %v1143, %v1176
    %v1185 = vmul.f32 %v1145, %v1177
    %v1186 = vpack.c.bf16 %v1178, %v1178
    %v1187 = vpack.c.bf16 %v1179, %v1179
    %v1188 = vpack.c.bf16 %v1180, %v1180
    %v1189 = vpack.c.bf16 %v1181, %v1181
    %v1190 = vpack.c.bf16 %v1182, %v1182
    %v1191 = vpack.c.bf16 %v1183, %v1183
    %v1192 = vpack.c.bf16 %v1184, %v1184
    %v1193 = vpack.c.bf16 %v1185, %v1185
    %1194 = vst [vmem:[#allocation1] ss:$9 sm:$0xff] %v399
    %v1195 = vld [vmem:[#allocation1] sm:$0xff]
    %1197 = vrot.lane.b32.xlu0 %v1195, 112
    %v1198 = vpop.permute.xlu0 %1197
    %v1200 = vsel %vm715, %v1186, 0
    %v1203 = vsel %vm333, %v1198, 0
    %1205 = vmatpush.bf16.msra.mxu0 0
    %1206 = vmatpush.bf16.msra.mxu0 0
    %1207 = vmatpush.bf16.msra.mxu0 0
    %1208 = vmatpush.bf16.msra.mxu0 0
    %1209 = vmatpush.bf16.msra.mxu0 0
    %1210 = vmatpush.bf16.msra.mxu0 0
    %1211 = vmatpush.bf16.msra.mxu0 0
    %1212 = vmatpush.bf16.msra.mxu0 %v1203
    %1213 = vmatmul.bf16.gmra.mxu0 %v1200
    %v1214 = vpop.f32.mrf.mxu0
    %v1215 = vadd.f32 0.0, %v1214
    %v1216 = vpop.f32.mrf.mxu0
    %1217 = vdwg.mxu0
    %1218 = vst [vmem:[#allocation1] ss:$9 sm:$0xff] %v402
    %v1219 = vld [vmem:[#allocation1] sm:$0xff]
    %1221 = vrot.lane.b32.xlu0 %v1219, 112
    %v1222 = vpop.permute.xlu0 %1221
    %v1224 = vsel %vm715, %v1187, 0
    %v1227 = vsel %vm333, %v1222, 0
    %1229 = vmatpush.bf16.msra.mxu0 0
    %1230 = vmatpush.bf16.msra.mxu0 0
    %1231 = vmatpush.bf16.msra.mxu0 0
    %1232 = vmatpush.bf16.msra.mxu0 0
    %1233 = vmatpush.bf16.msra.mxu0 0
    %1234 = vmatpush.bf16.msra.mxu0 0
    %1235 = vmatpush.bf16.msra.mxu0 0
    %1236 = vmatpush.bf16.msra.mxu0 %v1227
    %1237 = vmatmul.bf16.gmra.mxu0 %v1224
    %v1238 = vpop.f32.mrf.mxu0
    %v1239 = vadd.f32 0.0, %v1238
    %v1240 = vpop.f32.mrf.mxu0
    %1241 = vdwg.mxu0
    %1242 = vst [vmem:[#allocation1] ss:$9 sm:$0xff] %v405
    %v1243 = vld [vmem:[#allocation1] sm:$0xff]
    %1245 = vrot.lane.b32.xlu0 %v1243, 112
    %v1246 = vpop.permute.xlu0 %1245
    %v1248 = vsel %vm715, %v1188, 0
    %v1251 = vsel %vm333, %v1246, 0
    %1253 = vmatpush.bf16.msra.mxu0 0
    %1254 = vmatpush.bf16.msra.mxu0 0
    %1255 = vmatpush.bf16.msra.mxu0 0
    %1256 = vmatpush.bf16.msra.mxu0 0
    %1257 = vmatpush.bf16.msra.mxu0 0
    %1258 = vmatpush.bf16.msra.mxu0 0
    %1259 = vmatpush.bf16.msra.mxu0 0
    %1260 = vmatpush.bf16.msra.mxu0 %v1251
    %1261 = vmatmul.bf16.gmra.mxu0 %v1248
    %v1262 = vpop.f32.mrf.mxu0
    %v1263 = vadd.f32 0.0, %v1262
    %v1264 = vpop.f32.mrf.mxu0
    %1265 = vdwg.mxu0
    %1266 = vst [vmem:[#allocation1] ss:$9 sm:$0xff] %v408
    %v1267 = vld [vmem:[#allocation1] sm:$0xff]
    %1269 = vrot.lane.b32.xlu0 %v1267, 112
    %v1270 = vpop.permute.xlu0 %1269
    %v1272 = vsel %vm715, %v1189, 0
    %v1275 = vsel %vm333, %v1270, 0
    %1277 = vmatpush.bf16.msra.mxu0 0
    %1278 = vmatpush.bf16.msra.mxu0 0
    %1279 = vmatpush.bf16.msra.mxu0 0
    %1280 = vmatpush.bf16.msra.mxu0 0
    %1281 = vmatpush.bf16.msra.mxu0 0
    %1282 = vmatpush.bf16.msra.mxu0 0
    %1283 = vmatpush.bf16.msra.mxu0 0
    %1284 = vmatpush.bf16.msra.mxu0 %v1275
    %1285 = vmatmul.bf16.gmra.mxu0 %v1272
    %v1286 = vpop.f32.mrf.mxu0
    %v1287 = vadd.f32 0.0, %v1286
    %v1288 = vpop.f32.mrf.mxu0
    %1289 = vdwg.mxu0
    %1290 = vst [vmem:[#allocation1] ss:$9 sm:$0xff] %v411
    %v1291 = vld [vmem:[#allocation1] sm:$0xff]
    %1293 = vrot.lane.b32.xlu0 %v1291, 112
    %v1294 = vpop.permute.xlu0 %1293
    %v1296 = vsel %vm715, %v1190, 0
    %v1299 = vsel %vm333, %v1294, 0
    %1301 = vmatpush.bf16.msra.mxu0 0
    %1302 = vmatpush.bf16.msra.mxu0 0
    %1303 = vmatpush.bf16.msra.mxu0 0
    %1304 = vmatpush.bf16.msra.mxu0 0
    %1305 = vmatpush.bf16.msra.mxu0 0
    %1306 = vmatpush.bf16.msra.mxu0 0
    %1307 = vmatpush.bf16.msra.mxu0 0
    %1308 = vmatpush.bf16.msra.mxu0 %v1299
    %1309 = vmatmul.bf16.gmra.mxu0 %v1296
    %v1310 = vpop.f32.mrf.mxu0
    %v1311 = vadd.f32 0.0, %v1310
    %v1312 = vpop.f32.mrf.mxu0
    %1313 = vdwg.mxu0
    %1314 = vst [vmem:[#allocation1] ss:$9 sm:$0xff] %v414
    %v1315 = vld [vmem:[#allocation1] sm:$0xff]
    %1317 = vrot.lane.b32.xlu0 %v1315, 112
    %v1318 = vpop.permute.xlu0 %1317
    %v1320 = vsel %vm715, %v1191, 0
    %v1323 = vsel %vm333, %v1318, 0
    %1325 = vmatpush.bf16.msra.mxu0 0
    %1326 = vmatpush.bf16.msra.mxu0 0
    %1327 = vmatpush.bf16.msra.mxu0 0
    %1328 = vmatpush.bf16.msra.mxu0 0
    %1329 = vmatpush.bf16.msra.mxu0 0
    %1330 = vmatpush.bf16.msra.mxu0 0
    %1331 = vmatpush.bf16.msra.mxu0 0
    %1332 = vmatpush.bf16.msra.mxu0 %v1323
    %1333 = vmatmul.bf16.gmra.mxu0 %v1320
    %v1334 = vpop.f32.mrf.mxu0
    %v1335 = vadd.f32 0.0, %v1334
    %v1336 = vpop.f32.mrf.mxu0
    %1337 = vdwg.mxu0
    %1338 = vst [vmem:[#allocation1] ss:$9 sm:$0xff] %v417
    %v1339 = vld [vmem:[#allocation1] sm:$0xff]
    %1341 = vrot.lane.b32.xlu0 %v1339, 112
    %v1342 = vpop.permute.xlu0 %1341
    %v1344 = vsel %vm715, %v1192, 0
    %v1347 = vsel %vm333, %v1342, 0
    %1349 = vmatpush.bf16.msra.mxu0 0
    %1350 = vmatpush.bf16.msra.mxu0 0
    %1351 = vmatpush.bf16.msra.mxu0 0
    %1352 = vmatpush.bf16.msra.mxu0 0
    %1353 = vmatpush.bf16.msra.mxu0 0
    %1354 = vmatpush.bf16.msra.mxu0 0
    %1355 = vmatpush.bf16.msra.mxu0 0
    %1356 = vmatpush.bf16.msra.mxu0 %v1347
    %1357 = vmatmul.bf16.gmra.mxu0 %v1344
    %v1358 = vpop.f32.mrf.mxu0
    %v1359 = vadd.f32 0.0, %v1358
    %v1360 = vpop.f32.mrf.mxu0
    %1361 = vdwg.mxu0
    %1362 = vst [vmem:[#allocation1] ss:$9 sm:$0xff] %v420
    %v1363 = vld [vmem:[#allocation1] sm:$0xff]
    %1365 = vrot.lane.b32.xlu0 %v1363, 112
    %v1366 = vpop.permute.xlu0 %1365
    %v1368 = vsel %vm715, %v1193, 0
    %v1371 = vsel %vm333, %v1366, 0
    %1373 = vmatpush.bf16.msra.mxu0 0
    %1374 = vmatpush.bf16.msra.mxu0 0
    %1375 = vmatpush.bf16.msra.mxu0 0
    %1376 = vmatpush.bf16.msra.mxu0 0
    %1377 = vmatpush.bf16.msra.mxu0 0
    %1378 = vmatpush.bf16.msra.mxu0 0
    %1379 = vmatpush.bf16.msra.mxu0 0
    %1380 = vmatpush.bf16.msra.mxu0 %v1371
    %1381 = vmatmul.bf16.gmra.mxu0 %v1368
    %v1382 = vpop.f32.mrf.mxu0
    %v1383 = vadd.f32 0.0, %v1382
    %v1384 = vpop.f32.mrf.mxu0
    %1385 = vdwg.mxu0
    %1386 = vst [vmem:[#allocation1] ss:$9 sm:$0xff] %v336
    %v1387 = vld [vmem:[#allocation1] sm:$0xff]
    %1389 = vrot.lane.b32.xlu0 %v1387, 96
    %v1390 = vpop.permute.xlu0 %1389
    %1391 = vst [vmem:[#allocation1] ss:$9 sm:$0xff] %v369
    %v1392 = vld [vmem:[#allocation1] sm:$0xff]
    %1394 = vrot.lane.b32.xlu0 %v1392, 32
    %v1395 = vpop.permute.xlu0 %1394
    %v1397 = vsel %vm426, %v1390, 0
    %v1400 = vsel %vm426, %v1395, 0
    %1402 = vmatpush.bf16.xpose.msra.mxu0 0
    %1403 = vmatpush.bf16.xpose.msra.mxu0 0
    %1404 = vmatpush.bf16.xpose.msra.mxu0 0
    %1405 = vmatpush.bf16.xpose.msra.mxu0 0
    %1406 = vmatpush.bf16.xpose.msra.mxu0 0
    %1407 = vmatpush.bf16.xpose.msra.mxu0 0
    %1408 = vmatpush.bf16.xpose.msra.mxu0 0
    %1409 = vmatpush.bf16.xpose.msra.mxu0 %v1400
    %1410 = vmatmul.bf16.gmra.mxu0 %v1397
    %v1411 = vpop.f32.mrf.mxu0
    %v1412 = vadd.f32 0.0, %v1411
    %v1413 = vpop.f32.mrf.mxu0
    %1414 = vdwg.mxu0
    %1415 = vst [vmem:[#allocation1] ss:$9 sm:$0xff] %v340
    %v1416 = vld [vmem:[#allocation1] sm:$0xff]
    %1418 = vrot.lane.b32.xlu0 %v1416, 96
    %v1419 = vpop.permute.xlu0 %1418
    %1420 = vst [vmem:[#allocation1] ss:$9 sm:$0xff] %v372
    %v1421 = vld [vmem:[#allocation1] sm:$0xff]
    %1423 = vrot.lane.b32.xlu0 %v1421, 32
    %v1424 = vpop.permute.xlu0 %1423
    %v1426 = vsel %vm426, %v1419, 0
    %v1429 = vsel %vm426, %v1424, 0
    %1431 = vmatpush.bf16.xpose.msra.mxu0 0
    %1432 = vmatpush.bf16.xpose.msra.mxu0 0
    %1433 = vmatpush.bf16.xpose.msra.mxu0 0
    %1434 = vmatpush.bf16.xpose.msra.mxu0 0
    %1435 = vmatpush.bf16.xpose.msra.mxu0 0
    %1436 = vmatpush.bf16.xpose.msra.mxu0 0
    %1437 = vmatpush.bf16.xpose.msra.mxu0 0
    %1438 = vmatpush.bf16.xpose.msra.mxu0 %v1429
    %1439 = vmatmul.bf16.gmra.mxu0 %v1426
    %v1440 = vpop.f32.mrf.mxu0
    %v1441 = vadd.f32 0.0, %v1440
    %v1442 = vpop.f32.mrf.mxu0
    %1443 = vdwg.mxu0
    %1444 = vst [vmem:[#allocation1] ss:$9 sm:$0xff] %v344
    %v1445 = vld [vmem:[#allocation1] sm:$0xff]
    %1447 = vrot.lane.b32.xlu0 %v1445, 96
    %v1448 = vpop.permute.xlu0 %1447
    %1449 = vst [vmem:[#allocation1] ss:$9 sm:$0xff] %v375
    %v1450 = vld [vmem:[#allocation1] sm:$0xff]
    %1452 = vrot.lane.b32.xlu0 %v1450, 32
    %v1453 = vpop.permute.xlu0 %1452
    %v1455 = vsel %vm426, %v1448, 0
    %v1458 = vsel %vm426, %v1453, 0
    %1460 = vmatpush.bf16.xpose.msra.mxu0 0
    %1461 = vmatpush.bf16.xpose.msra.mxu0 0
    %1462 = vmatpush.bf16.xpose.msra.mxu0 0
    %1463 = vmatpush.bf16.xpose.msra.mxu0 0
    %1464 = vmatpush.bf16.xpose.msra.mxu0 0
    %1465 = vmatpush.bf16.xpose.msra.mxu0 0
    %1466 = vmatpush.bf16.xpose.msra.mxu0 0
    %1467 = vmatpush.bf16.xpose.msra.mxu0 %v1458
    %1468 = vmatmul.bf16.gmra.mxu0 %v1455
    %v1469 = vpop.f32.mrf.mxu0
    %v1470 = vadd.f32 0.0, %v1469
    %v1471 = vpop.f32.mrf.mxu0
    %1472 = vdwg.mxu0
    %1473 = vst [vmem:[#allocation1] ss:$9 sm:$0xff] %v348
    %v1474 = vld [vmem:[#allocation1] sm:$0xff]
    %1476 = vrot.lane.b32.xlu0 %v1474, 96
    %v1477 = vpop.permute.xlu0 %1476
    %1478 = vst [vmem:[#allocation1] ss:$9 sm:$0xff] %v378
    %v1479 = vld [vmem:[#allocation1] sm:$0xff]
    %1481 = vrot.lane.b32.xlu0 %v1479, 32
    %v1482 = vpop.permute.xlu0 %1481
    %v1484 = vsel %vm426, %v1477, 0
    %v1487 = vsel %vm426, %v1482, 0
    %1489 = vmatpush.bf16.xpose.msra.mxu0 0
    %1490 = vmatpush.bf16.xpose.msra.mxu0 0
    %1491 = vmatpush.bf16.xpose.msra.mxu0 0
    %1492 = vmatpush.bf16.xpose.msra.mxu0 0
    %1493 = vmatpush.bf16.xpose.msra.mxu0 0
    %1494 = vmatpush.bf16.xpose.msra.mxu0 0
    %1495 = vmatpush.bf16.xpose.msra.mxu0 0
    %1496 = vmatpush.bf16.xpose.msra.mxu0 %v1487
    %1497 = vmatmul.bf16.gmra.mxu0 %v1484
    %v1498 = vpop.f32.mrf.mxu0
    %v1499 = vadd.f32 0.0, %v1498
    %v1500 = vpop.f32.mrf.mxu0
    %1501 = vdwg.mxu0
    %1502 = vst [vmem:[#allocation1] ss:$9 sm:$0xff] %v351
    %v1503 = vld [vmem:[#allocation1] sm:$0xff]
    %1505 = vrot.lane.b32.xlu0 %v1503, 96
    %v1506 = vpop.permute.xlu0 %1505
    %1507 = vst [vmem:[#allocation1] ss:$9 sm:$0xff] %v381
    %v1508 = vld [vmem:[#allocation1] sm:$0xff]
    %1510 = vrot.lane.b32.xlu0 %v1508, 32
    %v1511 = vpop.permute.xlu0 %1510
    %v1513 = vsel %vm426, %v1506, 0
    %v1516 = vsel %vm426, %v1511, 0
    %1518 = vmatpush.bf16.xpose.msra.mxu0 0
    %1519 = vmatpush.bf16.xpose.msra.mxu0 0
    %1520 = vmatpush.bf16.xpose.msra.mxu0 0
    %1521 = vmatpush.bf16.xpose.msra.mxu0 0
    %1522 = vmatpush.bf16.xpose.msra.mxu0 0
    %1523 = vmatpush.bf16.xpose.msra.mxu0 0
    %1524 = vmatpush.bf16.xpose.msra.mxu0 0
    %1525 = vmatpush.bf16.xpose.msra.mxu0 %v1516
    %1526 = vmatmul.bf16.gmra.mxu0 %v1513
    %v1527 = vpop.f32.mrf.mxu0
    %v1528 = vadd.f32 0.0, %v1527
    %v1529 = vpop.f32.mrf.mxu0
    %1530 = vdwg.mxu0
    %1531 = vst [vmem:[#allocation1] ss:$9 sm:$0xff] %v354
    %v1532 = vld [vmem:[#allocation1] sm:$0xff]
    %1534 = vrot.lane.b32.xlu0 %v1532, 96
    %v1535 = vpop.permute.xlu0 %1534
    %1536 = vst [vmem:[#allocation1] ss:$9 sm:$0xff] %v384
    %v1537 = vld [vmem:[#allocation1] sm:$0xff]
    %1539 = vrot.lane.b32.xlu0 %v1537, 32
    %v1540 = vpop.permute.xlu0 %1539
    %v1542 = vsel %vm426, %v1535, 0
    %v1545 = vsel %vm426, %v1540, 0
    %1547 = vmatpush.bf16.xpose.msra.mxu0 0
    %1548 = vmatpush.bf16.xpose.msra.mxu0 0
    %1549 = vmatpush.bf16.xpose.msra.mxu0 0
    %1550 = vmatpush.bf16.xpose.msra.mxu0 0
    %1551 = vmatpush.bf16.xpose.msra.mxu0 0
    %1552 = vmatpush.bf16.xpose.msra.mxu0 0
    %1553 = vmatpush.bf16.xpose.msra.mxu0 0
    %1554 = vmatpush.bf16.xpose.msra.mxu0 %v1545
    %1555 = vmatmul.bf16.gmra.mxu0 %v1542
    %v1556 = vpop.f32.mrf.mxu0
    %v1557 = vadd.f32 0.0, %v1556
    %v1558 = vpop.f32.mrf.mxu0
    %1559 = vdwg.mxu0
    %1560 = vst [vmem:[#allocation1] ss:$9 sm:$0xff] %v357
    %v1561 = vld [vmem:[#allocation1] sm:$0xff]
    %1563 = vrot.lane.b32.xlu0 %v1561, 96
    %v1564 = vpop.permute.xlu0 %1563
    %1565 = vst [vmem:[#allocation1] ss:$9 sm:$0xff] %v387
    %v1566 = vld [vmem:[#allocation1] sm:$0xff]
    %1568 = vrot.lane.b32.xlu0 %v1566, 32
    %v1569 = vpop.permute.xlu0 %1568
    %v1571 = vsel %vm426, %v1564, 0
    %v1574 = vsel %vm426, %v1569, 0
    %1576 = vmatpush.bf16.xpose.msra.mxu0 0
    %1577 = vmatpush.bf16.xpose.msra.mxu0 0
    %1578 = vmatpush.bf16.xpose.msra.mxu0 0
    %1579 = vmatpush.bf16.xpose.msra.mxu0 0
    %1580 = vmatpush.bf16.xpose.msra.mxu0 0
    %1581 = vmatpush.bf16.xpose.msra.mxu0 0
    %1582 = vmatpush.bf16.xpose.msra.mxu0 0
    %1583 = vmatpush.bf16.xpose.msra.mxu0 %v1574
    %1584 = vmatmul.bf16.gmra.mxu0 %v1571
    %v1585 = vpop.f32.mrf.mxu0
    %v1586 = vadd.f32 0.0, %v1585
    %v1587 = vpop.f32.mrf.mxu0
    %1588 = vdwg.mxu0
    %1589 = vst [vmem:[#allocation1] ss:$9 sm:$0xff] %v360
    %v1590 = vld [vmem:[#allocation1] sm:$0xff]
    %1592 = vrot.lane.b32.xlu0 %v1590, 96
    %v1593 = vpop.permute.xlu0 %1592
    %1594 = vst [vmem:[#allocation1] ss:$9 sm:$0xff] %v390
    %v1595 = vld [vmem:[#allocation1] sm:$0xff]
    %1597 = vrot.lane.b32.xlu0 %v1595, 32
    %v1598 = vpop.permute.xlu0 %1597
    %v1600 = vsel %vm426, %v1593, 0
    %v1603 = vsel %vm426, %v1598, 0
    %1605 = vmatpush.bf16.xpose.msra.mxu0 0
    %1606 = vmatpush.bf16.xpose.msra.mxu0 0
    %1607 = vmatpush.bf16.xpose.msra.mxu0 0
    %1608 = vmatpush.bf16.xpose.msra.mxu0 0
    %1609 = vmatpush.bf16.xpose.msra.mxu0 0
    %1610 = vmatpush.bf16.xpose.msra.mxu0 0
    %1611 = vmatpush.bf16.xpose.msra.mxu0 0
    %1612 = vmatpush.bf16.xpose.msra.mxu0 %v1603
    %1613 = vmatmul.bf16.gmra.mxu0 %v1600
    %v1614 = vpop.f32.mrf.mxu0
    %v1615 = vadd.f32 0.0, %v1614
    %v1616 = vpop.f32.mrf.mxu0
    %1617 = vdwg.mxu0
    %v1618 = vsel %vm618, %v1412, -inf
    %1619 = vmax.xlane.f32.xlu0 %v1618
    %v1620 = vpop.xlane.xlu0 %1619
    %v1621 = vsel %vm618, %v1441, -inf
    %1622 = vmax.xlane.f32.xlu0 %v1621
    %v1623 = vpop.xlane.xlu0 %1622
    %v1624 = vsel %vm618, %v1470, -inf
    %1625 = vmax.xlane.f32.xlu0 %v1624
    %v1626 = vpop.xlane.xlu0 %1625
    %v1627 = vsel %vm618, %v1499, -inf
    %1628 = vmax.xlane.f32.xlu0 %v1627
    %v1629 = vpop.xlane.xlu0 %1628
    %v1630 = vsel %vm618, %v1528, -inf
    %1631 = vmax.xlane.f32.xlu0 %v1630
    %v1632 = vpop.xlane.xlu0 %1631
    %v1633 = vsel %vm618, %v1557, -inf
    %1634 = vmax.xlane.f32.xlu0 %v1633
    %v1635 = vpop.xlane.xlu0 %1634
    %v1636 = vsel %vm618, %v1586, -inf
    %1637 = vmax.xlane.f32.xlu0 %v1636
    %v1638 = vpop.xlane.xlu0 %1637
    %v1639 = vsel %vm618, %v1615, -inf
    %1640 = vmax.xlane.f32.xlu0 %v1639
    %v1641 = vpop.xlane.xlu0 %1640
    %v1642 = vsub.f32 %v1412, %v1620
    %v1643 = vsub.f32 %v1441, %v1623
    %v1644 = vsub.f32 %v1470, %v1626
    %v1645 = vsub.f32 %v1499, %v1629
    %v1646 = vsub.f32 %v1528, %v1632
    %v1647 = vsub.f32 %v1557, %v1635
    %v1648 = vsub.f32 %v1586, %v1638
    %v1649 = vsub.f32 %v1615, %v1641
    %v1650 = vmul.f32 %v1642, 1.442695
    %v1651 = vpow.pop %v1650
    %v1652 = vmul.f32 %v1643, 1.442695
    %v1653 = vpow.pop %v1652
    %v1654 = vmul.f32 %v1644, 1.442695
    %v1655 = vpow.pop %v1654
    %v1656 = vmul.f32 %v1645, 1.442695
    %v1657 = vpow.pop %v1656
    %v1658 = vmul.f32 %v1646, 1.442695
    %v1659 = vpow.pop %v1658
    %v1660 = vmul.f32 %v1647, 1.442695
    %v1661 = vpow.pop %v1660
    %v1662 = vmul.f32 %v1648, 1.442695
    %v1663 = vpow.pop %v1662
    %v1664 = vmul.f32 %v1649, 1.442695
    %v1665 = vpow.pop %v1664
    %v1666 = vsel %vm618, %v1651, 0.0
    %1667 = vadd.xlane.f32.xlu0 %v1666
    %v1668 = vpop.xlane.xlu0 %1667
    %v1669 = vsel %vm618, %v1653, 0.0
    %1670 = vadd.xlane.f32.xlu0 %v1669
    %v1671 = vpop.xlane.xlu0 %1670
    %v1672 = vsel %vm618, %v1655, 0.0
    %1673 = vadd.xlane.f32.xlu0 %v1672
    %v1674 = vpop.xlane.xlu0 %1673
    %v1675 = vsel %vm618, %v1657, 0.0
    %1676 = vadd.xlane.f32.xlu0 %v1675
    %v1677 = vpop.xlane.xlu0 %1676
    %v1678 = vsel %vm618, %v1659, 0.0
    %1679 = vadd.xlane.f32.xlu0 %v1678
    %v1680 = vpop.xlane.xlu0 %1679
    %v1681 = vsel %vm618, %v1661, 0.0
    %1682 = vadd.xlane.f32.xlu0 %v1681
    %v1683 = vpop.xlane.xlu0 %1682
    %v1684 = vsel %vm618, %v1663, 0.0
    %1685 = vadd.xlane.f32.xlu0 %v1684
    %v1686 = vpop.xlane.xlu0 %1685
    %v1687 = vsel %vm618, %v1665, 0.0
    %1688 = vadd.xlane.f32.xlu0 %v1687
    %v1689 = vpop.xlane.xlu0 %1688
    %v1690 = vrcp.pop %v1668
    %v1691 = vrcp.pop %v1671
    %v1692 = vrcp.pop %v1674
    %v1693 = vrcp.pop %v1677
    %v1694 = vrcp.pop %v1680
    %v1695 = vrcp.pop %v1683
    %v1696 = vrcp.pop %v1686
    %v1697 = vrcp.pop %v1689
    %v1698 = vmul.f32 %v1651, %v1690
    %v1699 = vmul.f32 %v1653, %v1691
    %v1700 = vmul.f32 %v1655, %v1692
    %v1701 = vmul.f32 %v1657, %v1693
    %v1702 = vmul.f32 %v1659, %v1694
    %v1703 = vmul.f32 %v1661, %v1695
    %v1704 = vmul.f32 %v1663, %v1696
    %v1705 = vmul.f32 %v1665, %v1697
    %v1706 = vpack.c.bf16 %v1698, %v1698
    %v1707 = vpack.c.bf16 %v1699, %v1699
    %v1708 = vpack.c.bf16 %v1700, %v1700
    %v1709 = vpack.c.bf16 %v1701, %v1701
    %v1710 = vpack.c.bf16 %v1702, %v1702
    %v1711 = vpack.c.bf16 %v1703, %v1703
    %v1712 = vpack.c.bf16 %v1704, %v1704
    %v1713 = vpack.c.bf16 %v1705, %v1705
    %1714 = vst [vmem:[#allocation1] ss:$9 sm:$0xff] %v399
    %v1715 = vld [vmem:[#allocation1] sm:$0xff]
    %1717 = vrot.lane.b32.xlu0 %v1715, 96
    %v1718 = vpop.permute.xlu0 %1717
    %v1720 = vsel %vm715, %v1706, 0
    %v1723 = vsel %vm333, %v1718, 0
    %1725 = vmatpush.bf16.msra.mxu0 0
    %1726 = vmatpush.bf16.msra.mxu0 0
    %1727 = vmatpush.bf16.msra.mxu0 0
    %1728 = vmatpush.bf16.msra.mxu0 0
    %1729 = vmatpush.bf16.msra.mxu0 0
    %1730 = vmatpush.bf16.msra.mxu0 0
    %1731 = vmatpush.bf16.msra.mxu0 0
    %1732 = vmatpush.bf16.msra.mxu0 %v1723
    %1733 = vmatmul.bf16.gmra.mxu0 %v1720
    %v1734 = vpop.f32.mrf.mxu0
    %v1735 = vadd.f32 0.0, %v1734
    %v1736 = vpop.f32.mrf.mxu0
    %1737 = vdwg.mxu0
    %1738 = vst [vmem:[#allocation1] ss:$9 sm:$0xff] %v402
    %v1739 = vld [vmem:[#allocation1] sm:$0xff]
    %1741 = vrot.lane.b32.xlu0 %v1739, 96
    %v1742 = vpop.permute.xlu0 %1741
    %v1744 = vsel %vm715, %v1707, 0
    %v1747 = vsel %vm333, %v1742, 0
    %1749 = vmatpush.bf16.msra.mxu0 0
    %1750 = vmatpush.bf16.msra.mxu0 0
    %1751 = vmatpush.bf16.msra.mxu0 0
    %1752 = vmatpush.bf16.msra.mxu0 0
    %1753 = vmatpush.bf16.msra.mxu0 0
    %1754 = vmatpush.bf16.msra.mxu0 0
    %1755 = vmatpush.bf16.msra.mxu0 0
    %1756 = vmatpush.bf16.msra.mxu0 %v1747
    %1757 = vmatmul.bf16.gmra.mxu0 %v1744
    %v1758 = vpop.f32.mrf.mxu0
    %v1759 = vadd.f32 0.0, %v1758
    %v1760 = vpop.f32.mrf.mxu0
    %1761 = vdwg.mxu0
    %1762 = vst [vmem:[#allocation1] ss:$9 sm:$0xff] %v405
    %v1763 = vld [vmem:[#allocation1] sm:$0xff]
    %1765 = vrot.lane.b32.xlu0 %v1763, 96
    %v1766 = vpop.permute.xlu0 %1765
    %v1768 = vsel %vm715, %v1708, 0
    %v1771 = vsel %vm333, %v1766, 0
    %1773 = vmatpush.bf16.msra.mxu0 0
    %1774 = vmatpush.bf16.msra.mxu0 0
    %1775 = vmatpush.bf16.msra.mxu0 0
    %1776 = vmatpush.bf16.msra.mxu0 0
    %1777 = vmatpush.bf16.msra.mxu0 0
    %1778 = vmatpush.bf16.msra.mxu0 0
    %1779 = vmatpush.bf16.msra.mxu0 0
    %1780 = vmatpush.bf16.msra.mxu0 %v1771
    %1781 = vmatmul.bf16.gmra.mxu0 %v1768
    %v1782 = vpop.f32.mrf.mxu0
    %v1783 = vadd.f32 0.0, %v1782
    %v1784 = vpop.f32.mrf.mxu0
    %1785 = vdwg.mxu0
    %1786 = vst [vmem:[#allocation1] ss:$9 sm:$0xff] %v408
    %v1787 = vld [vmem:[#allocation1] sm:$0xff]
    %1789 = vrot.lane.b32.xlu0 %v1787, 96
    %v1790 = vpop.permute.xlu0 %1789
    %v1792 = vsel %vm715, %v1709, 0
    %v1795 = vsel %vm333, %v1790, 0
    %1797 = vmatpush.bf16.msra.mxu0 0
    %1798 = vmatpush.bf16.msra.mxu0 0
    %1799 = vmatpush.bf16.msra.mxu0 0
    %1800 = vmatpush.bf16.msra.mxu0 0
    %1801 = vmatpush.bf16.msra.mxu0 0
    %1802 = vmatpush.bf16.msra.mxu0 0
    %1803 = vmatpush.bf16.msra.mxu0 0
    %1804 = vmatpush.bf16.msra.mxu0 %v1795
    %1805 = vmatmul.bf16.gmra.mxu0 %v1792
    %v1806 = vpop.f32.mrf.mxu0
    %v1807 = vadd.f32 0.0, %v1806
    %v1808 = vpop.f32.mrf.mxu0
    %1809 = vdwg.mxu0
    %1810 = vst [vmem:[#allocation1] ss:$9 sm:$0xff] %v411
    %v1811 = vld [vmem:[#allocation1] sm:$0xff]
    %1813 = vrot.lane.b32.xlu0 %v1811, 96
    %v1814 = vpop.permute.xlu0 %1813
    %v1816 = vsel %vm715, %v1710, 0
    %v1819 = vsel %vm333, %v1814, 0
    %1821 = vmatpush.bf16.msra.mxu0 0
    %1822 = vmatpush.bf16.msra.mxu0 0
    %1823 = vmatpush.bf16.msra.mxu0 0
    %1824 = vmatpush.bf16.msra.mxu0 0
    %1825 = vmatpush.bf16.msra.mxu0 0
    %1826 = vmatpush.bf16.msra.mxu0 0
    %1827 = vmatpush.bf16.msra.mxu0 0
    %1828 = vmatpush.bf16.msra.mxu0 %v1819
    %1829 = vmatmul.bf16.gmra.mxu0 %v1816
    %v1830 = vpop.f32.mrf.mxu0
    %v1831 = vadd.f32 0.0, %v1830
    %v1832 = vpop.f32.mrf.mxu0
    %1833 = vdwg.mxu0
    %1834 = vst [vmem:[#allocation1] ss:$9 sm:$0xff] %v414
    %v1835 = vld [vmem:[#allocation1] sm:$0xff]
    %1837 = vrot.lane.b32.xlu0 %v1835, 96
    %v1838 = vpop.permute.xlu0 %1837
    %v1840 = vsel %vm715, %v1711, 0
    %v1843 = vsel %vm333, %v1838, 0
    %1845 = vmatpush.bf16.msra.mxu0 0
    %1846 = vmatpush.bf16.msra.mxu0 0
    %1847 = vmatpush.bf16.msra.mxu0 0
    %1848 = vmatpush.bf16.msra.mxu0 0
    %1849 = vmatpush.bf16.msra.mxu0 0
    %1850 = vmatpush.bf16.msra.mxu0 0
    %1851 = vmatpush.bf16.msra.mxu0 0
    %1852 = vmatpush.bf16.msra.mxu0 %v1843
    %1853 = vmatmul.bf16.gmra.mxu0 %v1840
    %v1854 = vpop.f32.mrf.mxu0
    %v1855 = vadd.f32 0.0, %v1854
    %v1856 = vpop.f32.mrf.mxu0
    %1857 = vdwg.mxu0
    %1858 = vst [vmem:[#allocation1] ss:$9 sm:$0xff] %v417
    %v1859 = vld [vmem:[#allocation1] sm:$0xff]
    %1861 = vrot.lane.b32.xlu0 %v1859, 96
    %v1862 = vpop.permute.xlu0 %1861
    %v1864 = vsel %vm715, %v1712, 0
    %v1867 = vsel %vm333, %v1862, 0
    %1869 = vmatpush.bf16.msra.mxu0 0
    %1870 = vmatpush.bf16.msra.mxu0 0
    %1871 = vmatpush.bf16.msra.mxu0 0
    %1872 = vmatpush.bf16.msra.mxu0 0
    %1873 = vmatpush.bf16.msra.mxu0 0
    %1874 = vmatpush.bf16.msra.mxu0 0
    %1875 = vmatpush.bf16.msra.mxu0 0
    %1876 = vmatpush.bf16.msra.mxu0 %v1867
    %1877 = vmatmul.bf16.gmra.mxu0 %v1864
    %v1878 = vpop.f32.mrf.mxu0
    %v1879 = vadd.f32 0.0, %v1878
    %v1880 = vpop.f32.mrf.mxu0
    %1881 = vdwg.mxu0
    %1882 = vst [vmem:[#allocation1] ss:$9 sm:$0xff] %v420
    %v1883 = vld [vmem:[#allocation1] sm:$0xff]
    %1885 = vrot.lane.b32.xlu0 %v1883, 96
    %v1886 = vpop.permute.xlu0 %1885
    %v1888 = vsel %vm715, %v1713, 0
    %v1891 = vsel %vm333, %v1886, 0
    %1893 = vmatpush.bf16.msra.mxu0 0
    %1894 = vmatpush.bf16.msra.mxu0 0
    %1895 = vmatpush.bf16.msra.mxu0 0
    %1896 = vmatpush.bf16.msra.mxu0 0
    %1897 = vmatpush.bf16.msra.mxu0 0
    %1898 = vmatpush.bf16.msra.mxu0 0
    %1899 = vmatpush.bf16.msra.mxu0 0
    %1900 = vmatpush.bf16.msra.mxu0 %v1891
    %1901 = vmatmul.bf16.gmra.mxu0 %v1888
    %v1902 = vpop.f32.mrf.mxu0
    %v1903 = vadd.f32 0.0, %v1902
    %v1904 = vpop.f32.mrf.mxu0
    %1905 = vdwg.mxu0
    %1906 = vst [vmem:[#allocation1] ss:$9 sm:$0xff] %v336
    %v1907 = vld [vmem:[#allocation1] sm:$0xff]
    %1909 = vrot.lane.b32.xlu0 %v1907, 80
    %v1910 = vpop.permute.xlu0 %1909
    %1911 = vst [vmem:[#allocation1] ss:$9 sm:$0xff] %v369
    %v1912 = vld [vmem:[#allocation1] sm:$0xff]
    %1914 = vrot.lane.b32.xlu0 %v1912, 16
    %v1915 = vpop.permute.xlu0 %1914
    %v1917 = vsel %vm426, %v1910, 0
    %v1920 = vsel %vm426, %v1915, 0
    %1922 = vmatpush.bf16.xpose.msra.mxu0 0
    %1923 = vmatpush.bf16.xpose.msra.mxu0 0
    %1924 = vmatpush.bf16.xpose.msra.mxu0 0
    %1925 = vmatpush.bf16.xpose.msra.mxu0 0
    %1926 = vmatpush.bf16.xpose.msra.mxu0 0
    %1927 = vmatpush.bf16.xpose.msra.mxu0 0
    %1928 = vmatpush.bf16.xpose.msra.mxu0 0
    %1929 = vmatpush.bf16.xpose.msra.mxu0 %v1920
    %1930 = vmatmul.bf16.gmra.mxu0 %v1917
    %v1931 = vpop.f32.mrf.mxu0
    %v1932 = vadd.f32 0.0, %v1931
    %v1933 = vpop.f32.mrf.mxu0
    %1934 = vdwg.mxu0
    %1935 = vst [vmem:[#allocation1] ss:$9 sm:$0xff] %v340
    %v1936 = vld [vmem:[#allocation1] sm:$0xff]
    %1938 = vrot.lane.b32.xlu0 %v1936, 80
    %v1939 = vpop.permute.xlu0 %1938
    %1940 = vst [vmem:[#allocation1] ss:$9 sm:$0xff] %v372
    %v1941 = vld [vmem:[#allocation1] sm:$0xff]
    %1943 = vrot.lane.b32.xlu0 %v1941, 16
    %v1944 = vpop.permute.xlu0 %1943
    %v1946 = vsel %vm426, %v1939, 0
    %v1949 = vsel %vm426, %v1944, 0
    %1951 = vmatpush.bf16.xpose.msra.mxu0 0
    %1952 = vmatpush.bf16.xpose.msra.mxu0 0
    %1953 = vmatpush.bf16.xpose.msra.mxu0 0
    %1954 = vmatpush.bf16.xpose.msra.mxu0 0
    %1955 = vmatpush.bf16.xpose.msra.mxu0 0
    %1956 = vmatpush.bf16.xpose.msra.mxu0 0
    %1957 = vmatpush.bf16.xpose.msra.mxu0 0
    %1958 = vmatpush.bf16.xpose.msra.mxu0 %v1949
    %1959 = vmatmul.bf16.gmra.mxu0 %v1946
    %v1960 = vpop.f32.mrf.mxu0
    %v1961 = vadd.f32 0.0, %v1960
    %v1962 = vpop.f32.mrf.mxu0
    %1963 = vdwg.mxu0
    %1964 = vst [vmem:[#allocation1] ss:$9 sm:$0xff] %v344
    %v1965 = vld [vmem:[#allocation1] sm:$0xff]
    %1967 = vrot.lane.b32.xlu0 %v1965, 80
    %v1968 = vpop.permute.xlu0 %1967
    %1969 = vst [vmem:[#allocation1] ss:$9 sm:$0xff] %v375
    %v1970 = vld [vmem:[#allocation1] sm:$0xff]
    %1972 = vrot.lane.b32.xlu0 %v1970, 16
    %v1973 = vpop.permute.xlu0 %1972
    %v1975 = vsel %vm426, %v1968, 0
    %v1978 = vsel %vm426, %v1973, 0
    %1980 = vmatpush.bf16.xpose.msra.mxu0 0
    %1981 = vmatpush.bf16.xpose.msra.mxu0 0
    %1982 = vmatpush.bf16.xpose.msra.mxu0 0
    %1983 = vmatpush.bf16.xpose.msra.mxu0 0
    %1984 = vmatpush.bf16.xpose.msra.mxu0 0
    %1985 = vmatpush.bf16.xpose.msra.mxu0 0
    %1986 = vmatpush.bf16.xpose.msra.mxu0 0
    %1987 = vmatpush.bf16.xpose.msra.mxu0 %v1978
    %1988 = vmatmul.bf16.gmra.mxu0 %v1975
    %v1989 = vpop.f32.mrf.mxu0
    %v1990 = vadd.f32 0.0, %v1989
    %v1991 = vpop.f32.mrf.mxu0
    %1992 = vdwg.mxu0
    %1993 = vst [vmem:[#allocation1] ss:$9 sm:$0xff] %v348
    %v1994 = vld [vmem:[#allocation1] sm:$0xff]
    %1996 = vrot.lane.b32.xlu0 %v1994, 80
    %v1997 = vpop.permute.xlu0 %1996
    %1998 = vst [vmem:[#allocation1] ss:$9 sm:$0xff] %v378
    %v1999 = vld [vmem:[#allocation1] sm:$0xff]
    %2001 = vrot.lane.b32.xlu0 %v1999, 16
    %v2002 = vpop.permute.xlu0 %2001
    %v2004 = vsel %vm426, %v1997, 0
    %v2007 = vsel %vm426, %v2002, 0
    %2009 = vmatpush.bf16.xpose.msra.mxu0 0
    %2010 = vmatpush.bf16.xpose.msra.mxu0 0
    %2011 = vmatpush.bf16.xpose.msra.mxu0 0
    %2012 = vmatpush.bf16.xpose.msra.mxu0 0
    %2013 = vmatpush.bf16.xpose.msra.mxu0 0
    %2014 = vmatpush.bf16.xpose.msra.mxu0 0
    %2015 = vmatpush.bf16.xpose.msra.mxu0 0
    %2016 = vmatpush.bf16.xpose.msra.mxu0 %v2007
    %2017 = vmatmul.bf16.gmra.mxu0 %v2004
    %v2018 = vpop.f32.mrf.mxu0
    %v2019 = vadd.f32 0.0, %v2018
    %v2020 = vpop.f32.mrf.mxu0
    %2021 = vdwg.mxu0
    %2022 = vst [vmem:[#allocation1] ss:$9 sm:$0xff] %v351
    %v2023 = vld [vmem:[#allocation1] sm:$0xff]
    %2025 = vrot.lane.b32.xlu0 %v2023, 80
    %v2026 = vpop.permute.xlu0 %2025
    %2027 = vst [vmem:[#allocation1] ss:$9 sm:$0xff] %v381
    %v2028 = vld [vmem:[#allocation1] sm:$0xff]
    %2030 = vrot.lane.b32.xlu0 %v2028, 16
    %v2031 = vpop.permute.xlu0 %2030
    %v2033 = vsel %vm426, %v2026, 0
    %v2036 = vsel %vm426, %v2031, 0
    %2038 = vmatpush.bf16.xpose.msra.mxu0 0
    %2039 = vmatpush.bf16.xpose.msra.mxu0 0
    %2040 = vmatpush.bf16.xpose.msra.mxu0 0
    %2041 = vmatpush.bf16.xpose.msra.mxu0 0
    %2042 = vmatpush.bf16.xpose.msra.mxu0 0
    %2043 = vmatpush.bf16.xpose.msra.mxu0 0
    %2044 = vmatpush.bf16.xpose.msra.mxu0 0
    %2045 = vmatpush.bf16.xpose.msra.mxu0 %v2036
    %2046 = vmatmul.bf16.gmra.mxu0 %v2033
    %v2047 = vpop.f32.mrf.mxu0
    %v2048 = vadd.f32 0.0, %v2047
    %v2049 = vpop.f32.mrf.mxu0
    %2050 = vdwg.mxu0
    %2051 = vst [vmem:[#allocation1] ss:$9 sm:$0xff] %v354
    %v2052 = vld [vmem:[#allocation1] sm:$0xff]
    %2054 = vrot.lane.b32.xlu0 %v2052, 80
    %v2055 = vpop.permute.xlu0 %2054
    %2056 = vst [vmem:[#allocation1] ss:$9 sm:$0xff] %v384
    %v2057 = vld [vmem:[#allocation1] sm:$0xff]
    %2059 = vrot.lane.b32.xlu0 %v2057, 16
    %v2060 = vpop.permute.xlu0 %2059
    %v2062 = vsel %vm426, %v2055, 0
    %v2065 = vsel %vm426, %v2060, 0
    %2067 = vmatpush.bf16.xpose.msra.mxu0 0
    %2068 = vmatpush.bf16.xpose.msra.mxu0 0
    %2069 = vmatpush.bf16.xpose.msra.mxu0 0
    %2070 = vmatpush.bf16.xpose.msra.mxu0 0
    %2071 = vmatpush.bf16.xpose.msra.mxu0 0
    %2072 = vmatpush.bf16.xpose.msra.mxu0 0
    %2073 = vmatpush.bf16.xpose.msra.mxu0 0
    %2074 = vmatpush.bf16.xpose.msra.mxu0 %v2065
    %2075 = vmatmul.bf16.gmra.mxu0 %v2062
    %v2076 = vpop.f32.mrf.mxu0
    %v2077 = vadd.f32 0.0, %v2076
    %v2078 = vpop.f32.mrf.mxu0
    %2079 = vdwg.mxu0
    %2080 = vst [vmem:[#allocation1] ss:$9 sm:$0xff] %v357
    %v2081 = vld [vmem:[#allocation1] sm:$0xff]
    %2083 = vrot.lane.b32.xlu0 %v2081, 80
    %v2084 = vpop.permute.xlu0 %2083
    %2085 = vst [vmem:[#allocation1] ss:$9 sm:$0xff] %v387
    %v2086 = vld [vmem:[#allocation1] sm:$0xff]
    %2088 = vrot.lane.b32.xlu0 %v2086, 16
    %v2089 = vpop.permute.xlu0 %2088
    %v2091 = vsel %vm426, %v2084, 0
    %v2094 = vsel %vm426, %v2089, 0
    %2096 = vmatpush.bf16.xpose.msra.mxu0 0
    %2097 = vmatpush.bf16.xpose.msra.mxu0 0
    %2098 = vmatpush.bf16.xpose.msra.mxu0 0
    %2099 = vmatpush.bf16.xpose.msra.mxu0 0
    %2100 = vmatpush.bf16.xpose.msra.mxu0 0
    %2101 = vmatpush.bf16.xpose.msra.mxu0 0
    %2102 = vmatpush.bf16.xpose.msra.mxu0 0
    %2103 = vmatpush.bf16.xpose.msra.mxu0 %v2094
    %2104 = vmatmul.bf16.gmra.mxu0 %v2091
    %v2105 = vpop.f32.mrf.mxu0
    %v2106 = vadd.f32 0.0, %v2105
    %v2107 = vpop.f32.mrf.mxu0
    %2108 = vdwg.mxu0
    %2109 = vst [vmem:[#allocation1] ss:$9 sm:$0xff] %v360
    %v2110 = vld [vmem:[#allocation1] sm:$0xff]
    %2112 = vrot.lane.b32.xlu0 %v2110, 80
    %v2113 = vpop.permute.xlu0 %2112
    %2114 = vst [vmem:[#allocation1] ss:$9 sm:$0xff] %v390
    %v2115 = vld [vmem:[#allocation1] sm:$0xff]
    %2117 = vrot.lane.b32.xlu0 %v2115, 16
    %v2118 = vpop.permute.xlu0 %2117
    %v2120 = vsel %vm426, %v2113, 0
    %v2123 = vsel %vm426, %v2118, 0
    %2125 = vmatpush.bf16.xpose.msra.mxu0 0
    %2126 = vmatpush.bf16.xpose.msra.mxu0 0
    %2127 = vmatpush.bf16.xpose.msra.mxu0 0
    %2128 = vmatpush.bf16.xpose.msra.mxu0 0
    %2129 = vmatpush.bf16.xpose.msra.mxu0 0
    %2130 = vmatpush.bf16.xpose.msra.mxu0 0
    %2131 = vmatpush.bf16.xpose.msra.mxu0 0
    %2132 = vmatpush.bf16.xpose.msra.mxu0 %v2123
    %2133 = vmatmul.bf16.gmra.mxu0 %v2120
    %v2134 = vpop.f32.mrf.mxu0
    %v2135 = vadd.f32 0.0, %v2134
    %v2136 = vpop.f32.mrf.mxu0
    %2137 = vdwg.mxu0
    %v2138 = vsel %vm618, %v1932, -inf
    %2139 = vmax.xlane.f32.xlu0 %v2138
    %v2140 = vpop.xlane.xlu0 %2139
    %v2141 = vsel %vm618, %v1961, -inf
    %2142 = vmax.xlane.f32.xlu0 %v2141
    %v2143 = vpop.xlane.xlu0 %2142
    %v2144 = vsel %vm618, %v1990, -inf
    %2145 = vmax.xlane.f32.xlu0 %v2144
    %v2146 = vpop.xlane.xlu0 %2145
    %v2147 = vsel %vm618, %v2019, -inf
    %2148 = vmax.xlane.f32.xlu0 %v2147
    %v2149 = vpop.xlane.xlu0 %2148
    %v2150 = vsel %vm618, %v2048, -inf
    %2151 = vmax.xlane.f32.xlu0 %v2150
    %v2152 = vpop.xlane.xlu0 %2151
    %v2153 = vsel %vm618, %v2077, -inf
    %2154 = vmax.xlane.f32.xlu0 %v2153
    %v2155 = vpop.xlane.xlu0 %2154
    %v2156 = vsel %vm618, %v2106, -inf
    %2157 = vmax.xlane.f32.xlu0 %v2156
    %v2158 = vpop.xlane.xlu0 %2157
    %v2159 = vsel %vm618, %v2135, -inf
    %2160 = vmax.xlane.f32.xlu0 %v2159
    %v2161 = vpop.xlane.xlu0 %2160
    %v2162 = vsub.f32 %v1932, %v2140
    %v2163 = vsub.f32 %v1961, %v2143
    %v2164 = vsub.f32 %v1990, %v2146
    %v2165 = vsub.f32 %v2019, %v2149
    %v2166 = vsub.f32 %v2048, %v2152
    %v2167 = vsub.f32 %v2077, %v2155
    %v2168 = vsub.f32 %v2106, %v2158
    %v2169 = vsub.f32 %v2135, %v2161
    %v2170 = vmul.f32 %v2162, 1.442695
    %v2171 = vpow.pop %v2170
    %v2172 = vmul.f32 %v2163, 1.442695
    %v2173 = vpow.pop %v2172
    %v2174 = vmul.f32 %v2164, 1.442695
    %v2175 = vpow.pop %v2174
    %v2176 = vmul.f32 %v2165, 1.442695
    %v2177 = vpow.pop %v2176
    %v2178 = vmul.f32 %v2166, 1.442695
    %v2179 = vpow.pop %v2178
    %v2180 = vmul.f32 %v2167, 1.442695
    %v2181 = vpow.pop %v2180
    %v2182 = vmul.f32 %v2168, 1.442695
    %v2183 = vpow.pop %v2182
    %v2184 = vmul.f32 %v2169, 1.442695
    %v2185 = vpow.pop %v2184
    %v2186 = vsel %vm618, %v2171, 0.0
    %2187 = vadd.xlane.f32.xlu0 %v2186
    %v2188 = vpop.xlane.xlu0 %2187
    %v2189 = vsel %vm618, %v2173, 0.0
    %2190 = vadd.xlane.f32.xlu0 %v2189
    %v2191 = vpop.xlane.xlu0 %2190
    %v2192 = vsel %vm618, %v2175, 0.0
    %2193 = vadd.xlane.f32.xlu0 %v2192
    %v2194 = vpop.xlane.xlu0 %2193
    %v2195 = vsel %vm618, %v2177, 0.0
    %2196 = vadd.xlane.f32.xlu0 %v2195
    %v2197 = vpop.xlane.xlu0 %2196
    %v2198 = vsel %vm618, %v2179, 0.0
    %2199 = vadd.xlane.f32.xlu0 %v2198
    %v2200 = vpop.xlane.xlu0 %2199
    %v2201 = vsel %vm618, %v2181, 0.0
    %2202 = vadd.xlane.f32.xlu0 %v2201
    %v2203 = vpop.xlane.xlu0 %2202
    %v2204 = vsel %vm618, %v2183, 0.0
    %2205 = vadd.xlane.f32.xlu0 %v2204
    %v2206 = vpop.xlane.xlu0 %2205
    %v2207 = vsel %vm618, %v2185, 0.0
    %2208 = vadd.xlane.f32.xlu0 %v2207
    %v2209 = vpop.xlane.xlu0 %2208
    %v2210 = vrcp.pop %v2188
    %v2211 = vrcp.pop %v2191
    %v2212 = vrcp.pop %v2194
    %v2213 = vrcp.pop %v2197
    %v2214 = vrcp.pop %v2200
    %v2215 = vrcp.pop %v2203
    %v2216 = vrcp.pop %v2206
    %v2217 = vrcp.pop %v2209
    %v2218 = vmul.f32 %v2171, %v2210
    %v2219 = vmul.f32 %v2173, %v2211
    %v2220 = vmul.f32 %v2175, %v2212
    %v2221 = vmul.f32 %v2177, %v2213
    %v2222 = vmul.f32 %v2179, %v2214
    %v2223 = vmul.f32 %v2181, %v2215
    %v2224 = vmul.f32 %v2183, %v2216
    %v2225 = vmul.f32 %v2185, %v2217
    %v2226 = vpack.c.bf16 %v2218, %v2218
    %v2227 = vpack.c.bf16 %v2219, %v2219
    %v2228 = vpack.c.bf16 %v2220, %v2220
    %v2229 = vpack.c.bf16 %v2221, %v2221
    %v2230 = vpack.c.bf16 %v2222, %v2222
    %v2231 = vpack.c.bf16 %v2223, %v2223
    %v2232 = vpack.c.bf16 %v2224, %v2224
    %v2233 = vpack.c.bf16 %v2225, %v2225
    %2234 = vst [vmem:[#allocation1] ss:$9 sm:$0xff] %v399
    %v2235 = vld [vmem:[#allocation1] sm:$0xff]
    %2237 = vrot.lane.b32.xlu0 %v2235, 80
    %v2238 = vpop.permute.xlu0 %2237
    %v2240 = vsel %vm715, %v2226, 0
    %v2243 = vsel %vm333, %v2238, 0
    %2245 = vmatpush.bf16.msra.mxu0 0
    %2246 = vmatpush.bf16.msra.mxu0 0
    %2247 = vmatpush.bf16.msra.mxu0 0
    %2248 = vmatpush.bf16.msra.mxu0 0
    %2249 = vmatpush.bf16.msra.mxu0 0
    %2250 = vmatpush.bf16.msra.mxu0 0
    %2251 = vmatpush.bf16.msra.mxu0 0
    %2252 = vmatpush.bf16.msra.mxu0 %v2243
    %2253 = vmatmul.bf16.gmra.mxu0 %v2240
    %v2254 = vpop.f32.mrf.mxu0
    %v2255 = vadd.f32 0.0, %v2254
    %v2256 = vpop.f32.mrf.mxu0
    %2257 = vdwg.mxu0
    %2258 = vst [vmem:[#allocation1] ss:$9 sm:$0xff] %v402
    %v2259 = vld [vmem:[#allocation1] sm:$0xff]
    %2261 = vrot.lane.b32.xlu0 %v2259, 80
    %v2262 = vpop.permute.xlu0 %2261
    %v2264 = vsel %vm715, %v2227, 0
    %v2267 = vsel %vm333, %v2262, 0
    %2269 = vmatpush.bf16.msra.mxu0 0
    %2270 = vmatpush.bf16.msra.mxu0 0
    %2271 = vmatpush.bf16.msra.mxu0 0
    %2272 = vmatpush.bf16.msra.mxu0 0
    %2273 = vmatpush.bf16.msra.mxu0 0
    %2274 = vmatpush.bf16.msra.mxu0 0
    %2275 = vmatpush.bf16.msra.mxu0 0
    %2276 = vmatpush.bf16.msra.mxu0 %v2267
    %2277 = vmatmul.bf16.gmra.mxu0 %v2264
    %v2278 = vpop.f32.mrf.mxu0
    %v2279 = vadd.f32 0.0, %v2278
    %v2280 = vpop.f32.mrf.mxu0
    %2281 = vdwg.mxu0
    %2282 = vst [vmem:[#allocation1] ss:$9 sm:$0xff] %v405
    %v2283 = vld [vmem:[#allocation1] sm:$0xff]
    %2285 = vrot.lane.b32.xlu0 %v2283, 80
    %v2286 = vpop.permute.xlu0 %2285
    %v2288 = vsel %vm715, %v2228, 0
    %v2291 = vsel %vm333, %v2286, 0
    %2293 = vmatpush.bf16.msra.mxu0 0
    %2294 = vmatpush.bf16.msra.mxu0 0
    %2295 = vmatpush.bf16.msra.mxu0 0
    %2296 = vmatpush.bf16.msra.mxu0 0
    %2297 = vmatpush.bf16.msra.mxu0 0
    %2298 = vmatpush.bf16.msra.mxu0 0
    %2299 = vmatpush.bf16.msra.mxu0 0
    %2300 = vmatpush.bf16.msra.mxu0 %v2291
    %2301 = vmatmul.bf16.gmra.mxu0 %v2288
    %v2302 = vpop.f32.mrf.mxu0
    %v2303 = vadd.f32 0.0, %v2302
    %v2304 = vpop.f32.mrf.mxu0
    %2305 = vdwg.mxu0
    %2306 = vst [vmem:[#allocation1] ss:$9 sm:$0xff] %v408
    %v2307 = vld [vmem:[#allocation1] sm:$0xff]
    %2309 = vrot.lane.b32.xlu0 %v2307, 80
    %v2310 = vpop.permute.xlu0 %2309
    %v2312 = vsel %vm715, %v2229, 0
    %v2315 = vsel %vm333, %v2310, 0
    %2317 = vmatpush.bf16.msra.mxu0 0
    %2318 = vmatpush.bf16.msra.mxu0 0
    %2319 = vmatpush.bf16.msra.mxu0 0
    %2320 = vmatpush.bf16.msra.mxu0 0
    %2321 = vmatpush.bf16.msra.mxu0 0
    %2322 = vmatpush.bf16.msra.mxu0 0
    %2323 = vmatpush.bf16.msra.mxu0 0
    %2324 = vmatpush.bf16.msra.mxu0 %v2315
    %2325 = vmatmul.bf16.gmra.mxu0 %v2312
    %v2326 = vpop.f32.mrf.mxu0
    %v2327 = vadd.f32 0.0, %v2326
    %v2328 = vpop.f32.mrf.mxu0
    %2329 = vdwg.mxu0
    %2330 = vst [vmem:[#allocation1] ss:$9 sm:$0xff] %v411
    %v2331 = vld [vmem:[#allocation1] sm:$0xff]
    %2333 = vrot.lane.b32.xlu0 %v2331, 80
    %v2334 = vpop.permute.xlu0 %2333
    %v2336 = vsel %vm715, %v2230, 0
    %v2339 = vsel %vm333, %v2334, 0
    %2341 = vmatpush.bf16.msra.mxu0 0
    %2342 = vmatpush.bf16.msra.mxu0 0
    %2343 = vmatpush.bf16.msra.mxu0 0
    %2344 = vmatpush.bf16.msra.mxu0 0
    %2345 = vmatpush.bf16.msra.mxu0 0
    %2346 = vmatpush.bf16.msra.mxu0 0
    %2347 = vmatpush.bf16.msra.mxu0 0
    %2348 = vmatpush.bf16.msra.mxu0 %v2339
    %2349 = vmatmul.bf16.gmra.mxu0 %v2336
    %v2350 = vpop.f32.mrf.mxu0
    %v2351 = vadd.f32 0.0, %v2350
    %v2352 = vpop.f32.mrf.mxu0
    %2353 = vdwg.mxu0
    %2354 = vst [vmem:[#allocation1] ss:$9 sm:$0xff] %v414
    %v2355 = vld [vmem:[#allocation1] sm:$0xff]
    %2357 = vrot.lane.b32.xlu0 %v2355, 80
    %v2358 = vpop.permute.xlu0 %2357
    %v2360 = vsel %vm715, %v2231, 0
    %v2363 = vsel %vm333, %v2358, 0
    %2365 = vmatpush.bf16.msra.mxu0 0
    %2366 = vmatpush.bf16.msra.mxu0 0
    %2367 = vmatpush.bf16.msra.mxu0 0
    %2368 = vmatpush.bf16.msra.mxu0 0
    %2369 = vmatpush.bf16.msra.mxu0 0
    %2370 = vmatpush.bf16.msra.mxu0 0
    %2371 = vmatpush.bf16.msra.mxu0 0
    %2372 = vmatpush.bf16.msra.mxu0 %v2363
    %2373 = vmatmul.bf16.gmra.mxu0 %v2360
    %v2374 = vpop.f32.mrf.mxu0
    %v2375 = vadd.f32 0.0, %v2374
    %v2376 = vpop.f32.mrf.mxu0
    %2377 = vdwg.mxu0
    %2378 = vst [vmem:[#allocation1] ss:$9 sm:$0xff] %v417
    %v2379 = vld [vmem:[#allocation1] sm:$0xff]
    %2381 = vrot.lane.b32.xlu0 %v2379, 80
    %v2382 = vpop.permute.xlu0 %2381
    %v2384 = vsel %vm715, %v2232, 0
    %v2387 = vsel %vm333, %v2382, 0
    %2389 = vmatpush.bf16.msra.mxu0 0
    %2390 = vmatpush.bf16.msra.mxu0 0
    %2391 = vmatpush.bf16.msra.mxu0 0
    %2392 = vmatpush.bf16.msra.mxu0 0
    %2393 = vmatpush.bf16.msra.mxu0 0
    %2394 = vmatpush.bf16.msra.mxu0 0
    %2395 = vmatpush.bf16.msra.mxu0 0
    %2396 = vmatpush.bf16.msra.mxu0 %v2387
    %2397 = vmatmul.bf16.gmra.mxu0 %v2384
    %v2398 = vpop.f32.mrf.mxu0
    %v2399 = vadd.f32 0.0, %v2398
    %v2400 = vpop.f32.mrf.mxu0
    %2401 = vdwg.mxu0
    %2402 = vst [vmem:[#allocation1] ss:$9 sm:$0xff] %v420
    %v2403 = vld [vmem:[#allocation1] sm:$0xff]
    %2405 = vrot.lane.b32.xlu0 %v2403, 80
    %v2406 = vpop.permute.xlu0 %2405
    %v2408 = vsel %vm715, %v2233, 0
    %v2411 = vsel %vm333, %v2406, 0
    %2413 = vmatpush.bf16.msra.mxu0 0
    %2414 = vmatpush.bf16.msra.mxu0 0
    %2415 = vmatpush.bf16.msra.mxu0 0
    %2416 = vmatpush.bf16.msra.mxu0 0
    %2417 = vmatpush.bf16.msra.mxu0 0
    %2418 = vmatpush.bf16.msra.mxu0 0
    %2419 = vmatpush.bf16.msra.mxu0 0
    %2420 = vmatpush.bf16.msra.mxu0 %v2411
    %2421 = vmatmul.bf16.gmra.mxu0 %v2408
    %v2422 = vpop.f32.mrf.mxu0
    %v2423 = vadd.f32 0.0, %v2422
    %v2424 = vpop.f32.mrf.mxu0
    %2425 = vdwg.mxu0
    %2434 = vst [vmem:[#allocation1] ss:$4 sm:$0xff] %v731
    %s2435 = scalar_lea.vmem [#allocation1], 1
    %2436 = vst [vmem:[%s2435] ss:$4 sm:$0xff] %v750
    %s2437 = scalar_lea.vmem [#allocation1], 2
    %2438 = vst [vmem:[%s2437] ss:$4 sm:$0xff] %v769
    %s2439 = scalar_lea.vmem [#allocation1], 3
    %2440 = vst [vmem:[%s2439] ss:$4 sm:$0xff] %v788
    %s2441 = scalar_lea.vmem [#allocation1], 32
    %2442 = vst [vmem:[%s2441] ss:$4 sm:$0xff] %v806
    %s2443 = scalar_lea.vmem [#allocation1], 33
    %2444 = vst [vmem:[%s2443] ss:$4 sm:$0xff] %v825
    %s2445 = scalar_lea.vmem [#allocation1], 34
    %2446 = vst [vmem:[%s2445] ss:$4 sm:$0xff] %v844
    %s2447 = scalar_lea.vmem [#allocation1], 35
    %2448 = vst [vmem:[%s2447] ss:$4 sm:$0xff] %v863
    %v2449 = vld.sshfl [vmem:[#allocation1] sm:$0xff pattern:$0x73625140]
    %v2450 = vld.sshfl [vmem:[#allocation1 + $0x20] sm:$0xff pattern:$0x73625140]
    %2461 = vst [vmem:[#allocation1] ss:$4 sm:$0xff] %v1215
    %s2462 = scalar_lea.vmem [#allocation1], 1
    %2463 = vst [vmem:[%s2462] ss:$4 sm:$0xff] %v1239
    %s2464 = scalar_lea.vmem [#allocation1], 2
    %2465 = vst [vmem:[%s2464] ss:$4 sm:$0xff] %v1263
    %s2466 = scalar_lea.vmem [#allocation1], 3
    %2467 = vst [vmem:[%s2466] ss:$4 sm:$0xff] %v1287
    %s2468 = scalar_lea.vmem [#allocation1], 32
    %2469 = vst [vmem:[%s2468] ss:$4 sm:$0xff] %v1311
    %s2470 = scalar_lea.vmem [#allocation1], 33
    %2471 = vst [vmem:[%s2470] ss:$4 sm:$0xff] %v1335
    %s2472 = scalar_lea.vmem [#allocation1], 34
    %2473 = vst [vmem:[%s2472] ss:$4 sm:$0xff] %v1359
    %s2474 = scalar_lea.vmem [#allocation1], 35
    %2475 = vst [vmem:[%s2474] ss:$4 sm:$0xff] %v1383
    %v2476 = vld.sshfl [vmem:[#allocation1] sm:$0xff pattern:$0x73625140]
    %v2477 = vld.sshfl [vmem:[#allocation1 + $0x20] sm:$0xff pattern:$0x73625140]
    %2478 = vrot.lane.b32.xlu0 %v2476, 16
    %v2479 = vpop.permute.xlu0 %2478
    %2480 = vrot.lane.b32.xlu0 %v2477, 16
    %v2481 = vpop.permute.xlu0 %2480
    %2492 = vst [vmem:[#allocation1] ss:$4 sm:$0xff] %v1735
    %s2493 = scalar_lea.vmem [#allocation1], 1
    %2494 = vst [vmem:[%s2493] ss:$4 sm:$0xff] %v1759
    %s2495 = scalar_lea.vmem [#allocation1], 2
    %2496 = vst [vmem:[%s2495] ss:$4 sm:$0xff] %v1783
    %s2497 = scalar_lea.vmem [#allocation1], 3
    %2498 = vst [vmem:[%s2497] ss:$4 sm:$0xff] %v1807
    %s2499 = scalar_lea.vmem [#allocation1], 32
    %2500 = vst [vmem:[%s2499] ss:$4 sm:$0xff] %v1831
    %s2501 = scalar_lea.vmem [#allocation1], 33
    %2502 = vst [vmem:[%s2501] ss:$4 sm:$0xff] %v1855
    %s2503 = scalar_lea.vmem [#allocation1], 34
    %2504 = vst [vmem:[%s2503] ss:$4 sm:$0xff] %v1879
    %s2505 = scalar_lea.vmem [#allocation1], 35
    %2506 = vst [vmem:[%s2505] ss:$4 sm:$0xff] %v1903
    %v2507 = vld.sshfl [vmem:[#allocation1] sm:$0xff pattern:$0x73625140]
    %v2508 = vld.sshfl [vmem:[#allocation1 + $0x20] sm:$0xff pattern:$0x73625140]
    %2509 = vrot.lane.b32.xlu0 %v2507, 32
    %v2510 = vpop.permute.xlu0 %2509
    %2511 = vrot.lane.b32.xlu0 %v2508, 32
    %v2512 = vpop.permute.xlu0 %2511
    %2523 = vst [vmem:[#allocation1] ss:$4 sm:$0xff] %v2255
    %s2524 = scalar_lea.vmem [#allocation1], 1
    %2525 = vst [vmem:[%s2524] ss:$4 sm:$0xff] %v2279
    %s2526 = scalar_lea.vmem [#allocation1], 2
    %2527 = vst [vmem:[%s2526] ss:$4 sm:$0xff] %v2303
    %s2528 = scalar_lea.vmem [#allocation1], 3
    %2529 = vst [vmem:[%s2528] ss:$4 sm:$0xff] %v2327
    %s2530 = scalar_lea.vmem [#allocation1], 32
    %2531 = vst [vmem:[%s2530] ss:$4 sm:$0xff] %v2351
    %s2532 = scalar_lea.vmem [#allocation1], 33
    %2533 = vst [vmem:[%s2532] ss:$4 sm:$0xff] %v2375
    %s2534 = scalar_lea.vmem [#allocation1], 34
    %2535 = vst [vmem:[%s2534] ss:$4 sm:$0xff] %v2399
    %s2536 = scalar_lea.vmem [#allocation1], 35
    %2537 = vst [vmem:[%s2536] ss:$4 sm:$0xff] %v2423
    %v2538 = vld.sshfl [vmem:[#allocation1] sm:$0xff pattern:$0x73625140]
    %v2539 = vld.sshfl [vmem:[#allocation1 + $0x20] sm:$0xff pattern:$0x73625140]
    %2540 = vrot.lane.b32.xlu0 %v2538, 48
    %v2541 = vpop.permute.xlu0 %2540
    %2542 = vrot.lane.b32.xlu0 %v2539, 48
    %v2543 = vpop.permute.xlu0 %2542
    %v2546 = vsel %vm426, %v2449, %v2479
    %v2547 = vsel %vm426, %v2450, %v2481
    %vm2548 = vcmask 261120
    %v2549 = vsel %vm2548, %v2546, %v2510
    %v2550 = vsel %vm2548, %v2547, %v2512
    %vm2551 = vcmask 392192
    %v2552 = vsel %vm2551, %v2549, %v2541
    %v2553 = vsel %vm2551, %v2550, %v2543
    %v2554 = vpack.c.bf16 %v2553, %v2552
    %v2555 = vld [vmem:[#allocation6] sm:$0xf]
    %v2556 = vld [vmem:[#allocation6 + $0x4] sm:$0xf]
    %v2557 = vld [vmem:[#allocation6 + $0x8] sm:$0xf]
    %v2558 = vld [vmem:[#allocation6 + $0xc] sm:$0xf]
    %v2559 = vld [vmem:[#allocation6 + $0x10] sm:$0xf]
    %v2560 = vld [vmem:[#allocation6 + $0x14] sm:$0xf]
    %v2561 = vld [vmem:[#allocation6 + $0x18] sm:$0xf]
    %v2562 = vld [vmem:[#allocation6 + $0x1c] sm:$0xf]
    %v2563 = vld [vmem:[#allocation7] sm:$0x1]
    %v2565 = vperm.slane %v2563, 0
    %v2575 = vunpack.c.l.b16 %v2555
    %v2576 = vunpack.c.l.b16 %v2556
    %v2577 = vunpack.c.l.b16 %v2557
    %v2578 = vunpack.c.l.b16 %v2558
    %v2579 = vunpack.c.l.b16 %v2559
    %v2580 = vunpack.c.l.b16 %v2560
    %v2581 = vunpack.c.l.b16 %v2561
    %v2582 = vunpack.c.l.b16 %v2562
    %v2583 = vpack.c.b16 %v2576, %v2575
    %v2584 = vpack.c.b16 %v2578, %v2577
    %v2585 = vpack.c.b16 %v2580, %v2579
    %v2586 = vpack.c.b16 %v2582, %v2581
    %v2592 = vsel %vm294, %v2554, 0
    %2594 = vmatpush.bf16.msra.mxu0 0
    %2595 = vmatpush.bf16.msra.mxu0 0
    %2596 = vmatpush.bf16.msra.mxu0 0
    %2597 = vmatpush.bf16.msra.mxu0 0
    %2598 = vmatpush.bf16.msra.mxu0 %v2586
    %2599 = vmatpush.bf16.msra.mxu0 %v2585
    %2600 = vmatpush.bf16.msra.mxu0 %v2584
    %2601 = vmatpush.bf16.msra.mxu0 %v2583
    %2602 = vmatmul.bf16.gmra.mxu0 %v2592
    %v2603 = vpop.f32.mrf.mxu0
    %v2604 = vadd.f32 %v2565, %v2603
    %v2605 = vpop.f32.mrf.mxu0
    %v2606 = vadd.f32 %v2565, %v2605
    %2607 = vdwg.mxu0
    %2616 = vst [vmem:[#allocation1] ss:$4 sm:$0xff] %v208
    %s2617 = scalar_lea.vmem [#allocation1], 1
    %2618 = vst [vmem:[%s2617] ss:$4 sm:$0xff] %v209
    %s2619 = scalar_lea.vmem [#allocation1], 2
    %2620 = vst [vmem:[%s2619] ss:$4 sm:$0xff] %v210
    %s2621 = scalar_lea.vmem [#allocation1], 3
    %2622 = vst [vmem:[%s2621] ss:$4 sm:$0xff] %v211
    %s2623 = scalar_lea.vmem [#allocation1], 32
    %2624 = vst [vmem:[%s2623] ss:$4 sm:$0xff] %v212
    %s2625 = scalar_lea.vmem [#allocation1], 33
    %2626 = vst [vmem:[%s2625] ss:$4 sm:$0xff] %v213
    %s2627 = scalar_lea.vmem [#allocation1], 34
    %2628 = vst [vmem:[%s2627] ss:$4 sm:$0xff] %v214
    %s2629 = scalar_lea.vmem [#allocation1], 35
    %2630 = vst [vmem:[%s2629] ss:$4 sm:$0xff] %v215
    %v2631 = vld.sshfl [vmem:[#allocation1] sm:$0xff pattern:$0x73625140]
    %v2632 = vld.sshfl [vmem:[#allocation1 + $0x20] sm:$0xff pattern:$0x73625140]
    %v2635 = vadd.f32 %v2604, %v2631
    %v2636 = vadd.f32 %v2606, %v2632
    %v2637 = vsel %vm294, %v2635, 0.0
    %2638 = vadd.xlane.f32.xlu0 %v2637
    %v2639 = vpop.xlane.xlu0 %2638
    %v2640 = vsel %vm294, %v2636, 0.0
    %2641 = vadd.xlane.f32.xlu0 %v2640
    %v2642 = vpop.xlane.xlu0 %2641
    %v2643 = vrcp.pop 64.0
    %v2644 = vmul.f32 64.0, %v2643
    %v2645 = vsub.f32 1.0, %v2644
    %v2646 = vmul.f32 %v2643, %v2645
    %v2647 = vadd.f32 %v2643, %v2646
    %vm2648 = vweird.f32 %v2643
    %v2649 = vsel %vm2648, %v2643, %v2647
    %v2650 = vmul.f32 %v2639, %v2649
    %v2651 = vmul.f32 %v2642, %v2649
    %v2652 = vsub.f32 %v2635, %v2650
    %v2653 = vsub.f32 %v2636, %v2651
    %v2654 = vmul.f32 %v2652, %v2652
    %v2655 = vmul.f32 %v2653, %v2653
    %v2656 = vsel %vm294, %v2654, 0.0
    %2657 = vadd.xlane.f32.xlu0 %v2656
    %v2658 = vpop.xlane.xlu0 %2657
    %v2659 = vsel %vm294, %v2655, 0.0
    %2660 = vadd.xlane.f32.xlu0 %v2659
    %v2661 = vpop.xlane.xlu0 %2660
    %v2662 = vmul.f32 %v2658, %v2649
    %v2663 = vmul.f32 %v2661, %v2649
    %v2664 = vadd.f32 %v2662, 1e-05
    %v2665 = vadd.f32 %v2663, 1e-05
    %v2666 = vrsqrt.pop %v2664
    %v2667 = vmul.f32 %v2666, %v2664
    %v2668 = vmul.f32 %v2667, %v2666
    %v2669 = vmul.f32 0.5, %v2668
    %v2670 = vsub.f32 1.5, %v2669
    %v2671 = vmul.f32 %v2666, %v2670
    %vm2672 = vweird.f32 %v2664
    %vm2673 = vweird.f32 %v2666
    %vm2674 = vmor %vm2672, %vm2673
    %v2675 = vsel %vm2674, %v2666, %v2671
    %v2676 = vrsqrt.pop %v2665
    %v2677 = vmul.f32 %v2676, %v2665
    %v2678 = vmul.f32 %v2677, %v2676
    %v2679 = vmul.f32 0.5, %v2678
    %v2680 = vsub.f32 1.5, %v2679
    %v2681 = vmul.f32 %v2676, %v2680
    %vm2682 = vweird.f32 %v2665
    %vm2683 = vweird.f32 %v2676
    %vm2684 = vmor %vm2682, %vm2683
    %v2685 = vsel %vm2684, %v2676, %v2681
    %v2686 = vmul.f32 %v2652, %v2675
    %v2687 = vmul.f32 %v2653, %v2685
    %v2688 = vld [vmem:[#allocation9] sm:$0x1]
    %v2690 = vperm.slane %v2688, 0
    %v2692 = vmul.f32 %v2686, %v2690
    %v2693 = vmul.f32 %v2687, %v2690
    %v2694 = vld [vmem:[#allocation10] sm:$0x1]
    %v2696 = vperm.slane %v2694, 0
    %v2698 = vadd.f32 %v2692, %v2696
    %v2699 = vadd.f32 %v2693, %v2696
    %v2700 = vpack.c.bf16 %v2699, %v2698
    %v2701 = vld [vmem:[#allocation12] sm:$0xf]
    %v2702 = vld [vmem:[#allocation12 + $0x4] sm:$0xf]
    %v2703 = vld [vmem:[#allocation12 + $0x8] sm:$0xf]
    %v2704 = vld [vmem:[#allocation12 + $0xc] sm:$0xf]
    %v2705 = vld [vmem:[#allocation12 + $0x10] sm:$0xf]
    %v2706 = vld [vmem:[#allocation12 + $0x14] sm:$0xf]
    %v2707 = vld [vmem:[#allocation12 + $0x18] sm:$0xf]
    %v2708 = vld [vmem:[#allocation12 + $0x1c] sm:$0xf]
    %v2709 = vld [vmem:[#allocation13] sm:$0x1]
    %v2711 = vperm.slane %v2709, 0
    %v2721 = vunpack.c.l.b16 %v2701
    %v2722 = vunpack.c.l.b16 %v2702
    %v2723 = vunpack.c.l.b16 %v2703
    %v2724 = vunpack.c.l.b16 %v2704
    %v2725 = vunpack.c.l.b16 %v2705
    %v2726 = vunpack.c.l.b16 %v2706
    %v2727 = vunpack.c.l.b16 %v2707
    %v2728 = vunpack.c.l.b16 %v2708
    %v2729 = vpack.c.b16 %v2722, %v2721
    %v2730 = vpack.c.b16 %v2724, %v2723
    %v2731 = vpack.c.b16 %v2726, %v2725
    %v2732 = vpack.c.b16 %v2728, %v2727
    %v2738 = vsel %vm294, %v2700, 0
    %2740 = vmatpush.bf16.msra.mxu0 0
    %2741 = vmatpush.bf16.msra.mxu0 0
    %2742 = vmatpush.bf16.msra.mxu0 0
    %2743 = vmatpush.bf16.msra.mxu0 0
    %2744 = vmatpush.bf16.msra.mxu0 %v2732
    %2745 = vmatpush.bf16.msra.mxu0 %v2731
    %2746 = vmatpush.bf16.msra.mxu0 %v2730
    %2747 = vmatpush.bf16.msra.mxu0 %v2729
    %2748 = vmatmul.bf16.gmra.mxu0 %v2738
    %v2749 = vpop.f32.mrf.mxu0
    %v2750 = vadd.f32 %v2711, %v2749
    %v2751 = vpop.f32.mrf.mxu0
    %v2752 = vadd.f32 %v2711, %v2751
    %2753 = vdwg.mxu0
    %v2754 = vmax.f32 %v2750, 0.0
    %v2755 = vmax.f32 %v2752, 0.0
    %v2756 = vpack.c.bf16 %v2755, %v2754
    %v2757 = vld [vmem:[%s9] sm:$0xf]
    %v2758 = vld [vmem:[%s9 + $0x4] sm:$0xf]
    %v2759 = vld [vmem:[%s9 + $0x8] sm:$0xf]
    %v2760 = vld [vmem:[%s9 + $0xc] sm:$0xf]
    %v2761 = vld [vmem:[%s9 + $0x10] sm:$0xf]
    %v2762 = vld [vmem:[%s9 + $0x14] sm:$0xf]
    %v2763 = vld [vmem:[%s9 + $0x18] sm:$0xf]
    %v2764 = vld [vmem:[%s9 + $0x1c] sm:$0xf]
    %v2765 = vld [vmem:[%s9 + $0x20] sm:$0xf]
    %v2766 = vld [vmem:[%s9 + $0x24] sm:$0xf]
    %v2767 = vld [vmem:[%s9 + $0x28] sm:$0xf]
    %v2768 = vld [vmem:[%s9 + $0x2c] sm:$0xf]
    %v2769 = vld [vmem:[%s9 + $0x30] sm:$0xf]
    %v2770 = vld [vmem:[%s9 + $0x34] sm:$0xf]
    %v2771 = vld [vmem:[%s9 + $0x38] sm:$0xf]
    %v2772 = vld [vmem:[%s9 + $0x3c] sm:$0xf]
    %v2773 = vld [vmem:[#allocation15] sm:$0x1]
    %v2775 = vperm.slane %v2773, 0
    %v2793 = vunpack.c.l.b16 %v2757
    %v2794 = vunpack.c.l.b16 %v2758
    %v2795 = vunpack.c.l.b16 %v2759
    %v2796 = vunpack.c.l.b16 %v2760
    %v2797 = vunpack.c.l.b16 %v2761
    %v2798 = vunpack.c.l.b16 %v2762
    %v2799 = vunpack.c.l.b16 %v2763
    %v2800 = vunpack.c.l.b16 %v2764
    %v2801 = vunpack.c.l.b16 %v2765
    %v2802 = vunpack.c.l.b16 %v2766
    %v2803 = vunpack.c.l.b16 %v2767
    %v2804 = vunpack.c.l.b16 %v2768
    %v2805 = vunpack.c.l.b16 %v2769
    %v2806 = vunpack.c.l.b16 %v2770
    %v2807 = vunpack.c.l.b16 %v2771
    %v2808 = vunpack.c.l.b16 %v2772
    %v2809 = vpack.c.b16 %v2794, %v2793
    %v2810 = vpack.c.b16 %v2796, %v2795
    %v2811 = vpack.c.b16 %v2798, %v2797
    %v2812 = vpack.c.b16 %v2800, %v2799
    %v2813 = vpack.c.b16 %v2802, %v2801
    %v2814 = vpack.c.b16 %v2804, %v2803
    %v2815 = vpack.c.b16 %v2806, %v2805
    %v2816 = vpack.c.b16 %v2808, %v2807
    %2825 = vmatpush.bf16.msra.mxu0 %v2816
    %2826 = vmatpush.bf16.msra.mxu0 %v2815
    %2827 = vmatpush.bf16.msra.mxu0 %v2814
    %2828 = vmatpush.bf16.msra.mxu0 %v2813
    %2829 = vmatpush.bf16.msra.mxu0 %v2812
    %2830 = vmatpush.bf16.msra.mxu0 %v2811
    %2831 = vmatpush.bf16.msra.mxu0 %v2810
    %2832 = vmatpush.bf16.msra.mxu0 %v2809
    %2833 = vmatmul.bf16.gmra.mxu0 %v2756
    %v2834 = vpop.f32.mrf.mxu0
    %v2835 = vadd.f32 %v2775, %v2834
    %v2836 = vpop.f32.mrf.mxu0
    %v2837 = vadd.f32 %v2775, %v2836
    %2838 = vdwg.mxu0
    %v2839 = vadd.f32 %v2835, %v2698
    %v2840 = vadd.f32 %v2837, %v2699
    %v2841 = vsel %vm294, %v2839, 0.0
    %2842 = vadd.xlane.f32.xlu0 %v2841
    %v2843 = vpop.xlane.xlu0 %2842
    %v2844 = vsel %vm294, %v2840, 0.0
    %2845 = vadd.xlane.f32.xlu0 %v2844
    %v2846 = vpop.xlane.xlu0 %2845
    %v2847 = vmul.f32 %v2843, %v2649
    %v2848 = vmul.f32 %v2846, %v2649
    %v2849 = vsub.f32 %v2839, %v2847
    %v2850 = vsub.f32 %v2840, %v2848
    %v2851 = vmul.f32 %v2849, %v2849
    %v2852 = vmul.f32 %v2850, %v2850
    %v2853 = vsel %vm294, %v2851, 0.0
    %2854 = vadd.xlane.f32.xlu0 %v2853
    %v2855 = vpop.xlane.xlu0 %2854
    %v2856 = vsel %vm294, %v2852, 0.0
    %2857 = vadd.xlane.f32.xlu0 %v2856
    %v2858 = vpop.xlane.xlu0 %2857
    %v2859 = vmul.f32 %v2855, %v2649
    %v2860 = vmul.f32 %v2858, %v2649
    %v2861 = vadd.f32 %v2859, 1e-05
    %v2862 = vadd.f32 %v2860, 1e-05
    %v2863 = vrsqrt.pop %v2861
    %v2864 = vmul.f32 %v2863, %v2861
    %v2865 = vmul.f32 %v2864, %v2863
    %v2866 = vmul.f32 0.5, %v2865
    %v2867 = vsub.f32 1.5, %v2866
    %v2868 = vmul.f32 %v2863, %v2867
    %vm2869 = vweird.f32 %v2861
    %vm2870 = vweird.f32 %v2863
    %vm2871 = vmor %vm2869, %vm2870
    %v2872 = vsel %vm2871, %v2863, %v2868
    %v2873 = vrsqrt.pop %v2862
    %v2874 = vmul.f32 %v2873, %v2862
    %v2875 = vmul.f32 %v2874, %v2873
    %v2876 = vmul.f32 0.5, %v2875
    %v2877 = vsub.f32 1.5, %v2876
    %v2878 = vmul.f32 %v2873, %v2877
    %vm2879 = vweird.f32 %v2862
    %vm2880 = vweird.f32 %v2873
    %vm2881 = vmor %vm2879, %vm2880
    %v2882 = vsel %vm2881, %v2873, %v2878
    %v2883 = vmul.f32 %v2849, %v2872
    %v2884 = vmul.f32 %v2850, %v2882
    %v2885 = vld [vmem:[#allocation16] sm:$0x1]
    %v2887 = vperm.slane %v2885, 0
    %v2889 = vmul.f32 %v2883, %v2887
    %v2890 = vmul.f32 %v2884, %v2887
    %v2891 = vld [vmem:[#allocation18] sm:$0x1]
    %v2893 = vperm.slane %v2891, 0
    %v2895 = vadd.f32 %v2889, %v2893
    %v2896 = vadd.f32 %v2890, %v2893
    %v2899 = vrot.slane %v2895, 2
    %v2900 = vrot.slane %v2895, 4
    %v2901 = vrot.slane %v2895, 6
    %v2902 = vrot.slane %v2896, 2
    %v2903 = vrot.slane %v2896, 4
    %v2904 = vrot.slane %v2896, 6
    %v2911 = vpack.c.bf16 %v2895, %v2895
    %v2912 = vpack.c.bf16 %v2899, %v2899
    %v2913 = vpack.c.bf16 %v2900, %v2900
    %v2914 = vpack.c.bf16 %v2901, %v2901
    %v2915 = vpack.c.bf16 %v2896, %v2896
    %v2916 = vpack.c.bf16 %v2902, %v2902
    %v2917 = vpack.c.bf16 %v2903, %v2903
    %v2918 = vpack.c.bf16 %v2904, %v2904
    %vm2919 = vcmask 516096
    %2920 = vst.msk [vmem:[%s13] sm:$0x1] %vm2919, %v2911
    %2921 = vst.msk [vmem:[%s13 + $0x1] sm:$0x1] %vm2919, %v2912
    %2922 = vst.msk [vmem:[%s13 + $0x2] sm:$0x1] %vm2919, %v2913
    %2923 = vst.msk [vmem:[%s13 + $0x3] sm:$0x1] %vm2919, %v2914
    %2924 = vst.msk [vmem:[%s13 + $0x4] sm:$0x1] %vm2919, %v2915
    %2925 = vst.msk [vmem:[%s13 + $0x5] sm:$0x1] %vm2919, %v2916
    %2926 = vst.msk [vmem:[%s13 + $0x6] sm:$0x1] %vm2919, %v2917
    %2927 = vst.msk [vmem:[%s13 + $0x7] sm:$0x1] %vm2919, %v2918
    // Predicated region
    $region98: #{model_forward.20} parent=1 // pred_check
      _
    $region99: #{model_forward.20} parent=1 // pred_check_branch
      %2929 = sbr.rel (0) target = $region101
    $region100: #{model_forward.20} parent=1 // pred_region
      _
    $region101: #{model_forward.20} parent=1 // pred_fallthru
      _
    // Predicated region
    $region102: #{model_forward.20} parent=1 // pred_check
      _
    $region103: #{model_forward.20} parent=1 // pred_check_branch
      %2931 = sbr.rel (0) target = $region105
    $region104: #{model_forward.20} parent=1 // pred_region
      _
    $region105: #{model_forward.20} parent=1 // pred_fallthru
      _
    %2932 = vsyncpa [#allocation3], 1
    %2933 = vsyncpa [#allocation5], 1
    %2934 = vsyncpa [#allocation8], 1
    %2935 = vsyncpa [#allocation11], 1
    %2936 = vsyncpa [#allocation14], 1
    %2937 = vsyncpa [#allocation17], 1

</llo_original>
